<compile_context>
chip_gen: v6e
topology: v6e:2x2x1
jax: 0.10.0
libtpu: 0.0.40
codegen_flags: <defaults>
</compile_context>

<pallas_src>
import functools

import numpy as np
import jax
import jax.numpy as jnp
from jax.experimental import pallas as pl
from jax.experimental.pallas import tpu as pltpu

BN_EPS = 1e-5

_COMPILER_PARAMS = pltpu.CompilerParams(vmem_limit_bytes=32 * 1024 * 1024)


def _vmem_spec():
    return pl.BlockSpec(memory_space=pltpu.MemorySpace.VMEM)


# ----------------------------------------------------------------------------
# In-kernel helpers (traced inside the Pallas kernels).
# ----------------------------------------------------------------------------
def _bn_cols(y, gamma, beta):
    """Training-mode BatchNorm: per-column (channel) batch statistics, f32."""
    mu = jnp.mean(y, axis=0, keepdims=True)
    var = jnp.mean(jnp.square(y - mu), axis=0, keepdims=True)
    return (y - mu) * jax.lax.rsqrt(var + BN_EPS) * gamma + beta


def _shift_mask(hh, ww, di, dj, h, w):
    """Validity mask for a conv tap reading spatial offset (di, dj).

    Returns None when the tap never crosses an image edge (no masking needed).
    """
    conds = []
    if di < 0:
        conds.append(hh >= -di)
    elif di > 0:
        conds.append(hh < h - di)
    if dj < 0:
        conds.append(ww >= -dj)
    elif dj > 0:
        conds.append(ww < w - dj)
    if not conds:
        return None
    mask = conds[0]
    for c in conds[1:]:
        mask = mask & c
    return mask


def _conv3x3_shifted(src_ref, pad, h, w, hh, ww, w_ref, cout):
    """3x3 / stride-1 / pad-1 conv over a row-padded flattened activation.

    src_ref : (pad + M + pad, Cin) ref; rows [pad, pad+M) hold the activation
              flattened as (N*h*w, Cin); the padding rows are zero.
    Tap (i, j) is the activation shifted by (i-1)*w + (j-1) rows; rows that
    would cross an image edge are masked.  The 9x patch duplication therefore
    stays in VMEM->vreg traffic (no HBM im2col) and the conv is 9 accumulating
    bf16 MXU matmuls with an f32 accumulator.
    """
    m = hh.shape[0]
    acc = jnp.zeros((m, cout), jnp.float32)
    for i in range(3):
        for j in range(3):
            di, dj = i - 1, j - 1
            tap = src_ref[pl.ds(pad + di * w + dj, m), :]
            mask = _shift_mask(hh, ww, di, dj, h, w)
            if mask is not None:
                tap = jnp.where(mask, tap, jnp.zeros_like(tap))
            acc = acc + jnp.dot(tap.astype(jnp.bfloat16), w_ref[i * 3 + j],
                                preferred_element_type=jnp.float32)
    return acc


# ----------------------------------------------------------------------------
# Pallas kernels.
# ----------------------------------------------------------------------------
def _stem_kernel(xpad_ref, hh_ref, ww_ref, w_ref, g_ref, b_ref, o_ref, *, h, w):
    """conv1 (3x3, s1, p1, no bias) + BN(batch stats) + ReLU (maxpool = id)."""
    pad = w + 1
    acc = _conv3x3_shifted(xpad_ref, pad, h, w, hh_ref[...], ww_ref[...],
                           w_ref, o_ref.shape[1])
    o_ref[...] = jnp.maximum(_bn_cols(acc, g_ref[...], b_ref[...]), 0.0)


def _block_s1_kernel(xpad_ref, hh_ref, ww_ref,
                     w1_ref, g1_ref, b1_ref,
                     w2_ref, g2_ref, b2_ref,
                     o_ref, mid_ref, *, h, w):
    """Fused stride-1 BasicBlock: conv1+BN+ReLU -> conv2+BN -> +x -> ReLU.

    The conv1 output never leaves VMEM (mid_ref scratch, row-padded so it can
    be consumed directly by conv2's shifted taps).
    """
    pad = w + 1
    m, cout = o_ref.shape
    hh = hh_ref[...]
    ww = ww_ref[...]

    acc1 = _conv3x3_shifted(xpad_ref, pad, h, w, hh, ww, w1_ref, cout)
    y1 = jnp.maximum(_bn_cols(acc1, g1_ref[...], b1_ref[...]), 0.0)
    # Zero the halo rows once, then write the interior.
    mid_ref[pl.ds(0, pad), :] = jnp.zeros((pad, cout), jnp.float32)
    mid_ref[pl.ds(pad + m, pad), :] = jnp.zeros((pad, cout), jnp.float32)
    mid_ref[pl.ds(pad, m), :] = y1

    acc2 = _conv3x3_shifted(mid_ref, pad, h, w, hh, ww, w2_ref, cout)
    y2 = _bn_cols(acc2, g2_ref[...], b2_ref[...])
    res = xpad_ref[pl.ds(pad, m), :]          # identity path, kept in f32
    o_ref[...] = jnp.maximum(y2 + res, 0.0)


def _block_s2_kernel(p00_ref, p01_ref, p10_ref, p11_ref, hh_ref, ww_ref,
                     w1_ref, g1_ref, b1_ref,
                     w2_ref, g2_ref, b2_ref,
                     wd_ref, gd_ref, bd_ref,
                     o_ref, mid_ref, *, ho, wo):
    """Fused stride-2 BasicBlock (with 1x1/s2 downsample on the identity path).

    The block input arrives decomposed into its 4 spatial phases, so the
    stride-2 3x3 conv becomes constant row-shift matmuls over the phases and
    the 1x1 stride-2 downsample is a single matmul on phase (0, 0).
    """
    pad = wo + 1
    m, cout = o_ref.shape
    hh = hh_ref[...]
    ww = ww_ref[...]
    phases = ((p00_ref, p01_ref), (p10_ref, p11_ref))

    # conv1: 3x3, stride 2, pad 1.  Input row 2*ho_out + (i-1) = 2*(ho_out+a)+p.
    acc1 = jnp.zeros((m, cout), jnp.float32)
    for i in range(3):
        for j in range(3):
            a, p = divmod(i - 1, 2)
            b, q = divmod(j - 1, 2)
            tap = phases[p][q][pl.ds(pad + a * wo + b, m), :]
            mask = _shift_mask(hh, ww, a, b, ho, wo)
            if mask is not None:
                tap = jnp.where(mask, tap, jnp.zeros_like(tap))
            acc1 = acc1 + jnp.dot(tap.astype(jnp.bfloat16), w1_ref[i * 3 + j],
                                  preferred_element_type=jnp.float32)
    y1 = jnp.maximum(_bn_cols(acc1, g1_ref[...], b1_ref[...]), 0.0)
    mid_ref[pl.ds(0, pad), :] = jnp.zeros((pad, cout), jnp.float32)
    mid_ref[pl.ds(pad + m, pad), :] = jnp.zeros((pad, cout), jnp.float32)
    mid_ref[pl.ds(pad, m), :] = y1

    # conv2: 3x3, stride 1, at the output resolution.
    acc2 = _conv3x3_shifted(mid_ref, pad, ho, wo, hh, ww, w2_ref, cout)
    y2 = _bn_cols(acc2, g2_ref[...], b2_ref[...])

    # Downsample identity: 1x1 stride-2 conv == matmul on phase (0, 0), + BN.
    x00 = p00_ref[pl.ds(pad, m), :].astype(jnp.bfloat16)
    iden = _bn_cols(jnp.dot(x00, wd_ref[0], preferred_element_type=jnp.float32),
                    gd_ref[...], bd_ref[...])
    o_ref[...] = jnp.maximum(y2 + iden, 0.0)


def _head_kernel(x_ref, w_ref, o_ref, *, hw):
    """Fused global average pool + bias-free fc (output padded to 128 lanes)."""
    for n in range(o_ref.shape[0]):
        pooled = jnp.mean(x_ref[pl.ds(n * hw, hw), :], axis=0, keepdims=True)
        o_ref[pl.ds(n, 1), :] = jnp.dot(pooled.astype(jnp.bfloat16), w_ref[...],
                                        preferred_element_type=jnp.float32)


# ----------------------------------------------------------------------------
# JAX glue: flattened-activation plumbing around the fused kernels.
# ----------------------------------------------------------------------------
@functools.lru_cache(maxsize=None)
def _row_coords(n, h, w):
    """Per-row (h, w) spatial coordinates of the flattened (n*h*w, C) layout."""
    r = np.arange(n * h * w)
    hh = ((r // w) % h).astype(np.int32).reshape(-1, 1)
    ww = (r % w).astype(np.int32).reshape(-1, 1)
    return jnp.asarray(hh), jnp.asarray(ww)


def _pad_rows(x2d, lo, hi):
    return jnp.pad(x2d, ((lo, hi), (0, 0)))


def _stem_forward(x2d, n, h, w, pp):
    m = n * h * w
    pad = w + 1
    hh, ww = _row_coords(n, h, w)
    cout = pp['w'].shape[-1]
    return pl.pallas_call(
        functools.partial(_stem_kernel, h=h, w=w),
        out_shape=jax.ShapeDtypeStruct((m, cout), jnp.float32),
        in_specs=[_vmem_spec()] * 6,
        out_specs=_vmem_spec(),
        compiler_params=_COMPILER_PARAMS,
    )(_pad_rows(x2d, pad, pad), hh, ww, pp['w'], pp['g'], pp['b'])


def _block_s1_forward(x2d, n, h, w, blk):
    m = n * h * w
    pad = w + 1
    hh, ww = _row_coords(n, h, w)
    cout = blk['w1'].shape[-1]
    assert blk['w1'].shape[1] == cout, "stride-1 block requires Cin == Cout"
    return pl.pallas_call(
        functools.partial(_block_s1_kernel, h=h, w=w),
        out_shape=jax.ShapeDtypeStruct((m, cout), jnp.float32),
        in_specs=[_vmem_spec()] * 9,
        out_specs=_vmem_spec(),
        scratch_shapes=[pltpu.VMEM((m + 2 * pad, cout), jnp.float32)],
        compiler_params=_COMPILER_PARAMS,
    )(_pad_rows(x2d, pad, pad), hh, ww,
      blk['w1'], blk['g1'], blk['b1'],
      blk['w2'], blk['g2'], blk['b2'])


def _block_s2_forward(x2d, n, h, w, blk):
    ho, wo = h // 2, w // 2
    m = n * ho * wo
    pad = wo + 1
    hh, ww = _row_coords(n, ho, wo)
    cin = blk['w1'].shape[1]
    cout = blk['w1'].shape[-1]
    x4d = x2d.reshape(n, h, w, cin)
    # 4 spatial phases of the block input (same total bytes as the input).
    phases = [_pad_rows(x4d[:, p::2, q::2, :].reshape(m, cin), pad, 0)
              for p in range(2) for q in range(2)]
    return pl.pallas_call(
        functools.partial(_block_s2_kernel, ho=ho, wo=wo),
        out_shape=jax.ShapeDtypeStruct((m, cout), jnp.float32),
        in_specs=[_vmem_spec()] * 15,
        out_specs=_vmem_spec(),
        scratch_shapes=[pltpu.VMEM((m + 2 * pad, cout), jnp.float32)],
        compiler_params=_COMPILER_PARAMS,
    )(phases[0], phases[1], phases[2], phases[3], hh, ww,
      blk['w1'], blk['g1'], blk['b1'],
      blk['w2'], blk['g2'], blk['b2'],
      blk['wd'], blk['gd'], blk['bd'])


def _head_forward(x2d, n, hw, fc_w):
    return pl.pallas_call(
        functools.partial(_head_kernel, hw=hw),
        out_shape=jax.ShapeDtypeStruct((n, fc_w.shape[-1]), jnp.float32),
        in_specs=[_vmem_spec()] * 2,
        out_specs=_vmem_spec(),
        compiler_params=_COMPILER_PARAMS,
    )(x2d, fc_w)


def baseline_forward(x_nchw, packed):
    """BaselineModel.forward: ResNet-18 with 3x3/s1/p1 stem, identity maxpool,
    bias-free 512->10 fc.  BatchNorm uses batch statistics (the module in its
    freshly-constructed, training-mode state), as in the previous version."""
    x = jnp.transpose(x_nchw, (0, 2, 3, 1)).astype(jnp.float32)   # NCHW -> NHWC
    n, h, w, c = x.shape
    x2d = x.reshape(n * h * w, c)
    x2d = _stem_forward(x2d, n, h, w, packed['stem'])
    for blk in packed['blocks']:
        if blk['stride'] == 2:
            x2d = _block_s2_forward(x2d, n, h, w, blk)
            h, w = h // 2, w // 2
        else:
            x2d = _block_s1_forward(x2d, n, h, w, blk)
    logits_pad = _head_forward(x2d, n, h * w, packed['fc_w'])
    return logits_pad[:, :packed['num_classes']]


# ----------------------------------------------------------------------------
# One-time weight packing (outside the per-forward path).
# ----------------------------------------------------------------------------
def _pack_conv(w):
    """PyTorch (Cout, Cin, kh, kw) -> (kh*kw, Cin, Cout) bf16 MXU operand."""
    cout, cin, kh, kw = w.shape
    return (jnp.transpose(w, (2, 3, 1, 0))
            .reshape(kh * kw, cin, cout).astype(jnp.bfloat16))


def _pack_bn(g, b):
    return (g.reshape(1, -1).astype(jnp.float32),
            b.reshape(1, -1).astype(jnp.float32))


def pack_params(params):
    """Re-layout weights once: convs to (taps, Cin, Cout) bf16, BN to (1, C)
    f32, fc to (512, 128) bf16 with the 10 real classes zero-padded so the
    kernel's output store is a full 128-lane tile."""
    g, b = _pack_bn(params['bn1_g'], params['bn1_b'])
    packed = {'stem': {'w': _pack_conv(params['conv1_w']), 'g': g, 'b': b}}
    blocks = []
    for layer in params['layers']:
        for blk in layer:
            g1, b1 = _pack_bn(blk['bn1_g'], blk['bn1_b'])
            g2, b2 = _pack_bn(blk['bn2_g'], blk['bn2_b'])
            pb = {'stride': blk['stride'],
                  'w1': _pack_conv(blk['conv1_w']), 'g1': g1, 'b1': b1,
                  'w2': _pack_conv(blk['conv2_w']), 'g2': g2, 'b2': b2}
            if 'down_w' in blk:
                gd, bd = _pack_bn(blk['down_g'], blk['down_b'])
                pb.update(wd=_pack_conv(blk['down_w']), gd=gd, bd=bd)
            blocks.append(pb)
    packed['blocks'] = blocks
    num_classes, feat = params['fc_w'].shape
    cpad = -(-num_classes // 128) * 128
    fc = jnp.zeros((feat, cpad), jnp.float32).at[:, :num_classes].set(
        params['fc_w'].T)
    packed['fc_w'] = fc.astype(jnp.bfloat16)
    packed['num_classes'] = num_classes
    return packed


# ----------------------------------------------------------------------------
# Deterministic parameter construction (shapes of torchvision resnet18 with
# the BaselineModel surgery applied).
# ----------------------------------------------------------------------------
def _kaiming(key, cout, cin, k):
    fan_in = cin * k * k
    return (jax.random.normal(key, (cout, cin, k, k), jnp.float32)
            * jnp.sqrt(2.0 / fan_in))


def make_params(key):
    keys = iter(jax.random.split(key, 64))
    p = {
        'conv1_w': _kaiming(next(keys), 64, 3, 3),
        'bn1_g': jnp.ones((64,), jnp.float32),
        'bn1_b': jnp.zeros((64,), jnp.float32),
    }
    layers = []
    cfg = [(64, 64, 1), (64, 128, 2), (128, 256, 2), (256, 512, 2)]
    for cin, cout, first_stride in cfg:
        blocks = []
        for b in range(2):
            s = first_stride if b == 0 else 1
            in_c = cin if b == 0 else cout
            blk = {
                'stride': s,
                'conv1_w': _kaiming(next(keys), cout, in_c, 3),
                'bn1_g': jnp.ones((cout,), jnp.float32),
                'bn1_b': jnp.zeros((cout,), jnp.float32),
                'conv2_w': _kaiming(next(keys), cout, cout, 3),
                'bn2_g': jnp.ones((cout,), jnp.float32),
                'bn2_b': jnp.zeros((cout,), jnp.float32),
            }
            if s != 1 or in_c != cout:
                blk['down_w'] = _kaiming(next(keys), cout, in_c, 1)
                blk['down_g'] = jnp.ones((cout,), jnp.float32)
                blk['down_b'] = jnp.zeros((cout,), jnp.float32)
            blocks.append(blk)
        layers.append(blocks)
    p['layers'] = layers
    p['fc_w'] = (jax.random.normal(next(keys), (10, 512), jnp.float32)
                 / jnp.sqrt(512.0))
    return p


if __name__ == "__main__":
    key = jax.random.PRNGKey(0)
    k_param, k_x = jax.random.split(key)
    params = make_params(k_param)
    packed = pack_params(params)          # one-time bf16 / MXU-layout packing
    # Small input consistent with the module: NCHW, 3 channels, 16x16 spatial.
    x = jax.random.normal(k_x, (2, 3, 16, 16), jnp.float32)
    logits = baseline_forward(x, packed)
    logits = jax.block_until_ready(logits)
    assert logits.shape == (2, 10) and logits.dtype == jnp.float32
    print("KERNEL_OK")
</pallas_src>

<mosaic_0001>
module attributes {stable_mosaic.version = 11 : i64} {
  func.func @_stem_kernel(%arg0: memref<546x3xf32, #tpu.memory_space<vmem>>, %arg1: memref<512x1xi32, #tpu.memory_space<vmem>>, %arg2: memref<512x1xi32, #tpu.memory_space<vmem>>, %arg3: memref<9x3x64xbf16, #tpu.memory_space<vmem>>, %arg4: memref<1x64xf32, #tpu.memory_space<vmem>>, %arg5: memref<1x64xf32, #tpu.memory_space<vmem>>, %arg6: memref<512x64xf32, #tpu.memory_space<vmem>>) attributes {dimension_semantics = [], scalar_prefetch = 0 : i64, scratch_operands = 0 : i64, tpu.core_type = #tpu.core_type<tc>} {
    %c0 = arith.constant 0 : index
    %c0_0 = arith.constant 0 : index
    %0 = vector.load %arg1[%c0, %c0_0] : memref<512x1xi32, #tpu.memory_space<vmem>>, vector<512x1xi32>
    %c0_1 = arith.constant 0 : index
    %c0_2 = arith.constant 0 : index
    %1 = vector.load %arg2[%c0_1, %c0_2] : memref<512x1xi32, #tpu.memory_space<vmem>>, vector<512x1xi32>
    %cst = arith.constant 0.000000e+00 : f32
    %2 = vector.broadcast %cst : f32 to vector<512x64xf32>
    %c0_3 = arith.constant 0 : index
    %c0_4 = arith.constant 0 : index
    %3 = vector.load %arg0[%c0_3, %c0_4] : memref<546x3xf32, #tpu.memory_space<vmem>>, vector<512x3xf32>
    %c1_i32 = arith.constant 1 : i32
    %4 = vector.broadcast %c1_i32 : i32 to vector<512x1xi32>
    %5 = arith.cmpi sge, %0, %4 : vector<512x1xi32>
    %c1_i32_5 = arith.constant 1 : i32
    %6 = vector.broadcast %c1_i32_5 : i32 to vector<512x1xi32>
    %7 = arith.cmpi sge, %1, %6 : vector<512x1xi32>
    %8 = arith.andi %5, %7 : vector<512x1xi1>
    %cst_6 = arith.constant 0.000000e+00 : f32
    %9 = vector.broadcast %cst_6 : f32 to vector<512x3xf32>
    %10 = vector.shape_cast %8 : vector<512x1xi1> to vector<512x1xi1>
    %11 = vector.broadcast %10 : vector<512x1xi1> to vector<512x3xi1>
    %12 = arith.select %11, %3, %9 : vector<512x3xi1>, vector<512x3xf32>
    %13 = arith.truncf %12 : vector<512x3xf32> to vector<512x3xbf16>
    %c0_7 = arith.constant 0 : index
    %c0_8 = arith.constant 0 : index
    %c0_9 = arith.constant 0 : index
    %14 = vector.load %arg3[%c0_7, %c0_8, %c0_9] : memref<9x3x64xbf16, #tpu.memory_space<vmem>>, vector<1x3x64xbf16>
    %15 = vector.shape_cast %14 : vector<1x3x64xbf16> to vector<3x64xbf16>
    %cst_10 = arith.constant dense<0.000000e+00> : vector<512x64xf32>
    %16 = tpu.matmul %13, %15, %cst_10 {dimension_numbers = #tpu.dot_dimension_numbers<[1], [0], [0], [1], [0, 0, 1, 1], [], []>} : vector<512x3xbf16>, vector<3x64xbf16>, vector<512x64xf32> -> vector<512x64xf32>
    %17 = arith.addf %2, %16 : vector<512x64xf32>
    %c1 = arith.constant 1 : index
    %c0_11 = arith.constant 0 : index
    %18 = vector.load %arg0[%c1, %c0_11] : memref<546x3xf32, #tpu.memory_space<vmem>>, vector<512x3xf32>
    %c1_i32_12 = arith.constant 1 : i32
    %19 = vector.broadcast %c1_i32_12 : i32 to vector<512x1xi32>
    %20 = arith.cmpi sge, %0, %19 : vector<512x1xi32>
    %cst_13 = arith.constant 0.000000e+00 : f32
    %21 = vector.broadcast %cst_13 : f32 to vector<512x3xf32>
    %22 = vector.shape_cast %20 : vector<512x1xi1> to vector<512x1xi1>
    %23 = vector.broadcast %22 : vector<512x1xi1> to vector<512x3xi1>
    %24 = arith.select %23, %18, %21 : vector<512x3xi1>, vector<512x3xf32>
    %25 = arith.truncf %24 : vector<512x3xf32> to vector<512x3xbf16>
    %c1_14 = arith.constant 1 : index
    %c0_15 = arith.constant 0 : index
    %c0_16 = arith.constant 0 : index
    %26 = vector.load %arg3[%c1_14, %c0_15, %c0_16] : memref<9x3x64xbf16, #tpu.memory_space<vmem>>, vector<1x3x64xbf16>
    %27 = vector.shape_cast %26 : vector<1x3x64xbf16> to vector<3x64xbf16>
    %cst_17 = arith.constant dense<0.000000e+00> : vector<512x64xf32>
    %28 = tpu.matmul %25, %27, %cst_17 {dimension_numbers = #tpu.dot_dimension_numbers<[1], [0], [0], [1], [0, 0, 1, 1], [], []>} : vector<512x3xbf16>, vector<3x64xbf16>, vector<512x64xf32> -> vector<512x64xf32>
    %29 = arith.addf %17, %28 : vector<512x64xf32>
    %c2 = arith.constant 2 : index
    %c0_18 = arith.constant 0 : index
    %30 = vector.load %arg0[%c2, %c0_18] : memref<546x3xf32, #tpu.memory_space<vmem>>, vector<512x3xf32>
    %c1_i32_19 = arith.constant 1 : i32
    %31 = vector.broadcast %c1_i32_19 : i32 to vector<512x1xi32>
    %32 = arith.cmpi sge, %0, %31 : vector<512x1xi32>
    %c15_i32 = arith.constant 15 : i32
    %33 = vector.broadcast %c15_i32 : i32 to vector<512x1xi32>
    %34 = arith.cmpi slt, %1, %33 : vector<512x1xi32>
    %35 = arith.andi %32, %34 : vector<512x1xi1>
    %cst_20 = arith.constant 0.000000e+00 : f32
    %36 = vector.broadcast %cst_20 : f32 to vector<512x3xf32>
    %37 = vector.shape_cast %35 : vector<512x1xi1> to vector<512x1xi1>
    %38 = vector.broadcast %37 : vector<512x1xi1> to vector<512x3xi1>
    %39 = arith.select %38, %30, %36 : vector<512x3xi1>, vector<512x3xf32>
    %40 = arith.truncf %39 : vector<512x3xf32> to vector<512x3xbf16>
    %c2_21 = arith.constant 2 : index
    %c0_22 = arith.constant 0 : index
    %c0_23 = arith.constant 0 : index
    %41 = vector.load %arg3[%c2_21, %c0_22, %c0_23] : memref<9x3x64xbf16, #tpu.memory_space<vmem>>, vector<1x3x64xbf16>
    %42 = vector.shape_cast %41 : vector<1x3x64xbf16> to vector<3x64xbf16>
    %cst_24 = arith.constant dense<0.000000e+00> : vector<512x64xf32>
    %43 = tpu.matmul %40, %42, %cst_24 {dimension_numbers = #tpu.dot_dimension_numbers<[1], [0], [0], [1], [0, 0, 1, 1], [], []>} : vector<512x3xbf16>, vector<3x64xbf16>, vector<512x64xf32> -> vector<512x64xf32>
    %44 = arith.addf %29, %43 : vector<512x64xf32>
    %c16 = arith.constant 16 : index
    %c0_25 = arith.constant 0 : index
    %45 = vector.load %arg0[%c16, %c0_25] : memref<546x3xf32, #tpu.memory_space<vmem>>, vector<512x3xf32>
    %c1_i32_26 = arith.constant 1 : i32
    %46 = vector.broadcast %c1_i32_26 : i32 to vector<512x1xi32>
    %47 = arith.cmpi sge, %1, %46 : vector<512x1xi32>
    %cst_27 = arith.constant 0.000000e+00 : f32
    %48 = vector.broadcast %cst_27 : f32 to vector<512x3xf32>
    %49 = vector.shape_cast %47 : vector<512x1xi1> to vector<512x1xi1>
    %50 = vector.broadcast %49 : vector<512x1xi1> to vector<512x3xi1>
    %51 = arith.select %50, %45, %48 : vector<512x3xi1>, vector<512x3xf32>
    %52 = arith.truncf %51 : vector<512x3xf32> to vector<512x3xbf16>
    %c3 = arith.constant 3 : index
    %c0_28 = arith.constant 0 : index
    %c0_29 = arith.constant 0 : index
    %53 = vector.load %arg3[%c3, %c0_28, %c0_29] : memref<9x3x64xbf16, #tpu.memory_space<vmem>>, vector<1x3x64xbf16>
    %54 = vector.shape_cast %53 : vector<1x3x64xbf16> to vector<3x64xbf16>
    %cst_30 = arith.constant dense<0.000000e+00> : vector<512x64xf32>
    %55 = tpu.matmul %52, %54, %cst_30 {dimension_numbers = #tpu.dot_dimension_numbers<[1], [0], [0], [1], [0, 0, 1, 1], [], []>} : vector<512x3xbf16>, vector<3x64xbf16>, vector<512x64xf32> -> vector<512x64xf32>
    %56 = arith.addf %44, %55 : vector<512x64xf32>
    %c17 = arith.constant 17 : index
    %c0_31 = arith.constant 0 : index
    %57 = vector.load %arg0[%c17, %c0_31] : memref<546x3xf32, #tpu.memory_space<vmem>>, vector<512x3xf32>
    %58 = arith.truncf %57 : vector<512x3xf32> to vector<512x3xbf16>
    %c4 = arith.constant 4 : index
    %c0_32 = arith.constant 0 : index
    %c0_33 = arith.constant 0 : index
    %59 = vector.load %arg3[%c4, %c0_32, %c0_33] : memref<9x3x64xbf16, #tpu.memory_space<vmem>>, vector<1x3x64xbf16>
    %60 = vector.shape_cast %59 : vector<1x3x64xbf16> to vector<3x64xbf16>
    %cst_34 = arith.constant dense<0.000000e+00> : vector<512x64xf32>
    %61 = tpu.matmul %58, %60, %cst_34 {dimension_numbers = #tpu.dot_dimension_numbers<[1], [0], [0], [1], [0, 0, 1, 1], [], []>} : vector<512x3xbf16>, vector<3x64xbf16>, vector<512x64xf32> -> vector<512x64xf32>
    %62 = arith.addf %56, %61 : vector<512x64xf32>
    %c18 = arith.constant 18 : index
    %c0_35 = arith.constant 0 : index
    %63 = vector.load %arg0[%c18, %c0_35] : memref<546x3xf32, #tpu.memory_space<vmem>>, vector<512x3xf32>
    %c15_i32_36 = arith.constant 15 : i32
    %64 = vector.broadcast %c15_i32_36 : i32 to vector<512x1xi32>
    %65 = arith.cmpi slt, %1, %64 : vector<512x1xi32>
    %cst_37 = arith.constant 0.000000e+00 : f32
    %66 = vector.broadcast %cst_37 : f32 to vector<512x3xf32>
    %67 = vector.shape_cast %65 : vector<512x1xi1> to vector<512x1xi1>
    %68 = vector.broadcast %67 : vector<512x1xi1> to vector<512x3xi1>
    %69 = arith.select %68, %63, %66 : vector<512x3xi1>, vector<512x3xf32>
    %70 = arith.truncf %69 : vector<512x3xf32> to vector<512x3xbf16>
    %c5 = arith.constant 5 : index
    %c0_38 = arith.constant 0 : index
    %c0_39 = arith.constant 0 : index
    %71 = vector.load %arg3[%c5, %c0_38, %c0_39] : memref<9x3x64xbf16, #tpu.memory_space<vmem>>, vector<1x3x64xbf16>
    %72 = vector.shape_cast %71 : vector<1x3x64xbf16> to vector<3x64xbf16>
    %cst_40 = arith.constant dense<0.000000e+00> : vector<512x64xf32>
    %73 = tpu.matmul %70, %72, %cst_40 {dimension_numbers = #tpu.dot_dimension_numbers<[1], [0], [0], [1], [0, 0, 1, 1], [], []>} : vector<512x3xbf16>, vector<3x64xbf16>, vector<512x64xf32> -> vector<512x64xf32>
    %74 = arith.addf %62, %73 : vector<512x64xf32>
    %c32 = arith.constant 32 : index
    %c0_41 = arith.constant 0 : index
    %75 = vector.load %arg0[%c32, %c0_41] : memref<546x3xf32, #tpu.memory_space<vmem>>, vector<512x3xf32>
    %c15_i32_42 = arith.constant 15 : i32
    %76 = vector.broadcast %c15_i32_42 : i32 to vector<512x1xi32>
    %77 = arith.cmpi slt, %0, %76 : vector<512x1xi32>
    %c1_i32_43 = arith.constant 1 : i32
    %78 = vector.broadcast %c1_i32_43 : i32 to vector<512x1xi32>
    %79 = arith.cmpi sge, %1, %78 : vector<512x1xi32>
    %80 = arith.andi %77, %79 : vector<512x1xi1>
    %cst_44 = arith.constant 0.000000e+00 : f32
    %81 = vector.broadcast %cst_44 : f32 to vector<512x3xf32>
    %82 = vector.shape_cast %80 : vector<512x1xi1> to vector<512x1xi1>
    %83 = vector.broadcast %82 : vector<512x1xi1> to vector<512x3xi1>
    %84 = arith.select %83, %75, %81 : vector<512x3xi1>, vector<512x3xf32>
    %85 = arith.truncf %84 : vector<512x3xf32> to vector<512x3xbf16>
    %c6 = arith.constant 6 : index
    %c0_45 = arith.constant 0 : index
    %c0_46 = arith.constant 0 : index
    %86 = vector.load %arg3[%c6, %c0_45, %c0_46] : memref<9x3x64xbf16, #tpu.memory_space<vmem>>, vector<1x3x64xbf16>
    %87 = vector.shape_cast %86 : vector<1x3x64xbf16> to vector<3x64xbf16>
    %cst_47 = arith.constant dense<0.000000e+00> : vector<512x64xf32>
    %88 = tpu.matmul %85, %87, %cst_47 {dimension_numbers = #tpu.dot_dimension_numbers<[1], [0], [0], [1], [0, 0, 1, 1], [], []>} : vector<512x3xbf16>, vector<3x64xbf16>, vector<512x64xf32> -> vector<512x64xf32>
    %89 = arith.addf %74, %88 : vector<512x64xf32>
    %c33 = arith.constant 33 : index
    %c0_48 = arith.constant 0 : index
    %90 = vector.load %arg0[%c33, %c0_48] : memref<546x3xf32, #tpu.memory_space<vmem>>, vector<512x3xf32>
    %c15_i32_49 = arith.constant 15 : i32
    %91 = vector.broadcast %c15_i32_49 : i32 to vector<512x1xi32>
    %92 = arith.cmpi slt, %0, %91 : vector<512x1xi32>
    %cst_50 = arith.constant 0.000000e+00 : f32
    %93 = vector.broadcast %cst_50 : f32 to vector<512x3xf32>
    %94 = vector.shape_cast %92 : vector<512x1xi1> to vector<512x1xi1>
    %95 = vector.broadcast %94 : vector<512x1xi1> to vector<512x3xi1>
    %96 = arith.select %95, %90, %93 : vector<512x3xi1>, vector<512x3xf32>
    %97 = arith.truncf %96 : vector<512x3xf32> to vector<512x3xbf16>
    %c7 = arith.constant 7 : index
    %c0_51 = arith.constant 0 : index
    %c0_52 = arith.constant 0 : index
    %98 = vector.load %arg3[%c7, %c0_51, %c0_52] : memref<9x3x64xbf16, #tpu.memory_space<vmem>>, vector<1x3x64xbf16>
    %99 = vector.shape_cast %98 : vector<1x3x64xbf16> to vector<3x64xbf16>
    %cst_53 = arith.constant dense<0.000000e+00> : vector<512x64xf32>
    %100 = tpu.matmul %97, %99, %cst_53 {dimension_numbers = #tpu.dot_dimension_numbers<[1], [0], [0], [1], [0, 0, 1, 1], [], []>} : vector<512x3xbf16>, vector<3x64xbf16>, vector<512x64xf32> -> vector<512x64xf32>
    %101 = arith.addf %89, %100 : vector<512x64xf32>
    %c34 = arith.constant 34 : index
    %c0_54 = arith.constant 0 : index
    %102 = vector.load %arg0[%c34, %c0_54] : memref<546x3xf32, #tpu.memory_space<vmem>>, vector<512x3xf32>
    %c15_i32_55 = arith.constant 15 : i32
    %103 = vector.broadcast %c15_i32_55 : i32 to vector<512x1xi32>
    %104 = arith.cmpi slt, %0, %103 : vector<512x1xi32>
    %c15_i32_56 = arith.constant 15 : i32
    %105 = vector.broadcast %c15_i32_56 : i32 to vector<512x1xi32>
    %106 = arith.cmpi slt, %1, %105 : vector<512x1xi32>
    %107 = arith.andi %104, %106 : vector<512x1xi1>
    %cst_57 = arith.constant 0.000000e+00 : f32
    %108 = vector.broadcast %cst_57 : f32 to vector<512x3xf32>
    %109 = vector.shape_cast %107 : vector<512x1xi1> to vector<512x1xi1>
    %110 = vector.broadcast %109 : vector<512x1xi1> to vector<512x3xi1>
    %111 = arith.select %110, %102, %108 : vector<512x3xi1>, vector<512x3xf32>
    %112 = arith.truncf %111 : vector<512x3xf32> to vector<512x3xbf16>
    %c8 = arith.constant 8 : index
    %c0_58 = arith.constant 0 : index
    %c0_59 = arith.constant 0 : index
    %113 = vector.load %arg3[%c8, %c0_58, %c0_59] : memref<9x3x64xbf16, #tpu.memory_space<vmem>>, vector<1x3x64xbf16>
    %114 = vector.shape_cast %113 : vector<1x3x64xbf16> to vector<3x64xbf16>
    %cst_60 = arith.constant dense<0.000000e+00> : vector<512x64xf32>
    %115 = tpu.matmul %112, %114, %cst_60 {dimension_numbers = #tpu.dot_dimension_numbers<[1], [0], [0], [1], [0, 0, 1, 1], [], []>} : vector<512x3xbf16>, vector<3x64xbf16>, vector<512x64xf32> -> vector<512x64xf32>
    %116 = arith.addf %101, %115 : vector<512x64xf32>
    %c0_61 = arith.constant 0 : index
    %c0_62 = arith.constant 0 : index
    %117 = vector.load %arg4[%c0_61, %c0_62] : memref<1x64xf32, #tpu.memory_space<vmem>>, vector<1x64xf32>
    %c0_63 = arith.constant 0 : index
    %c0_64 = arith.constant 0 : index
    %118 = vector.load %arg5[%c0_63, %c0_64] : memref<1x64xf32, #tpu.memory_space<vmem>>, vector<1x64xf32>
    %cst_65 = arith.constant dense<0.000000e+00> : vector<64xf32>
    %119 = vector.multi_reduction <add>, %116, %cst_65 [0] : vector<512x64xf32> to vector<64xf32>
    %120 = vector.shape_cast %119 : vector<64xf32> to vector<1x64xf32>
    %cst_66 = arith.constant 5.120000e+02 : f32
    %121 = vector.broadcast %cst_66 : f32 to vector<1x64xf32>
    %122 = arith.divf %120, %121 : vector<1x64xf32>
    %123 = vector.broadcast %122 : vector<1x64xf32> to vector<512x64xf32>
    %124 = arith.subf %116, %123 : vector<512x64xf32>
    %125 = arith.mulf %124, %124 : vector<512x64xf32>
    %cst_67 = arith.constant dense<0.000000e+00> : vector<64xf32>
    %126 = vector.multi_reduction <add>, %125, %cst_67 [0] : vector<512x64xf32> to vector<64xf32>
    %127 = vector.shape_cast %126 : vector<64xf32> to vector<1x64xf32>
    %cst_68 = arith.constant 5.120000e+02 : f32
    %128 = vector.broadcast %cst_68 : f32 to vector<1x64xf32>
    %129 = arith.divf %127, %128 : vector<1x64xf32>
    %130 = vector.broadcast %122 : vector<1x64xf32> to vector<512x64xf32>
    %131 = arith.subf %116, %130 : vector<512x64xf32>
    %cst_69 = arith.constant 9.99999974E-6 : f32
    %132 = vector.broadcast %cst_69 : f32 to vector<1x64xf32>
    %133 = arith.addf %129, %132 : vector<1x64xf32>
    %134 = math.rsqrt %133 : vector<1x64xf32>
    %135 = vector.broadcast %134 : vector<1x64xf32> to vector<512x64xf32>
    %136 = arith.mulf %131, %135 : vector<512x64xf32>
    %137 = vector.broadcast %117 : vector<1x64xf32> to vector<512x64xf32>
    %138 = arith.mulf %136, %137 : vector<512x64xf32>
    %139 = vector.broadcast %118 : vector<1x64xf32> to vector<512x64xf32>
    %140 = arith.addf %138, %139 : vector<512x64xf32>
    %cst_70 = arith.constant 0.000000e+00 : f32
    %141 = vector.broadcast %cst_70 : f32 to vector<512x64xf32>
    %142 = arith.maximumf %140, %141 : vector<512x64xf32>
    %c0_71 = arith.constant 0 : index
    %c0_72 = arith.constant 0 : index
    %143 = vector.load %arg6[%c0_71, %c0_72] : memref<512x64xf32, #tpu.memory_space<vmem>>, vector<512x64xf32>
    tpu.vector_store %arg6[%c0_71, %c0_72], %142 {strides = array<i32>} : memref<512x64xf32, #tpu.memory_space<vmem>>, vector<512x64xf32>,
    return
  }
}

</mosaic_0001>

<llo_original>
// kernel: tpu_custom_call.1
$region0: #{tpu_custom_call.1}
  #allocation0 [shape = 'u32[]', space=smem, size = 0x4, offset = 0x4, fixed_abs, tag = 'smem constant byte address 0x4 - core index']
  #allocation1 [shape = 'u32[144,128]{1,0:T(1,128)}', space=vmem, size = 0x12000, scoped, tag = 'internal scratch']
  %s0 = inlined_call_operand.vmem [shape: f32[546,3], index: 0, kind: input, shape index: {}]
  %s1 = inlined_call_operand.vmem [shape: s32[512,1], index: 1, kind: input, shape index: {}]
  %s2 = inlined_call_operand.vmem [shape: s32[512,1], index: 2, kind: input, shape index: {}]
  %s3 = inlined_call_operand.vmem [shape: bf16[9,3,64], index: 3, kind: input, shape index: {}]
  %s4 = inlined_call_operand.vmem [shape: f32[1,64], index: 4, kind: input, shape index: {}]
  %s5 = inlined_call_operand.vmem [shape: f32[1,64], index: 5, kind: input, shape index: {}]
  %s6 = inlined_call_operand.vmem [shape: f32[512,64], index: 6, kind: output, shape index: {}]
  %s7 = sld [smem:[#allocation0]]
  $region34: #{tpu_custom_call.1} parent=0
    _
  %s9 = ssub.s32 1, %s7
  %s10 = scalar_select 0, %s9, %s7
  // Predicated region
  $region2: #{tpu_custom_call.1} parent=0 // pred_check
    _
  $region3: #{tpu_custom_call.1} parent=0 // pred_check_branch
    %12 = sbr.rel (0) target = $region5
  $region4: #{tpu_custom_call.1} parent=0 // pred_region
    _
  $region5: #{tpu_custom_call.1} parent=0 // pred_fallthru
    _
  // Predicated region
  $region6: #{tpu_custom_call.1} parent=0 // pred_check
    _
  $region7: #{tpu_custom_call.1} parent=0 // pred_check_branch
    %14 = sbr.rel (0) target = $region9
  $region8: #{tpu_custom_call.1} parent=0 // pred_region
    _
  $region9: #{tpu_custom_call.1} parent=0 // pred_fallthru
    _
  // Predicated region
  $region10: #{tpu_custom_call.1} parent=0 // pred_check
    _
  $region11: #{tpu_custom_call.1} parent=0 // pred_check_branch
    %16 = sbr.rel (0) target = $region13
  $region12: #{tpu_custom_call.1} parent=0 // pred_region
    _
  $region13: #{tpu_custom_call.1} parent=0 // pred_fallthru
    _
  // Predicated region
  $region14: #{tpu_custom_call.1} parent=0 // pred_check
    _
  $region15: #{tpu_custom_call.1} parent=0 // pred_check_branch
    %18 = sbr.rel (0) target = $region17
  $region16: #{tpu_custom_call.1} parent=0 // pred_region
    _
  $region17: #{tpu_custom_call.1} parent=0 // pred_fallthru
    _
  // Predicated region
  $region18: #{tpu_custom_call.1} parent=0 // pred_check
    _
  $region19: #{tpu_custom_call.1} parent=0 // pred_check_branch
    %20 = sbr.rel (0) target = $region21
  $region20: #{tpu_custom_call.1} parent=0 // pred_region
    _
  $region21: #{tpu_custom_call.1} parent=0 // pred_fallthru
    _
  // Predicated region
  $region22: #{tpu_custom_call.1} parent=0 // pred_check
    _
  $region23: #{tpu_custom_call.1} parent=0 // pred_check_branch
    %22 = sbr.rel (0) target = $region25
  $region24: #{tpu_custom_call.1} parent=0 // pred_region
    _
  $region25: #{tpu_custom_call.1} parent=0 // pred_fallthru
    _
  %v24 = vld [vmem:[%s1] sm:$0xff]
  %v25 = vld [vmem:[%s1 + $0x8] sm:$0xff]
  %v26 = vld [vmem:[%s1 + $0x10] sm:$0xff]
  %v27 = vld [vmem:[%s1 + $0x18] sm:$0xff]
  %v28 = vld [vmem:[%s1 + $0x20] sm:$0xff]
  %v29 = vld [vmem:[%s1 + $0x28] sm:$0xff]
  %v30 = vld [vmem:[%s1 + $0x30] sm:$0xff]
  %v31 = vld [vmem:[%s1 + $0x38] sm:$0xff]
  %v32 = vld [vmem:[%s1 + $0x40] sm:$0xff]
  %v33 = vld [vmem:[%s1 + $0x48] sm:$0xff]
  %v34 = vld [vmem:[%s1 + $0x50] sm:$0xff]
  %v35 = vld [vmem:[%s1 + $0x58] sm:$0xff]
  %v36 = vld [vmem:[%s1 + $0x60] sm:$0xff]
  %v37 = vld [vmem:[%s1 + $0x68] sm:$0xff]
  %v38 = vld [vmem:[%s1 + $0x70] sm:$0xff]
  %v39 = vld [vmem:[%s1 + $0x78] sm:$0xff]
  %v40 = vld [vmem:[%s1 + $0x80] sm:$0xff]
  %v41 = vld [vmem:[%s1 + $0x88] sm:$0xff]
  %v42 = vld [vmem:[%s1 + $0x90] sm:$0xff]
  %v43 = vld [vmem:[%s1 + $0x98] sm:$0xff]
  %v44 = vld [vmem:[%s1 + $0xa0] sm:$0xff]
  %v45 = vld [vmem:[%s1 + $0xa8] sm:$0xff]
  %v46 = vld [vmem:[%s1 + $0xb0] sm:$0xff]
  %v47 = vld [vmem:[%s1 + $0xb8] sm:$0xff]
  %v48 = vld [vmem:[%s1 + $0xc0] sm:$0xff]
  %v49 = vld [vmem:[%s1 + $0xc8] sm:$0xff]
  %v50 = vld [vmem:[%s1 + $0xd0] sm:$0xff]
  %v51 = vld [vmem:[%s1 + $0xd8] sm:$0xff]
  %v52 = vld [vmem:[%s1 + $0xe0] sm:$0xff]
  %v53 = vld [vmem:[%s1 + $0xe8] sm:$0xff]
  %v54 = vld [vmem:[%s1 + $0xf0] sm:$0xff]
  %v55 = vld [vmem:[%s1 + $0xf8] sm:$0xff]
  %v56 = vld [vmem:[%s1 + $0x100] sm:$0xff]
  %v57 = vld [vmem:[%s1 + $0x108] sm:$0xff]
  %v58 = vld [vmem:[%s1 + $0x110] sm:$0xff]
  %v59 = vld [vmem:[%s1 + $0x118] sm:$0xff]
  %v60 = vld [vmem:[%s1 + $0x120] sm:$0xff]
  %v61 = vld [vmem:[%s1 + $0x128] sm:$0xff]
  %v62 = vld [vmem:[%s1 + $0x130] sm:$0xff]
  %v63 = vld [vmem:[%s1 + $0x138] sm:$0xff]
  %v64 = vld [vmem:[%s1 + $0x140] sm:$0xff]
  %v65 = vld [vmem:[%s1 + $0x148] sm:$0xff]
  %v66 = vld [vmem:[%s1 + $0x150] sm:$0xff]
  %v67 = vld [vmem:[%s1 + $0x158] sm:$0xff]
  %v68 = vld [vmem:[%s1 + $0x160] sm:$0xff]
  %v69 = vld [vmem:[%s1 + $0x168] sm:$0xff]
  %v70 = vld [vmem:[%s1 + $0x170] sm:$0xff]
  %v71 = vld [vmem:[%s1 + $0x178] sm:$0xff]
  %v72 = vld [vmem:[%s1 + $0x180] sm:$0xff]
  %v73 = vld [vmem:[%s1 + $0x188] sm:$0xff]
  %v74 = vld [vmem:[%s1 + $0x190] sm:$0xff]
  %v75 = vld [vmem:[%s1 + $0x198] sm:$0xff]
  %v76 = vld [vmem:[%s1 + $0x1a0] sm:$0xff]
  %v77 = vld [vmem:[%s1 + $0x1a8] sm:$0xff]
  %v78 = vld [vmem:[%s1 + $0x1b0] sm:$0xff]
  %v79 = vld [vmem:[%s1 + $0x1b8] sm:$0xff]
  %v80 = vld [vmem:[%s1 + $0x1c0] sm:$0xff]
  %v81 = vld [vmem:[%s1 + $0x1c8] sm:$0xff]
  %v82 = vld [vmem:[%s1 + $0x1d0] sm:$0xff]
  %v83 = vld [vmem:[%s1 + $0x1d8] sm:$0xff]
  %v84 = vld [vmem:[%s1 + $0x1e0] sm:$0xff]
  %v85 = vld [vmem:[%s1 + $0x1e8] sm:$0xff]
  %v86 = vld [vmem:[%s1 + $0x1f0] sm:$0xff]
  %v87 = vld [vmem:[%s1 + $0x1f8] sm:$0xff]
  %v88 = vld [vmem:[%s2] sm:$0xff]
  %v89 = vld [vmem:[%s2 + $0x8] sm:$0xff]
  %v90 = vld [vmem:[%s2 + $0x10] sm:$0xff]
  %v91 = vld [vmem:[%s2 + $0x18] sm:$0xff]
  %v92 = vld [vmem:[%s2 + $0x20] sm:$0xff]
  %v93 = vld [vmem:[%s2 + $0x28] sm:$0xff]
  %v94 = vld [vmem:[%s2 + $0x30] sm:$0xff]
  %v95 = vld [vmem:[%s2 + $0x38] sm:$0xff]
  %v96 = vld [vmem:[%s2 + $0x40] sm:$0xff]
  %v97 = vld [vmem:[%s2 + $0x48] sm:$0xff]
  %v98 = vld [vmem:[%s2 + $0x50] sm:$0xff]
  %v99 = vld [vmem:[%s2 + $0x58] sm:$0xff]
  %v100 = vld [vmem:[%s2 + $0x60] sm:$0xff]
  %v101 = vld [vmem:[%s2 + $0x68] sm:$0xff]
  %v102 = vld [vmem:[%s2 + $0x70] sm:$0xff]
  %v103 = vld [vmem:[%s2 + $0x78] sm:$0xff]
  %v104 = vld [vmem:[%s2 + $0x80] sm:$0xff]
  %v105 = vld [vmem:[%s2 + $0x88] sm:$0xff]
  %v106 = vld [vmem:[%s2 + $0x90] sm:$0xff]
  %v107 = vld [vmem:[%s2 + $0x98] sm:$0xff]
  %v108 = vld [vmem:[%s2 + $0xa0] sm:$0xff]
  %v109 = vld [vmem:[%s2 + $0xa8] sm:$0xff]
  %v110 = vld [vmem:[%s2 + $0xb0] sm:$0xff]
  %v111 = vld [vmem:[%s2 + $0xb8] sm:$0xff]
  %v112 = vld [vmem:[%s2 + $0xc0] sm:$0xff]
  %v113 = vld [vmem:[%s2 + $0xc8] sm:$0xff]
  %v114 = vld [vmem:[%s2 + $0xd0] sm:$0xff]
  %v115 = vld [vmem:[%s2 + $0xd8] sm:$0xff]
  %v116 = vld [vmem:[%s2 + $0xe0] sm:$0xff]
  %v117 = vld [vmem:[%s2 + $0xe8] sm:$0xff]
  %v118 = vld [vmem:[%s2 + $0xf0] sm:$0xff]
  %v119 = vld [vmem:[%s2 + $0xf8] sm:$0xff]
  %v120 = vld [vmem:[%s2 + $0x100] sm:$0xff]
  %v121 = vld [vmem:[%s2 + $0x108] sm:$0xff]
  %v122 = vld [vmem:[%s2 + $0x110] sm:$0xff]
  %v123 = vld [vmem:[%s2 + $0x118] sm:$0xff]
  %v124 = vld [vmem:[%s2 + $0x120] sm:$0xff]
  %v125 = vld [vmem:[%s2 + $0x128] sm:$0xff]
  %v126 = vld [vmem:[%s2 + $0x130] sm:$0xff]
  %v127 = vld [vmem:[%s2 + $0x138] sm:$0xff]
  %v128 = vld [vmem:[%s2 + $0x140] sm:$0xff]
  %v129 = vld [vmem:[%s2 + $0x148] sm:$0xff]
  %v130 = vld [vmem:[%s2 + $0x150] sm:$0xff]
  %v131 = vld [vmem:[%s2 + $0x158] sm:$0xff]
  %v132 = vld [vmem:[%s2 + $0x160] sm:$0xff]
  %v133 = vld [vmem:[%s2 + $0x168] sm:$0xff]
  %v134 = vld [vmem:[%s2 + $0x170] sm:$0xff]
  %v135 = vld [vmem:[%s2 + $0x178] sm:$0xff]
  %v136 = vld [vmem:[%s2 + $0x180] sm:$0xff]
  %v137 = vld [vmem:[%s2 + $0x188] sm:$0xff]
  %v138 = vld [vmem:[%s2 + $0x190] sm:$0xff]
  %v139 = vld [vmem:[%s2 + $0x198] sm:$0xff]
  %v140 = vld [vmem:[%s2 + $0x1a0] sm:$0xff]
  %v141 = vld [vmem:[%s2 + $0x1a8] sm:$0xff]
  %v142 = vld [vmem:[%s2 + $0x1b0] sm:$0xff]
  %v143 = vld [vmem:[%s2 + $0x1b8] sm:$0xff]
  %v144 = vld [vmem:[%s2 + $0x1c0] sm:$0xff]
  %v145 = vld [vmem:[%s2 + $0x1c8] sm:$0xff]
  %v146 = vld [vmem:[%s2 + $0x1d0] sm:$0xff]
  %v147 = vld [vmem:[%s2 + $0x1d8] sm:$0xff]
  %v148 = vld [vmem:[%s2 + $0x1e0] sm:$0xff]
  %v149 = vld [vmem:[%s2 + $0x1e8] sm:$0xff]
  %v150 = vld [vmem:[%s2 + $0x1f0] sm:$0xff]
  %v151 = vld [vmem:[%s2 + $0x1f8] sm:$0xff]
  %v152 = vld [vmem:[%s0] sm:$0xff]
  %v153 = vld [vmem:[%s0 + $0x8] sm:$0xff]
  %v154 = vld [vmem:[%s0 + $0x10] sm:$0xff]
  %v155 = vld [vmem:[%s0 + $0x18] sm:$0xff]
  %v156 = vld [vmem:[%s0 + $0x20] sm:$0xff]
  %v157 = vld [vmem:[%s0 + $0x28] sm:$0xff]
  %v158 = vld [vmem:[%s0 + $0x30] sm:$0xff]
  %v159 = vld [vmem:[%s0 + $0x38] sm:$0xff]
  %v160 = vld [vmem:[%s0 + $0x40] sm:$0xff]
  %v161 = vld [vmem:[%s0 + $0x48] sm:$0xff]
  %v162 = vld [vmem:[%s0 + $0x50] sm:$0xff]
  %v163 = vld [vmem:[%s0 + $0x58] sm:$0xff]
  %v164 = vld [vmem:[%s0 + $0x60] sm:$0xff]
  %v165 = vld [vmem:[%s0 + $0x68] sm:$0xff]
  %v166 = vld [vmem:[%s0 + $0x70] sm:$0xff]
  %v167 = vld [vmem:[%s0 + $0x78] sm:$0xff]
  %v168 = vld [vmem:[%s0 + $0x80] sm:$0xff]
  %v169 = vld [vmem:[%s0 + $0x88] sm:$0xff]
  %v170 = vld [vmem:[%s0 + $0x90] sm:$0xff]
  %v171 = vld [vmem:[%s0 + $0x98] sm:$0xff]
  %v172 = vld [vmem:[%s0 + $0xa0] sm:$0xff]
  %v173 = vld [vmem:[%s0 + $0xa8] sm:$0xff]
  %v174 = vld [vmem:[%s0 + $0xb0] sm:$0xff]
  %v175 = vld [vmem:[%s0 + $0xb8] sm:$0xff]
  %v176 = vld [vmem:[%s0 + $0xc0] sm:$0xff]
  %v177 = vld [vmem:[%s0 + $0xc8] sm:$0xff]
  %v178 = vld [vmem:[%s0 + $0xd0] sm:$0xff]
  %v179 = vld [vmem:[%s0 + $0xd8] sm:$0xff]
  %v180 = vld [vmem:[%s0 + $0xe0] sm:$0xff]
  %v181 = vld [vmem:[%s0 + $0xe8] sm:$0xff]
  %v182 = vld [vmem:[%s0 + $0xf0] sm:$0xff]
  %v183 = vld [vmem:[%s0 + $0xf8] sm:$0xff]
  %v184 = vld [vmem:[%s0 + $0x100] sm:$0xff]
  %v185 = vld [vmem:[%s0 + $0x108] sm:$0xff]
  %v186 = vld [vmem:[%s0 + $0x110] sm:$0xff]
  %v187 = vld [vmem:[%s0 + $0x118] sm:$0xff]
  %v188 = vld [vmem:[%s0 + $0x120] sm:$0xff]
  %v189 = vld [vmem:[%s0 + $0x128] sm:$0xff]
  %v190 = vld [vmem:[%s0 + $0x130] sm:$0xff]
  %v191 = vld [vmem:[%s0 + $0x138] sm:$0xff]
  %v192 = vld [vmem:[%s0 + $0x140] sm:$0xff]
  %v193 = vld [vmem:[%s0 + $0x148] sm:$0xff]
  %v194 = vld [vmem:[%s0 + $0x150] sm:$0xff]
  %v195 = vld [vmem:[%s0 + $0x158] sm:$0xff]
  %v196 = vld [vmem:[%s0 + $0x160] sm:$0xff]
  %v197 = vld [vmem:[%s0 + $0x168] sm:$0xff]
  %v198 = vld [vmem:[%s0 + $0x170] sm:$0xff]
  %v199 = vld [vmem:[%s0 + $0x178] sm:$0xff]
  %v200 = vld [vmem:[%s0 + $0x180] sm:$0xff]
  %v201 = vld [vmem:[%s0 + $0x188] sm:$0xff]
  %v202 = vld [vmem:[%s0 + $0x190] sm:$0xff]
  %v203 = vld [vmem:[%s0 + $0x198] sm:$0xff]
  %v204 = vld [vmem:[%s0 + $0x1a0] sm:$0xff]
  %v205 = vld [vmem:[%s0 + $0x1a8] sm:$0xff]
  %v206 = vld [vmem:[%s0 + $0x1b0] sm:$0xff]
  %v207 = vld [vmem:[%s0 + $0x1b8] sm:$0xff]
  %v208 = vld [vmem:[%s0 + $0x1c0] sm:$0xff]
  %v209 = vld [vmem:[%s0 + $0x1c8] sm:$0xff]
  %v210 = vld [vmem:[%s0 + $0x1d0] sm:$0xff]
  %v211 = vld [vmem:[%s0 + $0x1d8] sm:$0xff]
  %v212 = vld [vmem:[%s0 + $0x1e0] sm:$0xff]
  %v213 = vld [vmem:[%s0 + $0x1e8] sm:$0xff]
  %v214 = vld [vmem:[%s0 + $0x1f0] sm:$0xff]
  %v215 = vld [vmem:[%s0 + $0x1f8] sm:$0xff]
  %vm216 = vcmp.ge.s32.totalorder %v24, 1
  %vm217 = vcmp.ge.s32.totalorder %v25, 1
  %vm218 = vcmp.ge.s32.totalorder %v26, 1
  %vm219 = vcmp.ge.s32.totalorder %v27, 1
  %vm220 = vcmp.ge.s32.totalorder %v28, 1
  %vm221 = vcmp.ge.s32.totalorder %v29, 1
  %vm222 = vcmp.ge.s32.totalorder %v30, 1
  %vm223 = vcmp.ge.s32.totalorder %v31, 1
  %vm224 = vcmp.ge.s32.totalorder %v32, 1
  %vm225 = vcmp.ge.s32.totalorder %v33, 1
  %vm226 = vcmp.ge.s32.totalorder %v34, 1
  %vm227 = vcmp.ge.s32.totalorder %v35, 1
  %vm228 = vcmp.ge.s32.totalorder %v36, 1
  %vm229 = vcmp.ge.s32.totalorder %v37, 1
  %vm230 = vcmp.ge.s32.totalorder %v38, 1
  %vm231 = vcmp.ge.s32.totalorder %v39, 1
  %vm232 = vcmp.ge.s32.totalorder %v40, 1
  %vm233 = vcmp.ge.s32.totalorder %v41, 1
  %vm234 = vcmp.ge.s32.totalorder %v42, 1
  %vm235 = vcmp.ge.s32.totalorder %v43, 1
  %vm236 = vcmp.ge.s32.totalorder %v44, 1
  %vm237 = vcmp.ge.s32.totalorder %v45, 1
  %vm238 = vcmp.ge.s32.totalorder %v46, 1
  %vm239 = vcmp.ge.s32.totalorder %v47, 1
  %vm240 = vcmp.ge.s32.totalorder %v48, 1
  %vm241 = vcmp.ge.s32.totalorder %v49, 1
  %vm242 = vcmp.ge.s32.totalorder %v50, 1
  %vm243 = vcmp.ge.s32.totalorder %v51, 1
  %vm244 = vcmp.ge.s32.totalorder %v52, 1
  %vm245 = vcmp.ge.s32.totalorder %v53, 1
  %vm246 = vcmp.ge.s32.totalorder %v54, 1
  %vm247 = vcmp.ge.s32.totalorder %v55, 1
  %vm248 = vcmp.ge.s32.totalorder %v56, 1
  %vm249 = vcmp.ge.s32.totalorder %v57, 1
  %vm250 = vcmp.ge.s32.totalorder %v58, 1
  %vm251 = vcmp.ge.s32.totalorder %v59, 1
  %vm252 = vcmp.ge.s32.totalorder %v60, 1
  %vm253 = vcmp.ge.s32.totalorder %v61, 1
  %vm254 = vcmp.ge.s32.totalorder %v62, 1
  %vm255 = vcmp.ge.s32.totalorder %v63, 1
  %vm256 = vcmp.ge.s32.totalorder %v64, 1
  %vm257 = vcmp.ge.s32.totalorder %v65, 1
  %vm258 = vcmp.ge.s32.totalorder %v66, 1
  %vm259 = vcmp.ge.s32.totalorder %v67, 1
  %vm260 = vcmp.ge.s32.totalorder %v68, 1
  %vm261 = vcmp.ge.s32.totalorder %v69, 1
  %vm262 = vcmp.ge.s32.totalorder %v70, 1
  %vm263 = vcmp.ge.s32.totalorder %v71, 1
  %vm264 = vcmp.ge.s32.totalorder %v72, 1
  %vm265 = vcmp.ge.s32.totalorder %v73, 1
  %vm266 = vcmp.ge.s32.totalorder %v74, 1
  %vm267 = vcmp.ge.s32.totalorder %v75, 1
  %vm268 = vcmp.ge.s32.totalorder %v76, 1
  %vm269 = vcmp.ge.s32.totalorder %v77, 1
  %vm270 = vcmp.ge.s32.totalorder %v78, 1
  %vm271 = vcmp.ge.s32.totalorder %v79, 1
  %vm272 = vcmp.ge.s32.totalorder %v80, 1
  %vm273 = vcmp.ge.s32.totalorder %v81, 1
  %vm274 = vcmp.ge.s32.totalorder %v82, 1
  %vm275 = vcmp.ge.s32.totalorder %v83, 1
  %vm276 = vcmp.ge.s32.totalorder %v84, 1
  %vm277 = vcmp.ge.s32.totalorder %v85, 1
  %vm278 = vcmp.ge.s32.totalorder %v86, 1
  %vm279 = vcmp.ge.s32.totalorder %v87, 1
  %vm280 = vcmp.ge.s32.totalorder %v88, 1
  %vm281 = vcmp.ge.s32.totalorder %v89, 1
  %vm282 = vcmp.ge.s32.totalorder %v90, 1
  %vm283 = vcmp.ge.s32.totalorder %v91, 1
  %vm284 = vcmp.ge.s32.totalorder %v92, 1
  %vm285 = vcmp.ge.s32.totalorder %v93, 1
  %vm286 = vcmp.ge.s32.totalorder %v94, 1
  %vm287 = vcmp.ge.s32.totalorder %v95, 1
  %vm288 = vcmp.ge.s32.totalorder %v96, 1
  %vm289 = vcmp.ge.s32.totalorder %v97, 1
  %vm290 = vcmp.ge.s32.totalorder %v98, 1
  %vm291 = vcmp.ge.s32.totalorder %v99, 1
  %vm292 = vcmp.ge.s32.totalorder %v100, 1
  %vm293 = vcmp.ge.s32.totalorder %v101, 1
  %vm294 = vcmp.ge.s32.totalorder %v102, 1
  %vm295 = vcmp.ge.s32.totalorder %v103, 1
  %vm296 = vcmp.ge.s32.totalorder %v104, 1
  %vm297 = vcmp.ge.s32.totalorder %v105, 1
  %vm298 = vcmp.ge.s32.totalorder %v106, 1
  %vm299 = vcmp.ge.s32.totalorder %v107, 1
  %vm300 = vcmp.ge.s32.totalorder %v108, 1
  %vm301 = vcmp.ge.s32.totalorder %v109, 1
  %vm302 = vcmp.ge.s32.totalorder %v110, 1
  %vm303 = vcmp.ge.s32.totalorder %v111, 1
  %vm304 = vcmp.ge.s32.totalorder %v112, 1
  %vm305 = vcmp.ge.s32.totalorder %v113, 1
  %vm306 = vcmp.ge.s32.totalorder %v114, 1
  %vm307 = vcmp.ge.s32.totalorder %v115, 1
  %vm308 = vcmp.ge.s32.totalorder %v116, 1
  %vm309 = vcmp.ge.s32.totalorder %v117, 1
  %vm310 = vcmp.ge.s32.totalorder %v118, 1
  %vm311 = vcmp.ge.s32.totalorder %v119, 1
  %vm312 = vcmp.ge.s32.totalorder %v120, 1
  %vm313 = vcmp.ge.s32.totalorder %v121, 1
  %vm314 = vcmp.ge.s32.totalorder %v122, 1
  %vm315 = vcmp.ge.s32.totalorder %v123, 1
  %vm316 = vcmp.ge.s32.totalorder %v124, 1
  %vm317 = vcmp.ge.s32.totalorder %v125, 1
  %vm318 = vcmp.ge.s32.totalorder %v126, 1
  %vm319 = vcmp.ge.s32.totalorder %v127, 1
  %vm320 = vcmp.ge.s32.totalorder %v128, 1
  %vm321 = vcmp.ge.s32.totalorder %v129, 1
  %vm322 = vcmp.ge.s32.totalorder %v130, 1
  %vm323 = vcmp.ge.s32.totalorder %v131, 1
  %vm324 = vcmp.ge.s32.totalorder %v132, 1
  %vm325 = vcmp.ge.s32.totalorder %v133, 1
  %vm326 = vcmp.ge.s32.totalorder %v134, 1
  %vm327 = vcmp.ge.s32.totalorder %v135, 1
  %vm328 = vcmp.ge.s32.totalorder %v136, 1
  %vm329 = vcmp.ge.s32.totalorder %v137, 1
  %vm330 = vcmp.ge.s32.totalorder %v138, 1
  %vm331 = vcmp.ge.s32.totalorder %v139, 1
  %vm332 = vcmp.ge.s32.totalorder %v140, 1
  %vm333 = vcmp.ge.s32.totalorder %v141, 1
  %vm334 = vcmp.ge.s32.totalorder %v142, 1
  %vm335 = vcmp.ge.s32.totalorder %v143, 1
  %vm336 = vcmp.ge.s32.totalorder %v144, 1
  %vm337 = vcmp.ge.s32.totalorder %v145, 1
  %vm338 = vcmp.ge.s32.totalorder %v146, 1
  %vm339 = vcmp.ge.s32.totalorder %v147, 1
  %vm340 = vcmp.ge.s32.totalorder %v148, 1
  %vm341 = vcmp.ge.s32.totalorder %v149, 1
  %vm342 = vcmp.ge.s32.totalorder %v150, 1
  %vm343 = vcmp.ge.s32.totalorder %v151, 1
  %vm344 = vmand %vm216, %vm280
  %vm345 = vmand %vm217, %vm281
  %vm346 = vmand %vm218, %vm282
  %vm347 = vmand %vm219, %vm283
  %vm348 = vmand %vm220, %vm284
  %vm349 = vmand %vm221, %vm285
  %vm350 = vmand %vm222, %vm286
  %vm351 = vmand %vm223, %vm287
  %vm352 = vmand %vm224, %vm288
  %vm353 = vmand %vm225, %vm289
  %vm354 = vmand %vm226, %vm290
  %vm355 = vmand %vm227, %vm291
  %vm356 = vmand %vm228, %vm292
  %vm357 = vmand %vm229, %vm293
  %vm358 = vmand %vm230, %vm294
  %vm359 = vmand %vm231, %vm295
  %vm360 = vmand %vm232, %vm296
  %vm361 = vmand %vm233, %vm297
  %vm362 = vmand %vm234, %vm298
  %vm363 = vmand %vm235, %vm299
  %vm364 = vmand %vm236, %vm300
  %vm365 = vmand %vm237, %vm301
  %vm366 = vmand %vm238, %vm302
  %vm367 = vmand %vm239, %vm303
  %vm368 = vmand %vm240, %vm304
  %vm369 = vmand %vm241, %vm305
  %vm370 = vmand %vm242, %vm306
  %vm371 = vmand %vm243, %vm307
  %vm372 = vmand %vm244, %vm308
  %vm373 = vmand %vm245, %vm309
  %vm374 = vmand %vm246, %vm310
  %vm375 = vmand %vm247, %vm311
  %vm376 = vmand %vm248, %vm312
  %vm377 = vmand %vm249, %vm313
  %vm378 = vmand %vm250, %vm314
  %vm379 = vmand %vm251, %vm315
  %vm380 = vmand %vm252, %vm316
  %vm381 = vmand %vm253, %vm317
  %vm382 = vmand %vm254, %vm318
  %vm383 = vmand %vm255, %vm319
  %vm384 = vmand %vm256, %vm320
  %vm385 = vmand %vm257, %vm321
  %vm386 = vmand %vm258, %vm322
  %vm387 = vmand %vm259, %vm323
  %vm388 = vmand %vm260, %vm324
  %vm389 = vmand %vm261, %vm325
  %vm390 = vmand %vm262, %vm326
  %vm391 = vmand %vm263, %vm327
  %vm392 = vmand %vm264, %vm328
  %vm393 = vmand %vm265, %vm329
  %vm394 = vmand %vm266, %vm330
  %vm395 = vmand %vm267, %vm331
  %vm396 = vmand %vm268, %vm332
  %vm397 = vmand %vm269, %vm333
  %vm398 = vmand %vm270, %vm334
  %vm399 = vmand %vm271, %vm335
  %vm400 = vmand %vm272, %vm336
  %vm401 = vmand %vm273, %vm337
  %vm402 = vmand %vm274, %vm338
  %vm403 = vmand %vm275, %vm339
  %vm404 = vmand %vm276, %vm340
  %vm405 = vmand %vm277, %vm341
  %vm406 = vmand %vm278, %vm342
  %vm407 = vmand %vm279, %vm343
  %v408 = vsel %vm344, 1, 0
  %v409 = vsel %vm345, 1, 0
  %v410 = vsel %vm346, 1, 0
  %v411 = vsel %vm347, 1, 0
  %v412 = vsel %vm348, 1, 0
  %v413 = vsel %vm349, 1, 0
  %v414 = vsel %vm350, 1, 0
  %v415 = vsel %vm351, 1, 0
  %v416 = vsel %vm352, 1, 0
  %v417 = vsel %vm353, 1, 0
  %v418 = vsel %vm354, 1, 0
  %v419 = vsel %vm355, 1, 0
  %v420 = vsel %vm356, 1, 0
  %v421 = vsel %vm357, 1, 0
  %v422 = vsel %vm358, 1, 0
  %v423 = vsel %vm359, 1, 0
  %v424 = vsel %vm360, 1, 0
  %v425 = vsel %vm361, 1, 0
  %v426 = vsel %vm362, 1, 0
  %v427 = vsel %vm363, 1, 0
  %v428 = vsel %vm364, 1, 0
  %v429 = vsel %vm365, 1, 0
  %v430 = vsel %vm366, 1, 0
  %v431 = vsel %vm367, 1, 0
  %v432 = vsel %vm368, 1, 0
  %v433 = vsel %vm369, 1, 0
  %v434 = vsel %vm370, 1, 0
  %v435 = vsel %vm371, 1, 0
  %v436 = vsel %vm372, 1, 0
  %v437 = vsel %vm373, 1, 0
  %v438 = vsel %vm374, 1, 0
  %v439 = vsel %vm375, 1, 0
  %v440 = vsel %vm376, 1, 0
  %v441 = vsel %vm377, 1, 0
  %v442 = vsel %vm378, 1, 0
  %v443 = vsel %vm379, 1, 0
  %v444 = vsel %vm380, 1, 0
  %v445 = vsel %vm381, 1, 0
  %v446 = vsel %vm382, 1, 0
  %v447 = vsel %vm383, 1, 0
  %v448 = vsel %vm384, 1, 0
  %v449 = vsel %vm385, 1, 0
  %v450 = vsel %vm386, 1, 0
  %v451 = vsel %vm387, 1, 0
  %v452 = vsel %vm388, 1, 0
  %v453 = vsel %vm389, 1, 0
  %v454 = vsel %vm390, 1, 0
  %v455 = vsel %vm391, 1, 0
  %v456 = vsel %vm392, 1, 0
  %v457 = vsel %vm393, 1, 0
  %v458 = vsel %vm394, 1, 0
  %v459 = vsel %vm395, 1, 0
  %v460 = vsel %vm396, 1, 0
  %v461 = vsel %vm397, 1, 0
  %v462 = vsel %vm398, 1, 0
  %v463 = vsel %vm399, 1, 0
  %v464 = vsel %vm400, 1, 0
  %v465 = vsel %vm401, 1, 0
  %v466 = vsel %vm402, 1, 0
  %v467 = vsel %vm403, 1, 0
  %v468 = vsel %vm404, 1, 0
  %v469 = vsel %vm405, 1, 0
  %v470 = vsel %vm406, 1, 0
  %v471 = vsel %vm407, 1, 0
  %472 = vset.pattern.permute.xlu0 0
  %473 = vperm.xlu0 %472, %v408
  %v474 = vpop.permute.xlu0 %473
  %475 = vset.pattern.permute.xlu0 0
  %476 = vperm.xlu0 %475, %v409
  %v477 = vpop.permute.xlu0 %476
  %478 = vset.pattern.permute.xlu0 0
  %479 = vperm.xlu0 %478, %v410
  %v480 = vpop.permute.xlu0 %479
  %481 = vset.pattern.permute.xlu0 0
  %482 = vperm.xlu0 %481, %v411
  %v483 = vpop.permute.xlu0 %482
  %484 = vset.pattern.permute.xlu0 0
  %485 = vperm.xlu0 %484, %v412
  %v486 = vpop.permute.xlu0 %485
  %487 = vset.pattern.permute.xlu0 0
  %488 = vperm.xlu0 %487, %v413
  %v489 = vpop.permute.xlu0 %488
  %490 = vset.pattern.permute.xlu0 0
  %491 = vperm.xlu0 %490, %v414
  %v492 = vpop.permute.xlu0 %491
  %493 = vset.pattern.permute.xlu0 0
  %494 = vperm.xlu0 %493, %v415
  %v495 = vpop.permute.xlu0 %494
  %496 = vset.pattern.permute.xlu0 0
  %497 = vperm.xlu0 %496, %v416
  %v498 = vpop.permute.xlu0 %497
  %499 = vset.pattern.permute.xlu0 0
  %500 = vperm.xlu0 %499, %v417
  %v501 = vpop.permute.xlu0 %500
  %502 = vset.pattern.permute.xlu0 0
  %503 = vperm.xlu0 %502, %v418
  %v504 = vpop.permute.xlu0 %503
  %505 = vset.pattern.permute.xlu0 0
  %506 = vperm.xlu0 %505, %v419
  %v507 = vpop.permute.xlu0 %506
  %508 = vset.pattern.permute.xlu0 0
  %509 = vperm.xlu0 %508, %v420
  %v510 = vpop.permute.xlu0 %509
  %511 = vset.pattern.permute.xlu0 0
  %512 = vperm.xlu0 %511, %v421
  %v513 = vpop.permute.xlu0 %512
  %514 = vset.pattern.permute.xlu0 0
  %515 = vperm.xlu0 %514, %v422
  %v516 = vpop.permute.xlu0 %515
  %517 = vset.pattern.permute.xlu0 0
  %518 = vperm.xlu0 %517, %v423
  %v519 = vpop.permute.xlu0 %518
  %520 = vset.pattern.permute.xlu0 0
  %521 = vperm.xlu0 %520, %v424
  %v522 = vpop.permute.xlu0 %521
  %523 = vset.pattern.permute.xlu0 0
  %524 = vperm.xlu0 %523, %v425
  %v525 = vpop.permute.xlu0 %524
  %526 = vset.pattern.permute.xlu0 0
  %527 = vperm.xlu0 %526, %v426
  %v528 = vpop.permute.xlu0 %527
  %529 = vset.pattern.permute.xlu0 0
  %530 = vperm.xlu0 %529, %v427
  %v531 = vpop.permute.xlu0 %530
  %532 = vset.pattern.permute.xlu0 0
  %533 = vperm.xlu0 %532, %v428
  %v534 = vpop.permute.xlu0 %533
  %535 = vset.pattern.permute.xlu0 0
  %536 = vperm.xlu0 %535, %v429
  %v537 = vpop.permute.xlu0 %536
  %538 = vset.pattern.permute.xlu0 0
  %539 = vperm.xlu0 %538, %v430
  %v540 = vpop.permute.xlu0 %539
  %541 = vset.pattern.permute.xlu0 0
  %542 = vperm.xlu0 %541, %v431
  %v543 = vpop.permute.xlu0 %542
  %544 = vset.pattern.permute.xlu0 0
  %545 = vperm.xlu0 %544, %v432
  %v546 = vpop.permute.xlu0 %545
  %547 = vset.pattern.permute.xlu0 0
  %548 = vperm.xlu0 %547, %v433
  %v549 = vpop.permute.xlu0 %548
  %550 = vset.pattern.permute.xlu0 0
  %551 = vperm.xlu0 %550, %v434
  %v552 = vpop.permute.xlu0 %551
  %553 = vset.pattern.permute.xlu0 0
  %554 = vperm.xlu0 %553, %v435
  %v555 = vpop.permute.xlu0 %554
  %556 = vset.pattern.permute.xlu0 0
  %557 = vperm.xlu0 %556, %v436
  %v558 = vpop.permute.xlu0 %557
  %559 = vset.pattern.permute.xlu0 0
  %560 = vperm.xlu0 %559, %v437
  %v561 = vpop.permute.xlu0 %560
  %562 = vset.pattern.permute.xlu0 0
  %563 = vperm.xlu0 %562, %v438
  %v564 = vpop.permute.xlu0 %563
  %565 = vset.pattern.permute.xlu0 0
  %566 = vperm.xlu0 %565, %v439
  %v567 = vpop.permute.xlu0 %566
  %568 = vset.pattern.permute.xlu0 0
  %569 = vperm.xlu0 %568, %v440
  %v570 = vpop.permute.xlu0 %569
  %571 = vset.pattern.permute.xlu0 0
  %572 = vperm.xlu0 %571, %v441
  %v573 = vpop.permute.xlu0 %572
  %574 = vset.pattern.permute.xlu0 0
  %575 = vperm.xlu0 %574, %v442
  %v576 = vpop.permute.xlu0 %575
  %577 = vset.pattern.permute.xlu0 0
  %578 = vperm.xlu0 %577, %v443
  %v579 = vpop.permute.xlu0 %578
  %580 = vset.pattern.permute.xlu0 0
  %581 = vperm.xlu0 %580, %v444
  %v582 = vpop.permute.xlu0 %581
  %583 = vset.pattern.permute.xlu0 0
  %584 = vperm.xlu0 %583, %v445
  %v585 = vpop.permute.xlu0 %584
  %586 = vset.pattern.permute.xlu0 0
  %587 = vperm.xlu0 %586, %v446
  %v588 = vpop.permute.xlu0 %587
  %589 = vset.pattern.permute.xlu0 0
  %590 = vperm.xlu0 %589, %v447
  %v591 = vpop.permute.xlu0 %590
  %592 = vset.pattern.permute.xlu0 0
  %593 = vperm.xlu0 %592, %v448
  %v594 = vpop.permute.xlu0 %593
  %595 = vset.pattern.permute.xlu0 0
  %596 = vperm.xlu0 %595, %v449
  %v597 = vpop.permute.xlu0 %596
  %598 = vset.pattern.permute.xlu0 0
  %599 = vperm.xlu0 %598, %v450
  %v600 = vpop.permute.xlu0 %599
  %601 = vset.pattern.permute.xlu0 0
  %602 = vperm.xlu0 %601, %v451
  %v603 = vpop.permute.xlu0 %602
  %604 = vset.pattern.permute.xlu0 0
  %605 = vperm.xlu0 %604, %v452
  %v606 = vpop.permute.xlu0 %605
  %607 = vset.pattern.permute.xlu0 0
  %608 = vperm.xlu0 %607, %v453
  %v609 = vpop.permute.xlu0 %608
  %610 = vset.pattern.permute.xlu0 0
  %611 = vperm.xlu0 %610, %v454
  %v612 = vpop.permute.xlu0 %611
  %613 = vset.pattern.permute.xlu0 0
  %614 = vperm.xlu0 %613, %v455
  %v615 = vpop.permute.xlu0 %614
  %616 = vset.pattern.permute.xlu0 0
  %617 = vperm.xlu0 %616, %v456
  %v618 = vpop.permute.xlu0 %617
  %619 = vset.pattern.permute.xlu0 0
  %620 = vperm.xlu0 %619, %v457
  %v621 = vpop.permute.xlu0 %620
  %622 = vset.pattern.permute.xlu0 0
  %623 = vperm.xlu0 %622, %v458
  %v624 = vpop.permute.xlu0 %623
  %625 = vset.pattern.permute.xlu0 0
  %626 = vperm.xlu0 %625, %v459
  %v627 = vpop.permute.xlu0 %626
  %628 = vset.pattern.permute.xlu0 0
  %629 = vperm.xlu0 %628, %v460
  %v630 = vpop.permute.xlu0 %629
  %631 = vset.pattern.permute.xlu0 0
  %632 = vperm.xlu0 %631, %v461
  %v633 = vpop.permute.xlu0 %632
  %634 = vset.pattern.permute.xlu0 0
  %635 = vperm.xlu0 %634, %v462
  %v636 = vpop.permute.xlu0 %635
  %637 = vset.pattern.permute.xlu0 0
  %638 = vperm.xlu0 %637, %v463
  %v639 = vpop.permute.xlu0 %638
  %640 = vset.pattern.permute.xlu0 0
  %641 = vperm.xlu0 %640, %v464
  %v642 = vpop.permute.xlu0 %641
  %643 = vset.pattern.permute.xlu0 0
  %644 = vperm.xlu0 %643, %v465
  %v645 = vpop.permute.xlu0 %644
  %646 = vset.pattern.permute.xlu0 0
  %647 = vperm.xlu0 %646, %v466
  %v648 = vpop.permute.xlu0 %647
  %649 = vset.pattern.permute.xlu0 0
  %650 = vperm.xlu0 %649, %v467
  %v651 = vpop.permute.xlu0 %650
  %652 = vset.pattern.permute.xlu0 0
  %653 = vperm.xlu0 %652, %v468
  %v654 = vpop.permute.xlu0 %653
  %655 = vset.pattern.permute.xlu0 0
  %656 = vperm.xlu0 %655, %v469
  %v657 = vpop.permute.xlu0 %656
  %658 = vset.pattern.permute.xlu0 0
  %659 = vperm.xlu0 %658, %v470
  %v660 = vpop.permute.xlu0 %659
  %661 = vset.pattern.permute.xlu0 0
  %662 = vperm.xlu0 %661, %v471
  %v663 = vpop.permute.xlu0 %662
  %vm664 = vcmp.eq.s32.totalorder %v474, 1
  %vm665 = vcmp.eq.s32.totalorder %v477, 1
  %vm666 = vcmp.eq.s32.totalorder %v480, 1
  %vm667 = vcmp.eq.s32.totalorder %v483, 1
  %vm668 = vcmp.eq.s32.totalorder %v486, 1
  %vm669 = vcmp.eq.s32.totalorder %v489, 1
  %vm670 = vcmp.eq.s32.totalorder %v492, 1
  %vm671 = vcmp.eq.s32.totalorder %v495, 1
  %vm672 = vcmp.eq.s32.totalorder %v498, 1
  %vm673 = vcmp.eq.s32.totalorder %v501, 1
  %vm674 = vcmp.eq.s32.totalorder %v504, 1
  %vm675 = vcmp.eq.s32.totalorder %v507, 1
  %vm676 = vcmp.eq.s32.totalorder %v510, 1
  %vm677 = vcmp.eq.s32.totalorder %v513, 1
  %vm678 = vcmp.eq.s32.totalorder %v516, 1
  %vm679 = vcmp.eq.s32.totalorder %v519, 1
  %vm680 = vcmp.eq.s32.totalorder %v522, 1
  %vm681 = vcmp.eq.s32.totalorder %v525, 1
  %vm682 = vcmp.eq.s32.totalorder %v528, 1
  %vm683 = vcmp.eq.s32.totalorder %v531, 1
  %vm684 = vcmp.eq.s32.totalorder %v534, 1
  %vm685 = vcmp.eq.s32.totalorder %v537, 1
  %vm686 = vcmp.eq.s32.totalorder %v540, 1
  %vm687 = vcmp.eq.s32.totalorder %v543, 1
  %vm688 = vcmp.eq.s32.totalorder %v546, 1
  %vm689 = vcmp.eq.s32.totalorder %v549, 1
  %vm690 = vcmp.eq.s32.totalorder %v552, 1
  %vm691 = vcmp.eq.s32.totalorder %v555, 1
  %vm692 = vcmp.eq.s32.totalorder %v558, 1
  %vm693 = vcmp.eq.s32.totalorder %v561, 1
  %vm694 = vcmp.eq.s32.totalorder %v564, 1
  %vm695 = vcmp.eq.s32.totalorder %v567, 1
  %vm696 = vcmp.eq.s32.totalorder %v570, 1
  %vm697 = vcmp.eq.s32.totalorder %v573, 1
  %vm698 = vcmp.eq.s32.totalorder %v576, 1
  %vm699 = vcmp.eq.s32.totalorder %v579, 1
  %vm700 = vcmp.eq.s32.totalorder %v582, 1
  %vm701 = vcmp.eq.s32.totalorder %v585, 1
  %vm702 = vcmp.eq.s32.totalorder %v588, 1
  %vm703 = vcmp.eq.s32.totalorder %v591, 1
  %vm704 = vcmp.eq.s32.totalorder %v594, 1
  %vm705 = vcmp.eq.s32.totalorder %v597, 1
  %vm706 = vcmp.eq.s32.totalorder %v600, 1
  %vm707 = vcmp.eq.s32.totalorder %v603, 1
  %vm708 = vcmp.eq.s32.totalorder %v606, 1
  %vm709 = vcmp.eq.s32.totalorder %v609, 1
  %vm710 = vcmp.eq.s32.totalorder %v612, 1
  %vm711 = vcmp.eq.s32.totalorder %v615, 1
  %vm712 = vcmp.eq.s32.totalorder %v618, 1
  %vm713 = vcmp.eq.s32.totalorder %v621, 1
  %vm714 = vcmp.eq.s32.totalorder %v624, 1
  %vm715 = vcmp.eq.s32.totalorder %v627, 1
  %vm716 = vcmp.eq.s32.totalorder %v630, 1
  %vm717 = vcmp.eq.s32.totalorder %v633, 1
  %vm718 = vcmp.eq.s32.totalorder %v636, 1
  %vm719 = vcmp.eq.s32.totalorder %v639, 1
  %vm720 = vcmp.eq.s32.totalorder %v642, 1
  %vm721 = vcmp.eq.s32.totalorder %v645, 1
  %vm722 = vcmp.eq.s32.totalorder %v648, 1
  %vm723 = vcmp.eq.s32.totalorder %v651, 1
  %vm724 = vcmp.eq.s32.totalorder %v654, 1
  %vm725 = vcmp.eq.s32.totalorder %v657, 1
  %vm726 = vcmp.eq.s32.totalorder %v660, 1
  %vm727 = vcmp.eq.s32.totalorder %v663, 1
  %v728 = vsel %vm664, %v152, 0.0
  %v729 = vsel %vm665, %v153, 0.0
  %v730 = vsel %vm666, %v154, 0.0
  %v731 = vsel %vm667, %v155, 0.0
  %v732 = vsel %vm668, %v156, 0.0
  %v733 = vsel %vm669, %v157, 0.0
  %v734 = vsel %vm670, %v158, 0.0
  %v735 = vsel %vm671, %v159, 0.0
  %v736 = vsel %vm672, %v160, 0.0
  %v737 = vsel %vm673, %v161, 0.0
  %v738 = vsel %vm674, %v162, 0.0
  %v739 = vsel %vm675, %v163, 0.0
  %v740 = vsel %vm676, %v164, 0.0
  %v741 = vsel %vm677, %v165, 0.0
  %v742 = vsel %vm678, %v166, 0.0
  %v743 = vsel %vm679, %v167, 0.0
  %v744 = vsel %vm680, %v168, 0.0
  %v745 = vsel %vm681, %v169, 0.0
  %v746 = vsel %vm682, %v170, 0.0
  %v747 = vsel %vm683, %v171, 0.0
  %v748 = vsel %vm684, %v172, 0.0
  %v749 = vsel %vm685, %v173, 0.0
  %v750 = vsel %vm686, %v174, 0.0
  %v751 = vsel %vm687, %v175, 0.0
  %v752 = vsel %vm688, %v176, 0.0
  %v753 = vsel %vm689, %v177, 0.0
  %v754 = vsel %vm690, %v178, 0.0
  %v755 = vsel %vm691, %v179, 0.0
  %v756 = vsel %vm692, %v180, 0.0
  %v757 = vsel %vm693, %v181, 0.0
  %v758 = vsel %vm694, %v182, 0.0
  %v759 = vsel %vm695, %v183, 0.0
  %v760 = vsel %vm696, %v184, 0.0
  %v761 = vsel %vm697, %v185, 0.0
  %v762 = vsel %vm698, %v186, 0.0
  %v763 = vsel %vm699, %v187, 0.0
  %v764 = vsel %vm700, %v188, 0.0
  %v765 = vsel %vm701, %v189, 0.0
  %v766 = vsel %vm702, %v190, 0.0
  %v767 = vsel %vm703, %v191, 0.0
  %v768 = vsel %vm704, %v192, 0.0
  %v769 = vsel %vm705, %v193, 0.0
  %v770 = vsel %vm706, %v194, 0.0
  %v771 = vsel %vm707, %v195, 0.0
  %v772 = vsel %vm708, %v196, 0.0
  %v773 = vsel %vm709, %v197, 0.0
  %v774 = vsel %vm710, %v198, 0.0
  %v775 = vsel %vm711, %v199, 0.0
  %v776 = vsel %vm712, %v200, 0.0
  %v777 = vsel %vm713, %v201, 0.0
  %v778 = vsel %vm714, %v202, 0.0
  %v779 = vsel %vm715, %v203, 0.0
  %v780 = vsel %vm716, %v204, 0.0
  %v781 = vsel %vm717, %v205, 0.0
  %v782 = vsel %vm718, %v206, 0.0
  %v783 = vsel %vm719, %v207, 0.0
  %v784 = vsel %vm720, %v208, 0.0
  %v785 = vsel %vm721, %v209, 0.0
  %v786 = vsel %vm722, %v210, 0.0
  %v787 = vsel %vm723, %v211, 0.0
  %v788 = vsel %vm724, %v212, 0.0
  %v789 = vsel %vm725, %v213, 0.0
  %v790 = vsel %vm726, %v214, 0.0
  %v791 = vsel %vm727, %v215, 0.0
  %v792 = vpack.c.bf16 %v729, %v728
  %v793 = vpack.c.bf16 %v731, %v730
  %v794 = vpack.c.bf16 %v733, %v732
  %v795 = vpack.c.bf16 %v735, %v734
  %v796 = vpack.c.bf16 %v737, %v736
  %v797 = vpack.c.bf16 %v739, %v738
  %v798 = vpack.c.bf16 %v741, %v740
  %v799 = vpack.c.bf16 %v743, %v742
  %v800 = vpack.c.bf16 %v745, %v744
  %v801 = vpack.c.bf16 %v747, %v746
  %v802 = vpack.c.bf16 %v749, %v748
  %v803 = vpack.c.bf16 %v751, %v750
  %v804 = vpack.c.bf16 %v753, %v752
  %v805 = vpack.c.bf16 %v755, %v754
  %v806 = vpack.c.bf16 %v757, %v756
  %v807 = vpack.c.bf16 %v759, %v758
  %v808 = vpack.c.bf16 %v761, %v760
  %v809 = vpack.c.bf16 %v763, %v762
  %v810 = vpack.c.bf16 %v765, %v764
  %v811 = vpack.c.bf16 %v767, %v766
  %v812 = vpack.c.bf16 %v769, %v768
  %v813 = vpack.c.bf16 %v771, %v770
  %v814 = vpack.c.bf16 %v773, %v772
  %v815 = vpack.c.bf16 %v775, %v774
  %v816 = vpack.c.bf16 %v777, %v776
  %v817 = vpack.c.bf16 %v779, %v778
  %v818 = vpack.c.bf16 %v781, %v780
  %v819 = vpack.c.bf16 %v783, %v782
  %v820 = vpack.c.bf16 %v785, %v784
  %v821 = vpack.c.bf16 %v787, %v786
  %v822 = vpack.c.bf16 %v789, %v788
  %v823 = vpack.c.bf16 %v791, %v790
  %v824 = vld [vmem:[%s3] sm:$0x3]
  %v825 = vld [vmem:[%s0 + $0x1] sm:$0xff]
  %v826 = vld [vmem:[%s0 + $0x9] sm:$0xff]
  %v827 = vld [vmem:[%s0 + $0x11] sm:$0xff]
  %v828 = vld [vmem:[%s0 + $0x19] sm:$0xff]
  %v829 = vld [vmem:[%s0 + $0x21] sm:$0xff]
  %v830 = vld [vmem:[%s0 + $0x29] sm:$0xff]
  %v831 = vld [vmem:[%s0 + $0x31] sm:$0xff]
  %v832 = vld [vmem:[%s0 + $0x39] sm:$0xff]
  %v833 = vld [vmem:[%s0 + $0x41] sm:$0xff]
  %v834 = vld [vmem:[%s0 + $0x49] sm:$0xff]
  %v835 = vld [vmem:[%s0 + $0x51] sm:$0xff]
  %v836 = vld [vmem:[%s0 + $0x59] sm:$0xff]
  %v837 = vld [vmem:[%s0 + $0x61] sm:$0xff]
  %v838 = vld [vmem:[%s0 + $0x69] sm:$0xff]
  %v839 = vld [vmem:[%s0 + $0x71] sm:$0xff]
  %v840 = vld [vmem:[%s0 + $0x79] sm:$0xff]
  %v841 = vld [vmem:[%s0 + $0x81] sm:$0xff]
  %v842 = vld [vmem:[%s0 + $0x89] sm:$0xff]
  %v843 = vld [vmem:[%s0 + $0x91] sm:$0xff]
  %v844 = vld [vmem:[%s0 + $0x99] sm:$0xff]
  %v845 = vld [vmem:[%s0 + $0xa1] sm:$0xff]
  %v846 = vld [vmem:[%s0 + $0xa9] sm:$0xff]
  %v847 = vld [vmem:[%s0 + $0xb1] sm:$0xff]
  %v848 = vld [vmem:[%s0 + $0xb9] sm:$0xff]
  %v849 = vld [vmem:[%s0 + $0xc1] sm:$0xff]
  %v850 = vld [vmem:[%s0 + $0xc9] sm:$0xff]
  %v851 = vld [vmem:[%s0 + $0xd1] sm:$0xff]
  %v852 = vld [vmem:[%s0 + $0xd9] sm:$0xff]
  %v853 = vld [vmem:[%s0 + $0xe1] sm:$0xff]
  %v854 = vld [vmem:[%s0 + $0xe9] sm:$0xff]
  %v855 = vld [vmem:[%s0 + $0xf1] sm:$0xff]
  %v856 = vld [vmem:[%s0 + $0xf9] sm:$0xff]
  %v857 = vld [vmem:[%s0 + $0x101] sm:$0xff]
  %v858 = vld [vmem:[%s0 + $0x109] sm:$0xff]
  %v859 = vld [vmem:[%s0 + $0x111] sm:$0xff]
  %v860 = vld [vmem:[%s0 + $0x119] sm:$0xff]
  %v861 = vld [vmem:[%s0 + $0x121] sm:$0xff]
  %v862 = vld [vmem:[%s0 + $0x129] sm:$0xff]
  %v863 = vld [vmem:[%s0 + $0x131] sm:$0xff]
  %v864 = vld [vmem:[%s0 + $0x139] sm:$0xff]
  %v865 = vld [vmem:[%s0 + $0x141] sm:$0xff]
  %v866 = vld [vmem:[%s0 + $0x149] sm:$0xff]
  %v867 = vld [vmem:[%s0 + $0x151] sm:$0xff]
  %v868 = vld [vmem:[%s0 + $0x159] sm:$0xff]
  %v869 = vld [vmem:[%s0 + $0x161] sm:$0xff]
  %v870 = vld [vmem:[%s0 + $0x169] sm:$0xff]
  %v871 = vld [vmem:[%s0 + $0x171] sm:$0xff]
  %v872 = vld [vmem:[%s0 + $0x179] sm:$0xff]
  %v873 = vld [vmem:[%s0 + $0x181] sm:$0xff]
  %v874 = vld [vmem:[%s0 + $0x189] sm:$0xff]
  %v875 = vld [vmem:[%s0 + $0x191] sm:$0xff]
  %v876 = vld [vmem:[%s0 + $0x199] sm:$0xff]
  %v877 = vld [vmem:[%s0 + $0x1a1] sm:$0xff]
  %v878 = vld [vmem:[%s0 + $0x1a9] sm:$0xff]
  %v879 = vld [vmem:[%s0 + $0x1b1] sm:$0xff]
  %v880 = vld [vmem:[%s0 + $0x1b9] sm:$0xff]
  %v881 = vld [vmem:[%s0 + $0x1c1] sm:$0xff]
  %v882 = vld [vmem:[%s0 + $0x1c9] sm:$0xff]
  %v883 = vld [vmem:[%s0 + $0x1d1] sm:$0xff]
  %v884 = vld [vmem:[%s0 + $0x1d9] sm:$0xff]
  %v885 = vld [vmem:[%s0 + $0x1e1] sm:$0xff]
  %v886 = vld [vmem:[%s0 + $0x1e9] sm:$0xff]
  %v887 = vld [vmem:[%s0 + $0x1f1] sm:$0xff]
  %v888 = vld [vmem:[%s0 + $0x1f9] sm:$0xff]
  %v889 = vsel %vm216, 1, 0
  %v890 = vsel %vm217, 1, 0
  %v891 = vsel %vm218, 1, 0
  %v892 = vsel %vm219, 1, 0
  %v893 = vsel %vm220, 1, 0
  %v894 = vsel %vm221, 1, 0
  %v895 = vsel %vm222, 1, 0
  %v896 = vsel %vm223, 1, 0
  %v897 = vsel %vm224, 1, 0
  %v898 = vsel %vm225, 1, 0
  %v899 = vsel %vm226, 1, 0
  %v900 = vsel %vm227, 1, 0
  %v901 = vsel %vm228, 1, 0
  %v902 = vsel %vm229, 1, 0
  %v903 = vsel %vm230, 1, 0
  %v904 = vsel %vm231, 1, 0
  %v905 = vsel %vm232, 1, 0
  %v906 = vsel %vm233, 1, 0
  %v907 = vsel %vm234, 1, 0
  %v908 = vsel %vm235, 1, 0
  %v909 = vsel %vm236, 1, 0
  %v910 = vsel %vm237, 1, 0
  %v911 = vsel %vm238, 1, 0
  %v912 = vsel %vm239, 1, 0
  %v913 = vsel %vm240, 1, 0
  %v914 = vsel %vm241, 1, 0
  %v915 = vsel %vm242, 1, 0
  %v916 = vsel %vm243, 1, 0
  %v917 = vsel %vm244, 1, 0
  %v918 = vsel %vm245, 1, 0
  %v919 = vsel %vm246, 1, 0
  %v920 = vsel %vm247, 1, 0
  %v921 = vsel %vm248, 1, 0
  %v922 = vsel %vm249, 1, 0
  %v923 = vsel %vm250, 1, 0
  %v924 = vsel %vm251, 1, 0
  %v925 = vsel %vm252, 1, 0
  %v926 = vsel %vm253, 1, 0
  %v927 = vsel %vm254, 1, 0
  %v928 = vsel %vm255, 1, 0
  %v929 = vsel %vm256, 1, 0
  %v930 = vsel %vm257, 1, 0
  %v931 = vsel %vm258, 1, 0
  %v932 = vsel %vm259, 1, 0
  %v933 = vsel %vm260, 1, 0
  %v934 = vsel %vm261, 1, 0
  %v935 = vsel %vm262, 1, 0
  %v936 = vsel %vm263, 1, 0
  %v937 = vsel %vm264, 1, 0
  %v938 = vsel %vm265, 1, 0
  %v939 = vsel %vm266, 1, 0
  %v940 = vsel %vm267, 1, 0
  %v941 = vsel %vm268, 1, 0
  %v942 = vsel %vm269, 1, 0
  %v943 = vsel %vm270, 1, 0
  %v944 = vsel %vm271, 1, 0
  %v945 = vsel %vm272, 1, 0
  %v946 = vsel %vm273, 1, 0
  %v947 = vsel %vm274, 1, 0
  %v948 = vsel %vm275, 1, 0
  %v949 = vsel %vm276, 1, 0
  %v950 = vsel %vm277, 1, 0
  %v951 = vsel %vm278, 1, 0
  %v952 = vsel %vm279, 1, 0
  %953 = vset.pattern.permute.xlu0 0
  %954 = vperm.xlu0 %953, %v889
  %v955 = vpop.permute.xlu0 %954
  %956 = vset.pattern.permute.xlu0 0
  %957 = vperm.xlu0 %956, %v890
  %v958 = vpop.permute.xlu0 %957
  %959 = vset.pattern.permute.xlu0 0
  %960 = vperm.xlu0 %959, %v891
  %v961 = vpop.permute.xlu0 %960
  %962 = vset.pattern.permute.xlu0 0
  %963 = vperm.xlu0 %962, %v892
  %v964 = vpop.permute.xlu0 %963
  %965 = vset.pattern.permute.xlu0 0
  %966 = vperm.xlu0 %965, %v893
  %v967 = vpop.permute.xlu0 %966
  %968 = vset.pattern.permute.xlu0 0
  %969 = vperm.xlu0 %968, %v894
  %v970 = vpop.permute.xlu0 %969
  %971 = vset.pattern.permute.xlu0 0
  %972 = vperm.xlu0 %971, %v895
  %v973 = vpop.permute.xlu0 %972
  %974 = vset.pattern.permute.xlu0 0
  %975 = vperm.xlu0 %974, %v896
  %v976 = vpop.permute.xlu0 %975
  %977 = vset.pattern.permute.xlu0 0
  %978 = vperm.xlu0 %977, %v897
  %v979 = vpop.permute.xlu0 %978
  %980 = vset.pattern.permute.xlu0 0
  %981 = vperm.xlu0 %980, %v898
  %v982 = vpop.permute.xlu0 %981
  %983 = vset.pattern.permute.xlu0 0
  %984 = vperm.xlu0 %983, %v899
  %v985 = vpop.permute.xlu0 %984
  %986 = vset.pattern.permute.xlu0 0
  %987 = vperm.xlu0 %986, %v900
  %v988 = vpop.permute.xlu0 %987
  %989 = vset.pattern.permute.xlu0 0
  %990 = vperm.xlu0 %989, %v901
  %v991 = vpop.permute.xlu0 %990
  %992 = vset.pattern.permute.xlu0 0
  %993 = vperm.xlu0 %992, %v902
  %v994 = vpop.permute.xlu0 %993
  %995 = vset.pattern.permute.xlu0 0
  %996 = vperm.xlu0 %995, %v903
  %v997 = vpop.permute.xlu0 %996
  %998 = vset.pattern.permute.xlu0 0
  %999 = vperm.xlu0 %998, %v904
  %v1000 = vpop.permute.xlu0 %999
  %1001 = vset.pattern.permute.xlu0 0
  %1002 = vperm.xlu0 %1001, %v905
  %v1003 = vpop.permute.xlu0 %1002
  %1004 = vset.pattern.permute.xlu0 0
  %1005 = vperm.xlu0 %1004, %v906
  %v1006 = vpop.permute.xlu0 %1005
  %1007 = vset.pattern.permute.xlu0 0
  %1008 = vperm.xlu0 %1007, %v907
  %v1009 = vpop.permute.xlu0 %1008
  %1010 = vset.pattern.permute.xlu0 0
  %1011 = vperm.xlu0 %1010, %v908
  %v1012 = vpop.permute.xlu0 %1011
  %1013 = vset.pattern.permute.xlu0 0
  %1014 = vperm.xlu0 %1013, %v909
  %v1015 = vpop.permute.xlu0 %1014
  %1016 = vset.pattern.permute.xlu0 0
  %1017 = vperm.xlu0 %1016, %v910
  %v1018 = vpop.permute.xlu0 %1017
  %1019 = vset.pattern.permute.xlu0 0
  %1020 = vperm.xlu0 %1019, %v911
  %v1021 = vpop.permute.xlu0 %1020
  %1022 = vset.pattern.permute.xlu0 0
  %1023 = vperm.xlu0 %1022, %v912
  %v1024 = vpop.permute.xlu0 %1023
  %1025 = vset.pattern.permute.xlu0 0
  %1026 = vperm.xlu0 %1025, %v913
  %v1027 = vpop.permute.xlu0 %1026
  %1028 = vset.pattern.permute.xlu0 0
  %1029 = vperm.xlu0 %1028, %v914
  %v1030 = vpop.permute.xlu0 %1029
  %1031 = vset.pattern.permute.xlu0 0
  %1032 = vperm.xlu0 %1031, %v915
  %v1033 = vpop.permute.xlu0 %1032
  %1034 = vset.pattern.permute.xlu0 0
  %1035 = vperm.xlu0 %1034, %v916
  %v1036 = vpop.permute.xlu0 %1035
  %1037 = vset.pattern.permute.xlu0 0
  %1038 = vperm.xlu0 %1037, %v917
  %v1039 = vpop.permute.xlu0 %1038
  %1040 = vset.pattern.permute.xlu0 0
  %1041 = vperm.xlu0 %1040, %v918
  %v1042 = vpop.permute.xlu0 %1041
  %1043 = vset.pattern.permute.xlu0 0
  %1044 = vperm.xlu0 %1043, %v919
  %v1045 = vpop.permute.xlu0 %1044
  %1046 = vset.pattern.permute.xlu0 0
  %1047 = vperm.xlu0 %1046, %v920
  %v1048 = vpop.permute.xlu0 %1047
  %1049 = vset.pattern.permute.xlu0 0
  %1050 = vperm.xlu0 %1049, %v921
  %v1051 = vpop.permute.xlu0 %1050
  %1052 = vset.pattern.permute.xlu0 0
  %1053 = vperm.xlu0 %1052, %v922
  %v1054 = vpop.permute.xlu0 %1053
  %1055 = vset.pattern.permute.xlu0 0
  %1056 = vperm.xlu0 %1055, %v923
  %v1057 = vpop.permute.xlu0 %1056
  %1058 = vset.pattern.permute.xlu0 0
  %1059 = vperm.xlu0 %1058, %v924
  %v1060 = vpop.permute.xlu0 %1059
  %1061 = vset.pattern.permute.xlu0 0
  %1062 = vperm.xlu0 %1061, %v925
  %v1063 = vpop.permute.xlu0 %1062
  %1064 = vset.pattern.permute.xlu0 0
  %1065 = vperm.xlu0 %1064, %v926
  %v1066 = vpop.permute.xlu0 %1065
  %1067 = vset.pattern.permute.xlu0 0
  %1068 = vperm.xlu0 %1067, %v927
  %v1069 = vpop.permute.xlu0 %1068
  %1070 = vset.pattern.permute.xlu0 0
  %1071 = vperm.xlu0 %1070, %v928
  %v1072 = vpop.permute.xlu0 %1071
  %1073 = vset.pattern.permute.xlu0 0
  %1074 = vperm.xlu0 %1073, %v929
  %v1075 = vpop.permute.xlu0 %1074
  %1076 = vset.pattern.permute.xlu0 0
  %1077 = vperm.xlu0 %1076, %v930
  %v1078 = vpop.permute.xlu0 %1077
  %1079 = vset.pattern.permute.xlu0 0
  %1080 = vperm.xlu0 %1079, %v931
  %v1081 = vpop.permute.xlu0 %1080
  %1082 = vset.pattern.permute.xlu0 0
  %1083 = vperm.xlu0 %1082, %v932
  %v1084 = vpop.permute.xlu0 %1083
  %1085 = vset.pattern.permute.xlu0 0
  %1086 = vperm.xlu0 %1085, %v933
  %v1087 = vpop.permute.xlu0 %1086
  %1088 = vset.pattern.permute.xlu0 0
  %1089 = vperm.xlu0 %1088, %v934
  %v1090 = vpop.permute.xlu0 %1089
  %1091 = vset.pattern.permute.xlu0 0
  %1092 = vperm.xlu0 %1091, %v935
  %v1093 = vpop.permute.xlu0 %1092
  %1094 = vset.pattern.permute.xlu0 0
  %1095 = vperm.xlu0 %1094, %v936
  %v1096 = vpop.permute.xlu0 %1095
  %1097 = vset.pattern.permute.xlu0 0
  %1098 = vperm.xlu0 %1097, %v937
  %v1099 = vpop.permute.xlu0 %1098
  %1100 = vset.pattern.permute.xlu0 0
  %1101 = vperm.xlu0 %1100, %v938
  %v1102 = vpop.permute.xlu0 %1101
  %1103 = vset.pattern.permute.xlu0 0
  %1104 = vperm.xlu0 %1103, %v939
  %v1105 = vpop.permute.xlu0 %1104
  %1106 = vset.pattern.permute.xlu0 0
  %1107 = vperm.xlu0 %1106, %v940
  %v1108 = vpop.permute.xlu0 %1107
  %1109 = vset.pattern.permute.xlu0 0
  %1110 = vperm.xlu0 %1109, %v941
  %v1111 = vpop.permute.xlu0 %1110
  %1112 = vset.pattern.permute.xlu0 0
  %1113 = vperm.xlu0 %1112, %v942
  %v1114 = vpop.permute.xlu0 %1113
  %1115 = vset.pattern.permute.xlu0 0
  %1116 = vperm.xlu0 %1115, %v943
  %v1117 = vpop.permute.xlu0 %1116
  %1118 = vset.pattern.permute.xlu0 0
  %1119 = vperm.xlu0 %1118, %v944
  %v1120 = vpop.permute.xlu0 %1119
  %1121 = vset.pattern.permute.xlu0 0
  %1122 = vperm.xlu0 %1121, %v945
  %v1123 = vpop.permute.xlu0 %1122
  %1124 = vset.pattern.permute.xlu0 0
  %1125 = vperm.xlu0 %1124, %v946
  %v1126 = vpop.permute.xlu0 %1125
  %1127 = vset.pattern.permute.xlu0 0
  %1128 = vperm.xlu0 %1127, %v947
  %v1129 = vpop.permute.xlu0 %1128
  %1130 = vset.pattern.permute.xlu0 0
  %1131 = vperm.xlu0 %1130, %v948
  %v1132 = vpop.permute.xlu0 %1131
  %1133 = vset.pattern.permute.xlu0 0
  %1134 = vperm.xlu0 %1133, %v949
  %v1135 = vpop.permute.xlu0 %1134
  %1136 = vset.pattern.permute.xlu0 0
  %1137 = vperm.xlu0 %1136, %v950
  %v1138 = vpop.permute.xlu0 %1137
  %1139 = vset.pattern.permute.xlu0 0
  %1140 = vperm.xlu0 %1139, %v951
  %v1141 = vpop.permute.xlu0 %1140
  %1142 = vset.pattern.permute.xlu0 0
  %1143 = vperm.xlu0 %1142, %v952
  %v1144 = vpop.permute.xlu0 %1143
  %vm1145 = vcmp.eq.s32.totalorder %v955, 1
  %vm1146 = vcmp.eq.s32.totalorder %v958, 1
  %vm1147 = vcmp.eq.s32.totalorder %v961, 1
  %vm1148 = vcmp.eq.s32.totalorder %v964, 1
  %vm1149 = vcmp.eq.s32.totalorder %v967, 1
  %vm1150 = vcmp.eq.s32.totalorder %v970, 1
  %vm1151 = vcmp.eq.s32.totalorder %v973, 1
  %vm1152 = vcmp.eq.s32.totalorder %v976, 1
  %vm1153 = vcmp.eq.s32.totalorder %v979, 1
  %vm1154 = vcmp.eq.s32.totalorder %v982, 1
  %vm1155 = vcmp.eq.s32.totalorder %v985, 1
  %vm1156 = vcmp.eq.s32.totalorder %v988, 1
  %vm1157 = vcmp.eq.s32.totalorder %v991, 1
  %vm1158 = vcmp.eq.s32.totalorder %v994, 1
  %vm1159 = vcmp.eq.s32.totalorder %v997, 1
  %vm1160 = vcmp.eq.s32.totalorder %v1000, 1
  %vm1161 = vcmp.eq.s32.totalorder %v1003, 1
  %vm1162 = vcmp.eq.s32.totalorder %v1006, 1
  %vm1163 = vcmp.eq.s32.totalorder %v1009, 1
  %vm1164 = vcmp.eq.s32.totalorder %v1012, 1
  %vm1165 = vcmp.eq.s32.totalorder %v1015, 1
  %vm1166 = vcmp.eq.s32.totalorder %v1018, 1
  %vm1167 = vcmp.eq.s32.totalorder %v1021, 1
  %vm1168 = vcmp.eq.s32.totalorder %v1024, 1
  %vm1169 = vcmp.eq.s32.totalorder %v1027, 1
  %vm1170 = vcmp.eq.s32.totalorder %v1030, 1
  %vm1171 = vcmp.eq.s32.totalorder %v1033, 1
  %vm1172 = vcmp.eq.s32.totalorder %v1036, 1
  %vm1173 = vcmp.eq.s32.totalorder %v1039, 1
  %vm1174 = vcmp.eq.s32.totalorder %v1042, 1
  %vm1175 = vcmp.eq.s32.totalorder %v1045, 1
  %vm1176 = vcmp.eq.s32.totalorder %v1048, 1
  %vm1177 = vcmp.eq.s32.totalorder %v1051, 1
  %vm1178 = vcmp.eq.s32.totalorder %v1054, 1
  %vm1179 = vcmp.eq.s32.totalorder %v1057, 1
  %vm1180 = vcmp.eq.s32.totalorder %v1060, 1
  %vm1181 = vcmp.eq.s32.totalorder %v1063, 1
  %vm1182 = vcmp.eq.s32.totalorder %v1066, 1
  %vm1183 = vcmp.eq.s32.totalorder %v1069, 1
  %vm1184 = vcmp.eq.s32.totalorder %v1072, 1
  %vm1185 = vcmp.eq.s32.totalorder %v1075, 1
  %vm1186 = vcmp.eq.s32.totalorder %v1078, 1
  %vm1187 = vcmp.eq.s32.totalorder %v1081, 1
  %vm1188 = vcmp.eq.s32.totalorder %v1084, 1
  %vm1189 = vcmp.eq.s32.totalorder %v1087, 1
  %vm1190 = vcmp.eq.s32.totalorder %v1090, 1
  %vm1191 = vcmp.eq.s32.totalorder %v1093, 1
  %vm1192 = vcmp.eq.s32.totalorder %v1096, 1
  %vm1193 = vcmp.eq.s32.totalorder %v1099, 1
  %vm1194 = vcmp.eq.s32.totalorder %v1102, 1
  %vm1195 = vcmp.eq.s32.totalorder %v1105, 1
  %vm1196 = vcmp.eq.s32.totalorder %v1108, 1
  %vm1197 = vcmp.eq.s32.totalorder %v1111, 1
  %vm1198 = vcmp.eq.s32.totalorder %v1114, 1
  %vm1199 = vcmp.eq.s32.totalorder %v1117, 1
  %vm1200 = vcmp.eq.s32.totalorder %v1120, 1
  %vm1201 = vcmp.eq.s32.totalorder %v1123, 1
  %vm1202 = vcmp.eq.s32.totalorder %v1126, 1
  %vm1203 = vcmp.eq.s32.totalorder %v1129, 1
  %vm1204 = vcmp.eq.s32.totalorder %v1132, 1
  %vm1205 = vcmp.eq.s32.totalorder %v1135, 1
  %vm1206 = vcmp.eq.s32.totalorder %v1138, 1
  %vm1207 = vcmp.eq.s32.totalorder %v1141, 1
  %vm1208 = vcmp.eq.s32.totalorder %v1144, 1
  %v1209 = vsel %vm1145, %v825, 0.0
  %v1210 = vsel %vm1146, %v826, 0.0
  %v1211 = vsel %vm1147, %v827, 0.0
  %v1212 = vsel %vm1148, %v828, 0.0
  %v1213 = vsel %vm1149, %v829, 0.0
  %v1214 = vsel %vm1150, %v830, 0.0
  %v1215 = vsel %vm1151, %v831, 0.0
  %v1216 = vsel %vm1152, %v832, 0.0
  %v1217 = vsel %vm1153, %v833, 0.0
  %v1218 = vsel %vm1154, %v834, 0.0
  %v1219 = vsel %vm1155, %v835, 0.0
  %v1220 = vsel %vm1156, %v836, 0.0
  %v1221 = vsel %vm1157, %v837, 0.0
  %v1222 = vsel %vm1158, %v838, 0.0
  %v1223 = vsel %vm1159, %v839, 0.0
  %v1224 = vsel %vm1160, %v840, 0.0
  %v1225 = vsel %vm1161, %v841, 0.0
  %v1226 = vsel %vm1162, %v842, 0.0
  %v1227 = vsel %vm1163, %v843, 0.0
  %v1228 = vsel %vm1164, %v844, 0.0
  %v1229 = vsel %vm1165, %v845, 0.0
  %v1230 = vsel %vm1166, %v846, 0.0
  %v1231 = vsel %vm1167, %v847, 0.0
  %v1232 = vsel %vm1168, %v848, 0.0
  %v1233 = vsel %vm1169, %v849, 0.0
  %v1234 = vsel %vm1170, %v850, 0.0
  %v1235 = vsel %vm1171, %v851, 0.0
  %v1236 = vsel %vm1172, %v852, 0.0
  %v1237 = vsel %vm1173, %v853, 0.0
  %v1238 = vsel %vm1174, %v854, 0.0
  %v1239 = vsel %vm1175, %v855, 0.0
  %v1240 = vsel %vm1176, %v856, 0.0
  %v1241 = vsel %vm1177, %v857, 0.0
  %v1242 = vsel %vm1178, %v858, 0.0
  %v1243 = vsel %vm1179, %v859, 0.0
  %v1244 = vsel %vm1180, %v860, 0.0
  %v1245 = vsel %vm1181, %v861, 0.0
  %v1246 = vsel %vm1182, %v862, 0.0
  %v1247 = vsel %vm1183, %v863, 0.0
  %v1248 = vsel %vm1184, %v864, 0.0
  %v1249 = vsel %vm1185, %v865, 0.0
  %v1250 = vsel %vm1186, %v866, 0.0
  %v1251 = vsel %vm1187, %v867, 0.0
  %v1252 = vsel %vm1188, %v868, 0.0
  %v1253 = vsel %vm1189, %v869, 0.0
  %v1254 = vsel %vm1190, %v870, 0.0
  %v1255 = vsel %vm1191, %v871, 0.0
  %v1256 = vsel %vm1192, %v872, 0.0
  %v1257 = vsel %vm1193, %v873, 0.0
  %v1258 = vsel %vm1194, %v874, 0.0
  %v1259 = vsel %vm1195, %v875, 0.0
  %v1260 = vsel %vm1196, %v876, 0.0
  %v1261 = vsel %vm1197, %v877, 0.0
  %v1262 = vsel %vm1198, %v878, 0.0
  %v1263 = vsel %vm1199, %v879, 0.0
  %v1264 = vsel %vm1200, %v880, 0.0
  %v1265 = vsel %vm1201, %v881, 0.0
  %v1266 = vsel %vm1202, %v882, 0.0
  %v1267 = vsel %vm1203, %v883, 0.0
  %v1268 = vsel %vm1204, %v884, 0.0
  %v1269 = vsel %vm1205, %v885, 0.0
  %v1270 = vsel %vm1206, %v886, 0.0
  %v1271 = vsel %vm1207, %v887, 0.0
  %v1272 = vsel %vm1208, %v888, 0.0
  %v1273 = vpack.c.bf16 %v1210, %v1209
  %v1274 = vpack.c.bf16 %v1212, %v1211
  %v1275 = vpack.c.bf16 %v1214, %v1213
  %v1276 = vpack.c.bf16 %v1216, %v1215
  %v1277 = vpack.c.bf16 %v1218, %v1217
  %v1278 = vpack.c.bf16 %v1220, %v1219
  %v1279 = vpack.c.bf16 %v1222, %v1221
  %v1280 = vpack.c.bf16 %v1224, %v1223
  %v1281 = vpack.c.bf16 %v1226, %v1225
  %v1282 = vpack.c.bf16 %v1228, %v1227
  %v1283 = vpack.c.bf16 %v1230, %v1229
  %v1284 = vpack.c.bf16 %v1232, %v1231
  %v1285 = vpack.c.bf16 %v1234, %v1233
  %v1286 = vpack.c.bf16 %v1236, %v1235
  %v1287 = vpack.c.bf16 %v1238, %v1237
  %v1288 = vpack.c.bf16 %v1240, %v1239
  %v1289 = vpack.c.bf16 %v1242, %v1241
  %v1290 = vpack.c.bf16 %v1244, %v1243
  %v1291 = vpack.c.bf16 %v1246, %v1245
  %v1292 = vpack.c.bf16 %v1248, %v1247
  %v1293 = vpack.c.bf16 %v1250, %v1249
  %v1294 = vpack.c.bf16 %v1252, %v1251
  %v1295 = vpack.c.bf16 %v1254, %v1253
  %v1296 = vpack.c.bf16 %v1256, %v1255
  %v1297 = vpack.c.bf16 %v1258, %v1257
  %v1298 = vpack.c.bf16 %v1260, %v1259
  %v1299 = vpack.c.bf16 %v1262, %v1261
  %v1300 = vpack.c.bf16 %v1264, %v1263
  %v1301 = vpack.c.bf16 %v1266, %v1265
  %v1302 = vpack.c.bf16 %v1268, %v1267
  %v1303 = vpack.c.bf16 %v1270, %v1269
  %v1304 = vpack.c.bf16 %v1272, %v1271
  %s1305 = scalar_lea.vmem %s3, 2
  %v1306 = vld [vmem:[%s1305] sm:$0x3]
  %vm1307 = vcmask 23552
  %v1309 = vsel %vm1307, %v1273, 0
  %v1312 = vsel %vm1307, %v1274, 0
  %v1315 = vsel %vm1307, %v1275, 0
  %v1318 = vsel %vm1307, %v1276, 0
  %v1321 = vsel %vm1307, %v1277, 0
  %v1324 = vsel %vm1307, %v1278, 0
  %v1327 = vsel %vm1307, %v1279, 0
  %v1330 = vsel %vm1307, %v1280, 0
  %v1333 = vsel %vm1307, %v1281, 0
  %v1336 = vsel %vm1307, %v1282, 0
  %v1339 = vsel %vm1307, %v1283, 0
  %v1342 = vsel %vm1307, %v1284, 0
  %v1345 = vsel %vm1307, %v1285, 0
  %v1348 = vsel %vm1307, %v1286, 0
  %v1351 = vsel %vm1307, %v1287, 0
  %v1354 = vsel %vm1307, %v1288, 0
  %v1357 = vsel %vm1307, %v1289, 0
  %v1360 = vsel %vm1307, %v1290, 0
  %v1363 = vsel %vm1307, %v1291, 0
  %v1366 = vsel %vm1307, %v1292, 0
  %v1369 = vsel %vm1307, %v1293, 0
  %v1372 = vsel %vm1307, %v1294, 0
  %v1375 = vsel %vm1307, %v1295, 0
  %v1378 = vsel %vm1307, %v1296, 0
  %v1381 = vsel %vm1307, %v1297, 0
  %v1384 = vsel %vm1307, %v1298, 0
  %v1387 = vsel %vm1307, %v1299, 0
  %v1390 = vsel %vm1307, %v1300, 0
  %v1393 = vsel %vm1307, %v1301, 0
  %v1396 = vsel %vm1307, %v1302, 0
  %v1399 = vsel %vm1307, %v1303, 0
  %v1402 = vsel %vm1307, %v1304, 0
  %vm1404 = vcmask 1040384
  %vm1405 = vcmask 1041408
  %v1406 = vsel %vm1404, 4294967295, 65535
  %v1407 = vsel %vm1405, %v1406, 0
  %v1409 = vand.u32 %v1306, %v1407
  %1411 = vmatprep.subr.bf16.mxu0 0
  %1412 = vmatpush1.bf16.msra.mxu0 0
  %1413 = vmatprep.subr.bf16.mxu0 0
  %1414 = vmatpush1.bf16.msra.mxu0 0
  %1415 = vmatprep.subr.bf16.mxu0 0
  %1416 = vmatpush1.bf16.msra.mxu0 0
  %1417 = vmatprep.subr.bf16.mxu0 0
  %1418 = vmatpush1.bf16.msra.mxu0 0
  %1419 = vmatprep.subr.bf16.mxu0 0
  %1420 = vmatpush1.bf16.msra.mxu0 0
  %1421 = vmatprep.subr.bf16.mxu0 0
  %1422 = vmatpush1.bf16.msra.mxu0 0
  %1423 = vmatprep.subr.bf16.mxu0 0
  %1424 = vmatpush1.bf16.msra.mxu0 0
  %1425 = vmatprep.subr.bf16.mxu0 0
  %1426 = vmatpush1.bf16.msra.mxu0 %v1409
  %1427 = vmatprep.subr.bf16.mxu0 0
  %1428 = vmatpush2.bf16.msra.mxu0 0
  %1429 = vmatprep.subr.bf16.mxu0 0
  %1430 = vmatpush2.bf16.msra.mxu0 0
  %1431 = vmatprep.subr.bf16.mxu0 0
  %1432 = vmatpush2.bf16.msra.mxu0 0
  %1433 = vmatprep.subr.bf16.mxu0 0
  %1434 = vmatpush2.bf16.msra.mxu0 0
  %1435 = vmatprep.subr.bf16.mxu0 0
  %1436 = vmatpush2.bf16.msra.mxu0 0
  %1437 = vmatprep.subr.bf16.mxu0 0
  %1438 = vmatpush2.bf16.msra.mxu0 0
  %1439 = vmatprep.subr.bf16.mxu0 0
  %1440 = vmatpush2.bf16.msra.mxu0 0
  %1441 = vmatprep.subr.bf16.mxu0 0
  %1442 = vmatpush2.bf16.msra.mxu0 0
  %1443 = vmatprep.mubr.bf16.mxu0 0
  %1444 = vmatmul.mubr.bf16.gmra.mxu0 %v1309
  %v1445 = vpop.f32.mrf.mxu0
  %v1446 = vadd.f32 0.0, %v1445
  %v1447 = vpop.f32.mrf.mxu0
  %v1448 = vpop.f32.mrf.mxu0
  %v1449 = vadd.f32 0.0, %v1448
  %v1450 = vpop.f32.mrf.mxu0
  %1451 = vmatprep.mubr.bf16.mxu0 0
  %1452 = vmatmul.mubr.bf16.gmra.mxu0 %v1312
  %v1453 = vpop.f32.mrf.mxu0
  %v1454 = vadd.f32 0.0, %v1453
  %v1455 = vpop.f32.mrf.mxu0
  %v1456 = vpop.f32.mrf.mxu0
  %v1457 = vadd.f32 0.0, %v1456
  %v1458 = vpop.f32.mrf.mxu0
  %1459 = vmatprep.mubr.bf16.mxu0 0
  %1460 = vmatmul.mubr.bf16.gmra.mxu0 %v1315
  %v1461 = vpop.f32.mrf.mxu0
  %v1462 = vadd.f32 0.0, %v1461
  %v1463 = vpop.f32.mrf.mxu0
  %v1464 = vpop.f32.mrf.mxu0
  %v1465 = vadd.f32 0.0, %v1464
  %v1466 = vpop.f32.mrf.mxu0
  %1467 = vmatprep.mubr.bf16.mxu0 0
  %1468 = vmatmul.mubr.bf16.gmra.mxu0 %v1318
  %v1469 = vpop.f32.mrf.mxu0
  %v1470 = vadd.f32 0.0, %v1469
  %v1471 = vpop.f32.mrf.mxu0
  %v1472 = vpop.f32.mrf.mxu0
  %v1473 = vadd.f32 0.0, %v1472
  %v1474 = vpop.f32.mrf.mxu0
  %1475 = vmatprep.mubr.bf16.mxu0 0
  %1476 = vmatmul.mubr.bf16.gmra.mxu0 %v1321
  %v1477 = vpop.f32.mrf.mxu0
  %v1478 = vadd.f32 0.0, %v1477
  %v1479 = vpop.f32.mrf.mxu0
  %v1480 = vpop.f32.mrf.mxu0
  %v1481 = vadd.f32 0.0, %v1480
  %v1482 = vpop.f32.mrf.mxu0
  %1483 = vmatprep.mubr.bf16.mxu0 0
  %1484 = vmatmul.mubr.bf16.gmra.mxu0 %v1324
  %v1485 = vpop.f32.mrf.mxu0
  %v1486 = vadd.f32 0.0, %v1485
  %v1487 = vpop.f32.mrf.mxu0
  %v1488 = vpop.f32.mrf.mxu0
  %v1489 = vadd.f32 0.0, %v1488
  %v1490 = vpop.f32.mrf.mxu0
  %1491 = vmatprep.mubr.bf16.mxu0 0
  %1492 = vmatmul.mubr.bf16.gmra.mxu0 %v1327
  %v1493 = vpop.f32.mrf.mxu0
  %v1494 = vadd.f32 0.0, %v1493
  %v1495 = vpop.f32.mrf.mxu0
  %v1496 = vpop.f32.mrf.mxu0
  %v1497 = vadd.f32 0.0, %v1496
  %v1498 = vpop.f32.mrf.mxu0
  %1499 = vmatprep.mubr.bf16.mxu0 0
  %1500 = vmatmul.mubr.bf16.gmra.mxu0 %v1330
  %v1501 = vpop.f32.mrf.mxu0
  %v1502 = vadd.f32 0.0, %v1501
  %v1503 = vpop.f32.mrf.mxu0
  %v1504 = vpop.f32.mrf.mxu0
  %v1505 = vadd.f32 0.0, %v1504
  %v1506 = vpop.f32.mrf.mxu0
  %1507 = vmatprep.mubr.bf16.mxu0 0
  %1508 = vmatmul.mubr.bf16.gmra.mxu0 %v1333
  %v1509 = vpop.f32.mrf.mxu0
  %v1510 = vadd.f32 0.0, %v1509
  %v1511 = vpop.f32.mrf.mxu0
  %v1512 = vpop.f32.mrf.mxu0
  %v1513 = vadd.f32 0.0, %v1512
  %v1514 = vpop.f32.mrf.mxu0
  %1515 = vmatprep.mubr.bf16.mxu0 0
  %1516 = vmatmul.mubr.bf16.gmra.mxu0 %v1336
  %v1517 = vpop.f32.mrf.mxu0
  %v1518 = vadd.f32 0.0, %v1517
  %v1519 = vpop.f32.mrf.mxu0
  %v1520 = vpop.f32.mrf.mxu0
  %v1521 = vadd.f32 0.0, %v1520
  %v1522 = vpop.f32.mrf.mxu0
  %1523 = vmatprep.mubr.bf16.mxu0 0
  %1524 = vmatmul.mubr.bf16.gmra.mxu0 %v1339
  %v1525 = vpop.f32.mrf.mxu0
  %v1526 = vadd.f32 0.0, %v1525
  %v1527 = vpop.f32.mrf.mxu0
  %v1528 = vpop.f32.mrf.mxu0
  %v1529 = vadd.f32 0.0, %v1528
  %v1530 = vpop.f32.mrf.mxu0
  %1531 = vmatprep.mubr.bf16.mxu0 0
  %1532 = vmatmul.mubr.bf16.gmra.mxu0 %v1342
  %v1533 = vpop.f32.mrf.mxu0
  %v1534 = vadd.f32 0.0, %v1533
  %v1535 = vpop.f32.mrf.mxu0
  %v1536 = vpop.f32.mrf.mxu0
  %v1537 = vadd.f32 0.0, %v1536
  %v1538 = vpop.f32.mrf.mxu0
  %1539 = vmatprep.mubr.bf16.mxu0 0
  %1540 = vmatmul.mubr.bf16.gmra.mxu0 %v1345
  %v1541 = vpop.f32.mrf.mxu0
  %v1542 = vadd.f32 0.0, %v1541
  %v1543 = vpop.f32.mrf.mxu0
  %v1544 = vpop.f32.mrf.mxu0
  %v1545 = vadd.f32 0.0, %v1544
  %v1546 = vpop.f32.mrf.mxu0
  %1547 = vmatprep.mubr.bf16.mxu0 0
  %1548 = vmatmul.mubr.bf16.gmra.mxu0 %v1348
  %v1549 = vpop.f32.mrf.mxu0
  %v1550 = vadd.f32 0.0, %v1549
  %v1551 = vpop.f32.mrf.mxu0
  %v1552 = vpop.f32.mrf.mxu0
  %v1553 = vadd.f32 0.0, %v1552
  %v1554 = vpop.f32.mrf.mxu0
  %1555 = vmatprep.mubr.bf16.mxu0 0
  %1556 = vmatmul.mubr.bf16.gmra.mxu0 %v1351
  %v1557 = vpop.f32.mrf.mxu0
  %v1558 = vadd.f32 0.0, %v1557
  %v1559 = vpop.f32.mrf.mxu0
  %v1560 = vpop.f32.mrf.mxu0
  %v1561 = vadd.f32 0.0, %v1560
  %v1562 = vpop.f32.mrf.mxu0
  %1563 = vmatprep.mubr.bf16.mxu0 0
  %1564 = vmatmul.mubr.bf16.gmra.mxu0 %v1354
  %v1565 = vpop.f32.mrf.mxu0
  %v1566 = vadd.f32 0.0, %v1565
  %v1567 = vpop.f32.mrf.mxu0
  %v1568 = vpop.f32.mrf.mxu0
  %v1569 = vadd.f32 0.0, %v1568
  %v1570 = vpop.f32.mrf.mxu0
  %1571 = vmatprep.mubr.bf16.mxu0 0
  %1572 = vmatmul.mubr.bf16.gmra.mxu0 %v1357
  %v1573 = vpop.f32.mrf.mxu0
  %v1574 = vadd.f32 0.0, %v1573
  %v1575 = vpop.f32.mrf.mxu0
  %v1576 = vpop.f32.mrf.mxu0
  %v1577 = vadd.f32 0.0, %v1576
  %v1578 = vpop.f32.mrf.mxu0
  %1579 = vmatprep.mubr.bf16.mxu0 0
  %1580 = vmatmul.mubr.bf16.gmra.mxu0 %v1360
  %v1581 = vpop.f32.mrf.mxu0
  %v1582 = vadd.f32 0.0, %v1581
  %v1583 = vpop.f32.mrf.mxu0
  %v1584 = vpop.f32.mrf.mxu0
  %v1585 = vadd.f32 0.0, %v1584
  %v1586 = vpop.f32.mrf.mxu0
  %1587 = vmatprep.mubr.bf16.mxu0 0
  %1588 = vmatmul.mubr.bf16.gmra.mxu0 %v1363
  %v1589 = vpop.f32.mrf.mxu0
  %v1590 = vadd.f32 0.0, %v1589
  %v1591 = vpop.f32.mrf.mxu0
  %v1592 = vpop.f32.mrf.mxu0
  %v1593 = vadd.f32 0.0, %v1592
  %v1594 = vpop.f32.mrf.mxu0
  %1595 = vmatprep.mubr.bf16.mxu0 0
  %1596 = vmatmul.mubr.bf16.gmra.mxu0 %v1366
  %v1597 = vpop.f32.mrf.mxu0
  %v1598 = vadd.f32 0.0, %v1597
  %v1599 = vpop.f32.mrf.mxu0
  %v1600 = vpop.f32.mrf.mxu0
  %v1601 = vadd.f32 0.0, %v1600
  %v1602 = vpop.f32.mrf.mxu0
  %1603 = vmatprep.mubr.bf16.mxu0 0
  %1604 = vmatmul.mubr.bf16.gmra.mxu0 %v1369
  %v1605 = vpop.f32.mrf.mxu0
  %v1606 = vadd.f32 0.0, %v1605
  %v1607 = vpop.f32.mrf.mxu0
  %v1608 = vpop.f32.mrf.mxu0
  %v1609 = vadd.f32 0.0, %v1608
  %v1610 = vpop.f32.mrf.mxu0
  %1611 = vmatprep.mubr.bf16.mxu0 0
  %1612 = vmatmul.mubr.bf16.gmra.mxu0 %v1372
  %v1613 = vpop.f32.mrf.mxu0
  %v1614 = vadd.f32 0.0, %v1613
  %v1615 = vpop.f32.mrf.mxu0
  %v1616 = vpop.f32.mrf.mxu0
  %v1617 = vadd.f32 0.0, %v1616
  %v1618 = vpop.f32.mrf.mxu0
  %1619 = vmatprep.mubr.bf16.mxu0 0
  %1620 = vmatmul.mubr.bf16.gmra.mxu0 %v1375
  %v1621 = vpop.f32.mrf.mxu0
  %v1622 = vadd.f32 0.0, %v1621
  %v1623 = vpop.f32.mrf.mxu0
  %v1624 = vpop.f32.mrf.mxu0
  %v1625 = vadd.f32 0.0, %v1624
  %v1626 = vpop.f32.mrf.mxu0
  %1627 = vmatprep.mubr.bf16.mxu0 0
  %1628 = vmatmul.mubr.bf16.gmra.mxu0 %v1378
  %v1629 = vpop.f32.mrf.mxu0
  %v1630 = vadd.f32 0.0, %v1629
  %v1631 = vpop.f32.mrf.mxu0
  %v1632 = vpop.f32.mrf.mxu0
  %v1633 = vadd.f32 0.0, %v1632
  %v1634 = vpop.f32.mrf.mxu0
  %1635 = vmatprep.mubr.bf16.mxu0 0
  %1636 = vmatmul.mubr.bf16.gmra.mxu0 %v1381
  %v1637 = vpop.f32.mrf.mxu0
  %v1638 = vadd.f32 0.0, %v1637
  %v1639 = vpop.f32.mrf.mxu0
  %v1640 = vpop.f32.mrf.mxu0
  %v1641 = vadd.f32 0.0, %v1640
  %v1642 = vpop.f32.mrf.mxu0
  %1643 = vmatprep.mubr.bf16.mxu0 0
  %1644 = vmatmul.mubr.bf16.gmra.mxu0 %v1384
  %v1645 = vpop.f32.mrf.mxu0
  %v1646 = vadd.f32 0.0, %v1645
  %v1647 = vpop.f32.mrf.mxu0
  %v1648 = vpop.f32.mrf.mxu0
  %v1649 = vadd.f32 0.0, %v1648
  %v1650 = vpop.f32.mrf.mxu0
  %1651 = vmatprep.mubr.bf16.mxu0 0
  %1652 = vmatmul.mubr.bf16.gmra.mxu0 %v1387
  %v1653 = vpop.f32.mrf.mxu0
  %v1654 = vadd.f32 0.0, %v1653
  %v1655 = vpop.f32.mrf.mxu0
  %v1656 = vpop.f32.mrf.mxu0
  %v1657 = vadd.f32 0.0, %v1656
  %v1658 = vpop.f32.mrf.mxu0
  %1659 = vmatprep.mubr.bf16.mxu0 0
  %1660 = vmatmul.mubr.bf16.gmra.mxu0 %v1390
  %v1661 = vpop.f32.mrf.mxu0
  %v1662 = vadd.f32 0.0, %v1661
  %v1663 = vpop.f32.mrf.mxu0
  %v1664 = vpop.f32.mrf.mxu0
  %v1665 = vadd.f32 0.0, %v1664
  %v1666 = vpop.f32.mrf.mxu0
  %1667 = vmatprep.mubr.bf16.mxu0 0
  %1668 = vmatmul.mubr.bf16.gmra.mxu0 %v1393
  %v1669 = vpop.f32.mrf.mxu0
  %v1670 = vadd.f32 0.0, %v1669
  %v1671 = vpop.f32.mrf.mxu0
  %v1672 = vpop.f32.mrf.mxu0
  %v1673 = vadd.f32 0.0, %v1672
  %v1674 = vpop.f32.mrf.mxu0
  %1675 = vmatprep.mubr.bf16.mxu0 0
  %1676 = vmatmul.mubr.bf16.gmra.mxu0 %v1396
  %v1677 = vpop.f32.mrf.mxu0
  %v1678 = vadd.f32 0.0, %v1677
  %v1679 = vpop.f32.mrf.mxu0
  %v1680 = vpop.f32.mrf.mxu0
  %v1681 = vadd.f32 0.0, %v1680
  %v1682 = vpop.f32.mrf.mxu0
  %1683 = vmatprep.mubr.bf16.mxu0 0
  %1684 = vmatmul.mubr.bf16.gmra.mxu0 %v1399
  %v1685 = vpop.f32.mrf.mxu0
  %v1686 = vadd.f32 0.0, %v1685
  %v1687 = vpop.f32.mrf.mxu0
  %v1688 = vpop.f32.mrf.mxu0
  %v1689 = vadd.f32 0.0, %v1688
  %v1690 = vpop.f32.mrf.mxu0
  %1691 = vmatprep.mubr.bf16.mxu0 0
  %1692 = vmatmul.mubr.bf16.gmra.mxu0 %v1402
  %v1693 = vpop.f32.mrf.mxu0
  %v1694 = vadd.f32 0.0, %v1693
  %v1695 = vpop.f32.mrf.mxu0
  %v1696 = vpop.f32.mrf.mxu0
  %v1697 = vadd.f32 0.0, %v1696
  %v1698 = vpop.f32.mrf.mxu0
  %1699 = vdwg.mxu0
  %v1701 = vsel %vm1307, %v792, 0
  %v1704 = vsel %vm1307, %v793, 0
  %v1707 = vsel %vm1307, %v794, 0
  %v1710 = vsel %vm1307, %v795, 0
  %v1713 = vsel %vm1307, %v796, 0
  %v1716 = vsel %vm1307, %v797, 0
  %v1719 = vsel %vm1307, %v798, 0
  %v1722 = vsel %vm1307, %v799, 0
  %v1725 = vsel %vm1307, %v800, 0
  %v1728 = vsel %vm1307, %v801, 0
  %v1731 = vsel %vm1307, %v802, 0
  %v1734 = vsel %vm1307, %v803, 0
  %v1737 = vsel %vm1307, %v804, 0
  %v1740 = vsel %vm1307, %v805, 0
  %v1743 = vsel %vm1307, %v806, 0
  %v1746 = vsel %vm1307, %v807, 0
  %v1749 = vsel %vm1307, %v808, 0
  %v1752 = vsel %vm1307, %v809, 0
  %v1755 = vsel %vm1307, %v810, 0
  %v1758 = vsel %vm1307, %v811, 0
  %v1761 = vsel %vm1307, %v812, 0
  %v1764 = vsel %vm1307, %v813, 0
  %v1767 = vsel %vm1307, %v814, 0
  %v1770 = vsel %vm1307, %v815, 0
  %v1773 = vsel %vm1307, %v816, 0
  %v1776 = vsel %vm1307, %v817, 0
  %v1779 = vsel %vm1307, %v818, 0
  %v1782 = vsel %vm1307, %v819, 0
  %v1785 = vsel %vm1307, %v820, 0
  %v1788 = vsel %vm1307, %v821, 0
  %v1791 = vsel %vm1307, %v822, 0
  %v1794 = vsel %vm1307, %v823, 0
  %v1797 = vand.u32 %v824, %v1407
  %1799 = vmatprep.subr.bf16.mxu0 0
  %1800 = vmatpush1.bf16.msra.mxu0 0
  %1801 = vmatprep.subr.bf16.mxu0 0
  %1802 = vmatpush1.bf16.msra.mxu0 0
  %1803 = vmatprep.subr.bf16.mxu0 0
  %1804 = vmatpush1.bf16.msra.mxu0 0
  %1805 = vmatprep.subr.bf16.mxu0 0
  %1806 = vmatpush1.bf16.msra.mxu0 0
  %1807 = vmatprep.subr.bf16.mxu0 0
  %1808 = vmatpush1.bf16.msra.mxu0 0
  %1809 = vmatprep.subr.bf16.mxu0 0
  %1810 = vmatpush1.bf16.msra.mxu0 0
  %1811 = vmatprep.subr.bf16.mxu0 0
  %1812 = vmatpush1.bf16.msra.mxu0 0
  %1813 = vmatprep.subr.bf16.mxu0 0
  %1814 = vmatpush1.bf16.msra.mxu0 %v1797
  %1815 = vmatprep.subr.bf16.mxu0 0
  %1816 = vmatpush2.bf16.msra.mxu0 0
  %1817 = vmatprep.subr.bf16.mxu0 0
  %1818 = vmatpush2.bf16.msra.mxu0 0
  %1819 = vmatprep.subr.bf16.mxu0 0
  %1820 = vmatpush2.bf16.msra.mxu0 0
  %1821 = vmatprep.subr.bf16.mxu0 0
  %1822 = vmatpush2.bf16.msra.mxu0 0
  %1823 = vmatprep.subr.bf16.mxu0 0
  %1824 = vmatpush2.bf16.msra.mxu0 0
  %1825 = vmatprep.subr.bf16.mxu0 0
  %1826 = vmatpush2.bf16.msra.mxu0 0
  %1827 = vmatprep.subr.bf16.mxu0 0
  %1828 = vmatpush2.bf16.msra.mxu0 0
  %1829 = vmatprep.subr.bf16.mxu0 0
  %1830 = vmatpush2.bf16.msra.mxu0 0
  %1831 = vmatprep.mubr.bf16.mxu0 0
  %1832 = vmatmul.mubr.bf16.gmra.mxu0 %v1701
  %v1833 = vpop.f32.mrf.mxu0
  %v1834 = vadd.f32 %v1446, %v1833
  %v1835 = vpop.f32.mrf.mxu0
  %v1836 = vpop.f32.mrf.mxu0
  %v1837 = vadd.f32 %v1449, %v1836
  %v1838 = vpop.f32.mrf.mxu0
  %1839 = vmatprep.mubr.bf16.mxu0 0
  %1840 = vmatmul.mubr.bf16.gmra.mxu0 %v1704
  %v1841 = vpop.f32.mrf.mxu0
  %v1842 = vadd.f32 %v1454, %v1841
  %v1843 = vpop.f32.mrf.mxu0
  %v1844 = vpop.f32.mrf.mxu0
  %v1845 = vadd.f32 %v1457, %v1844
  %v1846 = vpop.f32.mrf.mxu0
  %1847 = vmatprep.mubr.bf16.mxu0 0
  %1848 = vmatmul.mubr.bf16.gmra.mxu0 %v1707
  %v1849 = vpop.f32.mrf.mxu0
  %v1850 = vadd.f32 %v1462, %v1849
  %v1851 = vpop.f32.mrf.mxu0
  %v1852 = vpop.f32.mrf.mxu0
  %v1853 = vadd.f32 %v1465, %v1852
  %v1854 = vpop.f32.mrf.mxu0
  %1855 = vmatprep.mubr.bf16.mxu0 0
  %1856 = vmatmul.mubr.bf16.gmra.mxu0 %v1710
  %v1857 = vpop.f32.mrf.mxu0
  %v1858 = vadd.f32 %v1470, %v1857
  %v1859 = vpop.f32.mrf.mxu0
  %v1860 = vpop.f32.mrf.mxu0
  %v1861 = vadd.f32 %v1473, %v1860
  %v1862 = vpop.f32.mrf.mxu0
  %1863 = vmatprep.mubr.bf16.mxu0 0
  %1864 = vmatmul.mubr.bf16.gmra.mxu0 %v1713
  %v1865 = vpop.f32.mrf.mxu0
  %v1866 = vadd.f32 %v1478, %v1865
  %v1867 = vpop.f32.mrf.mxu0
  %v1868 = vpop.f32.mrf.mxu0
  %v1869 = vadd.f32 %v1481, %v1868
  %v1870 = vpop.f32.mrf.mxu0
  %1871 = vmatprep.mubr.bf16.mxu0 0
  %1872 = vmatmul.mubr.bf16.gmra.mxu0 %v1716
  %v1873 = vpop.f32.mrf.mxu0
  %v1874 = vadd.f32 %v1486, %v1873
  %v1875 = vpop.f32.mrf.mxu0
  %v1876 = vpop.f32.mrf.mxu0
  %v1877 = vadd.f32 %v1489, %v1876
  %v1878 = vpop.f32.mrf.mxu0
  %1879 = vmatprep.mubr.bf16.mxu0 0
  %1880 = vmatmul.mubr.bf16.gmra.mxu0 %v1719
  %v1881 = vpop.f32.mrf.mxu0
  %v1882 = vadd.f32 %v1494, %v1881
  %v1883 = vpop.f32.mrf.mxu0
  %v1884 = vpop.f32.mrf.mxu0
  %v1885 = vadd.f32 %v1497, %v1884
  %v1886 = vpop.f32.mrf.mxu0
  %1887 = vmatprep.mubr.bf16.mxu0 0
  %1888 = vmatmul.mubr.bf16.gmra.mxu0 %v1722
  %v1889 = vpop.f32.mrf.mxu0
  %v1890 = vadd.f32 %v1502, %v1889
  %v1891 = vpop.f32.mrf.mxu0
  %v1892 = vpop.f32.mrf.mxu0
  %v1893 = vadd.f32 %v1505, %v1892
  %v1894 = vpop.f32.mrf.mxu0
  %1895 = vmatprep.mubr.bf16.mxu0 0
  %1896 = vmatmul.mubr.bf16.gmra.mxu0 %v1725
  %v1897 = vpop.f32.mrf.mxu0
  %v1898 = vadd.f32 %v1510, %v1897
  %v1899 = vpop.f32.mrf.mxu0
  %v1900 = vpop.f32.mrf.mxu0
  %v1901 = vadd.f32 %v1513, %v1900
  %v1902 = vpop.f32.mrf.mxu0
  %1903 = vmatprep.mubr.bf16.mxu0 0
  %1904 = vmatmul.mubr.bf16.gmra.mxu0 %v1728
  %v1905 = vpop.f32.mrf.mxu0
  %v1906 = vadd.f32 %v1518, %v1905
  %v1907 = vpop.f32.mrf.mxu0
  %v1908 = vpop.f32.mrf.mxu0
  %v1909 = vadd.f32 %v1521, %v1908
  %v1910 = vpop.f32.mrf.mxu0
  %1911 = vmatprep.mubr.bf16.mxu0 0
  %1912 = vmatmul.mubr.bf16.gmra.mxu0 %v1731
  %v1913 = vpop.f32.mrf.mxu0
  %v1914 = vadd.f32 %v1526, %v1913
  %v1915 = vpop.f32.mrf.mxu0
  %v1916 = vpop.f32.mrf.mxu0
  %v1917 = vadd.f32 %v1529, %v1916
  %v1918 = vpop.f32.mrf.mxu0
  %1919 = vmatprep.mubr.bf16.mxu0 0
  %1920 = vmatmul.mubr.bf16.gmra.mxu0 %v1734
  %v1921 = vpop.f32.mrf.mxu0
  %v1922 = vadd.f32 %v1534, %v1921
  %v1923 = vpop.f32.mrf.mxu0
  %v1924 = vpop.f32.mrf.mxu0
  %v1925 = vadd.f32 %v1537, %v1924
  %v1926 = vpop.f32.mrf.mxu0
  %1927 = vmatprep.mubr.bf16.mxu0 0
  %1928 = vmatmul.mubr.bf16.gmra.mxu0 %v1737
  %v1929 = vpop.f32.mrf.mxu0
  %v1930 = vadd.f32 %v1542, %v1929
  %v1931 = vpop.f32.mrf.mxu0
  %v1932 = vpop.f32.mrf.mxu0
  %v1933 = vadd.f32 %v1545, %v1932
  %v1934 = vpop.f32.mrf.mxu0
  %1935 = vmatprep.mubr.bf16.mxu0 0
  %1936 = vmatmul.mubr.bf16.gmra.mxu0 %v1740
  %v1937 = vpop.f32.mrf.mxu0
  %v1938 = vadd.f32 %v1550, %v1937
  %v1939 = vpop.f32.mrf.mxu0
  %v1940 = vpop.f32.mrf.mxu0
  %v1941 = vadd.f32 %v1553, %v1940
  %v1942 = vpop.f32.mrf.mxu0
  %1943 = vmatprep.mubr.bf16.mxu0 0
  %1944 = vmatmul.mubr.bf16.gmra.mxu0 %v1743
  %v1945 = vpop.f32.mrf.mxu0
  %v1946 = vadd.f32 %v1558, %v1945
  %v1947 = vpop.f32.mrf.mxu0
  %v1948 = vpop.f32.mrf.mxu0
  %v1949 = vadd.f32 %v1561, %v1948
  %v1950 = vpop.f32.mrf.mxu0
  %1951 = vmatprep.mubr.bf16.mxu0 0
  %1952 = vmatmul.mubr.bf16.gmra.mxu0 %v1746
  %v1953 = vpop.f32.mrf.mxu0
  %v1954 = vadd.f32 %v1566, %v1953
  %v1955 = vpop.f32.mrf.mxu0
  %v1956 = vpop.f32.mrf.mxu0
  %v1957 = vadd.f32 %v1569, %v1956
  %v1958 = vpop.f32.mrf.mxu0
  %1959 = vmatprep.mubr.bf16.mxu0 0
  %1960 = vmatmul.mubr.bf16.gmra.mxu0 %v1749
  %v1961 = vpop.f32.mrf.mxu0
  %v1962 = vadd.f32 %v1574, %v1961
  %v1963 = vpop.f32.mrf.mxu0
  %v1964 = vpop.f32.mrf.mxu0
  %v1965 = vadd.f32 %v1577, %v1964
  %v1966 = vpop.f32.mrf.mxu0
  %1967 = vmatprep.mubr.bf16.mxu0 0
  %1968 = vmatmul.mubr.bf16.gmra.mxu0 %v1752
  %v1969 = vpop.f32.mrf.mxu0
  %v1970 = vadd.f32 %v1582, %v1969
  %v1971 = vpop.f32.mrf.mxu0
  %v1972 = vpop.f32.mrf.mxu0
  %v1973 = vadd.f32 %v1585, %v1972
  %v1974 = vpop.f32.mrf.mxu0
  %1975 = vmatprep.mubr.bf16.mxu0 0
  %1976 = vmatmul.mubr.bf16.gmra.mxu0 %v1755
  %v1977 = vpop.f32.mrf.mxu0
  %v1978 = vadd.f32 %v1590, %v1977
  %v1979 = vpop.f32.mrf.mxu0
  %v1980 = vpop.f32.mrf.mxu0
  %v1981 = vadd.f32 %v1593, %v1980
  %v1982 = vpop.f32.mrf.mxu0
  %1983 = vmatprep.mubr.bf16.mxu0 0
  %1984 = vmatmul.mubr.bf16.gmra.mxu0 %v1758
  %v1985 = vpop.f32.mrf.mxu0
  %v1986 = vadd.f32 %v1598, %v1985
  %v1987 = vpop.f32.mrf.mxu0
  %v1988 = vpop.f32.mrf.mxu0
  %v1989 = vadd.f32 %v1601, %v1988
  %v1990 = vpop.f32.mrf.mxu0
  %1991 = vmatprep.mubr.bf16.mxu0 0
  %1992 = vmatmul.mubr.bf16.gmra.mxu0 %v1761
  %v1993 = vpop.f32.mrf.mxu0
  %v1994 = vadd.f32 %v1606, %v1993
  %v1995 = vpop.f32.mrf.mxu0
  %v1996 = vpop.f32.mrf.mxu0
  %v1997 = vadd.f32 %v1609, %v1996
  %v1998 = vpop.f32.mrf.mxu0
  %1999 = vmatprep.mubr.bf16.mxu0 0
  %2000 = vmatmul.mubr.bf16.gmra.mxu0 %v1764
  %v2001 = vpop.f32.mrf.mxu0
  %v2002 = vadd.f32 %v1614, %v2001
  %v2003 = vpop.f32.mrf.mxu0
  %v2004 = vpop.f32.mrf.mxu0
  %v2005 = vadd.f32 %v1617, %v2004
  %v2006 = vpop.f32.mrf.mxu0
  %2007 = vmatprep.mubr.bf16.mxu0 0
  %2008 = vmatmul.mubr.bf16.gmra.mxu0 %v1767
  %v2009 = vpop.f32.mrf.mxu0
  %v2010 = vadd.f32 %v1622, %v2009
  %v2011 = vpop.f32.mrf.mxu0
  %v2012 = vpop.f32.mrf.mxu0
  %v2013 = vadd.f32 %v1625, %v2012
  %v2014 = vpop.f32.mrf.mxu0
  %2015 = vmatprep.mubr.bf16.mxu0 0
  %2016 = vmatmul.mubr.bf16.gmra.mxu0 %v1770
  %v2017 = vpop.f32.mrf.mxu0
  %v2018 = vadd.f32 %v1630, %v2017
  %v2019 = vpop.f32.mrf.mxu0
  %v2020 = vpop.f32.mrf.mxu0
  %v2021 = vadd.f32 %v1633, %v2020
  %v2022 = vpop.f32.mrf.mxu0
  %2023 = vmatprep.mubr.bf16.mxu0 0
  %2024 = vmatmul.mubr.bf16.gmra.mxu0 %v1773
  %v2025 = vpop.f32.mrf.mxu0
  %v2026 = vadd.f32 %v1638, %v2025
  %v2027 = vpop.f32.mrf.mxu0
  %v2028 = vpop.f32.mrf.mxu0
  %v2029 = vadd.f32 %v1641, %v2028
  %v2030 = vpop.f32.mrf.mxu0
  %2031 = vmatprep.mubr.bf16.mxu0 0
  %2032 = vmatmul.mubr.bf16.gmra.mxu0 %v1776
  %v2033 = vpop.f32.mrf.mxu0
  %v2034 = vadd.f32 %v1646, %v2033
  %v2035 = vpop.f32.mrf.mxu0
  %v2036 = vpop.f32.mrf.mxu0
  %v2037 = vadd.f32 %v1649, %v2036
  %v2038 = vpop.f32.mrf.mxu0
  %2039 = vmatprep.mubr.bf16.mxu0 0
  %2040 = vmatmul.mubr.bf16.gmra.mxu0 %v1779
  %v2041 = vpop.f32.mrf.mxu0
  %v2042 = vadd.f32 %v1654, %v2041
  %v2043 = vpop.f32.mrf.mxu0
  %v2044 = vpop.f32.mrf.mxu0
  %v2045 = vadd.f32 %v1657, %v2044
  %v2046 = vpop.f32.mrf.mxu0
  %2047 = vmatprep.mubr.bf16.mxu0 0
  %2048 = vmatmul.mubr.bf16.gmra.mxu0 %v1782
  %v2049 = vpop.f32.mrf.mxu0
  %v2050 = vadd.f32 %v1662, %v2049
  %v2051 = vpop.f32.mrf.mxu0
  %v2052 = vpop.f32.mrf.mxu0
  %v2053 = vadd.f32 %v1665, %v2052
  %v2054 = vpop.f32.mrf.mxu0
  %2055 = vmatprep.mubr.bf16.mxu0 0
  %2056 = vmatmul.mubr.bf16.gmra.mxu0 %v1785
  %v2057 = vpop.f32.mrf.mxu0
  %v2058 = vadd.f32 %v1670, %v2057
  %v2059 = vpop.f32.mrf.mxu0
  %v2060 = vpop.f32.mrf.mxu0
  %v2061 = vadd.f32 %v1673, %v2060
  %v2062 = vpop.f32.mrf.mxu0
  %2063 = vmatprep.mubr.bf16.mxu0 0
  %2064 = vmatmul.mubr.bf16.gmra.mxu0 %v1788
  %v2065 = vpop.f32.mrf.mxu0
  %v2066 = vadd.f32 %v1678, %v2065
  %v2067 = vpop.f32.mrf.mxu0
  %v2068 = vpop.f32.mrf.mxu0
  %v2069 = vadd.f32 %v1681, %v2068
  %v2070 = vpop.f32.mrf.mxu0
  %2071 = vmatprep.mubr.bf16.mxu0 0
  %2072 = vmatmul.mubr.bf16.gmra.mxu0 %v1791
  %v2073 = vpop.f32.mrf.mxu0
  %v2074 = vadd.f32 %v1686, %v2073
  %v2075 = vpop.f32.mrf.mxu0
  %v2076 = vpop.f32.mrf.mxu0
  %v2077 = vadd.f32 %v1689, %v2076
  %v2078 = vpop.f32.mrf.mxu0
  %2079 = vmatprep.mubr.bf16.mxu0 0
  %2080 = vmatmul.mubr.bf16.gmra.mxu0 %v1794
  %v2081 = vpop.f32.mrf.mxu0
  %v2082 = vadd.f32 %v1694, %v2081
  %v2083 = vpop.f32.mrf.mxu0
  %v2084 = vpop.f32.mrf.mxu0
  %v2085 = vadd.f32 %v1697, %v2084
  %v2086 = vpop.f32.mrf.mxu0
  %2087 = vdwg.mxu0
  %v2088 = vld [vmem:[%s0 + $0x2] sm:$0xff]
  %v2089 = vld [vmem:[%s0 + $0xa] sm:$0xff]
  %v2090 = vld [vmem:[%s0 + $0x12] sm:$0xff]
  %v2091 = vld [vmem:[%s0 + $0x1a] sm:$0xff]
  %v2092 = vld [vmem:[%s0 + $0x22] sm:$0xff]
  %v2093 = vld [vmem:[%s0 + $0x2a] sm:$0xff]
  %v2094 = vld [vmem:[%s0 + $0x32] sm:$0xff]
  %v2095 = vld [vmem:[%s0 + $0x3a] sm:$0xff]
  %v2096 = vld [vmem:[%s0 + $0x42] sm:$0xff]
  %v2097 = vld [vmem:[%s0 + $0x4a] sm:$0xff]
  %v2098 = vld [vmem:[%s0 + $0x52] sm:$0xff]
  %v2099 = vld [vmem:[%s0 + $0x5a] sm:$0xff]
  %v2100 = vld [vmem:[%s0 + $0x62] sm:$0xff]
  %v2101 = vld [vmem:[%s0 + $0x6a] sm:$0xff]
  %v2102 = vld [vmem:[%s0 + $0x72] sm:$0xff]
  %v2103 = vld [vmem:[%s0 + $0x7a] sm:$0xff]
  %v2104 = vld [vmem:[%s0 + $0x82] sm:$0xff]
  %v2105 = vld [vmem:[%s0 + $0x8a] sm:$0xff]
  %v2106 = vld [vmem:[%s0 + $0x92] sm:$0xff]
  %v2107 = vld [vmem:[%s0 + $0x9a] sm:$0xff]
  %v2108 = vld [vmem:[%s0 + $0xa2] sm:$0xff]
  %v2109 = vld [vmem:[%s0 + $0xaa] sm:$0xff]
  %v2110 = vld [vmem:[%s0 + $0xb2] sm:$0xff]
  %v2111 = vld [vmem:[%s0 + $0xba] sm:$0xff]
  %v2112 = vld [vmem:[%s0 + $0xc2] sm:$0xff]
  %v2113 = vld [vmem:[%s0 + $0xca] sm:$0xff]
  %v2114 = vld [vmem:[%s0 + $0xd2] sm:$0xff]
  %v2115 = vld [vmem:[%s0 + $0xda] sm:$0xff]
  %v2116 = vld [vmem:[%s0 + $0xe2] sm:$0xff]
  %v2117 = vld [vmem:[%s0 + $0xea] sm:$0xff]
  %v2118 = vld [vmem:[%s0 + $0xf2] sm:$0xff]
  %v2119 = vld [vmem:[%s0 + $0xfa] sm:$0xff]
  %v2120 = vld [vmem:[%s0 + $0x102] sm:$0xff]
  %v2121 = vld [vmem:[%s0 + $0x10a] sm:$0xff]
  %v2122 = vld [vmem:[%s0 + $0x112] sm:$0xff]
  %v2123 = vld [vmem:[%s0 + $0x11a] sm:$0xff]
  %v2124 = vld [vmem:[%s0 + $0x122] sm:$0xff]
  %v2125 = vld [vmem:[%s0 + $0x12a] sm:$0xff]
  %v2126 = vld [vmem:[%s0 + $0x132] sm:$0xff]
  %v2127 = vld [vmem:[%s0 + $0x13a] sm:$0xff]
  %v2128 = vld [vmem:[%s0 + $0x142] sm:$0xff]
  %v2129 = vld [vmem:[%s0 + $0x14a] sm:$0xff]
  %v2130 = vld [vmem:[%s0 + $0x152] sm:$0xff]
  %v2131 = vld [vmem:[%s0 + $0x15a] sm:$0xff]
  %v2132 = vld [vmem:[%s0 + $0x162] sm:$0xff]
  %v2133 = vld [vmem:[%s0 + $0x16a] sm:$0xff]
  %v2134 = vld [vmem:[%s0 + $0x172] sm:$0xff]
  %v2135 = vld [vmem:[%s0 + $0x17a] sm:$0xff]
  %v2136 = vld [vmem:[%s0 + $0x182] sm:$0xff]
  %v2137 = vld [vmem:[%s0 + $0x18a] sm:$0xff]
  %v2138 = vld [vmem:[%s0 + $0x192] sm:$0xff]
  %v2139 = vld [vmem:[%s0 + $0x19a] sm:$0xff]
  %v2140 = vld [vmem:[%s0 + $0x1a2] sm:$0xff]
  %v2141 = vld [vmem:[%s0 + $0x1aa] sm:$0xff]
  %v2142 = vld [vmem:[%s0 + $0x1b2] sm:$0xff]
  %v2143 = vld [vmem:[%s0 + $0x1ba] sm:$0xff]
  %v2144 = vld [vmem:[%s0 + $0x1c2] sm:$0xff]
  %v2145 = vld [vmem:[%s0 + $0x1ca] sm:$0xff]
  %v2146 = vld [vmem:[%s0 + $0x1d2] sm:$0xff]
  %v2147 = vld [vmem:[%s0 + $0x1da] sm:$0xff]
  %v2148 = vld [vmem:[%s0 + $0x1e2] sm:$0xff]
  %v2149 = vld [vmem:[%s0 + $0x1ea] sm:$0xff]
  %v2150 = vld [vmem:[%s0 + $0x1f2] sm:$0xff]
  %v2151 = vld [vmem:[%s0 + $0x1fa] sm:$0xff]
  %vm2152 = vcmp.lt.s32.totalorder %v88, 15
  %vm2153 = vcmp.lt.s32.totalorder %v89, 15
  %vm2154 = vcmp.lt.s32.totalorder %v90, 15
  %vm2155 = vcmp.lt.s32.totalorder %v91, 15
  %vm2156 = vcmp.lt.s32.totalorder %v92, 15
  %vm2157 = vcmp.lt.s32.totalorder %v93, 15
  %vm2158 = vcmp.lt.s32.totalorder %v94, 15
  %vm2159 = vcmp.lt.s32.totalorder %v95, 15
  %vm2160 = vcmp.lt.s32.totalorder %v96, 15
  %vm2161 = vcmp.lt.s32.totalorder %v97, 15
  %vm2162 = vcmp.lt.s32.totalorder %v98, 15
  %vm2163 = vcmp.lt.s32.totalorder %v99, 15
  %vm2164 = vcmp.lt.s32.totalorder %v100, 15
  %vm2165 = vcmp.lt.s32.totalorder %v101, 15
  %vm2166 = vcmp.lt.s32.totalorder %v102, 15
  %vm2167 = vcmp.lt.s32.totalorder %v103, 15
  %vm2168 = vcmp.lt.s32.totalorder %v104, 15
  %vm2169 = vcmp.lt.s32.totalorder %v105, 15
  %vm2170 = vcmp.lt.s32.totalorder %v106, 15
  %vm2171 = vcmp.lt.s32.totalorder %v107, 15
  %vm2172 = vcmp.lt.s32.totalorder %v108, 15
  %vm2173 = vcmp.lt.s32.totalorder %v109, 15
  %vm2174 = vcmp.lt.s32.totalorder %v110, 15
  %vm2175 = vcmp.lt.s32.totalorder %v111, 15
  %vm2176 = vcmp.lt.s32.totalorder %v112, 15
  %vm2177 = vcmp.lt.s32.totalorder %v113, 15
  %vm2178 = vcmp.lt.s32.totalorder %v114, 15
  %vm2179 = vcmp.lt.s32.totalorder %v115, 15
  %vm2180 = vcmp.lt.s32.totalorder %v116, 15
  %vm2181 = vcmp.lt.s32.totalorder %v117, 15
  %vm2182 = vcmp.lt.s32.totalorder %v118, 15
  %vm2183 = vcmp.lt.s32.totalorder %v119, 15
  %vm2184 = vcmp.lt.s32.totalorder %v120, 15
  %vm2185 = vcmp.lt.s32.totalorder %v121, 15
  %vm2186 = vcmp.lt.s32.totalorder %v122, 15
  %vm2187 = vcmp.lt.s32.totalorder %v123, 15
  %vm2188 = vcmp.lt.s32.totalorder %v124, 15
  %vm2189 = vcmp.lt.s32.totalorder %v125, 15
  %vm2190 = vcmp.lt.s32.totalorder %v126, 15
  %vm2191 = vcmp.lt.s32.totalorder %v127, 15
  %vm2192 = vcmp.lt.s32.totalorder %v128, 15
  %vm2193 = vcmp.lt.s32.totalorder %v129, 15
  %vm2194 = vcmp.lt.s32.totalorder %v130, 15
  %vm2195 = vcmp.lt.s32.totalorder %v131, 15
  %vm2196 = vcmp.lt.s32.totalorder %v132, 15
  %vm2197 = vcmp.lt.s32.totalorder %v133, 15
  %vm2198 = vcmp.lt.s32.totalorder %v134, 15
  %vm2199 = vcmp.lt.s32.totalorder %v135, 15
  %vm2200 = vcmp.lt.s32.totalorder %v136, 15
  %vm2201 = vcmp.lt.s32.totalorder %v137, 15
  %vm2202 = vcmp.lt.s32.totalorder %v138, 15
  %vm2203 = vcmp.lt.s32.totalorder %v139, 15
  %vm2204 = vcmp.lt.s32.totalorder %v140, 15
  %vm2205 = vcmp.lt.s32.totalorder %v141, 15
  %vm2206 = vcmp.lt.s32.totalorder %v142, 15
  %vm2207 = vcmp.lt.s32.totalorder %v143, 15
  %vm2208 = vcmp.lt.s32.totalorder %v144, 15
  %vm2209 = vcmp.lt.s32.totalorder %v145, 15
  %vm2210 = vcmp.lt.s32.totalorder %v146, 15
  %vm2211 = vcmp.lt.s32.totalorder %v147, 15
  %vm2212 = vcmp.lt.s32.totalorder %v148, 15
  %vm2213 = vcmp.lt.s32.totalorder %v149, 15
  %vm2214 = vcmp.lt.s32.totalorder %v150, 15
  %vm2215 = vcmp.lt.s32.totalorder %v151, 15
  %vm2216 = vmand %vm216, %vm2152
  %vm2217 = vmand %vm217, %vm2153
  %vm2218 = vmand %vm218, %vm2154
  %vm2219 = vmand %vm219, %vm2155
  %vm2220 = vmand %vm220, %vm2156
  %vm2221 = vmand %vm221, %vm2157
  %vm2222 = vmand %vm222, %vm2158
  %vm2223 = vmand %vm223, %vm2159
  %vm2224 = vmand %vm224, %vm2160
  %vm2225 = vmand %vm225, %vm2161
  %vm2226 = vmand %vm226, %vm2162
  %vm2227 = vmand %vm227, %vm2163
  %vm2228 = vmand %vm228, %vm2164
  %vm2229 = vmand %vm229, %vm2165
  %vm2230 = vmand %vm230, %vm2166
  %vm2231 = vmand %vm231, %vm2167
  %vm2232 = vmand %vm232, %vm2168
  %vm2233 = vmand %vm233, %vm2169
  %vm2234 = vmand %vm234, %vm2170
  %vm2235 = vmand %vm235, %vm2171
  %vm2236 = vmand %vm236, %vm2172
  %vm2237 = vmand %vm237, %vm2173
  %vm2238 = vmand %vm238, %vm2174
  %vm2239 = vmand %vm239, %vm2175
  %vm2240 = vmand %vm240, %vm2176
  %vm2241 = vmand %vm241, %vm2177
  %vm2242 = vmand %vm242, %vm2178
  %vm2243 = vmand %vm243, %vm2179
  %vm2244 = vmand %vm244, %vm2180
  %vm2245 = vmand %vm245, %vm2181
  %vm2246 = vmand %vm246, %vm2182
  %vm2247 = vmand %vm247, %vm2183
  %vm2248 = vmand %vm248, %vm2184
  %vm2249 = vmand %vm249, %vm2185
  %vm2250 = vmand %vm250, %vm2186
  %vm2251 = vmand %vm251, %vm2187
  %vm2252 = vmand %vm252, %vm2188
  %vm2253 = vmand %vm253, %vm2189
  %vm2254 = vmand %vm254, %vm2190
  %vm2255 = vmand %vm255, %vm2191
  %vm2256 = vmand %vm256, %vm2192
  %vm2257 = vmand %vm257, %vm2193
  %vm2258 = vmand %vm258, %vm2194
  %vm2259 = vmand %vm259, %vm2195
  %vm2260 = vmand %vm260, %vm2196
  %vm2261 = vmand %vm261, %vm2197
  %vm2262 = vmand %vm262, %vm2198
  %vm2263 = vmand %vm263, %vm2199
  %vm2264 = vmand %vm264, %vm2200
  %vm2265 = vmand %vm265, %vm2201
  %vm2266 = vmand %vm266, %vm2202
  %vm2267 = vmand %vm267, %vm2203
  %vm2268 = vmand %vm268, %vm2204
  %vm2269 = vmand %vm269, %vm2205
  %vm2270 = vmand %vm270, %vm2206
  %vm2271 = vmand %vm271, %vm2207
  %vm2272 = vmand %vm272, %vm2208
  %vm2273 = vmand %vm273, %vm2209
  %vm2274 = vmand %vm274, %vm2210
  %vm2275 = vmand %vm275, %vm2211
  %vm2276 = vmand %vm276, %vm2212
  %vm2277 = vmand %vm277, %vm2213
  %vm2278 = vmand %vm278, %vm2214
  %vm2279 = vmand %vm279, %vm2215
  %v2280 = vsel %vm2216, 1, 0
  %v2281 = vsel %vm2217, 1, 0
  %v2282 = vsel %vm2218, 1, 0
  %v2283 = vsel %vm2219, 1, 0
  %v2284 = vsel %vm2220, 1, 0
  %v2285 = vsel %vm2221, 1, 0
  %v2286 = vsel %vm2222, 1, 0
  %v2287 = vsel %vm2223, 1, 0
  %v2288 = vsel %vm2224, 1, 0
  %v2289 = vsel %vm2225, 1, 0
  %v2290 = vsel %vm2226, 1, 0
  %v2291 = vsel %vm2227, 1, 0
  %v2292 = vsel %vm2228, 1, 0
  %v2293 = vsel %vm2229, 1, 0
  %v2294 = vsel %vm2230, 1, 0
  %v2295 = vsel %vm2231, 1, 0
  %v2296 = vsel %vm2232, 1, 0
  %v2297 = vsel %vm2233, 1, 0
  %v2298 = vsel %vm2234, 1, 0
  %v2299 = vsel %vm2235, 1, 0
  %v2300 = vsel %vm2236, 1, 0
  %v2301 = vsel %vm2237, 1, 0
  %v2302 = vsel %vm2238, 1, 0
  %v2303 = vsel %vm2239, 1, 0
  %v2304 = vsel %vm2240, 1, 0
  %v2305 = vsel %vm2241, 1, 0
  %v2306 = vsel %vm2242, 1, 0
  %v2307 = vsel %vm2243, 1, 0
  %v2308 = vsel %vm2244, 1, 0
  %v2309 = vsel %vm2245, 1, 0
  %v2310 = vsel %vm2246, 1, 0
  %v2311 = vsel %vm2247, 1, 0
  %v2312 = vsel %vm2248, 1, 0
  %v2313 = vsel %vm2249, 1, 0
  %v2314 = vsel %vm2250, 1, 0
  %v2315 = vsel %vm2251, 1, 0
  %v2316 = vsel %vm2252, 1, 0
  %v2317 = vsel %vm2253, 1, 0
  %v2318 = vsel %vm2254, 1, 0
  %v2319 = vsel %vm2255, 1, 0
  %v2320 = vsel %vm2256, 1, 0
  %v2321 = vsel %vm2257, 1, 0
  %v2322 = vsel %vm2258, 1, 0
  %v2323 = vsel %vm2259, 1, 0
  %v2324 = vsel %vm2260, 1, 0
  %v2325 = vsel %vm2261, 1, 0
  %v2326 = vsel %vm2262, 1, 0
  %v2327 = vsel %vm2263, 1, 0
  %v2328 = vsel %vm2264, 1, 0
  %v2329 = vsel %vm2265, 1, 0
  %v2330 = vsel %vm2266, 1, 0
  %v2331 = vsel %vm2267, 1, 0
  %v2332 = vsel %vm2268, 1, 0
  %v2333 = vsel %vm2269, 1, 0
  %v2334 = vsel %vm2270, 1, 0
  %v2335 = vsel %vm2271, 1, 0
  %v2336 = vsel %vm2272, 1, 0
  %v2337 = vsel %vm2273, 1, 0
  %v2338 = vsel %vm2274, 1, 0
  %v2339 = vsel %vm2275, 1, 0
  %v2340 = vsel %vm2276, 1, 0
  %v2341 = vsel %vm2277, 1, 0
  %v2342 = vsel %vm2278, 1, 0
  %v2343 = vsel %vm2279, 1, 0
  %2344 = vset.pattern.permute.xlu0 0
  %2345 = vperm.xlu0 %2344, %v2280
  %v2346 = vpop.permute.xlu0 %2345
  %2347 = vset.pattern.permute.xlu0 0
  %2348 = vperm.xlu0 %2347, %v2281
  %v2349 = vpop.permute.xlu0 %2348
  %2350 = vset.pattern.permute.xlu0 0
  %2351 = vperm.xlu0 %2350, %v2282
  %v2352 = vpop.permute.xlu0 %2351
  %2353 = vset.pattern.permute.xlu0 0
  %2354 = vperm.xlu0 %2353, %v2283
  %v2355 = vpop.permute.xlu0 %2354
  %2356 = vset.pattern.permute.xlu0 0
  %2357 = vperm.xlu0 %2356, %v2284
  %v2358 = vpop.permute.xlu0 %2357
  %2359 = vset.pattern.permute.xlu0 0
  %2360 = vperm.xlu0 %2359, %v2285
  %v2361 = vpop.permute.xlu0 %2360
  %2362 = vset.pattern.permute.xlu0 0
  %2363 = vperm.xlu0 %2362, %v2286
  %v2364 = vpop.permute.xlu0 %2363
  %2365 = vset.pattern.permute.xlu0 0
  %2366 = vperm.xlu0 %2365, %v2287
  %v2367 = vpop.permute.xlu0 %2366
  %2368 = vset.pattern.permute.xlu0 0
  %2369 = vperm.xlu0 %2368, %v2288
  %v2370 = vpop.permute.xlu0 %2369
  %2371 = vset.pattern.permute.xlu0 0
  %2372 = vperm.xlu0 %2371, %v2289
  %v2373 = vpop.permute.xlu0 %2372
  %2374 = vset.pattern.permute.xlu0 0
  %2375 = vperm.xlu0 %2374, %v2290
  %v2376 = vpop.permute.xlu0 %2375
  %2377 = vset.pattern.permute.xlu0 0
  %2378 = vperm.xlu0 %2377, %v2291
  %v2379 = vpop.permute.xlu0 %2378
  %2380 = vset.pattern.permute.xlu0 0
  %2381 = vperm.xlu0 %2380, %v2292
  %v2382 = vpop.permute.xlu0 %2381
  %2383 = vset.pattern.permute.xlu0 0
  %2384 = vperm.xlu0 %2383, %v2293
  %v2385 = vpop.permute.xlu0 %2384
  %2386 = vset.pattern.permute.xlu0 0
  %2387 = vperm.xlu0 %2386, %v2294
  %v2388 = vpop.permute.xlu0 %2387
  %2389 = vset.pattern.permute.xlu0 0
  %2390 = vperm.xlu0 %2389, %v2295
  %v2391 = vpop.permute.xlu0 %2390
  %2392 = vset.pattern.permute.xlu0 0
  %2393 = vperm.xlu0 %2392, %v2296
  %v2394 = vpop.permute.xlu0 %2393
  %2395 = vset.pattern.permute.xlu0 0
  %2396 = vperm.xlu0 %2395, %v2297
  %v2397 = vpop.permute.xlu0 %2396
  %2398 = vset.pattern.permute.xlu0 0
  %2399 = vperm.xlu0 %2398, %v2298
  %v2400 = vpop.permute.xlu0 %2399
  %2401 = vset.pattern.permute.xlu0 0
  %2402 = vperm.xlu0 %2401, %v2299
  %v2403 = vpop.permute.xlu0 %2402
  %2404 = vset.pattern.permute.xlu0 0
  %2405 = vperm.xlu0 %2404, %v2300
  %v2406 = vpop.permute.xlu0 %2405
  %2407 = vset.pattern.permute.xlu0 0
  %2408 = vperm.xlu0 %2407, %v2301
  %v2409 = vpop.permute.xlu0 %2408
  %2410 = vset.pattern.permute.xlu0 0
  %2411 = vperm.xlu0 %2410, %v2302
  %v2412 = vpop.permute.xlu0 %2411
  %2413 = vset.pattern.permute.xlu0 0
  %2414 = vperm.xlu0 %2413, %v2303
  %v2415 = vpop.permute.xlu0 %2414
  %2416 = vset.pattern.permute.xlu0 0
  %2417 = vperm.xlu0 %2416, %v2304
  %v2418 = vpop.permute.xlu0 %2417
  %2419 = vset.pattern.permute.xlu0 0
  %2420 = vperm.xlu0 %2419, %v2305
  %v2421 = vpop.permute.xlu0 %2420
  %2422 = vset.pattern.permute.xlu0 0
  %2423 = vperm.xlu0 %2422, %v2306
  %v2424 = vpop.permute.xlu0 %2423
  %2425 = vset.pattern.permute.xlu0 0
  %2426 = vperm.xlu0 %2425, %v2307
  %v2427 = vpop.permute.xlu0 %2426
  %2428 = vset.pattern.permute.xlu0 0
  %2429 = vperm.xlu0 %2428, %v2308
  %v2430 = vpop.permute.xlu0 %2429
  %2431 = vset.pattern.permute.xlu0 0
  %2432 = vperm.xlu0 %2431, %v2309
  %v2433 = vpop.permute.xlu0 %2432
  %2434 = vset.pattern.permute.xlu0 0
  %2435 = vperm.xlu0 %2434, %v2310
  %v2436 = vpop.permute.xlu0 %2435
  %2437 = vset.pattern.permute.xlu0 0
  %2438 = vperm.xlu0 %2437, %v2311
  %v2439 = vpop.permute.xlu0 %2438
  %2440 = vset.pattern.permute.xlu0 0
  %2441 = vperm.xlu0 %2440, %v2312
  %v2442 = vpop.permute.xlu0 %2441
  %2443 = vset.pattern.permute.xlu0 0
  %2444 = vperm.xlu0 %2443, %v2313
  %v2445 = vpop.permute.xlu0 %2444
  %2446 = vset.pattern.permute.xlu0 0
  %2447 = vperm.xlu0 %2446, %v2314
  %v2448 = vpop.permute.xlu0 %2447
  %2449 = vset.pattern.permute.xlu0 0
  %2450 = vperm.xlu0 %2449, %v2315
  %v2451 = vpop.permute.xlu0 %2450
  %2452 = vset.pattern.permute.xlu0 0
  %2453 = vperm.xlu0 %2452, %v2316
  %v2454 = vpop.permute.xlu0 %2453
  %2455 = vset.pattern.permute.xlu0 0
  %2456 = vperm.xlu0 %2455, %v2317
  %v2457 = vpop.permute.xlu0 %2456
  %2458 = vset.pattern.permute.xlu0 0
  %2459 = vperm.xlu0 %2458, %v2318
  %v2460 = vpop.permute.xlu0 %2459
  %2461 = vset.pattern.permute.xlu0 0
  %2462 = vperm.xlu0 %2461, %v2319
  %v2463 = vpop.permute.xlu0 %2462
  %2464 = vset.pattern.permute.xlu0 0
  %2465 = vperm.xlu0 %2464, %v2320
  %v2466 = vpop.permute.xlu0 %2465
  %2467 = vset.pattern.permute.xlu0 0
  %2468 = vperm.xlu0 %2467, %v2321
  %v2469 = vpop.permute.xlu0 %2468
  %2470 = vset.pattern.permute.xlu0 0
  %2471 = vperm.xlu0 %2470, %v2322
  %v2472 = vpop.permute.xlu0 %2471
  %2473 = vset.pattern.permute.xlu0 0
  %2474 = vperm.xlu0 %2473, %v2323
  %v2475 = vpop.permute.xlu0 %2474
  %2476 = vset.pattern.permute.xlu0 0
  %2477 = vperm.xlu0 %2476, %v2324
  %v2478 = vpop.permute.xlu0 %2477
  %2479 = vset.pattern.permute.xlu0 0
  %2480 = vperm.xlu0 %2479, %v2325
  %v2481 = vpop.permute.xlu0 %2480
  %2482 = vset.pattern.permute.xlu0 0
  %2483 = vperm.xlu0 %2482, %v2326
  %v2484 = vpop.permute.xlu0 %2483
  %2485 = vset.pattern.permute.xlu0 0
  %2486 = vperm.xlu0 %2485, %v2327
  %v2487 = vpop.permute.xlu0 %2486
  %2488 = vset.pattern.permute.xlu0 0
  %2489 = vperm.xlu0 %2488, %v2328
  %v2490 = vpop.permute.xlu0 %2489
  %2491 = vset.pattern.permute.xlu0 0
  %2492 = vperm.xlu0 %2491, %v2329
  %v2493 = vpop.permute.xlu0 %2492
  %2494 = vset.pattern.permute.xlu0 0
  %2495 = vperm.xlu0 %2494, %v2330
  %v2496 = vpop.permute.xlu0 %2495
  %2497 = vset.pattern.permute.xlu0 0
  %2498 = vperm.xlu0 %2497, %v2331
  %v2499 = vpop.permute.xlu0 %2498
  %2500 = vset.pattern.permute.xlu0 0
  %2501 = vperm.xlu0 %2500, %v2332
  %v2502 = vpop.permute.xlu0 %2501
  %2503 = vset.pattern.permute.xlu0 0
  %2504 = vperm.xlu0 %2503, %v2333
  %v2505 = vpop.permute.xlu0 %2504
  %2506 = vset.pattern.permute.xlu0 0
  %2507 = vperm.xlu0 %2506, %v2334
  %v2508 = vpop.permute.xlu0 %2507
  %2509 = vset.pattern.permute.xlu0 0
  %2510 = vperm.xlu0 %2509, %v2335
  %v2511 = vpop.permute.xlu0 %2510
  %2512 = vset.pattern.permute.xlu0 0
  %2513 = vperm.xlu0 %2512, %v2336
  %v2514 = vpop.permute.xlu0 %2513
  %2515 = vset.pattern.permute.xlu0 0
  %2516 = vperm.xlu0 %2515, %v2337
  %v2517 = vpop.permute.xlu0 %2516
  %2518 = vset.pattern.permute.xlu0 0
  %2519 = vperm.xlu0 %2518, %v2338
  %v2520 = vpop.permute.xlu0 %2519
  %2521 = vset.pattern.permute.xlu0 0
  %2522 = vperm.xlu0 %2521, %v2339
  %v2523 = vpop.permute.xlu0 %2522
  %2524 = vset.pattern.permute.xlu0 0
  %2525 = vperm.xlu0 %2524, %v2340
  %v2526 = vpop.permute.xlu0 %2525
  %2527 = vset.pattern.permute.xlu0 0
  %2528 = vperm.xlu0 %2527, %v2341
  %v2529 = vpop.permute.xlu0 %2528
  %2530 = vset.pattern.permute.xlu0 0
  %2531 = vperm.xlu0 %2530, %v2342
  %v2532 = vpop.permute.xlu0 %2531
  %2533 = vset.pattern.permute.xlu0 0
  %2534 = vperm.xlu0 %2533, %v2343
  %v2535 = vpop.permute.xlu0 %2534
  %vm2536 = vcmp.eq.s32.totalorder %v2346, 1
  %vm2537 = vcmp.eq.s32.totalorder %v2349, 1
  %vm2538 = vcmp.eq.s32.totalorder %v2352, 1
  %vm2539 = vcmp.eq.s32.totalorder %v2355, 1
  %vm2540 = vcmp.eq.s32.totalorder %v2358, 1
  %vm2541 = vcmp.eq.s32.totalorder %v2361, 1
  %vm2542 = vcmp.eq.s32.totalorder %v2364, 1
  %vm2543 = vcmp.eq.s32.totalorder %v2367, 1
  %vm2544 = vcmp.eq.s32.totalorder %v2370, 1
  %vm2545 = vcmp.eq.s32.totalorder %v2373, 1
  %vm2546 = vcmp.eq.s32.totalorder %v2376, 1
  %vm2547 = vcmp.eq.s32.totalorder %v2379, 1
  %vm2548 = vcmp.eq.s32.totalorder %v2382, 1
  %vm2549 = vcmp.eq.s32.totalorder %v2385, 1
  %vm2550 = vcmp.eq.s32.totalorder %v2388, 1
  %vm2551 = vcmp.eq.s32.totalorder %v2391, 1
  %vm2552 = vcmp.eq.s32.totalorder %v2394, 1
  %vm2553 = vcmp.eq.s32.totalorder %v2397, 1
  %vm2554 = vcmp.eq.s32.totalorder %v2400, 1
  %vm2555 = vcmp.eq.s32.totalorder %v2403, 1
  %vm2556 = vcmp.eq.s32.totalorder %v2406, 1
  %vm2557 = vcmp.eq.s32.totalorder %v2409, 1
  %vm2558 = vcmp.eq.s32.totalorder %v2412, 1
  %vm2559 = vcmp.eq.s32.totalorder %v2415, 1
  %vm2560 = vcmp.eq.s32.totalorder %v2418, 1
  %vm2561 = vcmp.eq.s32.totalorder %v2421, 1
  %vm2562 = vcmp.eq.s32.totalorder %v2424, 1
  %vm2563 = vcmp.eq.s32.totalorder %v2427, 1
  %vm2564 = vcmp.eq.s32.totalorder %v2430, 1
  %vm2565 = vcmp.eq.s32.totalorder %v2433, 1
  %vm2566 = vcmp.eq.s32.totalorder %v2436, 1
  %vm2567 = vcmp.eq.s32.totalorder %v2439, 1
  %vm2568 = vcmp.eq.s32.totalorder %v2442, 1
  %vm2569 = vcmp.eq.s32.totalorder %v2445, 1
  %vm2570 = vcmp.eq.s32.totalorder %v2448, 1
  %vm2571 = vcmp.eq.s32.totalorder %v2451, 1
  %vm2572 = vcmp.eq.s32.totalorder %v2454, 1
  %vm2573 = vcmp.eq.s32.totalorder %v2457, 1
  %vm2574 = vcmp.eq.s32.totalorder %v2460, 1
  %vm2575 = vcmp.eq.s32.totalorder %v2463, 1
  %vm2576 = vcmp.eq.s32.totalorder %v2466, 1
  %vm2577 = vcmp.eq.s32.totalorder %v2469, 1
  %vm2578 = vcmp.eq.s32.totalorder %v2472, 1
  %vm2579 = vcmp.eq.s32.totalorder %v2475, 1
  %vm2580 = vcmp.eq.s32.totalorder %v2478, 1
  %vm2581 = vcmp.eq.s32.totalorder %v2481, 1
  %vm2582 = vcmp.eq.s32.totalorder %v2484, 1
  %vm2583 = vcmp.eq.s32.totalorder %v2487, 1
  %vm2584 = vcmp.eq.s32.totalorder %v2490, 1
  %vm2585 = vcmp.eq.s32.totalorder %v2493, 1
  %vm2586 = vcmp.eq.s32.totalorder %v2496, 1
  %vm2587 = vcmp.eq.s32.totalorder %v2499, 1
  %vm2588 = vcmp.eq.s32.totalorder %v2502, 1
  %vm2589 = vcmp.eq.s32.totalorder %v2505, 1
  %vm2590 = vcmp.eq.s32.totalorder %v2508, 1
  %vm2591 = vcmp.eq.s32.totalorder %v2511, 1
  %vm2592 = vcmp.eq.s32.totalorder %v2514, 1
  %vm2593 = vcmp.eq.s32.totalorder %v2517, 1
  %vm2594 = vcmp.eq.s32.totalorder %v2520, 1
  %vm2595 = vcmp.eq.s32.totalorder %v2523, 1
  %vm2596 = vcmp.eq.s32.totalorder %v2526, 1
  %vm2597 = vcmp.eq.s32.totalorder %v2529, 1
  %vm2598 = vcmp.eq.s32.totalorder %v2532, 1
  %vm2599 = vcmp.eq.s32.totalorder %v2535, 1
  %v2600 = vsel %vm2536, %v2088, 0.0
  %v2601 = vsel %vm2537, %v2089, 0.0
  %v2602 = vsel %vm2538, %v2090, 0.0
  %v2603 = vsel %vm2539, %v2091, 0.0
  %v2604 = vsel %vm2540, %v2092, 0.0
  %v2605 = vsel %vm2541, %v2093, 0.0
  %v2606 = vsel %vm2542, %v2094, 0.0
  %v2607 = vsel %vm2543, %v2095, 0.0
  %v2608 = vsel %vm2544, %v2096, 0.0
  %v2609 = vsel %vm2545, %v2097, 0.0
  %v2610 = vsel %vm2546, %v2098, 0.0
  %v2611 = vsel %vm2547, %v2099, 0.0
  %v2612 = vsel %vm2548, %v2100, 0.0
  %v2613 = vsel %vm2549, %v2101, 0.0
  %v2614 = vsel %vm2550, %v2102, 0.0
  %v2615 = vsel %vm2551, %v2103, 0.0
  %v2616 = vsel %vm2552, %v2104, 0.0
  %v2617 = vsel %vm2553, %v2105, 0.0
  %v2618 = vsel %vm2554, %v2106, 0.0
  %v2619 = vsel %vm2555, %v2107, 0.0
  %v2620 = vsel %vm2556, %v2108, 0.0
  %v2621 = vsel %vm2557, %v2109, 0.0
  %v2622 = vsel %vm2558, %v2110, 0.0
  %v2623 = vsel %vm2559, %v2111, 0.0
  %v2624 = vsel %vm2560, %v2112, 0.0
  %v2625 = vsel %vm2561, %v2113, 0.0
  %v2626 = vsel %vm2562, %v2114, 0.0
  %v2627 = vsel %vm2563, %v2115, 0.0
  %v2628 = vsel %vm2564, %v2116, 0.0
  %v2629 = vsel %vm2565, %v2117, 0.0
  %v2630 = vsel %vm2566, %v2118, 0.0
  %v2631 = vsel %vm2567, %v2119, 0.0
  %v2632 = vsel %vm2568, %v2120, 0.0
  %v2633 = vsel %vm2569, %v2121, 0.0
  %v2634 = vsel %vm2570, %v2122, 0.0
  %v2635 = vsel %vm2571, %v2123, 0.0
  %v2636 = vsel %vm2572, %v2124, 0.0
  %v2637 = vsel %vm2573, %v2125, 0.0
  %v2638 = vsel %vm2574, %v2126, 0.0
  %v2639 = vsel %vm2575, %v2127, 0.0
  %v2640 = vsel %vm2576, %v2128, 0.0
  %v2641 = vsel %vm2577, %v2129, 0.0
  %v2642 = vsel %vm2578, %v2130, 0.0
  %v2643 = vsel %vm2579, %v2131, 0.0
  %v2644 = vsel %vm2580, %v2132, 0.0
  %v2645 = vsel %vm2581, %v2133, 0.0
  %v2646 = vsel %vm2582, %v2134, 0.0
  %v2647 = vsel %vm2583, %v2135, 0.0
  %v2648 = vsel %vm2584, %v2136, 0.0
  %v2649 = vsel %vm2585, %v2137, 0.0
  %v2650 = vsel %vm2586, %v2138, 0.0
  %v2651 = vsel %vm2587, %v2139, 0.0
  %v2652 = vsel %vm2588, %v2140, 0.0
  %v2653 = vsel %vm2589, %v2141, 0.0
  %v2654 = vsel %vm2590, %v2142, 0.0
  %v2655 = vsel %vm2591, %v2143, 0.0
  %v2656 = vsel %vm2592, %v2144, 0.0
  %v2657 = vsel %vm2593, %v2145, 0.0
  %v2658 = vsel %vm2594, %v2146, 0.0
  %v2659 = vsel %vm2595, %v2147, 0.0
  %v2660 = vsel %vm2596, %v2148, 0.0
  %v2661 = vsel %vm2597, %v2149, 0.0
  %v2662 = vsel %vm2598, %v2150, 0.0
  %v2663 = vsel %vm2599, %v2151, 0.0
  %v2664 = vpack.c.bf16 %v2601, %v2600
  %v2665 = vpack.c.bf16 %v2603, %v2602
  %v2666 = vpack.c.bf16 %v2605, %v2604
  %v2667 = vpack.c.bf16 %v2607, %v2606
  %v2668 = vpack.c.bf16 %v2609, %v2608
  %v2669 = vpack.c.bf16 %v2611, %v2610
  %v2670 = vpack.c.bf16 %v2613, %v2612
  %v2671 = vpack.c.bf16 %v2615, %v2614
  %v2672 = vpack.c.bf16 %v2617, %v2616
  %v2673 = vpack.c.bf16 %v2619, %v2618
  %v2674 = vpack.c.bf16 %v2621, %v2620
  %v2675 = vpack.c.bf16 %v2623, %v2622
  %v2676 = vpack.c.bf16 %v2625, %v2624
  %v2677 = vpack.c.bf16 %v2627, %v2626
  %v2678 = vpack.c.bf16 %v2629, %v2628
  %v2679 = vpack.c.bf16 %v2631, %v2630
  %v2680 = vpack.c.bf16 %v2633, %v2632
  %v2681 = vpack.c.bf16 %v2635, %v2634
  %v2682 = vpack.c.bf16 %v2637, %v2636
  %v2683 = vpack.c.bf16 %v2639, %v2638
  %v2684 = vpack.c.bf16 %v2641, %v2640
  %v2685 = vpack.c.bf16 %v2643, %v2642
  %v2686 = vpack.c.bf16 %v2645, %v2644
  %v2687 = vpack.c.bf16 %v2647, %v2646
  %v2688 = vpack.c.bf16 %v2649, %v2648
  %v2689 = vpack.c.bf16 %v2651, %v2650
  %v2690 = vpack.c.bf16 %v2653, %v2652
  %v2691 = vpack.c.bf16 %v2655, %v2654
  %v2692 = vpack.c.bf16 %v2657, %v2656
  %v2693 = vpack.c.bf16 %v2659, %v2658
  %v2694 = vpack.c.bf16 %v2661, %v2660
  %v2695 = vpack.c.bf16 %v2663, %v2662
  %s2696 = scalar_lea.vmem %s3, 4
  %v2697 = vld [vmem:[%s2696] sm:$0x3]
  %v2699 = vsel %vm1307, %v2664, 0
  %v2702 = vsel %vm1307, %v2665, 0
  %v2705 = vsel %vm1307, %v2666, 0
  %v2708 = vsel %vm1307, %v2667, 0
  %v2711 = vsel %vm1307, %v2668, 0
  %v2714 = vsel %vm1307, %v2669, 0
  %v2717 = vsel %vm1307, %v2670, 0
  %v2720 = vsel %vm1307, %v2671, 0
  %v2723 = vsel %vm1307, %v2672, 0
  %v2726 = vsel %vm1307, %v2673, 0
  %v2729 = vsel %vm1307, %v2674, 0
  %v2732 = vsel %vm1307, %v2675, 0
  %v2735 = vsel %vm1307, %v2676, 0
  %v2738 = vsel %vm1307, %v2677, 0
  %v2741 = vsel %vm1307, %v2678, 0
  %v2744 = vsel %vm1307, %v2679, 0
  %v2747 = vsel %vm1307, %v2680, 0
  %v2750 = vsel %vm1307, %v2681, 0
  %v2753 = vsel %vm1307, %v2682, 0
  %v2756 = vsel %vm1307, %v2683, 0
  %v2759 = vsel %vm1307, %v2684, 0
  %v2762 = vsel %vm1307, %v2685, 0
  %v2765 = vsel %vm1307, %v2686, 0
  %v2768 = vsel %vm1307, %v2687, 0
  %v2771 = vsel %vm1307, %v2688, 0
  %v2774 = vsel %vm1307, %v2689, 0
  %v2777 = vsel %vm1307, %v2690, 0
  %v2780 = vsel %vm1307, %v2691, 0
  %v2783 = vsel %vm1307, %v2692, 0
  %v2786 = vsel %vm1307, %v2693, 0
  %v2789 = vsel %vm1307, %v2694, 0
  %v2792 = vsel %vm1307, %v2695, 0
  %v2795 = vand.u32 %v2697, %v1407
  %2797 = vmatprep.subr.bf16.mxu0 0
  %2798 = vmatpush1.bf16.msra.mxu0 0
  %2799 = vmatprep.subr.bf16.mxu0 0
  %2800 = vmatpush1.bf16.msra.mxu0 0
  %2801 = vmatprep.subr.bf16.mxu0 0
  %2802 = vmatpush1.bf16.msra.mxu0 0
  %2803 = vmatprep.subr.bf16.mxu0 0
  %2804 = vmatpush1.bf16.msra.mxu0 0
  %2805 = vmatprep.subr.bf16.mxu0 0
  %2806 = vmatpush1.bf16.msra.mxu0 0
  %2807 = vmatprep.subr.bf16.mxu0 0
  %2808 = vmatpush1.bf16.msra.mxu0 0
  %2809 = vmatprep.subr.bf16.mxu0 0
  %2810 = vmatpush1.bf16.msra.mxu0 0
  %2811 = vmatprep.subr.bf16.mxu0 0
  %2812 = vmatpush1.bf16.msra.mxu0 %v2795
  %2813 = vmatprep.subr.bf16.mxu0 0
  %2814 = vmatpush2.bf16.msra.mxu0 0
  %2815 = vmatprep.subr.bf16.mxu0 0
  %2816 = vmatpush2.bf16.msra.mxu0 0
  %2817 = vmatprep.subr.bf16.mxu0 0
  %2818 = vmatpush2.bf16.msra.mxu0 0
  %2819 = vmatprep.subr.bf16.mxu0 0
  %2820 = vmatpush2.bf16.msra.mxu0 0
  %2821 = vmatprep.subr.bf16.mxu0 0
  %2822 = vmatpush2.bf16.msra.mxu0 0
  %2823 = vmatprep.subr.bf16.mxu0 0
  %2824 = vmatpush2.bf16.msra.mxu0 0
  %2825 = vmatprep.subr.bf16.mxu0 0
  %2826 = vmatpush2.bf16.msra.mxu0 0
  %2827 = vmatprep.subr.bf16.mxu0 0
  %2828 = vmatpush2.bf16.msra.mxu0 0
  %2829 = vmatprep.mubr.bf16.mxu0 0
  %2830 = vmatmul.mubr.bf16.gmra.mxu0 %v2699
  %v2831 = vpop.f32.mrf.mxu0
  %v2832 = vadd.f32 0.0, %v2831
  %v2833 = vpop.f32.mrf.mxu0
  %v2834 = vpop.f32.mrf.mxu0
  %v2835 = vadd.f32 0.0, %v2834
  %v2836 = vpop.f32.mrf.mxu0
  %2837 = vmatprep.mubr.bf16.mxu0 0
  %2838 = vmatmul.mubr.bf16.gmra.mxu0 %v2702
  %v2839 = vpop.f32.mrf.mxu0
  %v2840 = vadd.f32 0.0, %v2839
  %v2841 = vpop.f32.mrf.mxu0
  %v2842 = vpop.f32.mrf.mxu0
  %v2843 = vadd.f32 0.0, %v2842
  %v2844 = vpop.f32.mrf.mxu0
  %2845 = vmatprep.mubr.bf16.mxu0 0
  %2846 = vmatmul.mubr.bf16.gmra.mxu0 %v2705
  %v2847 = vpop.f32.mrf.mxu0
  %v2848 = vadd.f32 0.0, %v2847
  %v2849 = vpop.f32.mrf.mxu0
  %v2850 = vpop.f32.mrf.mxu0
  %v2851 = vadd.f32 0.0, %v2850
  %v2852 = vpop.f32.mrf.mxu0
  %2853 = vmatprep.mubr.bf16.mxu0 0
  %2854 = vmatmul.mubr.bf16.gmra.mxu0 %v2708
  %v2855 = vpop.f32.mrf.mxu0
  %v2856 = vadd.f32 0.0, %v2855
  %v2857 = vpop.f32.mrf.mxu0
  %v2858 = vpop.f32.mrf.mxu0
  %v2859 = vadd.f32 0.0, %v2858
  %v2860 = vpop.f32.mrf.mxu0
  %2861 = vmatprep.mubr.bf16.mxu0 0
  %2862 = vmatmul.mubr.bf16.gmra.mxu0 %v2711
  %v2863 = vpop.f32.mrf.mxu0
  %v2864 = vadd.f32 0.0, %v2863
  %v2865 = vpop.f32.mrf.mxu0
  %v2866 = vpop.f32.mrf.mxu0
  %v2867 = vadd.f32 0.0, %v2866
  %v2868 = vpop.f32.mrf.mxu0
  %2869 = vmatprep.mubr.bf16.mxu0 0
  %2870 = vmatmul.mubr.bf16.gmra.mxu0 %v2714
  %v2871 = vpop.f32.mrf.mxu0
  %v2872 = vadd.f32 0.0, %v2871
  %v2873 = vpop.f32.mrf.mxu0
  %v2874 = vpop.f32.mrf.mxu0
  %v2875 = vadd.f32 0.0, %v2874
  %v2876 = vpop.f32.mrf.mxu0
  %2877 = vmatprep.mubr.bf16.mxu0 0
  %2878 = vmatmul.mubr.bf16.gmra.mxu0 %v2717
  %v2879 = vpop.f32.mrf.mxu0
  %v2880 = vadd.f32 0.0, %v2879
  %v2881 = vpop.f32.mrf.mxu0
  %v2882 = vpop.f32.mrf.mxu0
  %v2883 = vadd.f32 0.0, %v2882
  %v2884 = vpop.f32.mrf.mxu0
  %2885 = vmatprep.mubr.bf16.mxu0 0
  %2886 = vmatmul.mubr.bf16.gmra.mxu0 %v2720
  %v2887 = vpop.f32.mrf.mxu0
  %v2888 = vadd.f32 0.0, %v2887
  %v2889 = vpop.f32.mrf.mxu0
  %v2890 = vpop.f32.mrf.mxu0
  %v2891 = vadd.f32 0.0, %v2890
  %v2892 = vpop.f32.mrf.mxu0
  %2893 = vmatprep.mubr.bf16.mxu0 0
  %2894 = vmatmul.mubr.bf16.gmra.mxu0 %v2723
  %v2895 = vpop.f32.mrf.mxu0
  %v2896 = vadd.f32 0.0, %v2895
  %v2897 = vpop.f32.mrf.mxu0
  %v2898 = vpop.f32.mrf.mxu0
  %v2899 = vadd.f32 0.0, %v2898
  %v2900 = vpop.f32.mrf.mxu0
  %2901 = vmatprep.mubr.bf16.mxu0 0
  %2902 = vmatmul.mubr.bf16.gmra.mxu0 %v2726
  %v2903 = vpop.f32.mrf.mxu0
  %v2904 = vadd.f32 0.0, %v2903
  %v2905 = vpop.f32.mrf.mxu0
  %v2906 = vpop.f32.mrf.mxu0
  %v2907 = vadd.f32 0.0, %v2906
  %v2908 = vpop.f32.mrf.mxu0
  %2909 = vmatprep.mubr.bf16.mxu0 0
  %2910 = vmatmul.mubr.bf16.gmra.mxu0 %v2729
  %v2911 = vpop.f32.mrf.mxu0
  %v2912 = vadd.f32 0.0, %v2911
  %v2913 = vpop.f32.mrf.mxu0
  %v2914 = vpop.f32.mrf.mxu0
  %v2915 = vadd.f32 0.0, %v2914
  %v2916 = vpop.f32.mrf.mxu0
  %2917 = vmatprep.mubr.bf16.mxu0 0
  %2918 = vmatmul.mubr.bf16.gmra.mxu0 %v2732
  %v2919 = vpop.f32.mrf.mxu0
  %v2920 = vadd.f32 0.0, %v2919
  %v2921 = vpop.f32.mrf.mxu0
  %v2922 = vpop.f32.mrf.mxu0
  %v2923 = vadd.f32 0.0, %v2922
  %v2924 = vpop.f32.mrf.mxu0
  %2925 = vmatprep.mubr.bf16.mxu0 0
  %2926 = vmatmul.mubr.bf16.gmra.mxu0 %v2735
  %v2927 = vpop.f32.mrf.mxu0
  %v2928 = vadd.f32 0.0, %v2927
  %v2929 = vpop.f32.mrf.mxu0
  %v2930 = vpop.f32.mrf.mxu0
  %v2931 = vadd.f32 0.0, %v2930
  %v2932 = vpop.f32.mrf.mxu0
  %2933 = vmatprep.mubr.bf16.mxu0 0
  %2934 = vmatmul.mubr.bf16.gmra.mxu0 %v2738
  %v2935 = vpop.f32.mrf.mxu0
  %v2936 = vadd.f32 0.0, %v2935
  %v2937 = vpop.f32.mrf.mxu0
  %v2938 = vpop.f32.mrf.mxu0
  %v2939 = vadd.f32 0.0, %v2938
  %v2940 = vpop.f32.mrf.mxu0
  %2941 = vmatprep.mubr.bf16.mxu0 0
  %2942 = vmatmul.mubr.bf16.gmra.mxu0 %v2741
  %v2943 = vpop.f32.mrf.mxu0
  %v2944 = vadd.f32 0.0, %v2943
  %v2945 = vpop.f32.mrf.mxu0
  %v2946 = vpop.f32.mrf.mxu0
  %v2947 = vadd.f32 0.0, %v2946
  %v2948 = vpop.f32.mrf.mxu0
  %2949 = vmatprep.mubr.bf16.mxu0 0
  %2950 = vmatmul.mubr.bf16.gmra.mxu0 %v2744
  %v2951 = vpop.f32.mrf.mxu0
  %v2952 = vadd.f32 0.0, %v2951
  %v2953 = vpop.f32.mrf.mxu0
  %v2954 = vpop.f32.mrf.mxu0
  %v2955 = vadd.f32 0.0, %v2954
  %v2956 = vpop.f32.mrf.mxu0
  %2957 = vmatprep.mubr.bf16.mxu0 0
  %2958 = vmatmul.mubr.bf16.gmra.mxu0 %v2747
  %v2959 = vpop.f32.mrf.mxu0
  %v2960 = vadd.f32 0.0, %v2959
  %v2961 = vpop.f32.mrf.mxu0
  %v2962 = vpop.f32.mrf.mxu0
  %v2963 = vadd.f32 0.0, %v2962
  %v2964 = vpop.f32.mrf.mxu0
  %2965 = vmatprep.mubr.bf16.mxu0 0
  %2966 = vmatmul.mubr.bf16.gmra.mxu0 %v2750
  %v2967 = vpop.f32.mrf.mxu0
  %v2968 = vadd.f32 0.0, %v2967
  %v2969 = vpop.f32.mrf.mxu0
  %v2970 = vpop.f32.mrf.mxu0
  %v2971 = vadd.f32 0.0, %v2970
  %v2972 = vpop.f32.mrf.mxu0
  %2973 = vmatprep.mubr.bf16.mxu0 0
  %2974 = vmatmul.mubr.bf16.gmra.mxu0 %v2753
  %v2975 = vpop.f32.mrf.mxu0
  %v2976 = vadd.f32 0.0, %v2975
  %v2977 = vpop.f32.mrf.mxu0
  %v2978 = vpop.f32.mrf.mxu0
  %v2979 = vadd.f32 0.0, %v2978
  %v2980 = vpop.f32.mrf.mxu0
  %2981 = vmatprep.mubr.bf16.mxu0 0
  %2982 = vmatmul.mubr.bf16.gmra.mxu0 %v2756
  %v2983 = vpop.f32.mrf.mxu0
  %v2984 = vadd.f32 0.0, %v2983
  %v2985 = vpop.f32.mrf.mxu0
  %v2986 = vpop.f32.mrf.mxu0
  %v2987 = vadd.f32 0.0, %v2986
  %v2988 = vpop.f32.mrf.mxu0
  %2989 = vmatprep.mubr.bf16.mxu0 0
  %2990 = vmatmul.mubr.bf16.gmra.mxu0 %v2759
  %v2991 = vpop.f32.mrf.mxu0
  %v2992 = vadd.f32 0.0, %v2991
  %v2993 = vpop.f32.mrf.mxu0
  %v2994 = vpop.f32.mrf.mxu0
  %v2995 = vadd.f32 0.0, %v2994
  %v2996 = vpop.f32.mrf.mxu0
  %2997 = vmatprep.mubr.bf16.mxu0 0
  %2998 = vmatmul.mubr.bf16.gmra.mxu0 %v2762
  %v2999 = vpop.f32.mrf.mxu0
  %v3000 = vadd.f32 0.0, %v2999
  %v3001 = vpop.f32.mrf.mxu0
  %v3002 = vpop.f32.mrf.mxu0
  %v3003 = vadd.f32 0.0, %v3002
  %v3004 = vpop.f32.mrf.mxu0
  %3005 = vmatprep.mubr.bf16.mxu0 0
  %3006 = vmatmul.mubr.bf16.gmra.mxu0 %v2765
  %v3007 = vpop.f32.mrf.mxu0
  %v3008 = vadd.f32 0.0, %v3007
  %v3009 = vpop.f32.mrf.mxu0
  %v3010 = vpop.f32.mrf.mxu0
  %v3011 = vadd.f32 0.0, %v3010
  %v3012 = vpop.f32.mrf.mxu0
  %3013 = vmatprep.mubr.bf16.mxu0 0
  %3014 = vmatmul.mubr.bf16.gmra.mxu0 %v2768
  %v3015 = vpop.f32.mrf.mxu0
  %v3016 = vadd.f32 0.0, %v3015
  %v3017 = vpop.f32.mrf.mxu0
  %v3018 = vpop.f32.mrf.mxu0
  %v3019 = vadd.f32 0.0, %v3018
  %v3020 = vpop.f32.mrf.mxu0
  %3021 = vmatprep.mubr.bf16.mxu0 0
  %3022 = vmatmul.mubr.bf16.gmra.mxu0 %v2771
  %v3023 = vpop.f32.mrf.mxu0
  %v3024 = vadd.f32 0.0, %v3023
  %v3025 = vpop.f32.mrf.mxu0
  %v3026 = vpop.f32.mrf.mxu0
  %v3027 = vadd.f32 0.0, %v3026
  %v3028 = vpop.f32.mrf.mxu0
  %3029 = vmatprep.mubr.bf16.mxu0 0
  %3030 = vmatmul.mubr.bf16.gmra.mxu0 %v2774
  %v3031 = vpop.f32.mrf.mxu0
  %v3032 = vadd.f32 0.0, %v3031
  %v3033 = vpop.f32.mrf.mxu0
  %v3034 = vpop.f32.mrf.mxu0
  %v3035 = vadd.f32 0.0, %v3034
  %v3036 = vpop.f32.mrf.mxu0
  %3037 = vmatprep.mubr.bf16.mxu0 0
  %3038 = vmatmul.mubr.bf16.gmra.mxu0 %v2777
  %v3039 = vpop.f32.mrf.mxu0
  %v3040 = vadd.f32 0.0, %v3039
  %v3041 = vpop.f32.mrf.mxu0
  %v3042 = vpop.f32.mrf.mxu0
  %v3043 = vadd.f32 0.0, %v3042
  %v3044 = vpop.f32.mrf.mxu0
  %3045 = vmatprep.mubr.bf16.mxu0 0
  %3046 = vmatmul.mubr.bf16.gmra.mxu0 %v2780
  %v3047 = vpop.f32.mrf.mxu0
  %v3048 = vadd.f32 0.0, %v3047
  %v3049 = vpop.f32.mrf.mxu0
  %v3050 = vpop.f32.mrf.mxu0
  %v3051 = vadd.f32 0.0, %v3050
  %v3052 = vpop.f32.mrf.mxu0
  %3053 = vmatprep.mubr.bf16.mxu0 0
  %3054 = vmatmul.mubr.bf16.gmra.mxu0 %v2783
  %v3055 = vpop.f32.mrf.mxu0
  %v3056 = vadd.f32 0.0, %v3055
  %v3057 = vpop.f32.mrf.mxu0
  %v3058 = vpop.f32.mrf.mxu0
  %v3059 = vadd.f32 0.0, %v3058
  %v3060 = vpop.f32.mrf.mxu0
  %3061 = vmatprep.mubr.bf16.mxu0 0
  %3062 = vmatmul.mubr.bf16.gmra.mxu0 %v2786
  %v3063 = vpop.f32.mrf.mxu0
  %v3064 = vadd.f32 0.0, %v3063
  %v3065 = vpop.f32.mrf.mxu0
  %v3066 = vpop.f32.mrf.mxu0
  %v3067 = vadd.f32 0.0, %v3066
  %v3068 = vpop.f32.mrf.mxu0
  %3069 = vmatprep.mubr.bf16.mxu0 0
  %3070 = vmatmul.mubr.bf16.gmra.mxu0 %v2789
  %v3071 = vpop.f32.mrf.mxu0
  %v3072 = vadd.f32 0.0, %v3071
  %v3073 = vpop.f32.mrf.mxu0
  %v3074 = vpop.f32.mrf.mxu0
  %v3075 = vadd.f32 0.0, %v3074
  %v3076 = vpop.f32.mrf.mxu0
  %3077 = vmatprep.mubr.bf16.mxu0 0
  %3078 = vmatmul.mubr.bf16.gmra.mxu0 %v2792
  %v3079 = vpop.f32.mrf.mxu0
  %v3080 = vadd.f32 0.0, %v3079
  %v3081 = vpop.f32.mrf.mxu0
  %v3082 = vpop.f32.mrf.mxu0
  %v3083 = vadd.f32 0.0, %v3082
  %v3084 = vpop.f32.mrf.mxu0
  %3085 = vdwg.mxu0
  %v3086 = vadd.f32 %v1834, %v2832
  %v3087 = vadd.f32 %v1837, %v2835
  %v3088 = vadd.f32 %v1842, %v2840
  %v3089 = vadd.f32 %v1845, %v2843
  %v3090 = vadd.f32 %v1850, %v2848
  %v3091 = vadd.f32 %v1853, %v2851
  %v3092 = vadd.f32 %v1858, %v2856
  %v3093 = vadd.f32 %v1861, %v2859
  %v3094 = vadd.f32 %v1866, %v2864
  %v3095 = vadd.f32 %v1869, %v2867
  %v3096 = vadd.f32 %v1874, %v2872
  %v3097 = vadd.f32 %v1877, %v2875
  %v3098 = vadd.f32 %v1882, %v2880
  %v3099 = vadd.f32 %v1885, %v2883
  %v3100 = vadd.f32 %v1890, %v2888
  %v3101 = vadd.f32 %v1893, %v2891
  %v3102 = vadd.f32 %v1898, %v2896
  %v3103 = vadd.f32 %v1901, %v2899
  %v3104 = vadd.f32 %v1906, %v2904
  %v3105 = vadd.f32 %v1909, %v2907
  %v3106 = vadd.f32 %v1914, %v2912
  %v3107 = vadd.f32 %v1917, %v2915
  %v3108 = vadd.f32 %v1922, %v2920
  %v3109 = vadd.f32 %v1925, %v2923
  %v3110 = vadd.f32 %v1930, %v2928
  %v3111 = vadd.f32 %v1933, %v2931
  %v3112 = vadd.f32 %v1938, %v2936
  %v3113 = vadd.f32 %v1941, %v2939
  %v3114 = vadd.f32 %v1946, %v2944
  %v3115 = vadd.f32 %v1949, %v2947
  %v3116 = vadd.f32 %v1954, %v2952
  %v3117 = vadd.f32 %v1957, %v2955
  %v3118 = vadd.f32 %v1962, %v2960
  %v3119 = vadd.f32 %v1965, %v2963
  %v3120 = vadd.f32 %v1970, %v2968
  %v3121 = vadd.f32 %v1973, %v2971
  %v3122 = vadd.f32 %v1978, %v2976
  %v3123 = vadd.f32 %v1981, %v2979
  %v3124 = vadd.f32 %v1986, %v2984
  %v3125 = vadd.f32 %v1989, %v2987
  %v3126 = vadd.f32 %v1994, %v2992
  %v3127 = vadd.f32 %v1997, %v2995
  %v3128 = vadd.f32 %v2002, %v3000
  %v3129 = vadd.f32 %v2005, %v3003
  %v3130 = vadd.f32 %v2010, %v3008
  %v3131 = vadd.f32 %v2013, %v3011
  %v3132 = vadd.f32 %v2018, %v3016
  %v3133 = vadd.f32 %v2021, %v3019
  %v3134 = vadd.f32 %v2026, %v3024
  %v3135 = vadd.f32 %v2029, %v3027
  %v3136 = vadd.f32 %v2034, %v3032
  %v3137 = vadd.f32 %v2037, %v3035
  %v3138 = vadd.f32 %v2042, %v3040
  %v3139 = vadd.f32 %v2045, %v3043
  %v3140 = vadd.f32 %v2050, %v3048
  %v3141 = vadd.f32 %v2053, %v3051
  %v3142 = vadd.f32 %v2058, %v3056
  %v3143 = vadd.f32 %v2061, %v3059
  %v3144 = vadd.f32 %v2066, %v3064
  %v3145 = vadd.f32 %v2069, %v3067
  %v3146 = vadd.f32 %v2074, %v3072
  %v3147 = vadd.f32 %v2077, %v3075
  %v3148 = vadd.f32 %v2082, %v3080
  %v3149 = vadd.f32 %v2085, %v3083
  %v3150 = vld [vmem:[%s0 + $0x10] sm:$0xff]
  %v3151 = vld [vmem:[%s0 + $0x18] sm:$0xff]
  %v3152 = vld [vmem:[%s0 + $0x20] sm:$0xff]
  %v3153 = vld [vmem:[%s0 + $0x28] sm:$0xff]
  %v3154 = vld [vmem:[%s0 + $0x30] sm:$0xff]
  %v3155 = vld [vmem:[%s0 + $0x38] sm:$0xff]
  %v3156 = vld [vmem:[%s0 + $0x40] sm:$0xff]
  %v3157 = vld [vmem:[%s0 + $0x48] sm:$0xff]
  %v3158 = vld [vmem:[%s0 + $0x50] sm:$0xff]
  %v3159 = vld [vmem:[%s0 + $0x58] sm:$0xff]
  %v3160 = vld [vmem:[%s0 + $0x60] sm:$0xff]
  %v3161 = vld [vmem:[%s0 + $0x68] sm:$0xff]
  %v3162 = vld [vmem:[%s0 + $0x70] sm:$0xff]
  %v3163 = vld [vmem:[%s0 + $0x78] sm:$0xff]
  %v3164 = vld [vmem:[%s0 + $0x80] sm:$0xff]
  %v3165 = vld [vmem:[%s0 + $0x88] sm:$0xff]
  %v3166 = vld [vmem:[%s0 + $0x90] sm:$0xff]
  %v3167 = vld [vmem:[%s0 + $0x98] sm:$0xff]
  %v3168 = vld [vmem:[%s0 + $0xa0] sm:$0xff]
  %v3169 = vld [vmem:[%s0 + $0xa8] sm:$0xff]
  %v3170 = vld [vmem:[%s0 + $0xb0] sm:$0xff]
  %v3171 = vld [vmem:[%s0 + $0xb8] sm:$0xff]
  %v3172 = vld [vmem:[%s0 + $0xc0] sm:$0xff]
  %v3173 = vld [vmem:[%s0 + $0xc8] sm:$0xff]
  %v3174 = vld [vmem:[%s0 + $0xd0] sm:$0xff]
  %v3175 = vld [vmem:[%s0 + $0xd8] sm:$0xff]
  %v3176 = vld [vmem:[%s0 + $0xe0] sm:$0xff]
  %v3177 = vld [vmem:[%s0 + $0xe8] sm:$0xff]
  %v3178 = vld [vmem:[%s0 + $0xf0] sm:$0xff]
  %v3179 = vld [vmem:[%s0 + $0xf8] sm:$0xff]
  %v3180 = vld [vmem:[%s0 + $0x100] sm:$0xff]
  %v3181 = vld [vmem:[%s0 + $0x108] sm:$0xff]
  %v3182 = vld [vmem:[%s0 + $0x110] sm:$0xff]
  %v3183 = vld [vmem:[%s0 + $0x118] sm:$0xff]
  %v3184 = vld [vmem:[%s0 + $0x120] sm:$0xff]
  %v3185 = vld [vmem:[%s0 + $0x128] sm:$0xff]
  %v3186 = vld [vmem:[%s0 + $0x130] sm:$0xff]
  %v3187 = vld [vmem:[%s0 + $0x138] sm:$0xff]
  %v3188 = vld [vmem:[%s0 + $0x140] sm:$0xff]
  %v3189 = vld [vmem:[%s0 + $0x148] sm:$0xff]
  %v3190 = vld [vmem:[%s0 + $0x150] sm:$0xff]
  %v3191 = vld [vmem:[%s0 + $0x158] sm:$0xff]
  %v3192 = vld [vmem:[%s0 + $0x160] sm:$0xff]
  %v3193 = vld [vmem:[%s0 + $0x168] sm:$0xff]
  %v3194 = vld [vmem:[%s0 + $0x170] sm:$0xff]
  %v3195 = vld [vmem:[%s0 + $0x178] sm:$0xff]
  %v3196 = vld [vmem:[%s0 + $0x180] sm:$0xff]
  %v3197 = vld [vmem:[%s0 + $0x188] sm:$0xff]
  %v3198 = vld [vmem:[%s0 + $0x190] sm:$0xff]
  %v3199 = vld [vmem:[%s0 + $0x198] sm:$0xff]
  %v3200 = vld [vmem:[%s0 + $0x1a0] sm:$0xff]
  %v3201 = vld [vmem:[%s0 + $0x1a8] sm:$0xff]
  %v3202 = vld [vmem:[%s0 + $0x1b0] sm:$0xff]
  %v3203 = vld [vmem:[%s0 + $0x1b8] sm:$0xff]
  %v3204 = vld [vmem:[%s0 + $0x1c0] sm:$0xff]
  %v3205 = vld [vmem:[%s0 + $0x1c8] sm:$0xff]
  %v3206 = vld [vmem:[%s0 + $0x1d0] sm:$0xff]
  %v3207 = vld [vmem:[%s0 + $0x1d8] sm:$0xff]
  %v3208 = vld [vmem:[%s0 + $0x1e0] sm:$0xff]
  %v3209 = vld [vmem:[%s0 + $0x1e8] sm:$0xff]
  %v3210 = vld [vmem:[%s0 + $0x1f0] sm:$0xff]
  %v3211 = vld [vmem:[%s0 + $0x1f8] sm:$0xff]
  %v3212 = vld [vmem:[%s0 + $0x200] sm:$0xff]
  %v3213 = vld [vmem:[%s0 + $0x208] sm:$0xff]
  %v3214 = vsel %vm280, 1, 0
  %v3215 = vsel %vm281, 1, 0
  %v3216 = vsel %vm282, 1, 0
  %v3217 = vsel %vm283, 1, 0
  %v3218 = vsel %vm284, 1, 0
  %v3219 = vsel %vm285, 1, 0
  %v3220 = vsel %vm286, 1, 0
  %v3221 = vsel %vm287, 1, 0
  %v3222 = vsel %vm288, 1, 0
  %v3223 = vsel %vm289, 1, 0
  %v3224 = vsel %vm290, 1, 0
  %v3225 = vsel %vm291, 1, 0
  %v3226 = vsel %vm292, 1, 0
  %v3227 = vsel %vm293, 1, 0
  %v3228 = vsel %vm294, 1, 0
  %v3229 = vsel %vm295, 1, 0
  %v3230 = vsel %vm296, 1, 0
  %v3231 = vsel %vm297, 1, 0
  %v3232 = vsel %vm298, 1, 0
  %v3233 = vsel %vm299, 1, 0
  %v3234 = vsel %vm300, 1, 0
  %v3235 = vsel %vm301, 1, 0
  %v3236 = vsel %vm302, 1, 0
  %v3237 = vsel %vm303, 1, 0
  %v3238 = vsel %vm304, 1, 0
  %v3239 = vsel %vm305, 1, 0
  %v3240 = vsel %vm306, 1, 0
  %v3241 = vsel %vm307, 1, 0
  %v3242 = vsel %vm308, 1, 0
  %v3243 = vsel %vm309, 1, 0
  %v3244 = vsel %vm310, 1, 0
  %v3245 = vsel %vm311, 1, 0
  %v3246 = vsel %vm312, 1, 0
  %v3247 = vsel %vm313, 1, 0
  %v3248 = vsel %vm314, 1, 0
  %v3249 = vsel %vm315, 1, 0
  %v3250 = vsel %vm316, 1, 0
  %v3251 = vsel %vm317, 1, 0
  %v3252 = vsel %vm318, 1, 0
  %v3253 = vsel %vm319, 1, 0
  %v3254 = vsel %vm320, 1, 0
  %v3255 = vsel %vm321, 1, 0
  %v3256 = vsel %vm322, 1, 0
  %v3257 = vsel %vm323, 1, 0
  %v3258 = vsel %vm324, 1, 0
  %v3259 = vsel %vm325, 1, 0
  %v3260 = vsel %vm326, 1, 0
  %v3261 = vsel %vm327, 1, 0
  %v3262 = vsel %vm328, 1, 0
  %v3263 = vsel %vm329, 1, 0
  %v3264 = vsel %vm330, 1, 0
  %v3265 = vsel %vm331, 1, 0
  %v3266 = vsel %vm332, 1, 0
  %v3267 = vsel %vm333, 1, 0
  %v3268 = vsel %vm334, 1, 0
  %v3269 = vsel %vm335, 1, 0
  %v3270 = vsel %vm336, 1, 0
  %v3271 = vsel %vm337, 1, 0
  %v3272 = vsel %vm338, 1, 0
  %v3273 = vsel %vm339, 1, 0
  %v3274 = vsel %vm340, 1, 0
  %v3275 = vsel %vm341, 1, 0
  %v3276 = vsel %vm342, 1, 0
  %v3277 = vsel %vm343, 1, 0
  %3278 = vset.pattern.permute.xlu0 0
  %3279 = vperm.xlu0 %3278, %v3214
  %v3280 = vpop.permute.xlu0 %3279
  %3281 = vset.pattern.permute.xlu0 0
  %3282 = vperm.xlu0 %3281, %v3215
  %v3283 = vpop.permute.xlu0 %3282
  %3284 = vset.pattern.permute.xlu0 0
  %3285 = vperm.xlu0 %3284, %v3216
  %v3286 = vpop.permute.xlu0 %3285
  %3287 = vset.pattern.permute.xlu0 0
  %3288 = vperm.xlu0 %3287, %v3217
  %v3289 = vpop.permute.xlu0 %3288
  %3290 = vset.pattern.permute.xlu0 0
  %3291 = vperm.xlu0 %3290, %v3218
  %v3292 = vpop.permute.xlu0 %3291
  %3293 = vset.pattern.permute.xlu0 0
  %3294 = vperm.xlu0 %3293, %v3219
  %v3295 = vpop.permute.xlu0 %3294
  %3296 = vset.pattern.permute.xlu0 0
  %3297 = vperm.xlu0 %3296, %v3220
  %v3298 = vpop.permute.xlu0 %3297
  %3299 = vset.pattern.permute.xlu0 0
  %3300 = vperm.xlu0 %3299, %v3221
  %v3301 = vpop.permute.xlu0 %3300
  %3302 = vset.pattern.permute.xlu0 0
  %3303 = vperm.xlu0 %3302, %v3222
  %v3304 = vpop.permute.xlu0 %3303
  %3305 = vset.pattern.permute.xlu0 0
  %3306 = vperm.xlu0 %3305, %v3223
  %v3307 = vpop.permute.xlu0 %3306
  %3308 = vset.pattern.permute.xlu0 0
  %3309 = vperm.xlu0 %3308, %v3224
  %v3310 = vpop.permute.xlu0 %3309
  %3311 = vset.pattern.permute.xlu0 0
  %3312 = vperm.xlu0 %3311, %v3225
  %v3313 = vpop.permute.xlu0 %3312
  %3314 = vset.pattern.permute.xlu0 0
  %3315 = vperm.xlu0 %3314, %v3226
  %v3316 = vpop.permute.xlu0 %3315
  %3317 = vset.pattern.permute.xlu0 0
  %3318 = vperm.xlu0 %3317, %v3227
  %v3319 = vpop.permute.xlu0 %3318
  %3320 = vset.pattern.permute.xlu0 0
  %3321 = vperm.xlu0 %3320, %v3228
  %v3322 = vpop.permute.xlu0 %3321
  %3323 = vset.pattern.permute.xlu0 0
  %3324 = vperm.xlu0 %3323, %v3229
  %v3325 = vpop.permute.xlu0 %3324
  %3326 = vset.pattern.permute.xlu0 0
  %3327 = vperm.xlu0 %3326, %v3230
  %v3328 = vpop.permute.xlu0 %3327
  %3329 = vset.pattern.permute.xlu0 0
  %3330 = vperm.xlu0 %3329, %v3231
  %v3331 = vpop.permute.xlu0 %3330
  %3332 = vset.pattern.permute.xlu0 0
  %3333 = vperm.xlu0 %3332, %v3232
  %v3334 = vpop.permute.xlu0 %3333
  %3335 = vset.pattern.permute.xlu0 0
  %3336 = vperm.xlu0 %3335, %v3233
  %v3337 = vpop.permute.xlu0 %3336
  %3338 = vset.pattern.permute.xlu0 0
  %3339 = vperm.xlu0 %3338, %v3234
  %v3340 = vpop.permute.xlu0 %3339
  %3341 = vset.pattern.permute.xlu0 0
  %3342 = vperm.xlu0 %3341, %v3235
  %v3343 = vpop.permute.xlu0 %3342
  %3344 = vset.pattern.permute.xlu0 0
  %3345 = vperm.xlu0 %3344, %v3236
  %v3346 = vpop.permute.xlu0 %3345
  %3347 = vset.pattern.permute.xlu0 0
  %3348 = vperm.xlu0 %3347, %v3237
  %v3349 = vpop.permute.xlu0 %3348
  %3350 = vset.pattern.permute.xlu0 0
  %3351 = vperm.xlu0 %3350, %v3238
  %v3352 = vpop.permute.xlu0 %3351
  %3353 = vset.pattern.permute.xlu0 0
  %3354 = vperm.xlu0 %3353, %v3239
  %v3355 = vpop.permute.xlu0 %3354
  %3356 = vset.pattern.permute.xlu0 0
  %3357 = vperm.xlu0 %3356, %v3240
  %v3358 = vpop.permute.xlu0 %3357
  %3359 = vset.pattern.permute.xlu0 0
  %3360 = vperm.xlu0 %3359, %v3241
  %v3361 = vpop.permute.xlu0 %3360
  %3362 = vset.pattern.permute.xlu0 0
  %3363 = vperm.xlu0 %3362, %v3242
  %v3364 = vpop.permute.xlu0 %3363
  %3365 = vset.pattern.permute.xlu0 0
  %3366 = vperm.xlu0 %3365, %v3243
  %v3367 = vpop.permute.xlu0 %3366
  %3368 = vset.pattern.permute.xlu0 0
  %3369 = vperm.xlu0 %3368, %v3244
  %v3370 = vpop.permute.xlu0 %3369
  %3371 = vset.pattern.permute.xlu0 0
  %3372 = vperm.xlu0 %3371, %v3245
  %v3373 = vpop.permute.xlu0 %3372
  %3374 = vset.pattern.permute.xlu0 0
  %3375 = vperm.xlu0 %3374, %v3246
  %v3376 = vpop.permute.xlu0 %3375
  %3377 = vset.pattern.permute.xlu0 0
  %3378 = vperm.xlu0 %3377, %v3247
  %v3379 = vpop.permute.xlu0 %3378
  %3380 = vset.pattern.permute.xlu0 0
  %3381 = vperm.xlu0 %3380, %v3248
  %v3382 = vpop.permute.xlu0 %3381
  %3383 = vset.pattern.permute.xlu0 0
  %3384 = vperm.xlu0 %3383, %v3249
  %v3385 = vpop.permute.xlu0 %3384
  %3386 = vset.pattern.permute.xlu0 0
  %3387 = vperm.xlu0 %3386, %v3250
  %v3388 = vpop.permute.xlu0 %3387
  %3389 = vset.pattern.permute.xlu0 0
  %3390 = vperm.xlu0 %3389, %v3251
  %v3391 = vpop.permute.xlu0 %3390
  %3392 = vset.pattern.permute.xlu0 0
  %3393 = vperm.xlu0 %3392, %v3252
  %v3394 = vpop.permute.xlu0 %3393
  %3395 = vset.pattern.permute.xlu0 0
  %3396 = vperm.xlu0 %3395, %v3253
  %v3397 = vpop.permute.xlu0 %3396
  %3398 = vset.pattern.permute.xlu0 0
  %3399 = vperm.xlu0 %3398, %v3254
  %v3400 = vpop.permute.xlu0 %3399
  %3401 = vset.pattern.permute.xlu0 0
  %3402 = vperm.xlu0 %3401, %v3255
  %v3403 = vpop.permute.xlu0 %3402
  %3404 = vset.pattern.permute.xlu0 0
  %3405 = vperm.xlu0 %3404, %v3256
  %v3406 = vpop.permute.xlu0 %3405
  %3407 = vset.pattern.permute.xlu0 0
  %3408 = vperm.xlu0 %3407, %v3257
  %v3409 = vpop.permute.xlu0 %3408
  %3410 = vset.pattern.permute.xlu0 0
  %3411 = vperm.xlu0 %3410, %v3258
  %v3412 = vpop.permute.xlu0 %3411
  %3413 = vset.pattern.permute.xlu0 0
  %3414 = vperm.xlu0 %3413, %v3259
  %v3415 = vpop.permute.xlu0 %3414
  %3416 = vset.pattern.permute.xlu0 0
  %3417 = vperm.xlu0 %3416, %v3260
  %v3418 = vpop.permute.xlu0 %3417
  %3419 = vset.pattern.permute.xlu0 0
  %3420 = vperm.xlu0 %3419, %v3261
  %v3421 = vpop.permute.xlu0 %3420
  %3422 = vset.pattern.permute.xlu0 0
  %3423 = vperm.xlu0 %3422, %v3262
  %v3424 = vpop.permute.xlu0 %3423
  %3425 = vset.pattern.permute.xlu0 0
  %3426 = vperm.xlu0 %3425, %v3263
  %v3427 = vpop.permute.xlu0 %3426
  %3428 = vset.pattern.permute.xlu0 0
  %3429 = vperm.xlu0 %3428, %v3264
  %v3430 = vpop.permute.xlu0 %3429
  %3431 = vset.pattern.permute.xlu0 0
  %3432 = vperm.xlu0 %3431, %v3265
  %v3433 = vpop.permute.xlu0 %3432
  %3434 = vset.pattern.permute.xlu0 0
  %3435 = vperm.xlu0 %3434, %v3266
  %v3436 = vpop.permute.xlu0 %3435
  %3437 = vset.pattern.permute.xlu0 0
  %3438 = vperm.xlu0 %3437, %v3267
  %v3439 = vpop.permute.xlu0 %3438
  %3440 = vset.pattern.permute.xlu0 0
  %3441 = vperm.xlu0 %3440, %v3268
  %v3442 = vpop.permute.xlu0 %3441
  %3443 = vset.pattern.permute.xlu0 0
  %3444 = vperm.xlu0 %3443, %v3269
  %v3445 = vpop.permute.xlu0 %3444
  %3446 = vset.pattern.permute.xlu0 0
  %3447 = vperm.xlu0 %3446, %v3270
  %v3448 = vpop.permute.xlu0 %3447
  %3449 = vset.pattern.permute.xlu0 0
  %3450 = vperm.xlu0 %3449, %v3271
  %v3451 = vpop.permute.xlu0 %3450
  %3452 = vset.pattern.permute.xlu0 0
  %3453 = vperm.xlu0 %3452, %v3272
  %v3454 = vpop.permute.xlu0 %3453
  %3455 = vset.pattern.permute.xlu0 0
  %3456 = vperm.xlu0 %3455, %v3273
  %v3457 = vpop.permute.xlu0 %3456
  %3458 = vset.pattern.permute.xlu0 0
  %3459 = vperm.xlu0 %3458, %v3274
  %v3460 = vpop.permute.xlu0 %3459
  %3461 = vset.pattern.permute.xlu0 0
  %3462 = vperm.xlu0 %3461, %v3275
  %v3463 = vpop.permute.xlu0 %3462
  %3464 = vset.pattern.permute.xlu0 0
  %3465 = vperm.xlu0 %3464, %v3276
  %v3466 = vpop.permute.xlu0 %3465
  %3467 = vset.pattern.permute.xlu0 0
  %3468 = vperm.xlu0 %3467, %v3277
  %v3469 = vpop.permute.xlu0 %3468
  %vm3470 = vcmp.eq.s32.totalorder %v3280, 1
  %vm3471 = vcmp.eq.s32.totalorder %v3283, 1
  %vm3472 = vcmp.eq.s32.totalorder %v3286, 1
  %vm3473 = vcmp.eq.s32.totalorder %v3289, 1
  %vm3474 = vcmp.eq.s32.totalorder %v3292, 1
  %vm3475 = vcmp.eq.s32.totalorder %v3295, 1
  %vm3476 = vcmp.eq.s32.totalorder %v3298, 1
  %vm3477 = vcmp.eq.s32.totalorder %v3301, 1
  %vm3478 = vcmp.eq.s32.totalorder %v3304, 1
  %vm3479 = vcmp.eq.s32.totalorder %v3307, 1
  %vm3480 = vcmp.eq.s32.totalorder %v3310, 1
  %vm3481 = vcmp.eq.s32.totalorder %v3313, 1
  %vm3482 = vcmp.eq.s32.totalorder %v3316, 1
  %vm3483 = vcmp.eq.s32.totalorder %v3319, 1
  %vm3484 = vcmp.eq.s32.totalorder %v3322, 1
  %vm3485 = vcmp.eq.s32.totalorder %v3325, 1
  %vm3486 = vcmp.eq.s32.totalorder %v3328, 1
  %vm3487 = vcmp.eq.s32.totalorder %v3331, 1
  %vm3488 = vcmp.eq.s32.totalorder %v3334, 1
  %vm3489 = vcmp.eq.s32.totalorder %v3337, 1
  %vm3490 = vcmp.eq.s32.totalorder %v3340, 1
  %vm3491 = vcmp.eq.s32.totalorder %v3343, 1
  %vm3492 = vcmp.eq.s32.totalorder %v3346, 1
  %vm3493 = vcmp.eq.s32.totalorder %v3349, 1
  %vm3494 = vcmp.eq.s32.totalorder %v3352, 1
  %vm3495 = vcmp.eq.s32.totalorder %v3355, 1
  %vm3496 = vcmp.eq.s32.totalorder %v3358, 1
  %vm3497 = vcmp.eq.s32.totalorder %v3361, 1
  %vm3498 = vcmp.eq.s32.totalorder %v3364, 1
  %vm3499 = vcmp.eq.s32.totalorder %v3367, 1
  %vm3500 = vcmp.eq.s32.totalorder %v3370, 1
  %vm3501 = vcmp.eq.s32.totalorder %v3373, 1
  %vm3502 = vcmp.eq.s32.totalorder %v3376, 1
  %vm3503 = vcmp.eq.s32.totalorder %v3379, 1
  %vm3504 = vcmp.eq.s32.totalorder %v3382, 1
  %vm3505 = vcmp.eq.s32.totalorder %v3385, 1
  %vm3506 = vcmp.eq.s32.totalorder %v3388, 1
  %vm3507 = vcmp.eq.s32.totalorder %v3391, 1
  %vm3508 = vcmp.eq.s32.totalorder %v3394, 1
  %vm3509 = vcmp.eq.s32.totalorder %v3397, 1
  %vm3510 = vcmp.eq.s32.totalorder %v3400, 1
  %vm3511 = vcmp.eq.s32.totalorder %v3403, 1
  %vm3512 = vcmp.eq.s32.totalorder %v3406, 1
  %vm3513 = vcmp.eq.s32.totalorder %v3409, 1
  %vm3514 = vcmp.eq.s32.totalorder %v3412, 1
  %vm3515 = vcmp.eq.s32.totalorder %v3415, 1
  %vm3516 = vcmp.eq.s32.totalorder %v3418, 1
  %vm3517 = vcmp.eq.s32.totalorder %v3421, 1
  %vm3518 = vcmp.eq.s32.totalorder %v3424, 1
  %vm3519 = vcmp.eq.s32.totalorder %v3427, 1
  %vm3520 = vcmp.eq.s32.totalorder %v3430, 1
  %vm3521 = vcmp.eq.s32.totalorder %v3433, 1
  %vm3522 = vcmp.eq.s32.totalorder %v3436, 1
  %vm3523 = vcmp.eq.s32.totalorder %v3439, 1
  %vm3524 = vcmp.eq.s32.totalorder %v3442, 1
  %vm3525 = vcmp.eq.s32.totalorder %v3445, 1
  %vm3526 = vcmp.eq.s32.totalorder %v3448, 1
  %vm3527 = vcmp.eq.s32.totalorder %v3451, 1
  %vm3528 = vcmp.eq.s32.totalorder %v3454, 1
  %vm3529 = vcmp.eq.s32.totalorder %v3457, 1
  %vm3530 = vcmp.eq.s32.totalorder %v3460, 1
  %vm3531 = vcmp.eq.s32.totalorder %v3463, 1
  %vm3532 = vcmp.eq.s32.totalorder %v3466, 1
  %vm3533 = vcmp.eq.s32.totalorder %v3469, 1
  %v3534 = vsel %vm3470, %v3150, 0.0
  %v3535 = vsel %vm3471, %v3151, 0.0
  %v3536 = vsel %vm3472, %v3152, 0.0
  %v3537 = vsel %vm3473, %v3153, 0.0
  %v3538 = vsel %vm3474, %v3154, 0.0
  %v3539 = vsel %vm3475, %v3155, 0.0
  %v3540 = vsel %vm3476, %v3156, 0.0
  %v3541 = vsel %vm3477, %v3157, 0.0
  %v3542 = vsel %vm3478, %v3158, 0.0
  %v3543 = vsel %vm3479, %v3159, 0.0
  %v3544 = vsel %vm3480, %v3160, 0.0
  %v3545 = vsel %vm3481, %v3161, 0.0
  %v3546 = vsel %vm3482, %v3162, 0.0
  %v3547 = vsel %vm3483, %v3163, 0.0
  %v3548 = vsel %vm3484, %v3164, 0.0
  %v3549 = vsel %vm3485, %v3165, 0.0
  %v3550 = vsel %vm3486, %v3166, 0.0
  %v3551 = vsel %vm3487, %v3167, 0.0
  %v3552 = vsel %vm3488, %v3168, 0.0
  %v3553 = vsel %vm3489, %v3169, 0.0
  %v3554 = vsel %vm3490, %v3170, 0.0
  %v3555 = vsel %vm3491, %v3171, 0.0
  %v3556 = vsel %vm3492, %v3172, 0.0
  %v3557 = vsel %vm3493, %v3173, 0.0
  %v3558 = vsel %vm3494, %v3174, 0.0
  %v3559 = vsel %vm3495, %v3175, 0.0
  %v3560 = vsel %vm3496, %v3176, 0.0
  %v3561 = vsel %vm3497, %v3177, 0.0
  %v3562 = vsel %vm3498, %v3178, 0.0
  %v3563 = vsel %vm3499, %v3179, 0.0
  %v3564 = vsel %vm3500, %v3180, 0.0
  %v3565 = vsel %vm3501, %v3181, 0.0
  %v3566 = vsel %vm3502, %v3182, 0.0
  %v3567 = vsel %vm3503, %v3183, 0.0
  %v3568 = vsel %vm3504, %v3184, 0.0
  %v3569 = vsel %vm3505, %v3185, 0.0
  %v3570 = vsel %vm3506, %v3186, 0.0
  %v3571 = vsel %vm3507, %v3187, 0.0
  %v3572 = vsel %vm3508, %v3188, 0.0
  %v3573 = vsel %vm3509, %v3189, 0.0
  %v3574 = vsel %vm3510, %v3190, 0.0
  %v3575 = vsel %vm3511, %v3191, 0.0
  %v3576 = vsel %vm3512, %v3192, 0.0
  %v3577 = vsel %vm3513, %v3193, 0.0
  %v3578 = vsel %vm3514, %v3194, 0.0
  %v3579 = vsel %vm3515, %v3195, 0.0
  %v3580 = vsel %vm3516, %v3196, 0.0
  %v3581 = vsel %vm3517, %v3197, 0.0
  %v3582 = vsel %vm3518, %v3198, 0.0
  %v3583 = vsel %vm3519, %v3199, 0.0
  %v3584 = vsel %vm3520, %v3200, 0.0
  %v3585 = vsel %vm3521, %v3201, 0.0
  %v3586 = vsel %vm3522, %v3202, 0.0
  %v3587 = vsel %vm3523, %v3203, 0.0
  %v3588 = vsel %vm3524, %v3204, 0.0
  %v3589 = vsel %vm3525, %v3205, 0.0
  %v3590 = vsel %vm3526, %v3206, 0.0
  %v3591 = vsel %vm3527, %v3207, 0.0
  %v3592 = vsel %vm3528, %v3208, 0.0
  %v3593 = vsel %vm3529, %v3209, 0.0
  %v3594 = vsel %vm3530, %v3210, 0.0
  %v3595 = vsel %vm3531, %v3211, 0.0
  %v3596 = vsel %vm3532, %v3212, 0.0
  %v3597 = vsel %vm3533, %v3213, 0.0
  %v3598 = vpack.c.bf16 %v3535, %v3534
  %v3599 = vpack.c.bf16 %v3537, %v3536
  %v3600 = vpack.c.bf16 %v3539, %v3538
  %v3601 = vpack.c.bf16 %v3541, %v3540
  %v3602 = vpack.c.bf16 %v3543, %v3542
  %v3603 = vpack.c.bf16 %v3545, %v3544
  %v3604 = vpack.c.bf16 %v3547, %v3546
  %v3605 = vpack.c.bf16 %v3549, %v3548
  %v3606 = vpack.c.bf16 %v3551, %v3550
  %v3607 = vpack.c.bf16 %v3553, %v3552
  %v3608 = vpack.c.bf16 %v3555, %v3554
  %v3609 = vpack.c.bf16 %v3557, %v3556
  %v3610 = vpack.c.bf16 %v3559, %v3558
  %v3611 = vpack.c.bf16 %v3561, %v3560
  %v3612 = vpack.c.bf16 %v3563, %v3562
  %v3613 = vpack.c.bf16 %v3565, %v3564
  %v3614 = vpack.c.bf16 %v3567, %v3566
  %v3615 = vpack.c.bf16 %v3569, %v3568
  %v3616 = vpack.c.bf16 %v3571, %v3570
  %v3617 = vpack.c.bf16 %v3573, %v3572
  %v3618 = vpack.c.bf16 %v3575, %v3574
  %v3619 = vpack.c.bf16 %v3577, %v3576
  %v3620 = vpack.c.bf16 %v3579, %v3578
  %v3621 = vpack.c.bf16 %v3581, %v3580
  %v3622 = vpack.c.bf16 %v3583, %v3582
  %v3623 = vpack.c.bf16 %v3585, %v3584
  %v3624 = vpack.c.bf16 %v3587, %v3586
  %v3625 = vpack.c.bf16 %v3589, %v3588
  %v3626 = vpack.c.bf16 %v3591, %v3590
  %v3627 = vpack.c.bf16 %v3593, %v3592
  %v3628 = vpack.c.bf16 %v3595, %v3594
  %v3629 = vpack.c.bf16 %v3597, %v3596
  %s3630 = scalar_lea.vmem %s3, 6
  %v3631 = vld [vmem:[%s3630] sm:$0x3]
  %v3633 = vsel %vm1307, %v3598, 0
  %v3636 = vsel %vm1307, %v3599, 0
  %v3639 = vsel %vm1307, %v3600, 0
  %v3642 = vsel %vm1307, %v3601, 0
  %v3645 = vsel %vm1307, %v3602, 0
  %v3648 = vsel %vm1307, %v3603, 0
  %v3651 = vsel %vm1307, %v3604, 0
  %v3654 = vsel %vm1307, %v3605, 0
  %v3657 = vsel %vm1307, %v3606, 0
  %v3660 = vsel %vm1307, %v3607, 0
  %v3663 = vsel %vm1307, %v3608, 0
  %v3666 = vsel %vm1307, %v3609, 0
  %v3669 = vsel %vm1307, %v3610, 0
  %v3672 = vsel %vm1307, %v3611, 0
  %v3675 = vsel %vm1307, %v3612, 0
  %v3678 = vsel %vm1307, %v3613, 0
  %v3681 = vsel %vm1307, %v3614, 0
  %v3684 = vsel %vm1307, %v3615, 0
  %v3687 = vsel %vm1307, %v3616, 0
  %v3690 = vsel %vm1307, %v3617, 0
  %v3693 = vsel %vm1307, %v3618, 0
  %v3696 = vsel %vm1307, %v3619, 0
  %v3699 = vsel %vm1307, %v3620, 0
  %v3702 = vsel %vm1307, %v3621, 0
  %v3705 = vsel %vm1307, %v3622, 0
  %v3708 = vsel %vm1307, %v3623, 0
  %v3711 = vsel %vm1307, %v3624, 0
  %v3714 = vsel %vm1307, %v3625, 0
  %v3717 = vsel %vm1307, %v3626, 0
  %v3720 = vsel %vm1307, %v3627, 0
  %v3723 = vsel %vm1307, %v3628, 0
  %v3726 = vsel %vm1307, %v3629, 0
  %v3729 = vand.u32 %v3631, %v1407
  %3731 = vmatprep.subr.bf16.mxu0 0
  %3732 = vmatpush1.bf16.msra.mxu0 0
  %3733 = vmatprep.subr.bf16.mxu0 0
  %3734 = vmatpush1.bf16.msra.mxu0 0
  %3735 = vmatprep.subr.bf16.mxu0 0
  %3736 = vmatpush1.bf16.msra.mxu0 0
  %3737 = vmatprep.subr.bf16.mxu0 0
  %3738 = vmatpush1.bf16.msra.mxu0 0
  %3739 = vmatprep.subr.bf16.mxu0 0
  %3740 = vmatpush1.bf16.msra.mxu0 0
  %3741 = vmatprep.subr.bf16.mxu0 0
  %3742 = vmatpush1.bf16.msra.mxu0 0
  %3743 = vmatprep.subr.bf16.mxu0 0
  %3744 = vmatpush1.bf16.msra.mxu0 0
  %3745 = vmatprep.subr.bf16.mxu0 0
  %3746 = vmatpush1.bf16.msra.mxu0 %v3729
  %3747 = vmatprep.subr.bf16.mxu0 0
  %3748 = vmatpush2.bf16.msra.mxu0 0
  %3749 = vmatprep.subr.bf16.mxu0 0
  %3750 = vmatpush2.bf16.msra.mxu0 0
  %3751 = vmatprep.subr.bf16.mxu0 0
  %3752 = vmatpush2.bf16.msra.mxu0 0
  %3753 = vmatprep.subr.bf16.mxu0 0
  %3754 = vmatpush2.bf16.msra.mxu0 0
  %3755 = vmatprep.subr.bf16.mxu0 0
  %3756 = vmatpush2.bf16.msra.mxu0 0
  %3757 = vmatprep.subr.bf16.mxu0 0
  %3758 = vmatpush2.bf16.msra.mxu0 0
  %3759 = vmatprep.subr.bf16.mxu0 0
  %3760 = vmatpush2.bf16.msra.mxu0 0
  %3761 = vmatprep.subr.bf16.mxu0 0
  %3762 = vmatpush2.bf16.msra.mxu0 0
  %3763 = vmatprep.mubr.bf16.mxu0 0
  %3764 = vmatmul.mubr.bf16.gmra.mxu0 %v3633
  %v3765 = vpop.f32.mrf.mxu0
  %v3766 = vadd.f32 0.0, %v3765
  %v3767 = vpop.f32.mrf.mxu0
  %v3768 = vpop.f32.mrf.mxu0
  %v3769 = vadd.f32 0.0, %v3768
  %v3770 = vpop.f32.mrf.mxu0
  %3771 = vmatprep.mubr.bf16.mxu0 0
  %3772 = vmatmul.mubr.bf16.gmra.mxu0 %v3636
  %v3773 = vpop.f32.mrf.mxu0
  %v3774 = vadd.f32 0.0, %v3773
  %v3775 = vpop.f32.mrf.mxu0
  %v3776 = vpop.f32.mrf.mxu0
  %v3777 = vadd.f32 0.0, %v3776
  %v3778 = vpop.f32.mrf.mxu0
  %3779 = vmatprep.mubr.bf16.mxu0 0
  %3780 = vmatmul.mubr.bf16.gmra.mxu0 %v3639
  %v3781 = vpop.f32.mrf.mxu0
  %v3782 = vadd.f32 0.0, %v3781
  %v3783 = vpop.f32.mrf.mxu0
  %v3784 = vpop.f32.mrf.mxu0
  %v3785 = vadd.f32 0.0, %v3784
  %v3786 = vpop.f32.mrf.mxu0
  %3787 = vmatprep.mubr.bf16.mxu0 0
  %3788 = vmatmul.mubr.bf16.gmra.mxu0 %v3642
  %v3789 = vpop.f32.mrf.mxu0
  %v3790 = vadd.f32 0.0, %v3789
  %v3791 = vpop.f32.mrf.mxu0
  %v3792 = vpop.f32.mrf.mxu0
  %v3793 = vadd.f32 0.0, %v3792
  %v3794 = vpop.f32.mrf.mxu0
  %3795 = vmatprep.mubr.bf16.mxu0 0
  %3796 = vmatmul.mubr.bf16.gmra.mxu0 %v3645
  %v3797 = vpop.f32.mrf.mxu0
  %v3798 = vadd.f32 0.0, %v3797
  %v3799 = vpop.f32.mrf.mxu0
  %v3800 = vpop.f32.mrf.mxu0
  %v3801 = vadd.f32 0.0, %v3800
  %v3802 = vpop.f32.mrf.mxu0
  %3803 = vmatprep.mubr.bf16.mxu0 0
  %3804 = vmatmul.mubr.bf16.gmra.mxu0 %v3648
  %v3805 = vpop.f32.mrf.mxu0
  %v3806 = vadd.f32 0.0, %v3805
  %v3807 = vpop.f32.mrf.mxu0
  %v3808 = vpop.f32.mrf.mxu0
  %v3809 = vadd.f32 0.0, %v3808
  %v3810 = vpop.f32.mrf.mxu0
  %3811 = vmatprep.mubr.bf16.mxu0 0
  %3812 = vmatmul.mubr.bf16.gmra.mxu0 %v3651
  %v3813 = vpop.f32.mrf.mxu0
  %v3814 = vadd.f32 0.0, %v3813
  %v3815 = vpop.f32.mrf.mxu0
  %v3816 = vpop.f32.mrf.mxu0
  %v3817 = vadd.f32 0.0, %v3816
  %v3818 = vpop.f32.mrf.mxu0
  %3819 = vmatprep.mubr.bf16.mxu0 0
  %3820 = vmatmul.mubr.bf16.gmra.mxu0 %v3654
  %v3821 = vpop.f32.mrf.mxu0
  %v3822 = vadd.f32 0.0, %v3821
  %v3823 = vpop.f32.mrf.mxu0
  %v3824 = vpop.f32.mrf.mxu0
  %v3825 = vadd.f32 0.0, %v3824
  %v3826 = vpop.f32.mrf.mxu0
  %3827 = vmatprep.mubr.bf16.mxu0 0
  %3828 = vmatmul.mubr.bf16.gmra.mxu0 %v3657
  %v3829 = vpop.f32.mrf.mxu0
  %v3830 = vadd.f32 0.0, %v3829
  %v3831 = vpop.f32.mrf.mxu0
  %v3832 = vpop.f32.mrf.mxu0
  %v3833 = vadd.f32 0.0, %v3832
  %v3834 = vpop.f32.mrf.mxu0
  %3835 = vmatprep.mubr.bf16.mxu0 0
  %3836 = vmatmul.mubr.bf16.gmra.mxu0 %v3660
  %v3837 = vpop.f32.mrf.mxu0
  %v3838 = vadd.f32 0.0, %v3837
  %v3839 = vpop.f32.mrf.mxu0
  %v3840 = vpop.f32.mrf.mxu0
  %v3841 = vadd.f32 0.0, %v3840
  %v3842 = vpop.f32.mrf.mxu0
  %3843 = vmatprep.mubr.bf16.mxu0 0
  %3844 = vmatmul.mubr.bf16.gmra.mxu0 %v3663
  %v3845 = vpop.f32.mrf.mxu0
  %v3846 = vadd.f32 0.0, %v3845
  %v3847 = vpop.f32.mrf.mxu0
  %v3848 = vpop.f32.mrf.mxu0
  %v3849 = vadd.f32 0.0, %v3848
  %v3850 = vpop.f32.mrf.mxu0
  %3851 = vmatprep.mubr.bf16.mxu0 0
  %3852 = vmatmul.mubr.bf16.gmra.mxu0 %v3666
  %v3853 = vpop.f32.mrf.mxu0
  %v3854 = vadd.f32 0.0, %v3853
  %v3855 = vpop.f32.mrf.mxu0
  %v3856 = vpop.f32.mrf.mxu0
  %v3857 = vadd.f32 0.0, %v3856
  %v3858 = vpop.f32.mrf.mxu0
  %3859 = vmatprep.mubr.bf16.mxu0 0
  %3860 = vmatmul.mubr.bf16.gmra.mxu0 %v3669
  %v3861 = vpop.f32.mrf.mxu0
  %v3862 = vadd.f32 0.0, %v3861
  %v3863 = vpop.f32.mrf.mxu0
  %v3864 = vpop.f32.mrf.mxu0
  %v3865 = vadd.f32 0.0, %v3864
  %v3866 = vpop.f32.mrf.mxu0
  %3867 = vmatprep.mubr.bf16.mxu0 0
  %3868 = vmatmul.mubr.bf16.gmra.mxu0 %v3672
  %v3869 = vpop.f32.mrf.mxu0
  %v3870 = vadd.f32 0.0, %v3869
  %v3871 = vpop.f32.mrf.mxu0
  %v3872 = vpop.f32.mrf.mxu0
  %v3873 = vadd.f32 0.0, %v3872
  %v3874 = vpop.f32.mrf.mxu0
  %3875 = vmatprep.mubr.bf16.mxu0 0
  %3876 = vmatmul.mubr.bf16.gmra.mxu0 %v3675
  %v3877 = vpop.f32.mrf.mxu0
  %v3878 = vadd.f32 0.0, %v3877
  %v3879 = vpop.f32.mrf.mxu0
  %v3880 = vpop.f32.mrf.mxu0
  %v3881 = vadd.f32 0.0, %v3880
  %v3882 = vpop.f32.mrf.mxu0
  %3883 = vmatprep.mubr.bf16.mxu0 0
  %3884 = vmatmul.mubr.bf16.gmra.mxu0 %v3678
  %v3885 = vpop.f32.mrf.mxu0
  %v3886 = vadd.f32 0.0, %v3885
  %v3887 = vpop.f32.mrf.mxu0
  %v3888 = vpop.f32.mrf.mxu0
  %v3889 = vadd.f32 0.0, %v3888
  %v3890 = vpop.f32.mrf.mxu0
  %3891 = vmatprep.mubr.bf16.mxu0 0
  %3892 = vmatmul.mubr.bf16.gmra.mxu0 %v3681
  %v3893 = vpop.f32.mrf.mxu0
  %v3894 = vadd.f32 0.0, %v3893
  %v3895 = vpop.f32.mrf.mxu0
  %v3896 = vpop.f32.mrf.mxu0
  %v3897 = vadd.f32 0.0, %v3896
  %v3898 = vpop.f32.mrf.mxu0
  %3899 = vmatprep.mubr.bf16.mxu0 0
  %3900 = vmatmul.mubr.bf16.gmra.mxu0 %v3684
  %v3901 = vpop.f32.mrf.mxu0
  %v3902 = vadd.f32 0.0, %v3901
  %v3903 = vpop.f32.mrf.mxu0
  %v3904 = vpop.f32.mrf.mxu0
  %v3905 = vadd.f32 0.0, %v3904
  %v3906 = vpop.f32.mrf.mxu0
  %3907 = vmatprep.mubr.bf16.mxu0 0
  %3908 = vmatmul.mubr.bf16.gmra.mxu0 %v3687
  %v3909 = vpop.f32.mrf.mxu0
  %v3910 = vadd.f32 0.0, %v3909
  %v3911 = vpop.f32.mrf.mxu0
  %v3912 = vpop.f32.mrf.mxu0
  %v3913 = vadd.f32 0.0, %v3912
  %v3914 = vpop.f32.mrf.mxu0
  %3915 = vmatprep.mubr.bf16.mxu0 0
  %3916 = vmatmul.mubr.bf16.gmra.mxu0 %v3690
  %v3917 = vpop.f32.mrf.mxu0
  %v3918 = vadd.f32 0.0, %v3917
  %v3919 = vpop.f32.mrf.mxu0
  %v3920 = vpop.f32.mrf.mxu0
  %v3921 = vadd.f32 0.0, %v3920
  %v3922 = vpop.f32.mrf.mxu0
  %3923 = vmatprep.mubr.bf16.mxu0 0
  %3924 = vmatmul.mubr.bf16.gmra.mxu0 %v3693
  %v3925 = vpop.f32.mrf.mxu0
  %v3926 = vadd.f32 0.0, %v3925
  %v3927 = vpop.f32.mrf.mxu0
  %v3928 = vpop.f32.mrf.mxu0
  %v3929 = vadd.f32 0.0, %v3928
  %v3930 = vpop.f32.mrf.mxu0
  %3931 = vmatprep.mubr.bf16.mxu0 0
  %3932 = vmatmul.mubr.bf16.gmra.mxu0 %v3696
  %v3933 = vpop.f32.mrf.mxu0
  %v3934 = vadd.f32 0.0, %v3933
  %v3935 = vpop.f32.mrf.mxu0
  %v3936 = vpop.f32.mrf.mxu0
  %v3937 = vadd.f32 0.0, %v3936
  %v3938 = vpop.f32.mrf.mxu0
  %3939 = vmatprep.mubr.bf16.mxu0 0
  %3940 = vmatmul.mubr.bf16.gmra.mxu0 %v3699
  %v3941 = vpop.f32.mrf.mxu0
  %v3942 = vadd.f32 0.0, %v3941
  %v3943 = vpop.f32.mrf.mxu0
  %v3944 = vpop.f32.mrf.mxu0
  %v3945 = vadd.f32 0.0, %v3944
  %v3946 = vpop.f32.mrf.mxu0
  %3947 = vmatprep.mubr.bf16.mxu0 0
  %3948 = vmatmul.mubr.bf16.gmra.mxu0 %v3702
  %v3949 = vpop.f32.mrf.mxu0
  %v3950 = vadd.f32 0.0, %v3949
  %v3951 = vpop.f32.mrf.mxu0
  %v3952 = vpop.f32.mrf.mxu0
  %v3953 = vadd.f32 0.0, %v3952
  %v3954 = vpop.f32.mrf.mxu0
  %3955 = vmatprep.mubr.bf16.mxu0 0
  %3956 = vmatmul.mubr.bf16.gmra.mxu0 %v3705
  %v3957 = vpop.f32.mrf.mxu0
  %v3958 = vadd.f32 0.0, %v3957
  %v3959 = vpop.f32.mrf.mxu0
  %v3960 = vpop.f32.mrf.mxu0
  %v3961 = vadd.f32 0.0, %v3960
  %v3962 = vpop.f32.mrf.mxu0
  %3963 = vmatprep.mubr.bf16.mxu0 0
  %3964 = vmatmul.mubr.bf16.gmra.mxu0 %v3708
  %v3965 = vpop.f32.mrf.mxu0
  %v3966 = vadd.f32 0.0, %v3965
  %v3967 = vpop.f32.mrf.mxu0
  %v3968 = vpop.f32.mrf.mxu0
  %v3969 = vadd.f32 0.0, %v3968
  %v3970 = vpop.f32.mrf.mxu0
  %3971 = vmatprep.mubr.bf16.mxu0 0
  %3972 = vmatmul.mubr.bf16.gmra.mxu0 %v3711
  %v3973 = vpop.f32.mrf.mxu0
  %v3974 = vadd.f32 0.0, %v3973
  %v3975 = vpop.f32.mrf.mxu0
  %v3976 = vpop.f32.mrf.mxu0
  %v3977 = vadd.f32 0.0, %v3976
  %v3978 = vpop.f32.mrf.mxu0
  %3979 = vmatprep.mubr.bf16.mxu0 0
  %3980 = vmatmul.mubr.bf16.gmra.mxu0 %v3714
  %v3981 = vpop.f32.mrf.mxu0
  %v3982 = vadd.f32 0.0, %v3981
  %v3983 = vpop.f32.mrf.mxu0
  %v3984 = vpop.f32.mrf.mxu0
  %v3985 = vadd.f32 0.0, %v3984
  %v3986 = vpop.f32.mrf.mxu0
  %3987 = vmatprep.mubr.bf16.mxu0 0
  %3988 = vmatmul.mubr.bf16.gmra.mxu0 %v3717
  %v3989 = vpop.f32.mrf.mxu0
  %v3990 = vadd.f32 0.0, %v3989
  %v3991 = vpop.f32.mrf.mxu0
  %v3992 = vpop.f32.mrf.mxu0
  %v3993 = vadd.f32 0.0, %v3992
  %v3994 = vpop.f32.mrf.mxu0
  %3995 = vmatprep.mubr.bf16.mxu0 0
  %3996 = vmatmul.mubr.bf16.gmra.mxu0 %v3720
  %v3997 = vpop.f32.mrf.mxu0
  %v3998 = vadd.f32 0.0, %v3997
  %v3999 = vpop.f32.mrf.mxu0
  %v4000 = vpop.f32.mrf.mxu0
  %v4001 = vadd.f32 0.0, %v4000
  %v4002 = vpop.f32.mrf.mxu0
  %4003 = vmatprep.mubr.bf16.mxu0 0
  %4004 = vmatmul.mubr.bf16.gmra.mxu0 %v3723
  %v4005 = vpop.f32.mrf.mxu0
  %v4006 = vadd.f32 0.0, %v4005
  %v4007 = vpop.f32.mrf.mxu0
  %v4008 = vpop.f32.mrf.mxu0
  %v4009 = vadd.f32 0.0, %v4008
  %v4010 = vpop.f32.mrf.mxu0
  %4011 = vmatprep.mubr.bf16.mxu0 0
  %4012 = vmatmul.mubr.bf16.gmra.mxu0 %v3726
  %v4013 = vpop.f32.mrf.mxu0
  %v4014 = vadd.f32 0.0, %v4013
  %v4015 = vpop.f32.mrf.mxu0
  %v4016 = vpop.f32.mrf.mxu0
  %v4017 = vadd.f32 0.0, %v4016
  %v4018 = vpop.f32.mrf.mxu0
  %4019 = vdwg.mxu0
  %v4020 = vadd.f32 %v3086, %v3766
  %v4021 = vadd.f32 %v3087, %v3769
  %v4022 = vadd.f32 %v3088, %v3774
  %v4023 = vadd.f32 %v3089, %v3777
  %v4024 = vadd.f32 %v3090, %v3782
  %v4025 = vadd.f32 %v3091, %v3785
  %v4026 = vadd.f32 %v3092, %v3790
  %v4027 = vadd.f32 %v3093, %v3793
  %v4028 = vadd.f32 %v3094, %v3798
  %v4029 = vadd.f32 %v3095, %v3801
  %v4030 = vadd.f32 %v3096, %v3806
  %v4031 = vadd.f32 %v3097, %v3809
  %v4032 = vadd.f32 %v3098, %v3814
  %v4033 = vadd.f32 %v3099, %v3817
  %v4034 = vadd.f32 %v3100, %v3822
  %v4035 = vadd.f32 %v3101, %v3825
  %v4036 = vadd.f32 %v3102, %v3830
  %v4037 = vadd.f32 %v3103, %v3833
  %v4038 = vadd.f32 %v3104, %v3838
  %v4039 = vadd.f32 %v3105, %v3841
  %v4040 = vadd.f32 %v3106, %v3846
  %v4041 = vadd.f32 %v3107, %v3849
  %v4042 = vadd.f32 %v3108, %v3854
  %v4043 = vadd.f32 %v3109, %v3857
  %v4044 = vadd.f32 %v3110, %v3862
  %v4045 = vadd.f32 %v3111, %v3865
  %v4046 = vadd.f32 %v3112, %v3870
  %v4047 = vadd.f32 %v3113, %v3873
  %v4048 = vadd.f32 %v3114, %v3878
  %v4049 = vadd.f32 %v3115, %v3881
  %v4050 = vadd.f32 %v3116, %v3886
  %v4051 = vadd.f32 %v3117, %v3889
  %v4052 = vadd.f32 %v3118, %v3894
  %v4053 = vadd.f32 %v3119, %v3897
  %v4054 = vadd.f32 %v3120, %v3902
  %v4055 = vadd.f32 %v3121, %v3905
  %v4056 = vadd.f32 %v3122, %v3910
  %v4057 = vadd.f32 %v3123, %v3913
  %v4058 = vadd.f32 %v3124, %v3918
  %v4059 = vadd.f32 %v3125, %v3921
  %v4060 = vadd.f32 %v3126, %v3926
  %v4061 = vadd.f32 %v3127, %v3929
  %v4062 = vadd.f32 %v3128, %v3934
  %v4063 = vadd.f32 %v3129, %v3937
  %v4064 = vadd.f32 %v3130, %v3942
  %v4065 = vadd.f32 %v3131, %v3945
  %v4066 = vadd.f32 %v3132, %v3950
  %v4067 = vadd.f32 %v3133, %v3953
  %v4068 = vadd.f32 %v3134, %v3958
  %v4069 = vadd.f32 %v3135, %v3961
  %v4070 = vadd.f32 %v3136, %v3966
  %v4071 = vadd.f32 %v3137, %v3969
  %v4072 = vadd.f32 %v3138, %v3974
  %v4073 = vadd.f32 %v3139, %v3977
  %v4074 = vadd.f32 %v3140, %v3982
  %v4075 = vadd.f32 %v3141, %v3985
  %v4076 = vadd.f32 %v3142, %v3990
  %v4077 = vadd.f32 %v3143, %v3993
  %v4078 = vadd.f32 %v3144, %v3998
  %v4079 = vadd.f32 %v3145, %v4001
  %v4080 = vadd.f32 %v3146, %v4006
  %v4081 = vadd.f32 %v3147, %v4009
  %v4082 = vadd.f32 %v3148, %v4014
  %v4083 = vadd.f32 %v3149, %v4017
  %v4084 = vld [vmem:[%s0 + $0x11] sm:$0xff]
  %v4085 = vld [vmem:[%s0 + $0x19] sm:$0xff]
  %v4086 = vld [vmem:[%s0 + $0x21] sm:$0xff]
  %v4087 = vld [vmem:[%s0 + $0x29] sm:$0xff]
  %v4088 = vld [vmem:[%s0 + $0x31] sm:$0xff]
  %v4089 = vld [vmem:[%s0 + $0x39] sm:$0xff]
  %v4090 = vld [vmem:[%s0 + $0x41] sm:$0xff]
  %v4091 = vld [vmem:[%s0 + $0x49] sm:$0xff]
  %v4092 = vld [vmem:[%s0 + $0x51] sm:$0xff]
  %v4093 = vld [vmem:[%s0 + $0x59] sm:$0xff]
  %v4094 = vld [vmem:[%s0 + $0x61] sm:$0xff]
  %v4095 = vld [vmem:[%s0 + $0x69] sm:$0xff]
  %v4096 = vld [vmem:[%s0 + $0x71] sm:$0xff]
  %v4097 = vld [vmem:[%s0 + $0x79] sm:$0xff]
  %v4098 = vld [vmem:[%s0 + $0x81] sm:$0xff]
  %v4099 = vld [vmem:[%s0 + $0x89] sm:$0xff]
  %v4100 = vld [vmem:[%s0 + $0x91] sm:$0xff]
  %v4101 = vld [vmem:[%s0 + $0x99] sm:$0xff]
  %v4102 = vld [vmem:[%s0 + $0xa1] sm:$0xff]
  %v4103 = vld [vmem:[%s0 + $0xa9] sm:$0xff]
  %v4104 = vld [vmem:[%s0 + $0xb1] sm:$0xff]
  %v4105 = vld [vmem:[%s0 + $0xb9] sm:$0xff]
  %v4106 = vld [vmem:[%s0 + $0xc1] sm:$0xff]
  %v4107 = vld [vmem:[%s0 + $0xc9] sm:$0xff]
  %v4108 = vld [vmem:[%s0 + $0xd1] sm:$0xff]
  %v4109 = vld [vmem:[%s0 + $0xd9] sm:$0xff]
  %v4110 = vld [vmem:[%s0 + $0xe1] sm:$0xff]
  %v4111 = vld [vmem:[%s0 + $0xe9] sm:$0xff]
  %v4112 = vld [vmem:[%s0 + $0xf1] sm:$0xff]
  %v4113 = vld [vmem:[%s0 + $0xf9] sm:$0xff]
  %v4114 = vld [vmem:[%s0 + $0x101] sm:$0xff]
  %v4115 = vld [vmem:[%s0 + $0x109] sm:$0xff]
  %v4116 = vld [vmem:[%s0 + $0x111] sm:$0xff]
  %v4117 = vld [vmem:[%s0 + $0x119] sm:$0xff]
  %v4118 = vld [vmem:[%s0 + $0x121] sm:$0xff]
  %v4119 = vld [vmem:[%s0 + $0x129] sm:$0xff]
  %v4120 = vld [vmem:[%s0 + $0x131] sm:$0xff]
  %v4121 = vld [vmem:[%s0 + $0x139] sm:$0xff]
  %v4122 = vld [vmem:[%s0 + $0x141] sm:$0xff]
  %v4123 = vld [vmem:[%s0 + $0x149] sm:$0xff]
  %v4124 = vld [vmem:[%s0 + $0x151] sm:$0xff]
  %v4125 = vld [vmem:[%s0 + $0x159] sm:$0xff]
  %v4126 = vld [vmem:[%s0 + $0x161] sm:$0xff]
  %v4127 = vld [vmem:[%s0 + $0x169] sm:$0xff]
  %v4128 = vld [vmem:[%s0 + $0x171] sm:$0xff]
  %v4129 = vld [vmem:[%s0 + $0x179] sm:$0xff]
  %v4130 = vld [vmem:[%s0 + $0x181] sm:$0xff]
  %v4131 = vld [vmem:[%s0 + $0x189] sm:$0xff]
  %v4132 = vld [vmem:[%s0 + $0x191] sm:$0xff]
  %v4133 = vld [vmem:[%s0 + $0x199] sm:$0xff]
  %v4134 = vld [vmem:[%s0 + $0x1a1] sm:$0xff]
  %v4135 = vld [vmem:[%s0 + $0x1a9] sm:$0xff]
  %v4136 = vld [vmem:[%s0 + $0x1b1] sm:$0xff]
  %v4137 = vld [vmem:[%s0 + $0x1b9] sm:$0xff]
  %v4138 = vld [vmem:[%s0 + $0x1c1] sm:$0xff]
  %v4139 = vld [vmem:[%s0 + $0x1c9] sm:$0xff]
  %v4140 = vld [vmem:[%s0 + $0x1d1] sm:$0xff]
  %v4141 = vld [vmem:[%s0 + $0x1d9] sm:$0xff]
  %v4142 = vld [vmem:[%s0 + $0x1e1] sm:$0xff]
  %v4143 = vld [vmem:[%s0 + $0x1e9] sm:$0xff]
  %v4144 = vld [vmem:[%s0 + $0x1f1] sm:$0xff]
  %v4145 = vld [vmem:[%s0 + $0x1f9] sm:$0xff]
  %v4146 = vld [vmem:[%s0 + $0x201] sm:$0xff]
  %v4147 = vld [vmem:[%s0 + $0x209] sm:$0xff]
  %v4148 = vpack.c.bf16 %v4085, %v4084
  %v4149 = vpack.c.bf16 %v4087, %v4086
  %v4150 = vpack.c.bf16 %v4089, %v4088
  %v4151 = vpack.c.bf16 %v4091, %v4090
  %v4152 = vpack.c.bf16 %v4093, %v4092
  %v4153 = vpack.c.bf16 %v4095, %v4094
  %v4154 = vpack.c.bf16 %v4097, %v4096
  %v4155 = vpack.c.bf16 %v4099, %v4098
  %v4156 = vpack.c.bf16 %v4101, %v4100
  %v4157 = vpack.c.bf16 %v4103, %v4102
  %v4158 = vpack.c.bf16 %v4105, %v4104
  %v4159 = vpack.c.bf16 %v4107, %v4106
  %v4160 = vpack.c.bf16 %v4109, %v4108
  %v4161 = vpack.c.bf16 %v4111, %v4110
  %v4162 = vpack.c.bf16 %v4113, %v4112
  %v4163 = vpack.c.bf16 %v4115, %v4114
  %v4164 = vpack.c.bf16 %v4117, %v4116
  %v4165 = vpack.c.bf16 %v4119, %v4118
  %v4166 = vpack.c.bf16 %v4121, %v4120
  %v4167 = vpack.c.bf16 %v4123, %v4122
  %v4168 = vpack.c.bf16 %v4125, %v4124
  %v4169 = vpack.c.bf16 %v4127, %v4126
  %v4170 = vpack.c.bf16 %v4129, %v4128
  %v4171 = vpack.c.bf16 %v4131, %v4130
  %v4172 = vpack.c.bf16 %v4133, %v4132
  %v4173 = vpack.c.bf16 %v4135, %v4134
  %v4174 = vpack.c.bf16 %v4137, %v4136
  %v4175 = vpack.c.bf16 %v4139, %v4138
  %v4176 = vpack.c.bf16 %v4141, %v4140
  %v4177 = vpack.c.bf16 %v4143, %v4142
  %v4178 = vpack.c.bf16 %v4145, %v4144
  %v4179 = vpack.c.bf16 %v4147, %v4146
  %s4180 = scalar_lea.vmem %s3, 8
  %v4181 = vld [vmem:[%s4180] sm:$0x3]
  %v4183 = vsel %vm1307, %v4148, 0
  %v4186 = vsel %vm1307, %v4149, 0
  %v4189 = vsel %vm1307, %v4150, 0
  %v4192 = vsel %vm1307, %v4151, 0
  %v4195 = vsel %vm1307, %v4152, 0
  %v4198 = vsel %vm1307, %v4153, 0
  %v4201 = vsel %vm1307, %v4154, 0
  %v4204 = vsel %vm1307, %v4155, 0
  %v4207 = vsel %vm1307, %v4156, 0
  %v4210 = vsel %vm1307, %v4157, 0
  %v4213 = vsel %vm1307, %v4158, 0
  %v4216 = vsel %vm1307, %v4159, 0
  %v4219 = vsel %vm1307, %v4160, 0
  %v4222 = vsel %vm1307, %v4161, 0
  %v4225 = vsel %vm1307, %v4162, 0
  %v4228 = vsel %vm1307, %v4163, 0
  %v4231 = vsel %vm1307, %v4164, 0
  %v4234 = vsel %vm1307, %v4165, 0
  %v4237 = vsel %vm1307, %v4166, 0
  %v4240 = vsel %vm1307, %v4167, 0
  %v4243 = vsel %vm1307, %v4168, 0
  %v4246 = vsel %vm1307, %v4169, 0
  %v4249 = vsel %vm1307, %v4170, 0
  %v4252 = vsel %vm1307, %v4171, 0
  %v4255 = vsel %vm1307, %v4172, 0
  %v4258 = vsel %vm1307, %v4173, 0
  %v4261 = vsel %vm1307, %v4174, 0
  %v4264 = vsel %vm1307, %v4175, 0
  %v4267 = vsel %vm1307, %v4176, 0
  %v4270 = vsel %vm1307, %v4177, 0
  %v4273 = vsel %vm1307, %v4178, 0
  %v4276 = vsel %vm1307, %v4179, 0
  %v4279 = vand.u32 %v4181, %v1407
  %4281 = vmatprep.subr.bf16.mxu0 0
  %4282 = vmatpush1.bf16.msra.mxu0 0
  %4283 = vmatprep.subr.bf16.mxu0 0
  %4284 = vmatpush1.bf16.msra.mxu0 0
  %4285 = vmatprep.subr.bf16.mxu0 0
  %4286 = vmatpush1.bf16.msra.mxu0 0
  %4287 = vmatprep.subr.bf16.mxu0 0
  %4288 = vmatpush1.bf16.msra.mxu0 0
  %4289 = vmatprep.subr.bf16.mxu0 0
  %4290 = vmatpush1.bf16.msra.mxu0 0
  %4291 = vmatprep.subr.bf16.mxu0 0
  %4292 = vmatpush1.bf16.msra.mxu0 0
  %4293 = vmatprep.subr.bf16.mxu0 0
  %4294 = vmatpush1.bf16.msra.mxu0 0
  %4295 = vmatprep.subr.bf16.mxu0 0
  %4296 = vmatpush1.bf16.msra.mxu0 %v4279
  %4297 = vmatprep.subr.bf16.mxu0 0
  %4298 = vmatpush2.bf16.msra.mxu0 0
  %4299 = vmatprep.subr.bf16.mxu0 0
  %4300 = vmatpush2.bf16.msra.mxu0 0
  %4301 = vmatprep.subr.bf16.mxu0 0
  %4302 = vmatpush2.bf16.msra.mxu0 0
  %4303 = vmatprep.subr.bf16.mxu0 0
  %4304 = vmatpush2.bf16.msra.mxu0 0
  %4305 = vmatprep.subr.bf16.mxu0 0
  %4306 = vmatpush2.bf16.msra.mxu0 0
  %4307 = vmatprep.subr.bf16.mxu0 0
  %4308 = vmatpush2.bf16.msra.mxu0 0
  %4309 = vmatprep.subr.bf16.mxu0 0
  %4310 = vmatpush2.bf16.msra.mxu0 0
  %4311 = vmatprep.subr.bf16.mxu0 0
  %4312 = vmatpush2.bf16.msra.mxu0 0
  %4313 = vmatprep.mubr.bf16.mxu0 0
  %4314 = vmatmul.mubr.bf16.gmra.mxu0 %v4183
  %v4315 = vpop.f32.mrf.mxu0
  %v4316 = vadd.f32 0.0, %v4315
  %v4317 = vpop.f32.mrf.mxu0
  %v4318 = vpop.f32.mrf.mxu0
  %v4319 = vadd.f32 0.0, %v4318
  %v4320 = vpop.f32.mrf.mxu0
  %4321 = vmatprep.mubr.bf16.mxu0 0
  %4322 = vmatmul.mubr.bf16.gmra.mxu0 %v4186
  %v4323 = vpop.f32.mrf.mxu0
  %v4324 = vadd.f32 0.0, %v4323
  %v4325 = vpop.f32.mrf.mxu0
  %v4326 = vpop.f32.mrf.mxu0
  %v4327 = vadd.f32 0.0, %v4326
  %v4328 = vpop.f32.mrf.mxu0
  %4329 = vmatprep.mubr.bf16.mxu0 0
  %4330 = vmatmul.mubr.bf16.gmra.mxu0 %v4189
  %v4331 = vpop.f32.mrf.mxu0
  %v4332 = vadd.f32 0.0, %v4331
  %v4333 = vpop.f32.mrf.mxu0
  %v4334 = vpop.f32.mrf.mxu0
  %v4335 = vadd.f32 0.0, %v4334
  %v4336 = vpop.f32.mrf.mxu0
  %4337 = vmatprep.mubr.bf16.mxu0 0
  %4338 = vmatmul.mubr.bf16.gmra.mxu0 %v4192
  %v4339 = vpop.f32.mrf.mxu0
  %v4340 = vadd.f32 0.0, %v4339
  %v4341 = vpop.f32.mrf.mxu0
  %v4342 = vpop.f32.mrf.mxu0
  %v4343 = vadd.f32 0.0, %v4342
  %v4344 = vpop.f32.mrf.mxu0
  %4345 = vmatprep.mubr.bf16.mxu0 0
  %4346 = vmatmul.mubr.bf16.gmra.mxu0 %v4195
  %v4347 = vpop.f32.mrf.mxu0
  %v4348 = vadd.f32 0.0, %v4347
  %v4349 = vpop.f32.mrf.mxu0
  %v4350 = vpop.f32.mrf.mxu0
  %v4351 = vadd.f32 0.0, %v4350
  %v4352 = vpop.f32.mrf.mxu0
  %4353 = vmatprep.mubr.bf16.mxu0 0
  %4354 = vmatmul.mubr.bf16.gmra.mxu0 %v4198
  %v4355 = vpop.f32.mrf.mxu0
  %v4356 = vadd.f32 0.0, %v4355
  %v4357 = vpop.f32.mrf.mxu0
  %v4358 = vpop.f32.mrf.mxu0
  %v4359 = vadd.f32 0.0, %v4358
  %v4360 = vpop.f32.mrf.mxu0
  %4361 = vmatprep.mubr.bf16.mxu0 0
  %4362 = vmatmul.mubr.bf16.gmra.mxu0 %v4201
  %v4363 = vpop.f32.mrf.mxu0
  %v4364 = vadd.f32 0.0, %v4363
  %v4365 = vpop.f32.mrf.mxu0
  %v4366 = vpop.f32.mrf.mxu0
  %v4367 = vadd.f32 0.0, %v4366
  %v4368 = vpop.f32.mrf.mxu0
  %4369 = vmatprep.mubr.bf16.mxu0 0
  %4370 = vmatmul.mubr.bf16.gmra.mxu0 %v4204
  %v4371 = vpop.f32.mrf.mxu0
  %v4372 = vadd.f32 0.0, %v4371
  %v4373 = vpop.f32.mrf.mxu0
  %v4374 = vpop.f32.mrf.mxu0
  %v4375 = vadd.f32 0.0, %v4374
  %v4376 = vpop.f32.mrf.mxu0
  %4377 = vmatprep.mubr.bf16.mxu0 0
  %4378 = vmatmul.mubr.bf16.gmra.mxu0 %v4207
  %v4379 = vpop.f32.mrf.mxu0
  %v4380 = vadd.f32 0.0, %v4379
  %v4381 = vpop.f32.mrf.mxu0
  %v4382 = vpop.f32.mrf.mxu0
  %v4383 = vadd.f32 0.0, %v4382
  %v4384 = vpop.f32.mrf.mxu0
  %4385 = vmatprep.mubr.bf16.mxu0 0
  %4386 = vmatmul.mubr.bf16.gmra.mxu0 %v4210
  %v4387 = vpop.f32.mrf.mxu0
  %v4388 = vadd.f32 0.0, %v4387
  %v4389 = vpop.f32.mrf.mxu0
  %v4390 = vpop.f32.mrf.mxu0
  %v4391 = vadd.f32 0.0, %v4390
  %v4392 = vpop.f32.mrf.mxu0
  %4393 = vmatprep.mubr.bf16.mxu0 0
  %4394 = vmatmul.mubr.bf16.gmra.mxu0 %v4213
  %v4395 = vpop.f32.mrf.mxu0
  %v4396 = vadd.f32 0.0, %v4395
  %v4397 = vpop.f32.mrf.mxu0
  %v4398 = vpop.f32.mrf.mxu0
  %v4399 = vadd.f32 0.0, %v4398
  %v4400 = vpop.f32.mrf.mxu0
  %4401 = vmatprep.mubr.bf16.mxu0 0
  %4402 = vmatmul.mubr.bf16.gmra.mxu0 %v4216
  %v4403 = vpop.f32.mrf.mxu0
  %v4404 = vadd.f32 0.0, %v4403
  %v4405 = vpop.f32.mrf.mxu0
  %v4406 = vpop.f32.mrf.mxu0
  %v4407 = vadd.f32 0.0, %v4406
  %v4408 = vpop.f32.mrf.mxu0
  %4409 = vmatprep.mubr.bf16.mxu0 0
  %4410 = vmatmul.mubr.bf16.gmra.mxu0 %v4219
  %v4411 = vpop.f32.mrf.mxu0
  %v4412 = vadd.f32 0.0, %v4411
  %v4413 = vpop.f32.mrf.mxu0
  %v4414 = vpop.f32.mrf.mxu0
  %v4415 = vadd.f32 0.0, %v4414
  %v4416 = vpop.f32.mrf.mxu0
  %4417 = vmatprep.mubr.bf16.mxu0 0
  %4418 = vmatmul.mubr.bf16.gmra.mxu0 %v4222
  %v4419 = vpop.f32.mrf.mxu0
  %v4420 = vadd.f32 0.0, %v4419
  %v4421 = vpop.f32.mrf.mxu0
  %v4422 = vpop.f32.mrf.mxu0
  %v4423 = vadd.f32 0.0, %v4422
  %v4424 = vpop.f32.mrf.mxu0
  %4425 = vmatprep.mubr.bf16.mxu0 0
  %4426 = vmatmul.mubr.bf16.gmra.mxu0 %v4225
  %v4427 = vpop.f32.mrf.mxu0
  %v4428 = vadd.f32 0.0, %v4427
  %v4429 = vpop.f32.mrf.mxu0
  %v4430 = vpop.f32.mrf.mxu0
  %v4431 = vadd.f32 0.0, %v4430
  %v4432 = vpop.f32.mrf.mxu0
  %4433 = vmatprep.mubr.bf16.mxu0 0
  %4434 = vmatmul.mubr.bf16.gmra.mxu0 %v4228
  %v4435 = vpop.f32.mrf.mxu0
  %v4436 = vadd.f32 0.0, %v4435
  %v4437 = vpop.f32.mrf.mxu0
  %v4438 = vpop.f32.mrf.mxu0
  %v4439 = vadd.f32 0.0, %v4438
  %v4440 = vpop.f32.mrf.mxu0
  %4441 = vmatprep.mubr.bf16.mxu0 0
  %4442 = vmatmul.mubr.bf16.gmra.mxu0 %v4231
  %v4443 = vpop.f32.mrf.mxu0
  %v4444 = vadd.f32 0.0, %v4443
  %v4445 = vpop.f32.mrf.mxu0
  %v4446 = vpop.f32.mrf.mxu0
  %v4447 = vadd.f32 0.0, %v4446
  %v4448 = vpop.f32.mrf.mxu0
  %4449 = vmatprep.mubr.bf16.mxu0 0
  %4450 = vmatmul.mubr.bf16.gmra.mxu0 %v4234
  %v4451 = vpop.f32.mrf.mxu0
  %v4452 = vadd.f32 0.0, %v4451
  %v4453 = vpop.f32.mrf.mxu0
  %v4454 = vpop.f32.mrf.mxu0
  %v4455 = vadd.f32 0.0, %v4454
  %v4456 = vpop.f32.mrf.mxu0
  %4457 = vmatprep.mubr.bf16.mxu0 0
  %4458 = vmatmul.mubr.bf16.gmra.mxu0 %v4237
  %v4459 = vpop.f32.mrf.mxu0
  %v4460 = vadd.f32 0.0, %v4459
  %v4461 = vpop.f32.mrf.mxu0
  %v4462 = vpop.f32.mrf.mxu0
  %v4463 = vadd.f32 0.0, %v4462
  %v4464 = vpop.f32.mrf.mxu0
  %4465 = vmatprep.mubr.bf16.mxu0 0
  %4466 = vmatmul.mubr.bf16.gmra.mxu0 %v4240
  %v4467 = vpop.f32.mrf.mxu0
  %v4468 = vadd.f32 0.0, %v4467
  %v4469 = vpop.f32.mrf.mxu0
  %v4470 = vpop.f32.mrf.mxu0
  %v4471 = vadd.f32 0.0, %v4470
  %v4472 = vpop.f32.mrf.mxu0
  %4473 = vmatprep.mubr.bf16.mxu0 0
  %4474 = vmatmul.mubr.bf16.gmra.mxu0 %v4243
  %v4475 = vpop.f32.mrf.mxu0
  %v4476 = vadd.f32 0.0, %v4475
  %v4477 = vpop.f32.mrf.mxu0
  %v4478 = vpop.f32.mrf.mxu0
  %v4479 = vadd.f32 0.0, %v4478
  %v4480 = vpop.f32.mrf.mxu0
  %4481 = vmatprep.mubr.bf16.mxu0 0
  %4482 = vmatmul.mubr.bf16.gmra.mxu0 %v4246
  %v4483 = vpop.f32.mrf.mxu0
  %v4484 = vadd.f32 0.0, %v4483
  %v4485 = vpop.f32.mrf.mxu0
  %v4486 = vpop.f32.mrf.mxu0
  %v4487 = vadd.f32 0.0, %v4486
  %v4488 = vpop.f32.mrf.mxu0
  %4489 = vmatprep.mubr.bf16.mxu0 0
  %4490 = vmatmul.mubr.bf16.gmra.mxu0 %v4249
  %v4491 = vpop.f32.mrf.mxu0
  %v4492 = vadd.f32 0.0, %v4491
  %v4493 = vpop.f32.mrf.mxu0
  %v4494 = vpop.f32.mrf.mxu0
  %v4495 = vadd.f32 0.0, %v4494
  %v4496 = vpop.f32.mrf.mxu0
  %4497 = vmatprep.mubr.bf16.mxu0 0
  %4498 = vmatmul.mubr.bf16.gmra.mxu0 %v4252
  %v4499 = vpop.f32.mrf.mxu0
  %v4500 = vadd.f32 0.0, %v4499
  %v4501 = vpop.f32.mrf.mxu0
  %v4502 = vpop.f32.mrf.mxu0
  %v4503 = vadd.f32 0.0, %v4502
  %v4504 = vpop.f32.mrf.mxu0
  %4505 = vmatprep.mubr.bf16.mxu0 0
  %4506 = vmatmul.mubr.bf16.gmra.mxu0 %v4255
  %v4507 = vpop.f32.mrf.mxu0
  %v4508 = vadd.f32 0.0, %v4507
  %v4509 = vpop.f32.mrf.mxu0
  %v4510 = vpop.f32.mrf.mxu0
  %v4511 = vadd.f32 0.0, %v4510
  %v4512 = vpop.f32.mrf.mxu0
  %4513 = vmatprep.mubr.bf16.mxu0 0
  %4514 = vmatmul.mubr.bf16.gmra.mxu0 %v4258
  %v4515 = vpop.f32.mrf.mxu0
  %v4516 = vadd.f32 0.0, %v4515
  %v4517 = vpop.f32.mrf.mxu0
  %v4518 = vpop.f32.mrf.mxu0
  %v4519 = vadd.f32 0.0, %v4518
  %v4520 = vpop.f32.mrf.mxu0
  %4521 = vmatprep.mubr.bf16.mxu0 0
  %4522 = vmatmul.mubr.bf16.gmra.mxu0 %v4261
  %v4523 = vpop.f32.mrf.mxu0
  %v4524 = vadd.f32 0.0, %v4523
  %v4525 = vpop.f32.mrf.mxu0
  %v4526 = vpop.f32.mrf.mxu0
  %v4527 = vadd.f32 0.0, %v4526
  %v4528 = vpop.f32.mrf.mxu0
  %4529 = vmatprep.mubr.bf16.mxu0 0
  %4530 = vmatmul.mubr.bf16.gmra.mxu0 %v4264
  %v4531 = vpop.f32.mrf.mxu0
  %v4532 = vadd.f32 0.0, %v4531
  %v4533 = vpop.f32.mrf.mxu0
  %v4534 = vpop.f32.mrf.mxu0
  %v4535 = vadd.f32 0.0, %v4534
  %v4536 = vpop.f32.mrf.mxu0
  %4537 = vmatprep.mubr.bf16.mxu0 0
  %4538 = vmatmul.mubr.bf16.gmra.mxu0 %v4267
  %v4539 = vpop.f32.mrf.mxu0
  %v4540 = vadd.f32 0.0, %v4539
  %v4541 = vpop.f32.mrf.mxu0
  %v4542 = vpop.f32.mrf.mxu0
  %v4543 = vadd.f32 0.0, %v4542
  %v4544 = vpop.f32.mrf.mxu0
  %4545 = vmatprep.mubr.bf16.mxu0 0
  %4546 = vmatmul.mubr.bf16.gmra.mxu0 %v4270
  %v4547 = vpop.f32.mrf.mxu0
  %v4548 = vadd.f32 0.0, %v4547
  %v4549 = vpop.f32.mrf.mxu0
  %v4550 = vpop.f32.mrf.mxu0
  %v4551 = vadd.f32 0.0, %v4550
  %v4552 = vpop.f32.mrf.mxu0
  %4553 = vmatprep.mubr.bf16.mxu0 0
  %4554 = vmatmul.mubr.bf16.gmra.mxu0 %v4273
  %v4555 = vpop.f32.mrf.mxu0
  %v4556 = vadd.f32 0.0, %v4555
  %v4557 = vpop.f32.mrf.mxu0
  %v4558 = vpop.f32.mrf.mxu0
  %v4559 = vadd.f32 0.0, %v4558
  %v4560 = vpop.f32.mrf.mxu0
  %4561 = vmatprep.mubr.bf16.mxu0 0
  %4562 = vmatmul.mubr.bf16.gmra.mxu0 %v4276
  %v4563 = vpop.f32.mrf.mxu0
  %v4564 = vadd.f32 0.0, %v4563
  %v4565 = vpop.f32.mrf.mxu0
  %v4566 = vpop.f32.mrf.mxu0
  %v4567 = vadd.f32 0.0, %v4566
  %v4568 = vpop.f32.mrf.mxu0
  %4569 = vdwg.mxu0
  %v4570 = vadd.f32 %v4020, %v4316
  %v4571 = vadd.f32 %v4021, %v4319
  %v4572 = vadd.f32 %v4022, %v4324
  %v4573 = vadd.f32 %v4023, %v4327
  %v4574 = vadd.f32 %v4024, %v4332
  %v4575 = vadd.f32 %v4025, %v4335
  %v4576 = vadd.f32 %v4026, %v4340
  %v4577 = vadd.f32 %v4027, %v4343
  %v4578 = vadd.f32 %v4028, %v4348
  %v4579 = vadd.f32 %v4029, %v4351
  %v4580 = vadd.f32 %v4030, %v4356
  %v4581 = vadd.f32 %v4031, %v4359
  %v4582 = vadd.f32 %v4032, %v4364
  %v4583 = vadd.f32 %v4033, %v4367
  %v4584 = vadd.f32 %v4034, %v4372
  %v4585 = vadd.f32 %v4035, %v4375
  %v4586 = vadd.f32 %v4036, %v4380
  %v4587 = vadd.f32 %v4037, %v4383
  %v4588 = vadd.f32 %v4038, %v4388
  %v4589 = vadd.f32 %v4039, %v4391
  %v4590 = vadd.f32 %v4040, %v4396
  %v4591 = vadd.f32 %v4041, %v4399
  %v4592 = vadd.f32 %v4042, %v4404
  %v4593 = vadd.f32 %v4043, %v4407
  %v4594 = vadd.f32 %v4044, %v4412
  %v4595 = vadd.f32 %v4045, %v4415
  %v4596 = vadd.f32 %v4046, %v4420
  %v4597 = vadd.f32 %v4047, %v4423
  %v4598 = vadd.f32 %v4048, %v4428
  %v4599 = vadd.f32 %v4049, %v4431
  %v4600 = vadd.f32 %v4050, %v4436
  %v4601 = vadd.f32 %v4051, %v4439
  %v4602 = vadd.f32 %v4052, %v4444
  %v4603 = vadd.f32 %v4053, %v4447
  %v4604 = vadd.f32 %v4054, %v4452
  %v4605 = vadd.f32 %v4055, %v4455
  %v4606 = vadd.f32 %v4056, %v4460
  %v4607 = vadd.f32 %v4057, %v4463
  %v4608 = vadd.f32 %v4058, %v4468
  %v4609 = vadd.f32 %v4059, %v4471
  %v4610 = vadd.f32 %v4060, %v4476
  %v4611 = vadd.f32 %v4061, %v4479
  %v4612 = vadd.f32 %v4062, %v4484
  %v4613 = vadd.f32 %v4063, %v4487
  %v4614 = vadd.f32 %v4064, %v4492
  %v4615 = vadd.f32 %v4065, %v4495
  %v4616 = vadd.f32 %v4066, %v4500
  %v4617 = vadd.f32 %v4067, %v4503
  %v4618 = vadd.f32 %v4068, %v4508
  %v4619 = vadd.f32 %v4069, %v4511
  %v4620 = vadd.f32 %v4070, %v4516
  %v4621 = vadd.f32 %v4071, %v4519
  %v4622 = vadd.f32 %v4072, %v4524
  %v4623 = vadd.f32 %v4073, %v4527
  %v4624 = vadd.f32 %v4074, %v4532
  %v4625 = vadd.f32 %v4075, %v4535
  %v4626 = vadd.f32 %v4076, %v4540
  %v4627 = vadd.f32 %v4077, %v4543
  %v4628 = vadd.f32 %v4078, %v4548
  %v4629 = vadd.f32 %v4079, %v4551
  %v4630 = vadd.f32 %v4080, %v4556
  %v4631 = vadd.f32 %v4081, %v4559
  %v4632 = vadd.f32 %v4082, %v4564
  %v4633 = vadd.f32 %v4083, %v4567
  %v4634 = vld [vmem:[%s0 + $0x12] sm:$0xff]
  %v4635 = vld [vmem:[%s0 + $0x1a] sm:$0xff]
  %v4636 = vld [vmem:[%s0 + $0x22] sm:$0xff]
  %v4637 = vld [vmem:[%s0 + $0x2a] sm:$0xff]
  %v4638 = vld [vmem:[%s0 + $0x32] sm:$0xff]
  %v4639 = vld [vmem:[%s0 + $0x3a] sm:$0xff]
  %v4640 = vld [vmem:[%s0 + $0x42] sm:$0xff]
  %v4641 = vld [vmem:[%s0 + $0x4a] sm:$0xff]
  %v4642 = vld [vmem:[%s0 + $0x52] sm:$0xff]
  %v4643 = vld [vmem:[%s0 + $0x5a] sm:$0xff]
  %v4644 = vld [vmem:[%s0 + $0x62] sm:$0xff]
  %v4645 = vld [vmem:[%s0 + $0x6a] sm:$0xff]
  %v4646 = vld [vmem:[%s0 + $0x72] sm:$0xff]
  %v4647 = vld [vmem:[%s0 + $0x7a] sm:$0xff]
  %v4648 = vld [vmem:[%s0 + $0x82] sm:$0xff]
  %v4649 = vld [vmem:[%s0 + $0x8a] sm:$0xff]
  %v4650 = vld [vmem:[%s0 + $0x92] sm:$0xff]
  %v4651 = vld [vmem:[%s0 + $0x9a] sm:$0xff]
  %v4652 = vld [vmem:[%s0 + $0xa2] sm:$0xff]
  %v4653 = vld [vmem:[%s0 + $0xaa] sm:$0xff]
  %v4654 = vld [vmem:[%s0 + $0xb2] sm:$0xff]
  %v4655 = vld [vmem:[%s0 + $0xba] sm:$0xff]
  %v4656 = vld [vmem:[%s0 + $0xc2] sm:$0xff]
  %v4657 = vld [vmem:[%s0 + $0xca] sm:$0xff]
  %v4658 = vld [vmem:[%s0 + $0xd2] sm:$0xff]
  %v4659 = vld [vmem:[%s0 + $0xda] sm:$0xff]
  %v4660 = vld [vmem:[%s0 + $0xe2] sm:$0xff]
  %v4661 = vld [vmem:[%s0 + $0xea] sm:$0xff]
  %v4662 = vld [vmem:[%s0 + $0xf2] sm:$0xff]
  %v4663 = vld [vmem:[%s0 + $0xfa] sm:$0xff]
  %v4664 = vld [vmem:[%s0 + $0x102] sm:$0xff]
  %v4665 = vld [vmem:[%s0 + $0x10a] sm:$0xff]
  %v4666 = vld [vmem:[%s0 + $0x112] sm:$0xff]
  %v4667 = vld [vmem:[%s0 + $0x11a] sm:$0xff]
  %v4668 = vld [vmem:[%s0 + $0x122] sm:$0xff]
  %v4669 = vld [vmem:[%s0 + $0x12a] sm:$0xff]
  %v4670 = vld [vmem:[%s0 + $0x132] sm:$0xff]
  %v4671 = vld [vmem:[%s0 + $0x13a] sm:$0xff]
  %v4672 = vld [vmem:[%s0 + $0x142] sm:$0xff]
  %v4673 = vld [vmem:[%s0 + $0x14a] sm:$0xff]
  %v4674 = vld [vmem:[%s0 + $0x152] sm:$0xff]
  %v4675 = vld [vmem:[%s0 + $0x15a] sm:$0xff]
  %v4676 = vld [vmem:[%s0 + $0x162] sm:$0xff]
  %v4677 = vld [vmem:[%s0 + $0x16a] sm:$0xff]
  %v4678 = vld [vmem:[%s0 + $0x172] sm:$0xff]
  %v4679 = vld [vmem:[%s0 + $0x17a] sm:$0xff]
  %v4680 = vld [vmem:[%s0 + $0x182] sm:$0xff]
  %v4681 = vld [vmem:[%s0 + $0x18a] sm:$0xff]
  %v4682 = vld [vmem:[%s0 + $0x192] sm:$0xff]
  %v4683 = vld [vmem:[%s0 + $0x19a] sm:$0xff]
  %v4684 = vld [vmem:[%s0 + $0x1a2] sm:$0xff]
  %v4685 = vld [vmem:[%s0 + $0x1aa] sm:$0xff]
  %v4686 = vld [vmem:[%s0 + $0x1b2] sm:$0xff]
  %v4687 = vld [vmem:[%s0 + $0x1ba] sm:$0xff]
  %v4688 = vld [vmem:[%s0 + $0x1c2] sm:$0xff]
  %v4689 = vld [vmem:[%s0 + $0x1ca] sm:$0xff]
  %v4690 = vld [vmem:[%s0 + $0x1d2] sm:$0xff]
  %v4691 = vld [vmem:[%s0 + $0x1da] sm:$0xff]
  %v4692 = vld [vmem:[%s0 + $0x1e2] sm:$0xff]
  %v4693 = vld [vmem:[%s0 + $0x1ea] sm:$0xff]
  %v4694 = vld [vmem:[%s0 + $0x1f2] sm:$0xff]
  %v4695 = vld [vmem:[%s0 + $0x1fa] sm:$0xff]
  %v4696 = vld [vmem:[%s0 + $0x202] sm:$0xff]
  %v4697 = vld [vmem:[%s0 + $0x20a] sm:$0xff]
  %v4698 = vsel %vm2152, 1, 0
  %v4699 = vsel %vm2153, 1, 0
  %v4700 = vsel %vm2154, 1, 0
  %v4701 = vsel %vm2155, 1, 0
  %v4702 = vsel %vm2156, 1, 0
  %v4703 = vsel %vm2157, 1, 0
  %v4704 = vsel %vm2158, 1, 0
  %v4705 = vsel %vm2159, 1, 0
  %v4706 = vsel %vm2160, 1, 0
  %v4707 = vsel %vm2161, 1, 0
  %v4708 = vsel %vm2162, 1, 0
  %v4709 = vsel %vm2163, 1, 0
  %v4710 = vsel %vm2164, 1, 0
  %v4711 = vsel %vm2165, 1, 0
  %v4712 = vsel %vm2166, 1, 0
  %v4713 = vsel %vm2167, 1, 0
  %v4714 = vsel %vm2168, 1, 0
  %v4715 = vsel %vm2169, 1, 0
  %v4716 = vsel %vm2170, 1, 0
  %v4717 = vsel %vm2171, 1, 0
  %v4718 = vsel %vm2172, 1, 0
  %v4719 = vsel %vm2173, 1, 0
  %v4720 = vsel %vm2174, 1, 0
  %v4721 = vsel %vm2175, 1, 0
  %v4722 = vsel %vm2176, 1, 0
  %v4723 = vsel %vm2177, 1, 0
  %v4724 = vsel %vm2178, 1, 0
  %v4725 = vsel %vm2179, 1, 0
  %v4726 = vsel %vm2180, 1, 0
  %v4727 = vsel %vm2181, 1, 0
  %v4728 = vsel %vm2182, 1, 0
  %v4729 = vsel %vm2183, 1, 0
  %v4730 = vsel %vm2184, 1, 0
  %v4731 = vsel %vm2185, 1, 0
  %v4732 = vsel %vm2186, 1, 0
  %v4733 = vsel %vm2187, 1, 0
  %v4734 = vsel %vm2188, 1, 0
  %v4735 = vsel %vm2189, 1, 0
  %v4736 = vsel %vm2190, 1, 0
  %v4737 = vsel %vm2191, 1, 0
  %v4738 = vsel %vm2192, 1, 0
  %v4739 = vsel %vm2193, 1, 0
  %v4740 = vsel %vm2194, 1, 0
  %v4741 = vsel %vm2195, 1, 0
  %v4742 = vsel %vm2196, 1, 0
  %v4743 = vsel %vm2197, 1, 0
  %v4744 = vsel %vm2198, 1, 0
  %v4745 = vsel %vm2199, 1, 0
  %v4746 = vsel %vm2200, 1, 0
  %v4747 = vsel %vm2201, 1, 0
  %v4748 = vsel %vm2202, 1, 0
  %v4749 = vsel %vm2203, 1, 0
  %v4750 = vsel %vm2204, 1, 0
  %v4751 = vsel %vm2205, 1, 0
  %v4752 = vsel %vm2206, 1, 0
  %v4753 = vsel %vm2207, 1, 0
  %v4754 = vsel %vm2208, 1, 0
  %v4755 = vsel %vm2209, 1, 0
  %v4756 = vsel %vm2210, 1, 0
  %v4757 = vsel %vm2211, 1, 0
  %v4758 = vsel %vm2212, 1, 0
  %v4759 = vsel %vm2213, 1, 0
  %v4760 = vsel %vm2214, 1, 0
  %v4761 = vsel %vm2215, 1, 0
  %4762 = vset.pattern.permute.xlu0 0
  %4763 = vperm.xlu0 %4762, %v4698
  %v4764 = vpop.permute.xlu0 %4763
  %4765 = vset.pattern.permute.xlu0 0
  %4766 = vperm.xlu0 %4765, %v4699
  %v4767 = vpop.permute.xlu0 %4766
  %4768 = vset.pattern.permute.xlu0 0
  %4769 = vperm.xlu0 %4768, %v4700
  %v4770 = vpop.permute.xlu0 %4769
  %4771 = vset.pattern.permute.xlu0 0
  %4772 = vperm.xlu0 %4771, %v4701
  %v4773 = vpop.permute.xlu0 %4772
  %4774 = vset.pattern.permute.xlu0 0
  %4775 = vperm.xlu0 %4774, %v4702
  %v4776 = vpop.permute.xlu0 %4775
  %4777 = vset.pattern.permute.xlu0 0
  %4778 = vperm.xlu0 %4777, %v4703
  %v4779 = vpop.permute.xlu0 %4778
  %4780 = vset.pattern.permute.xlu0 0
  %4781 = vperm.xlu0 %4780, %v4704
  %v4782 = vpop.permute.xlu0 %4781
  %4783 = vset.pattern.permute.xlu0 0
  %4784 = vperm.xlu0 %4783, %v4705
  %v4785 = vpop.permute.xlu0 %4784
  %4786 = vset.pattern.permute.xlu0 0
  %4787 = vperm.xlu0 %4786, %v4706
  %v4788 = vpop.permute.xlu0 %4787
  %4789 = vset.pattern.permute.xlu0 0
  %4790 = vperm.xlu0 %4789, %v4707
  %v4791 = vpop.permute.xlu0 %4790
  %4792 = vset.pattern.permute.xlu0 0
  %4793 = vperm.xlu0 %4792, %v4708
  %v4794 = vpop.permute.xlu0 %4793
  %4795 = vset.pattern.permute.xlu0 0
  %4796 = vperm.xlu0 %4795, %v4709
  %v4797 = vpop.permute.xlu0 %4796
  %4798 = vset.pattern.permute.xlu0 0
  %4799 = vperm.xlu0 %4798, %v4710
  %v4800 = vpop.permute.xlu0 %4799
  %4801 = vset.pattern.permute.xlu0 0
  %4802 = vperm.xlu0 %4801, %v4711
  %v4803 = vpop.permute.xlu0 %4802
  %4804 = vset.pattern.permute.xlu0 0
  %4805 = vperm.xlu0 %4804, %v4712
  %v4806 = vpop.permute.xlu0 %4805
  %4807 = vset.pattern.permute.xlu0 0
  %4808 = vperm.xlu0 %4807, %v4713
  %v4809 = vpop.permute.xlu0 %4808
  %4810 = vset.pattern.permute.xlu0 0
  %4811 = vperm.xlu0 %4810, %v4714
  %v4812 = vpop.permute.xlu0 %4811
  %4813 = vset.pattern.permute.xlu0 0
  %4814 = vperm.xlu0 %4813, %v4715
  %v4815 = vpop.permute.xlu0 %4814
  %4816 = vset.pattern.permute.xlu0 0
  %4817 = vperm.xlu0 %4816, %v4716
  %v4818 = vpop.permute.xlu0 %4817
  %4819 = vset.pattern.permute.xlu0 0
  %4820 = vperm.xlu0 %4819, %v4717
  %v4821 = vpop.permute.xlu0 %4820
  %4822 = vset.pattern.permute.xlu0 0
  %4823 = vperm.xlu0 %4822, %v4718
  %v4824 = vpop.permute.xlu0 %4823
  %4825 = vset.pattern.permute.xlu0 0
  %4826 = vperm.xlu0 %4825, %v4719
  %v4827 = vpop.permute.xlu0 %4826
  %4828 = vset.pattern.permute.xlu0 0
  %4829 = vperm.xlu0 %4828, %v4720
  %v4830 = vpop.permute.xlu0 %4829
  %4831 = vset.pattern.permute.xlu0 0
  %4832 = vperm.xlu0 %4831, %v4721
  %v4833 = vpop.permute.xlu0 %4832
  %4834 = vset.pattern.permute.xlu0 0
  %4835 = vperm.xlu0 %4834, %v4722
  %v4836 = vpop.permute.xlu0 %4835
  %4837 = vset.pattern.permute.xlu0 0
  %4838 = vperm.xlu0 %4837, %v4723
  %v4839 = vpop.permute.xlu0 %4838
  %4840 = vset.pattern.permute.xlu0 0
  %4841 = vperm.xlu0 %4840, %v4724
  %v4842 = vpop.permute.xlu0 %4841
  %4843 = vset.pattern.permute.xlu0 0
  %4844 = vperm.xlu0 %4843, %v4725
  %v4845 = vpop.permute.xlu0 %4844
  %4846 = vset.pattern.permute.xlu0 0
  %4847 = vperm.xlu0 %4846, %v4726
  %v4848 = vpop.permute.xlu0 %4847
  %4849 = vset.pattern.permute.xlu0 0
  %4850 = vperm.xlu0 %4849, %v4727
  %v4851 = vpop.permute.xlu0 %4850
  %4852 = vset.pattern.permute.xlu0 0
  %4853 = vperm.xlu0 %4852, %v4728
  %v4854 = vpop.permute.xlu0 %4853
  %4855 = vset.pattern.permute.xlu0 0
  %4856 = vperm.xlu0 %4855, %v4729
  %v4857 = vpop.permute.xlu0 %4856
  %4858 = vset.pattern.permute.xlu0 0
  %4859 = vperm.xlu0 %4858, %v4730
  %v4860 = vpop.permute.xlu0 %4859
  %4861 = vset.pattern.permute.xlu0 0
  %4862 = vperm.xlu0 %4861, %v4731
  %v4863 = vpop.permute.xlu0 %4862
  %4864 = vset.pattern.permute.xlu0 0
  %4865 = vperm.xlu0 %4864, %v4732
  %v4866 = vpop.permute.xlu0 %4865
  %4867 = vset.pattern.permute.xlu0 0
  %4868 = vperm.xlu0 %4867, %v4733
  %v4869 = vpop.permute.xlu0 %4868
  %4870 = vset.pattern.permute.xlu0 0
  %4871 = vperm.xlu0 %4870, %v4734
  %v4872 = vpop.permute.xlu0 %4871
  %4873 = vset.pattern.permute.xlu0 0
  %4874 = vperm.xlu0 %4873, %v4735
  %v4875 = vpop.permute.xlu0 %4874
  %4876 = vset.pattern.permute.xlu0 0
  %4877 = vperm.xlu0 %4876, %v4736
  %v4878 = vpop.permute.xlu0 %4877
  %4879 = vset.pattern.permute.xlu0 0
  %4880 = vperm.xlu0 %4879, %v4737
  %v4881 = vpop.permute.xlu0 %4880
  %4882 = vset.pattern.permute.xlu0 0
  %4883 = vperm.xlu0 %4882, %v4738
  %v4884 = vpop.permute.xlu0 %4883
  %4885 = vset.pattern.permute.xlu0 0
  %4886 = vperm.xlu0 %4885, %v4739
  %v4887 = vpop.permute.xlu0 %4886
  %4888 = vset.pattern.permute.xlu0 0
  %4889 = vperm.xlu0 %4888, %v4740
  %v4890 = vpop.permute.xlu0 %4889
  %4891 = vset.pattern.permute.xlu0 0
  %4892 = vperm.xlu0 %4891, %v4741
  %v4893 = vpop.permute.xlu0 %4892
  %4894 = vset.pattern.permute.xlu0 0
  %4895 = vperm.xlu0 %4894, %v4742
  %v4896 = vpop.permute.xlu0 %4895
  %4897 = vset.pattern.permute.xlu0 0
  %4898 = vperm.xlu0 %4897, %v4743
  %v4899 = vpop.permute.xlu0 %4898
  %4900 = vset.pattern.permute.xlu0 0
  %4901 = vperm.xlu0 %4900, %v4744
  %v4902 = vpop.permute.xlu0 %4901
  %4903 = vset.pattern.permute.xlu0 0
  %4904 = vperm.xlu0 %4903, %v4745
  %v4905 = vpop.permute.xlu0 %4904
  %4906 = vset.pattern.permute.xlu0 0
  %4907 = vperm.xlu0 %4906, %v4746
  %v4908 = vpop.permute.xlu0 %4907
  %4909 = vset.pattern.permute.xlu0 0
  %4910 = vperm.xlu0 %4909, %v4747
  %v4911 = vpop.permute.xlu0 %4910
  %4912 = vset.pattern.permute.xlu0 0
  %4913 = vperm.xlu0 %4912, %v4748
  %v4914 = vpop.permute.xlu0 %4913
  %4915 = vset.pattern.permute.xlu0 0
  %4916 = vperm.xlu0 %4915, %v4749
  %v4917 = vpop.permute.xlu0 %4916
  %4918 = vset.pattern.permute.xlu0 0
  %4919 = vperm.xlu0 %4918, %v4750
  %v4920 = vpop.permute.xlu0 %4919
  %4921 = vset.pattern.permute.xlu0 0
  %4922 = vperm.xlu0 %4921, %v4751
  %v4923 = vpop.permute.xlu0 %4922
  %4924 = vset.pattern.permute.xlu0 0
  %4925 = vperm.xlu0 %4924, %v4752
  %v4926 = vpop.permute.xlu0 %4925
  %4927 = vset.pattern.permute.xlu0 0
  %4928 = vperm.xlu0 %4927, %v4753
  %v4929 = vpop.permute.xlu0 %4928
  %4930 = vset.pattern.permute.xlu0 0
  %4931 = vperm.xlu0 %4930, %v4754
  %v4932 = vpop.permute.xlu0 %4931
  %4933 = vset.pattern.permute.xlu0 0
  %4934 = vperm.xlu0 %4933, %v4755
  %v4935 = vpop.permute.xlu0 %4934
  %4936 = vset.pattern.permute.xlu0 0
  %4937 = vperm.xlu0 %4936, %v4756
  %v4938 = vpop.permute.xlu0 %4937
  %4939 = vset.pattern.permute.xlu0 0
  %4940 = vperm.xlu0 %4939, %v4757
  %v4941 = vpop.permute.xlu0 %4940
  %4942 = vset.pattern.permute.xlu0 0
  %4943 = vperm.xlu0 %4942, %v4758
  %v4944 = vpop.permute.xlu0 %4943
  %4945 = vset.pattern.permute.xlu0 0
  %4946 = vperm.xlu0 %4945, %v4759
  %v4947 = vpop.permute.xlu0 %4946
  %4948 = vset.pattern.permute.xlu0 0
  %4949 = vperm.xlu0 %4948, %v4760
  %v4950 = vpop.permute.xlu0 %4949
  %4951 = vset.pattern.permute.xlu0 0
  %4952 = vperm.xlu0 %4951, %v4761
  %v4953 = vpop.permute.xlu0 %4952
  %vm4954 = vcmp.eq.s32.totalorder %v4764, 1
  %vm4955 = vcmp.eq.s32.totalorder %v4767, 1
  %vm4956 = vcmp.eq.s32.totalorder %v4770, 1
  %vm4957 = vcmp.eq.s32.totalorder %v4773, 1
  %vm4958 = vcmp.eq.s32.totalorder %v4776, 1
  %vm4959 = vcmp.eq.s32.totalorder %v4779, 1
  %vm4960 = vcmp.eq.s32.totalorder %v4782, 1
  %vm4961 = vcmp.eq.s32.totalorder %v4785, 1
  %vm4962 = vcmp.eq.s32.totalorder %v4788, 1
  %vm4963 = vcmp.eq.s32.totalorder %v4791, 1
  %vm4964 = vcmp.eq.s32.totalorder %v4794, 1
  %vm4965 = vcmp.eq.s32.totalorder %v4797, 1
  %vm4966 = vcmp.eq.s32.totalorder %v4800, 1
  %vm4967 = vcmp.eq.s32.totalorder %v4803, 1
  %vm4968 = vcmp.eq.s32.totalorder %v4806, 1
  %vm4969 = vcmp.eq.s32.totalorder %v4809, 1
  %vm4970 = vcmp.eq.s32.totalorder %v4812, 1
  %vm4971 = vcmp.eq.s32.totalorder %v4815, 1
  %vm4972 = vcmp.eq.s32.totalorder %v4818, 1
  %vm4973 = vcmp.eq.s32.totalorder %v4821, 1
  %vm4974 = vcmp.eq.s32.totalorder %v4824, 1
  %vm4975 = vcmp.eq.s32.totalorder %v4827, 1
  %vm4976 = vcmp.eq.s32.totalorder %v4830, 1
  %vm4977 = vcmp.eq.s32.totalorder %v4833, 1
  %vm4978 = vcmp.eq.s32.totalorder %v4836, 1
  %vm4979 = vcmp.eq.s32.totalorder %v4839, 1
  %vm4980 = vcmp.eq.s32.totalorder %v4842, 1
  %vm4981 = vcmp.eq.s32.totalorder %v4845, 1
  %vm4982 = vcmp.eq.s32.totalorder %v4848, 1
  %vm4983 = vcmp.eq.s32.totalorder %v4851, 1
  %vm4984 = vcmp.eq.s32.totalorder %v4854, 1
  %vm4985 = vcmp.eq.s32.totalorder %v4857, 1
  %vm4986 = vcmp.eq.s32.totalorder %v4860, 1
  %vm4987 = vcmp.eq.s32.totalorder %v4863, 1
  %vm4988 = vcmp.eq.s32.totalorder %v4866, 1
  %vm4989 = vcmp.eq.s32.totalorder %v4869, 1
  %vm4990 = vcmp.eq.s32.totalorder %v4872, 1
  %vm4991 = vcmp.eq.s32.totalorder %v4875, 1
  %vm4992 = vcmp.eq.s32.totalorder %v4878, 1
  %vm4993 = vcmp.eq.s32.totalorder %v4881, 1
  %vm4994 = vcmp.eq.s32.totalorder %v4884, 1
  %vm4995 = vcmp.eq.s32.totalorder %v4887, 1
  %vm4996 = vcmp.eq.s32.totalorder %v4890, 1
  %vm4997 = vcmp.eq.s32.totalorder %v4893, 1
  %vm4998 = vcmp.eq.s32.totalorder %v4896, 1
  %vm4999 = vcmp.eq.s32.totalorder %v4899, 1
  %vm5000 = vcmp.eq.s32.totalorder %v4902, 1
  %vm5001 = vcmp.eq.s32.totalorder %v4905, 1
  %vm5002 = vcmp.eq.s32.totalorder %v4908, 1
  %vm5003 = vcmp.eq.s32.totalorder %v4911, 1
  %vm5004 = vcmp.eq.s32.totalorder %v4914, 1
  %vm5005 = vcmp.eq.s32.totalorder %v4917, 1
  %vm5006 = vcmp.eq.s32.totalorder %v4920, 1
  %vm5007 = vcmp.eq.s32.totalorder %v4923, 1
  %vm5008 = vcmp.eq.s32.totalorder %v4926, 1
  %vm5009 = vcmp.eq.s32.totalorder %v4929, 1
  %vm5010 = vcmp.eq.s32.totalorder %v4932, 1
  %vm5011 = vcmp.eq.s32.totalorder %v4935, 1
  %vm5012 = vcmp.eq.s32.totalorder %v4938, 1
  %vm5013 = vcmp.eq.s32.totalorder %v4941, 1
  %vm5014 = vcmp.eq.s32.totalorder %v4944, 1
  %vm5015 = vcmp.eq.s32.totalorder %v4947, 1
  %vm5016 = vcmp.eq.s32.totalorder %v4950, 1
  %vm5017 = vcmp.eq.s32.totalorder %v4953, 1
  %v5018 = vsel %vm4954, %v4634, 0.0
  %v5019 = vsel %vm4955, %v4635, 0.0
  %v5020 = vsel %vm4956, %v4636, 0.0
  %v5021 = vsel %vm4957, %v4637, 0.0
  %v5022 = vsel %vm4958, %v4638, 0.0
  %v5023 = vsel %vm4959, %v4639, 0.0
  %v5024 = vsel %vm4960, %v4640, 0.0
  %v5025 = vsel %vm4961, %v4641, 0.0
  %v5026 = vsel %vm4962, %v4642, 0.0
  %v5027 = vsel %vm4963, %v4643, 0.0
  %v5028 = vsel %vm4964, %v4644, 0.0
  %v5029 = vsel %vm4965, %v4645, 0.0
  %v5030 = vsel %vm4966, %v4646, 0.0
  %v5031 = vsel %vm4967, %v4647, 0.0
  %v5032 = vsel %vm4968, %v4648, 0.0
  %v5033 = vsel %vm4969, %v4649, 0.0
  %v5034 = vsel %vm4970, %v4650, 0.0
  %v5035 = vsel %vm4971, %v4651, 0.0
  %v5036 = vsel %vm4972, %v4652, 0.0
  %v5037 = vsel %vm4973, %v4653, 0.0
  %v5038 = vsel %vm4974, %v4654, 0.0
  %v5039 = vsel %vm4975, %v4655, 0.0
  %v5040 = vsel %vm4976, %v4656, 0.0
  %v5041 = vsel %vm4977, %v4657, 0.0
  %v5042 = vsel %vm4978, %v4658, 0.0
  %v5043 = vsel %vm4979, %v4659, 0.0
  %v5044 = vsel %vm4980, %v4660, 0.0
  %v5045 = vsel %vm4981, %v4661, 0.0
  %v5046 = vsel %vm4982, %v4662, 0.0
  %v5047 = vsel %vm4983, %v4663, 0.0
  %v5048 = vsel %vm4984, %v4664, 0.0
  %v5049 = vsel %vm4985, %v4665, 0.0
  %v5050 = vsel %vm4986, %v4666, 0.0
  %v5051 = vsel %vm4987, %v4667, 0.0
  %v5052 = vsel %vm4988, %v4668, 0.0
  %v5053 = vsel %vm4989, %v4669, 0.0
  %v5054 = vsel %vm4990, %v4670, 0.0
  %v5055 = vsel %vm4991, %v4671, 0.0
  %v5056 = vsel %vm4992, %v4672, 0.0
  %v5057 = vsel %vm4993, %v4673, 0.0
  %v5058 = vsel %vm4994, %v4674, 0.0
  %v5059 = vsel %vm4995, %v4675, 0.0
  %v5060 = vsel %vm4996, %v4676, 0.0
  %v5061 = vsel %vm4997, %v4677, 0.0
  %v5062 = vsel %vm4998, %v4678, 0.0
  %v5063 = vsel %vm4999, %v4679, 0.0
  %v5064 = vsel %vm5000, %v4680, 0.0
  %v5065 = vsel %vm5001, %v4681, 0.0
  %v5066 = vsel %vm5002, %v4682, 0.0
  %v5067 = vsel %vm5003, %v4683, 0.0
  %v5068 = vsel %vm5004, %v4684, 0.0
  %v5069 = vsel %vm5005, %v4685, 0.0
  %v5070 = vsel %vm5006, %v4686, 0.0
  %v5071 = vsel %vm5007, %v4687, 0.0
  %v5072 = vsel %vm5008, %v4688, 0.0
  %v5073 = vsel %vm5009, %v4689, 0.0
  %v5074 = vsel %vm5010, %v4690, 0.0
  %v5075 = vsel %vm5011, %v4691, 0.0
  %v5076 = vsel %vm5012, %v4692, 0.0
  %v5077 = vsel %vm5013, %v4693, 0.0
  %v5078 = vsel %vm5014, %v4694, 0.0
  %v5079 = vsel %vm5015, %v4695, 0.0
  %v5080 = vsel %vm5016, %v4696, 0.0
  %v5081 = vsel %vm5017, %v4697, 0.0
  %v5082 = vpack.c.bf16 %v5019, %v5018
  %v5083 = vpack.c.bf16 %v5021, %v5020
  %v5084 = vpack.c.bf16 %v5023, %v5022
  %v5085 = vpack.c.bf16 %v5025, %v5024
  %v5086 = vpack.c.bf16 %v5027, %v5026
  %v5087 = vpack.c.bf16 %v5029, %v5028
  %v5088 = vpack.c.bf16 %v5031, %v5030
  %v5089 = vpack.c.bf16 %v5033, %v5032
  %v5090 = vpack.c.bf16 %v5035, %v5034
  %v5091 = vpack.c.bf16 %v5037, %v5036
  %v5092 = vpack.c.bf16 %v5039, %v5038
  %v5093 = vpack.c.bf16 %v5041, %v5040
  %v5094 = vpack.c.bf16 %v5043, %v5042
  %v5095 = vpack.c.bf16 %v5045, %v5044
  %v5096 = vpack.c.bf16 %v5047, %v5046
  %v5097 = vpack.c.bf16 %v5049, %v5048
  %v5098 = vpack.c.bf16 %v5051, %v5050
  %v5099 = vpack.c.bf16 %v5053, %v5052
  %v5100 = vpack.c.bf16 %v5055, %v5054
  %v5101 = vpack.c.bf16 %v5057, %v5056
  %v5102 = vpack.c.bf16 %v5059, %v5058
  %v5103 = vpack.c.bf16 %v5061, %v5060
  %v5104 = vpack.c.bf16 %v5063, %v5062
  %v5105 = vpack.c.bf16 %v5065, %v5064
  %v5106 = vpack.c.bf16 %v5067, %v5066
  %v5107 = vpack.c.bf16 %v5069, %v5068
  %v5108 = vpack.c.bf16 %v5071, %v5070
  %v5109 = vpack.c.bf16 %v5073, %v5072
  %v5110 = vpack.c.bf16 %v5075, %v5074
  %v5111 = vpack.c.bf16 %v5077, %v5076
  %v5112 = vpack.c.bf16 %v5079, %v5078
  %v5113 = vpack.c.bf16 %v5081, %v5080
  %s5114 = scalar_lea.vmem %s3, 10
  %v5115 = vld [vmem:[%s5114] sm:$0x3]
  %v5117 = vsel %vm1307, %v5082, 0
  %v5120 = vsel %vm1307, %v5083, 0
  %v5123 = vsel %vm1307, %v5084, 0
  %v5126 = vsel %vm1307, %v5085, 0
  %v5129 = vsel %vm1307, %v5086, 0
  %v5132 = vsel %vm1307, %v5087, 0
  %v5135 = vsel %vm1307, %v5088, 0
  %v5138 = vsel %vm1307, %v5089, 0
  %v5141 = vsel %vm1307, %v5090, 0
  %v5144 = vsel %vm1307, %v5091, 0
  %v5147 = vsel %vm1307, %v5092, 0
  %v5150 = vsel %vm1307, %v5093, 0
  %v5153 = vsel %vm1307, %v5094, 0
  %v5156 = vsel %vm1307, %v5095, 0
  %v5159 = vsel %vm1307, %v5096, 0
  %v5162 = vsel %vm1307, %v5097, 0
  %v5165 = vsel %vm1307, %v5098, 0
  %v5168 = vsel %vm1307, %v5099, 0
  %v5171 = vsel %vm1307, %v5100, 0
  %v5174 = vsel %vm1307, %v5101, 0
  %v5177 = vsel %vm1307, %v5102, 0
  %v5180 = vsel %vm1307, %v5103, 0
  %v5183 = vsel %vm1307, %v5104, 0
  %v5186 = vsel %vm1307, %v5105, 0
  %v5189 = vsel %vm1307, %v5106, 0
  %v5192 = vsel %vm1307, %v5107, 0
  %v5195 = vsel %vm1307, %v5108, 0
  %v5198 = vsel %vm1307, %v5109, 0
  %v5201 = vsel %vm1307, %v5110, 0
  %v5204 = vsel %vm1307, %v5111, 0
  %v5207 = vsel %vm1307, %v5112, 0
  %v5210 = vsel %vm1307, %v5113, 0
  %v5213 = vand.u32 %v5115, %v1407
  %5215 = vmatprep.subr.bf16.mxu0 0
  %5216 = vmatpush1.bf16.msra.mxu0 0
  %5217 = vmatprep.subr.bf16.mxu0 0
  %5218 = vmatpush1.bf16.msra.mxu0 0
  %5219 = vmatprep.subr.bf16.mxu0 0
  %5220 = vmatpush1.bf16.msra.mxu0 0
  %5221 = vmatprep.subr.bf16.mxu0 0
  %5222 = vmatpush1.bf16.msra.mxu0 0
  %5223 = vmatprep.subr.bf16.mxu0 0
  %5224 = vmatpush1.bf16.msra.mxu0 0
  %5225 = vmatprep.subr.bf16.mxu0 0
  %5226 = vmatpush1.bf16.msra.mxu0 0
  %5227 = vmatprep.subr.bf16.mxu0 0
  %5228 = vmatpush1.bf16.msra.mxu0 0
  %5229 = vmatprep.subr.bf16.mxu0 0
  %5230 = vmatpush1.bf16.msra.mxu0 %v5213
  %5231 = vmatprep.subr.bf16.mxu0 0
  %5232 = vmatpush2.bf16.msra.mxu0 0
  %5233 = vmatprep.subr.bf16.mxu0 0
  %5234 = vmatpush2.bf16.msra.mxu0 0
  %5235 = vmatprep.subr.bf16.mxu0 0
  %5236 = vmatpush2.bf16.msra.mxu0 0
  %5237 = vmatprep.subr.bf16.mxu0 0
  %5238 = vmatpush2.bf16.msra.mxu0 0
  %5239 = vmatprep.subr.bf16.mxu0 0
  %5240 = vmatpush2.bf16.msra.mxu0 0
  %5241 = vmatprep.subr.bf16.mxu0 0
  %5242 = vmatpush2.bf16.msra.mxu0 0
  %5243 = vmatprep.subr.bf16.mxu0 0
  %5244 = vmatpush2.bf16.msra.mxu0 0
  %5245 = vmatprep.subr.bf16.mxu0 0
  %5246 = vmatpush2.bf16.msra.mxu0 0
  %5247 = vmatprep.mubr.bf16.mxu0 0
  %5248 = vmatmul.mubr.bf16.gmra.mxu0 %v5117
  %v5249 = vpop.f32.mrf.mxu0
  %v5250 = vadd.f32 0.0, %v5249
  %v5251 = vpop.f32.mrf.mxu0
  %v5252 = vpop.f32.mrf.mxu0
  %v5253 = vadd.f32 0.0, %v5252
  %v5254 = vpop.f32.mrf.mxu0
  %5255 = vmatprep.mubr.bf16.mxu0 0
  %5256 = vmatmul.mubr.bf16.gmra.mxu0 %v5120
  %v5257 = vpop.f32.mrf.mxu0
  %v5258 = vadd.f32 0.0, %v5257
  %v5259 = vpop.f32.mrf.mxu0
  %v5260 = vpop.f32.mrf.mxu0
  %v5261 = vadd.f32 0.0, %v5260
  %v5262 = vpop.f32.mrf.mxu0
  %5263 = vmatprep.mubr.bf16.mxu0 0
  %5264 = vmatmul.mubr.bf16.gmra.mxu0 %v5123
  %v5265 = vpop.f32.mrf.mxu0
  %v5266 = vadd.f32 0.0, %v5265
  %v5267 = vpop.f32.mrf.mxu0
  %v5268 = vpop.f32.mrf.mxu0
  %v5269 = vadd.f32 0.0, %v5268
  %v5270 = vpop.f32.mrf.mxu0
  %5271 = vmatprep.mubr.bf16.mxu0 0
  %5272 = vmatmul.mubr.bf16.gmra.mxu0 %v5126
  %v5273 = vpop.f32.mrf.mxu0
  %v5274 = vadd.f32 0.0, %v5273
  %v5275 = vpop.f32.mrf.mxu0
  %v5276 = vpop.f32.mrf.mxu0
  %v5277 = vadd.f32 0.0, %v5276
  %v5278 = vpop.f32.mrf.mxu0
  %5279 = vmatprep.mubr.bf16.mxu0 0
  %5280 = vmatmul.mubr.bf16.gmra.mxu0 %v5129
  %v5281 = vpop.f32.mrf.mxu0
  %v5282 = vadd.f32 0.0, %v5281
  %v5283 = vpop.f32.mrf.mxu0
  %v5284 = vpop.f32.mrf.mxu0
  %v5285 = vadd.f32 0.0, %v5284
  %v5286 = vpop.f32.mrf.mxu0
  %5287 = vmatprep.mubr.bf16.mxu0 0
  %5288 = vmatmul.mubr.bf16.gmra.mxu0 %v5132
  %v5289 = vpop.f32.mrf.mxu0
  %v5290 = vadd.f32 0.0, %v5289
  %v5291 = vpop.f32.mrf.mxu0
  %v5292 = vpop.f32.mrf.mxu0
  %v5293 = vadd.f32 0.0, %v5292
  %v5294 = vpop.f32.mrf.mxu0
  %5295 = vmatprep.mubr.bf16.mxu0 0
  %5296 = vmatmul.mubr.bf16.gmra.mxu0 %v5135
  %v5297 = vpop.f32.mrf.mxu0
  %v5298 = vadd.f32 0.0, %v5297
  %v5299 = vpop.f32.mrf.mxu0
  %v5300 = vpop.f32.mrf.mxu0
  %v5301 = vadd.f32 0.0, %v5300
  %v5302 = vpop.f32.mrf.mxu0
  %5303 = vmatprep.mubr.bf16.mxu0 0
  %5304 = vmatmul.mubr.bf16.gmra.mxu0 %v5138
  %v5305 = vpop.f32.mrf.mxu0
  %v5306 = vadd.f32 0.0, %v5305
  %v5307 = vpop.f32.mrf.mxu0
  %v5308 = vpop.f32.mrf.mxu0
  %v5309 = vadd.f32 0.0, %v5308
  %v5310 = vpop.f32.mrf.mxu0
  %5311 = vmatprep.mubr.bf16.mxu0 0
  %5312 = vmatmul.mubr.bf16.gmra.mxu0 %v5141
  %v5313 = vpop.f32.mrf.mxu0
  %v5314 = vadd.f32 0.0, %v5313
  %v5315 = vpop.f32.mrf.mxu0
  %v5316 = vpop.f32.mrf.mxu0
  %v5317 = vadd.f32 0.0, %v5316
  %v5318 = vpop.f32.mrf.mxu0
  %5319 = vmatprep.mubr.bf16.mxu0 0
  %5320 = vmatmul.mubr.bf16.gmra.mxu0 %v5144
  %v5321 = vpop.f32.mrf.mxu0
  %v5322 = vadd.f32 0.0, %v5321
  %v5323 = vpop.f32.mrf.mxu0
  %v5324 = vpop.f32.mrf.mxu0
  %v5325 = vadd.f32 0.0, %v5324
  %v5326 = vpop.f32.mrf.mxu0
  %5327 = vmatprep.mubr.bf16.mxu0 0
  %5328 = vmatmul.mubr.bf16.gmra.mxu0 %v5147
  %v5329 = vpop.f32.mrf.mxu0
  %v5330 = vadd.f32 0.0, %v5329
  %v5331 = vpop.f32.mrf.mxu0
  %v5332 = vpop.f32.mrf.mxu0
  %v5333 = vadd.f32 0.0, %v5332
  %v5334 = vpop.f32.mrf.mxu0
  %5335 = vmatprep.mubr.bf16.mxu0 0
  %5336 = vmatmul.mubr.bf16.gmra.mxu0 %v5150
  %v5337 = vpop.f32.mrf.mxu0
  %v5338 = vadd.f32 0.0, %v5337
  %v5339 = vpop.f32.mrf.mxu0
  %v5340 = vpop.f32.mrf.mxu0
  %v5341 = vadd.f32 0.0, %v5340
  %v5342 = vpop.f32.mrf.mxu0
  %5343 = vmatprep.mubr.bf16.mxu0 0
  %5344 = vmatmul.mubr.bf16.gmra.mxu0 %v5153
  %v5345 = vpop.f32.mrf.mxu0
  %v5346 = vadd.f32 0.0, %v5345
  %v5347 = vpop.f32.mrf.mxu0
  %v5348 = vpop.f32.mrf.mxu0
  %v5349 = vadd.f32 0.0, %v5348
  %v5350 = vpop.f32.mrf.mxu0
  %5351 = vmatprep.mubr.bf16.mxu0 0
  %5352 = vmatmul.mubr.bf16.gmra.mxu0 %v5156
  %v5353 = vpop.f32.mrf.mxu0
  %v5354 = vadd.f32 0.0, %v5353
  %v5355 = vpop.f32.mrf.mxu0
  %v5356 = vpop.f32.mrf.mxu0
  %v5357 = vadd.f32 0.0, %v5356
  %v5358 = vpop.f32.mrf.mxu0
  %5359 = vmatprep.mubr.bf16.mxu0 0
  %5360 = vmatmul.mubr.bf16.gmra.mxu0 %v5159
  %v5361 = vpop.f32.mrf.mxu0
  %v5362 = vadd.f32 0.0, %v5361
  %v5363 = vpop.f32.mrf.mxu0
  %v5364 = vpop.f32.mrf.mxu0
  %v5365 = vadd.f32 0.0, %v5364
  %v5366 = vpop.f32.mrf.mxu0
  %5367 = vmatprep.mubr.bf16.mxu0 0
  %5368 = vmatmul.mubr.bf16.gmra.mxu0 %v5162
  %v5369 = vpop.f32.mrf.mxu0
  %v5370 = vadd.f32 0.0, %v5369
  %v5371 = vpop.f32.mrf.mxu0
  %v5372 = vpop.f32.mrf.mxu0
  %v5373 = vadd.f32 0.0, %v5372
  %v5374 = vpop.f32.mrf.mxu0
  %5375 = vmatprep.mubr.bf16.mxu0 0
  %5376 = vmatmul.mubr.bf16.gmra.mxu0 %v5165
  %v5377 = vpop.f32.mrf.mxu0
  %v5378 = vadd.f32 0.0, %v5377
  %v5379 = vpop.f32.mrf.mxu0
  %v5380 = vpop.f32.mrf.mxu0
  %v5381 = vadd.f32 0.0, %v5380
  %v5382 = vpop.f32.mrf.mxu0
  %5383 = vmatprep.mubr.bf16.mxu0 0
  %5384 = vmatmul.mubr.bf16.gmra.mxu0 %v5168
  %v5385 = vpop.f32.mrf.mxu0
  %v5386 = vadd.f32 0.0, %v5385
  %v5387 = vpop.f32.mrf.mxu0
  %v5388 = vpop.f32.mrf.mxu0
  %v5389 = vadd.f32 0.0, %v5388
  %v5390 = vpop.f32.mrf.mxu0
  %5391 = vmatprep.mubr.bf16.mxu0 0
  %5392 = vmatmul.mubr.bf16.gmra.mxu0 %v5171
  %v5393 = vpop.f32.mrf.mxu0
  %v5394 = vadd.f32 0.0, %v5393
  %v5395 = vpop.f32.mrf.mxu0
  %v5396 = vpop.f32.mrf.mxu0
  %v5397 = vadd.f32 0.0, %v5396
  %v5398 = vpop.f32.mrf.mxu0
  %5399 = vmatprep.mubr.bf16.mxu0 0
  %5400 = vmatmul.mubr.bf16.gmra.mxu0 %v5174
  %v5401 = vpop.f32.mrf.mxu0
  %v5402 = vadd.f32 0.0, %v5401
  %v5403 = vpop.f32.mrf.mxu0
  %v5404 = vpop.f32.mrf.mxu0
  %v5405 = vadd.f32 0.0, %v5404
  %v5406 = vpop.f32.mrf.mxu0
  %5407 = vmatprep.mubr.bf16.mxu0 0
  %5408 = vmatmul.mubr.bf16.gmra.mxu0 %v5177
  %v5409 = vpop.f32.mrf.mxu0
  %v5410 = vadd.f32 0.0, %v5409
  %v5411 = vpop.f32.mrf.mxu0
  %v5412 = vpop.f32.mrf.mxu0
  %v5413 = vadd.f32 0.0, %v5412
  %v5414 = vpop.f32.mrf.mxu0
  %5415 = vmatprep.mubr.bf16.mxu0 0
  %5416 = vmatmul.mubr.bf16.gmra.mxu0 %v5180
  %v5417 = vpop.f32.mrf.mxu0
  %v5418 = vadd.f32 0.0, %v5417
  %v5419 = vpop.f32.mrf.mxu0
  %v5420 = vpop.f32.mrf.mxu0
  %v5421 = vadd.f32 0.0, %v5420
  %v5422 = vpop.f32.mrf.mxu0
  %5423 = vmatprep.mubr.bf16.mxu0 0
  %5424 = vmatmul.mubr.bf16.gmra.mxu0 %v5183
  %v5425 = vpop.f32.mrf.mxu0
  %v5426 = vadd.f32 0.0, %v5425
  %v5427 = vpop.f32.mrf.mxu0
  %v5428 = vpop.f32.mrf.mxu0
  %v5429 = vadd.f32 0.0, %v5428
  %v5430 = vpop.f32.mrf.mxu0
  %5431 = vmatprep.mubr.bf16.mxu0 0
  %5432 = vmatmul.mubr.bf16.gmra.mxu0 %v5186
  %v5433 = vpop.f32.mrf.mxu0
  %v5434 = vadd.f32 0.0, %v5433
  %v5435 = vpop.f32.mrf.mxu0
  %v5436 = vpop.f32.mrf.mxu0
  %v5437 = vadd.f32 0.0, %v5436
  %v5438 = vpop.f32.mrf.mxu0
  %5439 = vmatprep.mubr.bf16.mxu0 0
  %5440 = vmatmul.mubr.bf16.gmra.mxu0 %v5189
  %v5441 = vpop.f32.mrf.mxu0
  %v5442 = vadd.f32 0.0, %v5441
  %v5443 = vpop.f32.mrf.mxu0
  %v5444 = vpop.f32.mrf.mxu0
  %v5445 = vadd.f32 0.0, %v5444
  %v5446 = vpop.f32.mrf.mxu0
  %5447 = vmatprep.mubr.bf16.mxu0 0
  %5448 = vmatmul.mubr.bf16.gmra.mxu0 %v5192
  %v5449 = vpop.f32.mrf.mxu0
  %v5450 = vadd.f32 0.0, %v5449
  %v5451 = vpop.f32.mrf.mxu0
  %v5452 = vpop.f32.mrf.mxu0
  %v5453 = vadd.f32 0.0, %v5452
  %v5454 = vpop.f32.mrf.mxu0
  %5455 = vmatprep.mubr.bf16.mxu0 0
  %5456 = vmatmul.mubr.bf16.gmra.mxu0 %v5195
  %v5457 = vpop.f32.mrf.mxu0
  %v5458 = vadd.f32 0.0, %v5457
  %v5459 = vpop.f32.mrf.mxu0
  %v5460 = vpop.f32.mrf.mxu0
  %v5461 = vadd.f32 0.0, %v5460
  %v5462 = vpop.f32.mrf.mxu0
  %5463 = vmatprep.mubr.bf16.mxu0 0
  %5464 = vmatmul.mubr.bf16.gmra.mxu0 %v5198
  %v5465 = vpop.f32.mrf.mxu0
  %v5466 = vadd.f32 0.0, %v5465
  %v5467 = vpop.f32.mrf.mxu0
  %v5468 = vpop.f32.mrf.mxu0
  %v5469 = vadd.f32 0.0, %v5468
  %v5470 = vpop.f32.mrf.mxu0
  %5471 = vmatprep.mubr.bf16.mxu0 0
  %5472 = vmatmul.mubr.bf16.gmra.mxu0 %v5201
  %v5473 = vpop.f32.mrf.mxu0
  %v5474 = vadd.f32 0.0, %v5473
  %v5475 = vpop.f32.mrf.mxu0
  %v5476 = vpop.f32.mrf.mxu0
  %v5477 = vadd.f32 0.0, %v5476
  %v5478 = vpop.f32.mrf.mxu0
  %5479 = vmatprep.mubr.bf16.mxu0 0
  %5480 = vmatmul.mubr.bf16.gmra.mxu0 %v5204
  %v5481 = vpop.f32.mrf.mxu0
  %v5482 = vadd.f32 0.0, %v5481
  %v5483 = vpop.f32.mrf.mxu0
  %v5484 = vpop.f32.mrf.mxu0
  %v5485 = vadd.f32 0.0, %v5484
  %v5486 = vpop.f32.mrf.mxu0
  %5487 = vmatprep.mubr.bf16.mxu0 0
  %5488 = vmatmul.mubr.bf16.gmra.mxu0 %v5207
  %v5489 = vpop.f32.mrf.mxu0
  %v5490 = vadd.f32 0.0, %v5489
  %v5491 = vpop.f32.mrf.mxu0
  %v5492 = vpop.f32.mrf.mxu0
  %v5493 = vadd.f32 0.0, %v5492
  %v5494 = vpop.f32.mrf.mxu0
  %5495 = vmatprep.mubr.bf16.mxu0 0
  %5496 = vmatmul.mubr.bf16.gmra.mxu0 %v5210
  %v5497 = vpop.f32.mrf.mxu0
  %v5498 = vadd.f32 0.0, %v5497
  %v5499 = vpop.f32.mrf.mxu0
  %v5500 = vpop.f32.mrf.mxu0
  %v5501 = vadd.f32 0.0, %v5500
  %v5502 = vpop.f32.mrf.mxu0
  %5503 = vdwg.mxu0
  %v5504 = vadd.f32 %v4570, %v5250
  %v5505 = vadd.f32 %v4571, %v5253
  %v5506 = vadd.f32 %v4572, %v5258
  %v5507 = vadd.f32 %v4573, %v5261
  %v5508 = vadd.f32 %v4574, %v5266
  %v5509 = vadd.f32 %v4575, %v5269
  %v5510 = vadd.f32 %v4576, %v5274
  %v5511 = vadd.f32 %v4577, %v5277
  %v5512 = vadd.f32 %v4578, %v5282
  %v5513 = vadd.f32 %v4579, %v5285
  %v5514 = vadd.f32 %v4580, %v5290
  %v5515 = vadd.f32 %v4581, %v5293
  %v5516 = vadd.f32 %v4582, %v5298
  %v5517 = vadd.f32 %v4583, %v5301
  %v5518 = vadd.f32 %v4584, %v5306
  %v5519 = vadd.f32 %v4585, %v5309
  %v5520 = vadd.f32 %v4586, %v5314
  %v5521 = vadd.f32 %v4587, %v5317
  %v5522 = vadd.f32 %v4588, %v5322
  %v5523 = vadd.f32 %v4589, %v5325
  %v5524 = vadd.f32 %v4590, %v5330
  %v5525 = vadd.f32 %v4591, %v5333
  %v5526 = vadd.f32 %v4592, %v5338
  %v5527 = vadd.f32 %v4593, %v5341
  %v5528 = vadd.f32 %v4594, %v5346
  %v5529 = vadd.f32 %v4595, %v5349
  %v5530 = vadd.f32 %v4596, %v5354
  %v5531 = vadd.f32 %v4597, %v5357
  %v5532 = vadd.f32 %v4598, %v5362
  %v5533 = vadd.f32 %v4599, %v5365
  %v5534 = vadd.f32 %v4600, %v5370
  %v5535 = vadd.f32 %v4601, %v5373
  %v5536 = vadd.f32 %v4602, %v5378
  %v5537 = vadd.f32 %v4603, %v5381
  %v5538 = vadd.f32 %v4604, %v5386
  %v5539 = vadd.f32 %v4605, %v5389
  %v5540 = vadd.f32 %v4606, %v5394
  %v5541 = vadd.f32 %v4607, %v5397
  %v5542 = vadd.f32 %v4608, %v5402
  %v5543 = vadd.f32 %v4609, %v5405
  %v5544 = vadd.f32 %v4610, %v5410
  %v5545 = vadd.f32 %v4611, %v5413
  %v5546 = vadd.f32 %v4612, %v5418
  %v5547 = vadd.f32 %v4613, %v5421
  %v5548 = vadd.f32 %v4614, %v5426
  %v5549 = vadd.f32 %v4615, %v5429
  %v5550 = vadd.f32 %v4616, %v5434
  %v5551 = vadd.f32 %v4617, %v5437
  %v5552 = vadd.f32 %v4618, %v5442
  %v5553 = vadd.f32 %v4619, %v5445
  %v5554 = vadd.f32 %v4620, %v5450
  %v5555 = vadd.f32 %v4621, %v5453
  %v5556 = vadd.f32 %v4622, %v5458
  %v5557 = vadd.f32 %v4623, %v5461
  %v5558 = vadd.f32 %v4624, %v5466
  %v5559 = vadd.f32 %v4625, %v5469
  %v5560 = vadd.f32 %v4626, %v5474
  %v5561 = vadd.f32 %v4627, %v5477
  %v5562 = vadd.f32 %v4628, %v5482
  %v5563 = vadd.f32 %v4629, %v5485
  %v5564 = vadd.f32 %v4630, %v5490
  %v5565 = vadd.f32 %v4631, %v5493
  %v5566 = vadd.f32 %v4632, %v5498
  %v5567 = vadd.f32 %v4633, %v5501
  %v5568 = vld [vmem:[%s0 + $0x20] sm:$0xff]
  %v5569 = vld [vmem:[%s0 + $0x28] sm:$0xff]
  %v5570 = vld [vmem:[%s0 + $0x30] sm:$0xff]
  %v5571 = vld [vmem:[%s0 + $0x38] sm:$0xff]
  %v5572 = vld [vmem:[%s0 + $0x40] sm:$0xff]
  %v5573 = vld [vmem:[%s0 + $0x48] sm:$0xff]
  %v5574 = vld [vmem:[%s0 + $0x50] sm:$0xff]
  %v5575 = vld [vmem:[%s0 + $0x58] sm:$0xff]
  %v5576 = vld [vmem:[%s0 + $0x60] sm:$0xff]
  %v5577 = vld [vmem:[%s0 + $0x68] sm:$0xff]
  %v5578 = vld [vmem:[%s0 + $0x70] sm:$0xff]
  %v5579 = vld [vmem:[%s0 + $0x78] sm:$0xff]
  %v5580 = vld [vmem:[%s0 + $0x80] sm:$0xff]
  %v5581 = vld [vmem:[%s0 + $0x88] sm:$0xff]
  %v5582 = vld [vmem:[%s0 + $0x90] sm:$0xff]
  %v5583 = vld [vmem:[%s0 + $0x98] sm:$0xff]
  %v5584 = vld [vmem:[%s0 + $0xa0] sm:$0xff]
  %v5585 = vld [vmem:[%s0 + $0xa8] sm:$0xff]
  %v5586 = vld [vmem:[%s0 + $0xb0] sm:$0xff]
  %v5587 = vld [vmem:[%s0 + $0xb8] sm:$0xff]
  %v5588 = vld [vmem:[%s0 + $0xc0] sm:$0xff]
  %v5589 = vld [vmem:[%s0 + $0xc8] sm:$0xff]
  %v5590 = vld [vmem:[%s0 + $0xd0] sm:$0xff]
  %v5591 = vld [vmem:[%s0 + $0xd8] sm:$0xff]
  %v5592 = vld [vmem:[%s0 + $0xe0] sm:$0xff]
  %v5593 = vld [vmem:[%s0 + $0xe8] sm:$0xff]
  %v5594 = vld [vmem:[%s0 + $0xf0] sm:$0xff]
  %v5595 = vld [vmem:[%s0 + $0xf8] sm:$0xff]
  %v5596 = vld [vmem:[%s0 + $0x100] sm:$0xff]
  %v5597 = vld [vmem:[%s0 + $0x108] sm:$0xff]
  %v5598 = vld [vmem:[%s0 + $0x110] sm:$0xff]
  %v5599 = vld [vmem:[%s0 + $0x118] sm:$0xff]
  %v5600 = vld [vmem:[%s0 + $0x120] sm:$0xff]
  %v5601 = vld [vmem:[%s0 + $0x128] sm:$0xff]
  %v5602 = vld [vmem:[%s0 + $0x130] sm:$0xff]
  %v5603 = vld [vmem:[%s0 + $0x138] sm:$0xff]
  %v5604 = vld [vmem:[%s0 + $0x140] sm:$0xff]
  %v5605 = vld [vmem:[%s0 + $0x148] sm:$0xff]
  %v5606 = vld [vmem:[%s0 + $0x150] sm:$0xff]
  %v5607 = vld [vmem:[%s0 + $0x158] sm:$0xff]
  %v5608 = vld [vmem:[%s0 + $0x160] sm:$0xff]
  %v5609 = vld [vmem:[%s0 + $0x168] sm:$0xff]
  %v5610 = vld [vmem:[%s0 + $0x170] sm:$0xff]
  %v5611 = vld [vmem:[%s0 + $0x178] sm:$0xff]
  %v5612 = vld [vmem:[%s0 + $0x180] sm:$0xff]
  %v5613 = vld [vmem:[%s0 + $0x188] sm:$0xff]
  %v5614 = vld [vmem:[%s0 + $0x190] sm:$0xff]
  %v5615 = vld [vmem:[%s0 + $0x198] sm:$0xff]
  %v5616 = vld [vmem:[%s0 + $0x1a0] sm:$0xff]
  %v5617 = vld [vmem:[%s0 + $0x1a8] sm:$0xff]
  %v5618 = vld [vmem:[%s0 + $0x1b0] sm:$0xff]
  %v5619 = vld [vmem:[%s0 + $0x1b8] sm:$0xff]
  %v5620 = vld [vmem:[%s0 + $0x1c0] sm:$0xff]
  %v5621 = vld [vmem:[%s0 + $0x1c8] sm:$0xff]
  %v5622 = vld [vmem:[%s0 + $0x1d0] sm:$0xff]
  %v5623 = vld [vmem:[%s0 + $0x1d8] sm:$0xff]
  %v5624 = vld [vmem:[%s0 + $0x1e0] sm:$0xff]
  %v5625 = vld [vmem:[%s0 + $0x1e8] sm:$0xff]
  %v5626 = vld [vmem:[%s0 + $0x1f0] sm:$0xff]
  %v5627 = vld [vmem:[%s0 + $0x1f8] sm:$0xff]
  %v5628 = vld [vmem:[%s0 + $0x200] sm:$0xff]
  %v5629 = vld [vmem:[%s0 + $0x208] sm:$0xff]
  %v5630 = vld [vmem:[%s0 + $0x210] sm:$0xff]
  %v5631 = vld [vmem:[%s0 + $0x218] sm:$0xff]
  %vm5632 = vcmp.lt.s32.totalorder %v24, 15
  %vm5633 = vcmp.lt.s32.totalorder %v25, 15
  %vm5634 = vcmp.lt.s32.totalorder %v26, 15
  %vm5635 = vcmp.lt.s32.totalorder %v27, 15
  %vm5636 = vcmp.lt.s32.totalorder %v28, 15
  %vm5637 = vcmp.lt.s32.totalorder %v29, 15
  %vm5638 = vcmp.lt.s32.totalorder %v30, 15
  %vm5639 = vcmp.lt.s32.totalorder %v31, 15
  %vm5640 = vcmp.lt.s32.totalorder %v32, 15
  %vm5641 = vcmp.lt.s32.totalorder %v33, 15
  %vm5642 = vcmp.lt.s32.totalorder %v34, 15
  %vm5643 = vcmp.lt.s32.totalorder %v35, 15
  %vm5644 = vcmp.lt.s32.totalorder %v36, 15
  %vm5645 = vcmp.lt.s32.totalorder %v37, 15
  %vm5646 = vcmp.lt.s32.totalorder %v38, 15
  %vm5647 = vcmp.lt.s32.totalorder %v39, 15
  %vm5648 = vcmp.lt.s32.totalorder %v40, 15
  %vm5649 = vcmp.lt.s32.totalorder %v41, 15
  %vm5650 = vcmp.lt.s32.totalorder %v42, 15
  %vm5651 = vcmp.lt.s32.totalorder %v43, 15
  %vm5652 = vcmp.lt.s32.totalorder %v44, 15
  %vm5653 = vcmp.lt.s32.totalorder %v45, 15
  %vm5654 = vcmp.lt.s32.totalorder %v46, 15
  %vm5655 = vcmp.lt.s32.totalorder %v47, 15
  %vm5656 = vcmp.lt.s32.totalorder %v48, 15
  %vm5657 = vcmp.lt.s32.totalorder %v49, 15
  %vm5658 = vcmp.lt.s32.totalorder %v50, 15
  %vm5659 = vcmp.lt.s32.totalorder %v51, 15
  %vm5660 = vcmp.lt.s32.totalorder %v52, 15
  %vm5661 = vcmp.lt.s32.totalorder %v53, 15
  %vm5662 = vcmp.lt.s32.totalorder %v54, 15
  %vm5663 = vcmp.lt.s32.totalorder %v55, 15
  %vm5664 = vcmp.lt.s32.totalorder %v56, 15
  %vm5665 = vcmp.lt.s32.totalorder %v57, 15
  %vm5666 = vcmp.lt.s32.totalorder %v58, 15
  %vm5667 = vcmp.lt.s32.totalorder %v59, 15
  %vm5668 = vcmp.lt.s32.totalorder %v60, 15
  %vm5669 = vcmp.lt.s32.totalorder %v61, 15
  %vm5670 = vcmp.lt.s32.totalorder %v62, 15
  %vm5671 = vcmp.lt.s32.totalorder %v63, 15
  %vm5672 = vcmp.lt.s32.totalorder %v64, 15
  %vm5673 = vcmp.lt.s32.totalorder %v65, 15
  %vm5674 = vcmp.lt.s32.totalorder %v66, 15
  %vm5675 = vcmp.lt.s32.totalorder %v67, 15
  %vm5676 = vcmp.lt.s32.totalorder %v68, 15
  %vm5677 = vcmp.lt.s32.totalorder %v69, 15
  %vm5678 = vcmp.lt.s32.totalorder %v70, 15
  %vm5679 = vcmp.lt.s32.totalorder %v71, 15
  %vm5680 = vcmp.lt.s32.totalorder %v72, 15
  %vm5681 = vcmp.lt.s32.totalorder %v73, 15
  %vm5682 = vcmp.lt.s32.totalorder %v74, 15
  %vm5683 = vcmp.lt.s32.totalorder %v75, 15
  %vm5684 = vcmp.lt.s32.totalorder %v76, 15
  %vm5685 = vcmp.lt.s32.totalorder %v77, 15
  %vm5686 = vcmp.lt.s32.totalorder %v78, 15
  %vm5687 = vcmp.lt.s32.totalorder %v79, 15
  %vm5688 = vcmp.lt.s32.totalorder %v80, 15
  %vm5689 = vcmp.lt.s32.totalorder %v81, 15
  %vm5690 = vcmp.lt.s32.totalorder %v82, 15
  %vm5691 = vcmp.lt.s32.totalorder %v83, 15
  %vm5692 = vcmp.lt.s32.totalorder %v84, 15
  %vm5693 = vcmp.lt.s32.totalorder %v85, 15
  %vm5694 = vcmp.lt.s32.totalorder %v86, 15
  %vm5695 = vcmp.lt.s32.totalorder %v87, 15
  %vm5696 = vmand %vm5632, %vm280
  %vm5697 = vmand %vm5633, %vm281
  %vm5698 = vmand %vm5634, %vm282
  %vm5699 = vmand %vm5635, %vm283
  %vm5700 = vmand %vm5636, %vm284
  %vm5701 = vmand %vm5637, %vm285
  %vm5702 = vmand %vm5638, %vm286
  %vm5703 = vmand %vm5639, %vm287
  %vm5704 = vmand %vm5640, %vm288
  %vm5705 = vmand %vm5641, %vm289
  %vm5706 = vmand %vm5642, %vm290
  %vm5707 = vmand %vm5643, %vm291
  %vm5708 = vmand %vm5644, %vm292
  %vm5709 = vmand %vm5645, %vm293
  %vm5710 = vmand %vm5646, %vm294
  %vm5711 = vmand %vm5647, %vm295
  %vm5712 = vmand %vm5648, %vm296
  %vm5713 = vmand %vm5649, %vm297
  %vm5714 = vmand %vm5650, %vm298
  %vm5715 = vmand %vm5651, %vm299
  %vm5716 = vmand %vm5652, %vm300
  %vm5717 = vmand %vm5653, %vm301
  %vm5718 = vmand %vm5654, %vm302
  %vm5719 = vmand %vm5655, %vm303
  %vm5720 = vmand %vm5656, %vm304
  %vm5721 = vmand %vm5657, %vm305
  %vm5722 = vmand %vm5658, %vm306
  %vm5723 = vmand %vm5659, %vm307
  %vm5724 = vmand %vm5660, %vm308
  %vm5725 = vmand %vm5661, %vm309
  %vm5726 = vmand %vm5662, %vm310
  %vm5727 = vmand %vm5663, %vm311
  %vm5728 = vmand %vm5664, %vm312
  %vm5729 = vmand %vm5665, %vm313
  %vm5730 = vmand %vm5666, %vm314
  %vm5731 = vmand %vm5667, %vm315
  %vm5732 = vmand %vm5668, %vm316
  %vm5733 = vmand %vm5669, %vm317
  %vm5734 = vmand %vm5670, %vm318
  %vm5735 = vmand %vm5671, %vm319
  %vm5736 = vmand %vm5672, %vm320
  %vm5737 = vmand %vm5673, %vm321
  %vm5738 = vmand %vm5674, %vm322
  %vm5739 = vmand %vm5675, %vm323
  %vm5740 = vmand %vm5676, %vm324
  %vm5741 = vmand %vm5677, %vm325
  %vm5742 = vmand %vm5678, %vm326
  %vm5743 = vmand %vm5679, %vm327
  %vm5744 = vmand %vm5680, %vm328
  %vm5745 = vmand %vm5681, %vm329
  %vm5746 = vmand %vm5682, %vm330
  %vm5747 = vmand %vm5683, %vm331
  %vm5748 = vmand %vm5684, %vm332
  %vm5749 = vmand %vm5685, %vm333
  %vm5750 = vmand %vm5686, %vm334
  %vm5751 = vmand %vm5687, %vm335
  %vm5752 = vmand %vm5688, %vm336
  %vm5753 = vmand %vm5689, %vm337
  %vm5754 = vmand %vm5690, %vm338
  %vm5755 = vmand %vm5691, %vm339
  %vm5756 = vmand %vm5692, %vm340
  %vm5757 = vmand %vm5693, %vm341
  %vm5758 = vmand %vm5694, %vm342
  %vm5759 = vmand %vm5695, %vm343
  %v5760 = vsel %vm5696, 1, 0
  %v5761 = vsel %vm5697, 1, 0
  %v5762 = vsel %vm5698, 1, 0
  %v5763 = vsel %vm5699, 1, 0
  %v5764 = vsel %vm5700, 1, 0
  %v5765 = vsel %vm5701, 1, 0
  %v5766 = vsel %vm5702, 1, 0
  %v5767 = vsel %vm5703, 1, 0
  %v5768 = vsel %vm5704, 1, 0
  %v5769 = vsel %vm5705, 1, 0
  %v5770 = vsel %vm5706, 1, 0
  %v5771 = vsel %vm5707, 1, 0
  %v5772 = vsel %vm5708, 1, 0
  %v5773 = vsel %vm5709, 1, 0
  %v5774 = vsel %vm5710, 1, 0
  %v5775 = vsel %vm5711, 1, 0
  %v5776 = vsel %vm5712, 1, 0
  %v5777 = vsel %vm5713, 1, 0
  %v5778 = vsel %vm5714, 1, 0
  %v5779 = vsel %vm5715, 1, 0
  %v5780 = vsel %vm5716, 1, 0
  %v5781 = vsel %vm5717, 1, 0
  %v5782 = vsel %vm5718, 1, 0
  %v5783 = vsel %vm5719, 1, 0
  %v5784 = vsel %vm5720, 1, 0
  %v5785 = vsel %vm5721, 1, 0
  %v5786 = vsel %vm5722, 1, 0
  %v5787 = vsel %vm5723, 1, 0
  %v5788 = vsel %vm5724, 1, 0
  %v5789 = vsel %vm5725, 1, 0
  %v5790 = vsel %vm5726, 1, 0
  %v5791 = vsel %vm5727, 1, 0
  %v5792 = vsel %vm5728, 1, 0
  %v5793 = vsel %vm5729, 1, 0
  %v5794 = vsel %vm5730, 1, 0
  %v5795 = vsel %vm5731, 1, 0
  %v5796 = vsel %vm5732, 1, 0
  %v5797 = vsel %vm5733, 1, 0
  %v5798 = vsel %vm5734, 1, 0
  %v5799 = vsel %vm5735, 1, 0
  %v5800 = vsel %vm5736, 1, 0
  %v5801 = vsel %vm5737, 1, 0
  %v5802 = vsel %vm5738, 1, 0
  %v5803 = vsel %vm5739, 1, 0
  %v5804 = vsel %vm5740, 1, 0
  %v5805 = vsel %vm5741, 1, 0
  %v5806 = vsel %vm5742, 1, 0
  %v5807 = vsel %vm5743, 1, 0
  %v5808 = vsel %vm5744, 1, 0
  %v5809 = vsel %vm5745, 1, 0
  %v5810 = vsel %vm5746, 1, 0
  %v5811 = vsel %vm5747, 1, 0
  %v5812 = vsel %vm5748, 1, 0
  %v5813 = vsel %vm5749, 1, 0
  %v5814 = vsel %vm5750, 1, 0
  %v5815 = vsel %vm5751, 1, 0
  %v5816 = vsel %vm5752, 1, 0
  %v5817 = vsel %vm5753, 1, 0
  %v5818 = vsel %vm5754, 1, 0
  %v5819 = vsel %vm5755, 1, 0
  %v5820 = vsel %vm5756, 1, 0
  %v5821 = vsel %vm5757, 1, 0
  %v5822 = vsel %vm5758, 1, 0
  %v5823 = vsel %vm5759, 1, 0
  %5824 = vset.pattern.permute.xlu0 0
  %5825 = vperm.xlu0 %5824, %v5760
  %v5826 = vpop.permute.xlu0 %5825
  %5827 = vset.pattern.permute.xlu0 0
  %5828 = vperm.xlu0 %5827, %v5761
  %v5829 = vpop.permute.xlu0 %5828
  %5830 = vset.pattern.permute.xlu0 0
  %5831 = vperm.xlu0 %5830, %v5762
  %v5832 = vpop.permute.xlu0 %5831
  %5833 = vset.pattern.permute.xlu0 0
  %5834 = vperm.xlu0 %5833, %v5763
  %v5835 = vpop.permute.xlu0 %5834
  %5836 = vset.pattern.permute.xlu0 0
  %5837 = vperm.xlu0 %5836, %v5764
  %v5838 = vpop.permute.xlu0 %5837
  %5839 = vset.pattern.permute.xlu0 0
  %5840 = vperm.xlu0 %5839, %v5765
  %v5841 = vpop.permute.xlu0 %5840
  %5842 = vset.pattern.permute.xlu0 0
  %5843 = vperm.xlu0 %5842, %v5766
  %v5844 = vpop.permute.xlu0 %5843
  %5845 = vset.pattern.permute.xlu0 0
  %5846 = vperm.xlu0 %5845, %v5767
  %v5847 = vpop.permute.xlu0 %5846
  %5848 = vset.pattern.permute.xlu0 0
  %5849 = vperm.xlu0 %5848, %v5768
  %v5850 = vpop.permute.xlu0 %5849
  %5851 = vset.pattern.permute.xlu0 0
  %5852 = vperm.xlu0 %5851, %v5769
  %v5853 = vpop.permute.xlu0 %5852
  %5854 = vset.pattern.permute.xlu0 0
  %5855 = vperm.xlu0 %5854, %v5770
  %v5856 = vpop.permute.xlu0 %5855
  %5857 = vset.pattern.permute.xlu0 0
  %5858 = vperm.xlu0 %5857, %v5771
  %v5859 = vpop.permute.xlu0 %5858
  %5860 = vset.pattern.permute.xlu0 0
  %5861 = vperm.xlu0 %5860, %v5772
  %v5862 = vpop.permute.xlu0 %5861
  %5863 = vset.pattern.permute.xlu0 0
  %5864 = vperm.xlu0 %5863, %v5773
  %v5865 = vpop.permute.xlu0 %5864
  %5866 = vset.pattern.permute.xlu0 0
  %5867 = vperm.xlu0 %5866, %v5774
  %v5868 = vpop.permute.xlu0 %5867
  %5869 = vset.pattern.permute.xlu0 0
  %5870 = vperm.xlu0 %5869, %v5775
  %v5871 = vpop.permute.xlu0 %5870
  %5872 = vset.pattern.permute.xlu0 0
  %5873 = vperm.xlu0 %5872, %v5776
  %v5874 = vpop.permute.xlu0 %5873
  %5875 = vset.pattern.permute.xlu0 0
  %5876 = vperm.xlu0 %5875, %v5777
  %v5877 = vpop.permute.xlu0 %5876
  %5878 = vset.pattern.permute.xlu0 0
  %5879 = vperm.xlu0 %5878, %v5778
  %v5880 = vpop.permute.xlu0 %5879
  %5881 = vset.pattern.permute.xlu0 0
  %5882 = vperm.xlu0 %5881, %v5779
  %v5883 = vpop.permute.xlu0 %5882
  %5884 = vset.pattern.permute.xlu0 0
  %5885 = vperm.xlu0 %5884, %v5780
  %v5886 = vpop.permute.xlu0 %5885
  %5887 = vset.pattern.permute.xlu0 0
  %5888 = vperm.xlu0 %5887, %v5781
  %v5889 = vpop.permute.xlu0 %5888
  %5890 = vset.pattern.permute.xlu0 0
  %5891 = vperm.xlu0 %5890, %v5782
  %v5892 = vpop.permute.xlu0 %5891
  %5893 = vset.pattern.permute.xlu0 0
  %5894 = vperm.xlu0 %5893, %v5783
  %v5895 = vpop.permute.xlu0 %5894
  %5896 = vset.pattern.permute.xlu0 0
  %5897 = vperm.xlu0 %5896, %v5784
  %v5898 = vpop.permute.xlu0 %5897
  %5899 = vset.pattern.permute.xlu0 0
  %5900 = vperm.xlu0 %5899, %v5785
  %v5901 = vpop.permute.xlu0 %5900
  %5902 = vset.pattern.permute.xlu0 0
  %5903 = vperm.xlu0 %5902, %v5786
  %v5904 = vpop.permute.xlu0 %5903
  %5905 = vset.pattern.permute.xlu0 0
  %5906 = vperm.xlu0 %5905, %v5787
  %v5907 = vpop.permute.xlu0 %5906
  %5908 = vset.pattern.permute.xlu0 0
  %5909 = vperm.xlu0 %5908, %v5788
  %v5910 = vpop.permute.xlu0 %5909
  %5911 = vset.pattern.permute.xlu0 0
  %5912 = vperm.xlu0 %5911, %v5789
  %v5913 = vpop.permute.xlu0 %5912
  %5914 = vset.pattern.permute.xlu0 0
  %5915 = vperm.xlu0 %5914, %v5790
  %v5916 = vpop.permute.xlu0 %5915
  %5917 = vset.pattern.permute.xlu0 0
  %5918 = vperm.xlu0 %5917, %v5791
  %v5919 = vpop.permute.xlu0 %5918
  %5920 = vset.pattern.permute.xlu0 0
  %5921 = vperm.xlu0 %5920, %v5792
  %v5922 = vpop.permute.xlu0 %5921
  %5923 = vset.pattern.permute.xlu0 0
  %5924 = vperm.xlu0 %5923, %v5793
  %v5925 = vpop.permute.xlu0 %5924
  %5926 = vset.pattern.permute.xlu0 0
  %5927 = vperm.xlu0 %5926, %v5794
  %v5928 = vpop.permute.xlu0 %5927
  %5929 = vset.pattern.permute.xlu0 0
  %5930 = vperm.xlu0 %5929, %v5795
  %v5931 = vpop.permute.xlu0 %5930
  %5932 = vset.pattern.permute.xlu0 0
  %5933 = vperm.xlu0 %5932, %v5796
  %v5934 = vpop.permute.xlu0 %5933
  %5935 = vset.pattern.permute.xlu0 0
  %5936 = vperm.xlu0 %5935, %v5797
  %v5937 = vpop.permute.xlu0 %5936
  %5938 = vset.pattern.permute.xlu0 0
  %5939 = vperm.xlu0 %5938, %v5798
  %v5940 = vpop.permute.xlu0 %5939
  %5941 = vset.pattern.permute.xlu0 0
  %5942 = vperm.xlu0 %5941, %v5799
  %v5943 = vpop.permute.xlu0 %5942
  %5944 = vset.pattern.permute.xlu0 0
  %5945 = vperm.xlu0 %5944, %v5800
  %v5946 = vpop.permute.xlu0 %5945
  %5947 = vset.pattern.permute.xlu0 0
  %5948 = vperm.xlu0 %5947, %v5801
  %v5949 = vpop.permute.xlu0 %5948
  %5950 = vset.pattern.permute.xlu0 0
  %5951 = vperm.xlu0 %5950, %v5802
  %v5952 = vpop.permute.xlu0 %5951
  %5953 = vset.pattern.permute.xlu0 0
  %5954 = vperm.xlu0 %5953, %v5803
  %v5955 = vpop.permute.xlu0 %5954
  %5956 = vset.pattern.permute.xlu0 0
  %5957 = vperm.xlu0 %5956, %v5804
  %v5958 = vpop.permute.xlu0 %5957
  %5959 = vset.pattern.permute.xlu0 0
  %5960 = vperm.xlu0 %5959, %v5805
  %v5961 = vpop.permute.xlu0 %5960
  %5962 = vset.pattern.permute.xlu0 0
  %5963 = vperm.xlu0 %5962, %v5806
  %v5964 = vpop.permute.xlu0 %5963
  %5965 = vset.pattern.permute.xlu0 0
  %5966 = vperm.xlu0 %5965, %v5807
  %v5967 = vpop.permute.xlu0 %5966
  %5968 = vset.pattern.permute.xlu0 0
  %5969 = vperm.xlu0 %5968, %v5808
  %v5970 = vpop.permute.xlu0 %5969
  %5971 = vset.pattern.permute.xlu0 0
  %5972 = vperm.xlu0 %5971, %v5809
  %v5973 = vpop.permute.xlu0 %5972
  %5974 = vset.pattern.permute.xlu0 0
  %5975 = vperm.xlu0 %5974, %v5810
  %v5976 = vpop.permute.xlu0 %5975
  %5977 = vset.pattern.permute.xlu0 0
  %5978 = vperm.xlu0 %5977, %v5811
  %v5979 = vpop.permute.xlu0 %5978
  %5980 = vset.pattern.permute.xlu0 0
  %5981 = vperm.xlu0 %5980, %v5812
  %v5982 = vpop.permute.xlu0 %5981
  %5983 = vset.pattern.permute.xlu0 0
  %5984 = vperm.xlu0 %5983, %v5813
  %v5985 = vpop.permute.xlu0 %5984
  %5986 = vset.pattern.permute.xlu0 0
  %5987 = vperm.xlu0 %5986, %v5814
  %v5988 = vpop.permute.xlu0 %5987
  %5989 = vset.pattern.permute.xlu0 0
  %5990 = vperm.xlu0 %5989, %v5815
  %v5991 = vpop.permute.xlu0 %5990
  %5992 = vset.pattern.permute.xlu0 0
  %5993 = vperm.xlu0 %5992, %v5816
  %v5994 = vpop.permute.xlu0 %5993
  %5995 = vset.pattern.permute.xlu0 0
  %5996 = vperm.xlu0 %5995, %v5817
  %v5997 = vpop.permute.xlu0 %5996
  %5998 = vset.pattern.permute.xlu0 0
  %5999 = vperm.xlu0 %5998, %v5818
  %v6000 = vpop.permute.xlu0 %5999
  %6001 = vset.pattern.permute.xlu0 0
  %6002 = vperm.xlu0 %6001, %v5819
  %v6003 = vpop.permute.xlu0 %6002
  %6004 = vset.pattern.permute.xlu0 0
  %6005 = vperm.xlu0 %6004, %v5820
  %v6006 = vpop.permute.xlu0 %6005
  %6007 = vset.pattern.permute.xlu0 0
  %6008 = vperm.xlu0 %6007, %v5821
  %v6009 = vpop.permute.xlu0 %6008
  %6010 = vset.pattern.permute.xlu0 0
  %6011 = vperm.xlu0 %6010, %v5822
  %v6012 = vpop.permute.xlu0 %6011
  %6013 = vset.pattern.permute.xlu0 0
  %6014 = vperm.xlu0 %6013, %v5823
  %v6015 = vpop.permute.xlu0 %6014
  %vm6016 = vcmp.eq.s32.totalorder %v5826, 1
  %vm6017 = vcmp.eq.s32.totalorder %v5829, 1
  %vm6018 = vcmp.eq.s32.totalorder %v5832, 1
  %vm6019 = vcmp.eq.s32.totalorder %v5835, 1
  %vm6020 = vcmp.eq.s32.totalorder %v5838, 1
  %vm6021 = vcmp.eq.s32.totalorder %v5841, 1
  %vm6022 = vcmp.eq.s32.totalorder %v5844, 1
  %vm6023 = vcmp.eq.s32.totalorder %v5847, 1
  %vm6024 = vcmp.eq.s32.totalorder %v5850, 1
  %vm6025 = vcmp.eq.s32.totalorder %v5853, 1
  %vm6026 = vcmp.eq.s32.totalorder %v5856, 1
  %vm6027 = vcmp.eq.s32.totalorder %v5859, 1
  %vm6028 = vcmp.eq.s32.totalorder %v5862, 1
  %vm6029 = vcmp.eq.s32.totalorder %v5865, 1
  %vm6030 = vcmp.eq.s32.totalorder %v5868, 1
  %vm6031 = vcmp.eq.s32.totalorder %v5871, 1
  %vm6032 = vcmp.eq.s32.totalorder %v5874, 1
  %vm6033 = vcmp.eq.s32.totalorder %v5877, 1
  %vm6034 = vcmp.eq.s32.totalorder %v5880, 1
  %vm6035 = vcmp.eq.s32.totalorder %v5883, 1
  %vm6036 = vcmp.eq.s32.totalorder %v5886, 1
  %vm6037 = vcmp.eq.s32.totalorder %v5889, 1
  %vm6038 = vcmp.eq.s32.totalorder %v5892, 1
  %vm6039 = vcmp.eq.s32.totalorder %v5895, 1
  %vm6040 = vcmp.eq.s32.totalorder %v5898, 1
  %vm6041 = vcmp.eq.s32.totalorder %v5901, 1
  %vm6042 = vcmp.eq.s32.totalorder %v5904, 1
  %vm6043 = vcmp.eq.s32.totalorder %v5907, 1
  %vm6044 = vcmp.eq.s32.totalorder %v5910, 1
  %vm6045 = vcmp.eq.s32.totalorder %v5913, 1
  %vm6046 = vcmp.eq.s32.totalorder %v5916, 1
  %vm6047 = vcmp.eq.s32.totalorder %v5919, 1
  %vm6048 = vcmp.eq.s32.totalorder %v5922, 1
  %vm6049 = vcmp.eq.s32.totalorder %v5925, 1
  %vm6050 = vcmp.eq.s32.totalorder %v5928, 1
  %vm6051 = vcmp.eq.s32.totalorder %v5931, 1
  %vm6052 = vcmp.eq.s32.totalorder %v5934, 1
  %vm6053 = vcmp.eq.s32.totalorder %v5937, 1
  %vm6054 = vcmp.eq.s32.totalorder %v5940, 1
  %vm6055 = vcmp.eq.s32.totalorder %v5943, 1
  %vm6056 = vcmp.eq.s32.totalorder %v5946, 1
  %vm6057 = vcmp.eq.s32.totalorder %v5949, 1
  %vm6058 = vcmp.eq.s32.totalorder %v5952, 1
  %vm6059 = vcmp.eq.s32.totalorder %v5955, 1
  %vm6060 = vcmp.eq.s32.totalorder %v5958, 1
  %vm6061 = vcmp.eq.s32.totalorder %v5961, 1
  %vm6062 = vcmp.eq.s32.totalorder %v5964, 1
  %vm6063 = vcmp.eq.s32.totalorder %v5967, 1
  %vm6064 = vcmp.eq.s32.totalorder %v5970, 1
  %vm6065 = vcmp.eq.s32.totalorder %v5973, 1
  %vm6066 = vcmp.eq.s32.totalorder %v5976, 1
  %vm6067 = vcmp.eq.s32.totalorder %v5979, 1
  %vm6068 = vcmp.eq.s32.totalorder %v5982, 1
  %vm6069 = vcmp.eq.s32.totalorder %v5985, 1
  %vm6070 = vcmp.eq.s32.totalorder %v5988, 1
  %vm6071 = vcmp.eq.s32.totalorder %v5991, 1
  %vm6072 = vcmp.eq.s32.totalorder %v5994, 1
  %vm6073 = vcmp.eq.s32.totalorder %v5997, 1
  %vm6074 = vcmp.eq.s32.totalorder %v6000, 1
  %vm6075 = vcmp.eq.s32.totalorder %v6003, 1
  %vm6076 = vcmp.eq.s32.totalorder %v6006, 1
  %vm6077 = vcmp.eq.s32.totalorder %v6009, 1
  %vm6078 = vcmp.eq.s32.totalorder %v6012, 1
  %vm6079 = vcmp.eq.s32.totalorder %v6015, 1
  %v6080 = vsel %vm6016, %v5568, 0.0
  %v6081 = vsel %vm6017, %v5569, 0.0
  %v6082 = vsel %vm6018, %v5570, 0.0
  %v6083 = vsel %vm6019, %v5571, 0.0
  %v6084 = vsel %vm6020, %v5572, 0.0
  %v6085 = vsel %vm6021, %v5573, 0.0
  %v6086 = vsel %vm6022, %v5574, 0.0
  %v6087 = vsel %vm6023, %v5575, 0.0
  %v6088 = vsel %vm6024, %v5576, 0.0
  %v6089 = vsel %vm6025, %v5577, 0.0
  %v6090 = vsel %vm6026, %v5578, 0.0
  %v6091 = vsel %vm6027, %v5579, 0.0
  %v6092 = vsel %vm6028, %v5580, 0.0
  %v6093 = vsel %vm6029, %v5581, 0.0
  %v6094 = vsel %vm6030, %v5582, 0.0
  %v6095 = vsel %vm6031, %v5583, 0.0
  %v6096 = vsel %vm6032, %v5584, 0.0
  %v6097 = vsel %vm6033, %v5585, 0.0
  %v6098 = vsel %vm6034, %v5586, 0.0
  %v6099 = vsel %vm6035, %v5587, 0.0
  %v6100 = vsel %vm6036, %v5588, 0.0
  %v6101 = vsel %vm6037, %v5589, 0.0
  %v6102 = vsel %vm6038, %v5590, 0.0
  %v6103 = vsel %vm6039, %v5591, 0.0
  %v6104 = vsel %vm6040, %v5592, 0.0
  %v6105 = vsel %vm6041, %v5593, 0.0
  %v6106 = vsel %vm6042, %v5594, 0.0
  %v6107 = vsel %vm6043, %v5595, 0.0
  %v6108 = vsel %vm6044, %v5596, 0.0
  %v6109 = vsel %vm6045, %v5597, 0.0
  %v6110 = vsel %vm6046, %v5598, 0.0
  %v6111 = vsel %vm6047, %v5599, 0.0
  %v6112 = vsel %vm6048, %v5600, 0.0
  %v6113 = vsel %vm6049, %v5601, 0.0
  %v6114 = vsel %vm6050, %v5602, 0.0
  %v6115 = vsel %vm6051, %v5603, 0.0
  %v6116 = vsel %vm6052, %v5604, 0.0
  %v6117 = vsel %vm6053, %v5605, 0.0
  %v6118 = vsel %vm6054, %v5606, 0.0
  %v6119 = vsel %vm6055, %v5607, 0.0
  %v6120 = vsel %vm6056, %v5608, 0.0
  %v6121 = vsel %vm6057, %v5609, 0.0
  %v6122 = vsel %vm6058, %v5610, 0.0
  %v6123 = vsel %vm6059, %v5611, 0.0
  %v6124 = vsel %vm6060, %v5612, 0.0
  %v6125 = vsel %vm6061, %v5613, 0.0
  %v6126 = vsel %vm6062, %v5614, 0.0
  %v6127 = vsel %vm6063, %v5615, 0.0
  %v6128 = vsel %vm6064, %v5616, 0.0
  %v6129 = vsel %vm6065, %v5617, 0.0
  %v6130 = vsel %vm6066, %v5618, 0.0
  %v6131 = vsel %vm6067, %v5619, 0.0
  %v6132 = vsel %vm6068, %v5620, 0.0
  %v6133 = vsel %vm6069, %v5621, 0.0
  %v6134 = vsel %vm6070, %v5622, 0.0
  %v6135 = vsel %vm6071, %v5623, 0.0
  %v6136 = vsel %vm6072, %v5624, 0.0
  %v6137 = vsel %vm6073, %v5625, 0.0
  %v6138 = vsel %vm6074, %v5626, 0.0
  %v6139 = vsel %vm6075, %v5627, 0.0
  %v6140 = vsel %vm6076, %v5628, 0.0
  %v6141 = vsel %vm6077, %v5629, 0.0
  %v6142 = vsel %vm6078, %v5630, 0.0
  %v6143 = vsel %vm6079, %v5631, 0.0
  %v6144 = vpack.c.bf16 %v6081, %v6080
  %v6145 = vpack.c.bf16 %v6083, %v6082
  %v6146 = vpack.c.bf16 %v6085, %v6084
  %v6147 = vpack.c.bf16 %v6087, %v6086
  %v6148 = vpack.c.bf16 %v6089, %v6088
  %v6149 = vpack.c.bf16 %v6091, %v6090
  %v6150 = vpack.c.bf16 %v6093, %v6092
  %v6151 = vpack.c.bf16 %v6095, %v6094
  %v6152 = vpack.c.bf16 %v6097, %v6096
  %v6153 = vpack.c.bf16 %v6099, %v6098
  %v6154 = vpack.c.bf16 %v6101, %v6100
  %v6155 = vpack.c.bf16 %v6103, %v6102
  %v6156 = vpack.c.bf16 %v6105, %v6104
  %v6157 = vpack.c.bf16 %v6107, %v6106
  %v6158 = vpack.c.bf16 %v6109, %v6108
  %v6159 = vpack.c.bf16 %v6111, %v6110
  %v6160 = vpack.c.bf16 %v6113, %v6112
  %v6161 = vpack.c.bf16 %v6115, %v6114
  %v6162 = vpack.c.bf16 %v6117, %v6116
  %v6163 = vpack.c.bf16 %v6119, %v6118
  %v6164 = vpack.c.bf16 %v6121, %v6120
  %v6165 = vpack.c.bf16 %v6123, %v6122
  %v6166 = vpack.c.bf16 %v6125, %v6124
  %v6167 = vpack.c.bf16 %v6127, %v6126
  %v6168 = vpack.c.bf16 %v6129, %v6128
  %v6169 = vpack.c.bf16 %v6131, %v6130
  %v6170 = vpack.c.bf16 %v6133, %v6132
  %v6171 = vpack.c.bf16 %v6135, %v6134
  %v6172 = vpack.c.bf16 %v6137, %v6136
  %v6173 = vpack.c.bf16 %v6139, %v6138
  %v6174 = vpack.c.bf16 %v6141, %v6140
  %v6175 = vpack.c.bf16 %v6143, %v6142
  %s6176 = scalar_lea.vmem %s3, 12
  %v6177 = vld [vmem:[%s6176] sm:$0x3]
  %v6179 = vsel %vm1307, %v6144, 0
  %v6182 = vsel %vm1307, %v6145, 0
  %v6185 = vsel %vm1307, %v6146, 0
  %v6188 = vsel %vm1307, %v6147, 0
  %v6191 = vsel %vm1307, %v6148, 0
  %v6194 = vsel %vm1307, %v6149, 0
  %v6197 = vsel %vm1307, %v6150, 0
  %v6200 = vsel %vm1307, %v6151, 0
  %v6203 = vsel %vm1307, %v6152, 0
  %v6206 = vsel %vm1307, %v6153, 0
  %v6209 = vsel %vm1307, %v6154, 0
  %v6212 = vsel %vm1307, %v6155, 0
  %v6215 = vsel %vm1307, %v6156, 0
  %v6218 = vsel %vm1307, %v6157, 0
  %v6221 = vsel %vm1307, %v6158, 0
  %v6224 = vsel %vm1307, %v6159, 0
  %v6227 = vsel %vm1307, %v6160, 0
  %v6230 = vsel %vm1307, %v6161, 0
  %v6233 = vsel %vm1307, %v6162, 0
  %v6236 = vsel %vm1307, %v6163, 0
  %v6239 = vsel %vm1307, %v6164, 0
  %v6242 = vsel %vm1307, %v6165, 0
  %v6245 = vsel %vm1307, %v6166, 0
  %v6248 = vsel %vm1307, %v6167, 0
  %v6251 = vsel %vm1307, %v6168, 0
  %v6254 = vsel %vm1307, %v6169, 0
  %v6257 = vsel %vm1307, %v6170, 0
  %v6260 = vsel %vm1307, %v6171, 0
  %v6263 = vsel %vm1307, %v6172, 0
  %v6266 = vsel %vm1307, %v6173, 0
  %v6269 = vsel %vm1307, %v6174, 0
  %v6272 = vsel %vm1307, %v6175, 0
  %v6275 = vand.u32 %v6177, %v1407
  %6277 = vmatprep.subr.bf16.mxu0 0
  %6278 = vmatpush1.bf16.msra.mxu0 0
  %6279 = vmatprep.subr.bf16.mxu0 0
  %6280 = vmatpush1.bf16.msra.mxu0 0
  %6281 = vmatprep.subr.bf16.mxu0 0
  %6282 = vmatpush1.bf16.msra.mxu0 0
  %6283 = vmatprep.subr.bf16.mxu0 0
  %6284 = vmatpush1.bf16.msra.mxu0 0
  %6285 = vmatprep.subr.bf16.mxu0 0
  %6286 = vmatpush1.bf16.msra.mxu0 0
  %6287 = vmatprep.subr.bf16.mxu0 0
  %6288 = vmatpush1.bf16.msra.mxu0 0
  %6289 = vmatprep.subr.bf16.mxu0 0
  %6290 = vmatpush1.bf16.msra.mxu0 0
  %6291 = vmatprep.subr.bf16.mxu0 0
  %6292 = vmatpush1.bf16.msra.mxu0 %v6275
  %6293 = vmatprep.subr.bf16.mxu0 0
  %6294 = vmatpush2.bf16.msra.mxu0 0
  %6295 = vmatprep.subr.bf16.mxu0 0
  %6296 = vmatpush2.bf16.msra.mxu0 0
  %6297 = vmatprep.subr.bf16.mxu0 0
  %6298 = vmatpush2.bf16.msra.mxu0 0
  %6299 = vmatprep.subr.bf16.mxu0 0
  %6300 = vmatpush2.bf16.msra.mxu0 0
  %6301 = vmatprep.subr.bf16.mxu0 0
  %6302 = vmatpush2.bf16.msra.mxu0 0
  %6303 = vmatprep.subr.bf16.mxu0 0
  %6304 = vmatpush2.bf16.msra.mxu0 0
  %6305 = vmatprep.subr.bf16.mxu0 0
  %6306 = vmatpush2.bf16.msra.mxu0 0
  %6307 = vmatprep.subr.bf16.mxu0 0
  %6308 = vmatpush2.bf16.msra.mxu0 0
  %6309 = vmatprep.mubr.bf16.mxu0 0
  %6310 = vmatmul.mubr.bf16.gmra.mxu0 %v6179
  %v6311 = vpop.f32.mrf.mxu0
  %v6312 = vadd.f32 0.0, %v6311
  %v6313 = vpop.f32.mrf.mxu0
  %v6314 = vpop.f32.mrf.mxu0
  %v6315 = vadd.f32 0.0, %v6314
  %v6316 = vpop.f32.mrf.mxu0
  %6317 = vmatprep.mubr.bf16.mxu0 0
  %6318 = vmatmul.mubr.bf16.gmra.mxu0 %v6182
  %v6319 = vpop.f32.mrf.mxu0
  %v6320 = vadd.f32 0.0, %v6319
  %v6321 = vpop.f32.mrf.mxu0
  %v6322 = vpop.f32.mrf.mxu0
  %v6323 = vadd.f32 0.0, %v6322
  %v6324 = vpop.f32.mrf.mxu0
  %6325 = vmatprep.mubr.bf16.mxu0 0
  %6326 = vmatmul.mubr.bf16.gmra.mxu0 %v6185
  %v6327 = vpop.f32.mrf.mxu0
  %v6328 = vadd.f32 0.0, %v6327
  %v6329 = vpop.f32.mrf.mxu0
  %v6330 = vpop.f32.mrf.mxu0
  %v6331 = vadd.f32 0.0, %v6330
  %v6332 = vpop.f32.mrf.mxu0
  %6333 = vmatprep.mubr.bf16.mxu0 0
  %6334 = vmatmul.mubr.bf16.gmra.mxu0 %v6188
  %v6335 = vpop.f32.mrf.mxu0
  %v6336 = vadd.f32 0.0, %v6335
  %v6337 = vpop.f32.mrf.mxu0
  %v6338 = vpop.f32.mrf.mxu0
  %v6339 = vadd.f32 0.0, %v6338
  %v6340 = vpop.f32.mrf.mxu0
  %6341 = vmatprep.mubr.bf16.mxu0 0
  %6342 = vmatmul.mubr.bf16.gmra.mxu0 %v6191
  %v6343 = vpop.f32.mrf.mxu0
  %v6344 = vadd.f32 0.0, %v6343
  %v6345 = vpop.f32.mrf.mxu0
  %v6346 = vpop.f32.mrf.mxu0
  %v6347 = vadd.f32 0.0, %v6346
  %v6348 = vpop.f32.mrf.mxu0
  %6349 = vmatprep.mubr.bf16.mxu0 0
  %6350 = vmatmul.mubr.bf16.gmra.mxu0 %v6194
  %v6351 = vpop.f32.mrf.mxu0
  %v6352 = vadd.f32 0.0, %v6351
  %v6353 = vpop.f32.mrf.mxu0
  %v6354 = vpop.f32.mrf.mxu0
  %v6355 = vadd.f32 0.0, %v6354
  %v6356 = vpop.f32.mrf.mxu0
  %6357 = vmatprep.mubr.bf16.mxu0 0
  %6358 = vmatmul.mubr.bf16.gmra.mxu0 %v6197
  %v6359 = vpop.f32.mrf.mxu0
  %v6360 = vadd.f32 0.0, %v6359
  %v6361 = vpop.f32.mrf.mxu0
  %v6362 = vpop.f32.mrf.mxu0
  %v6363 = vadd.f32 0.0, %v6362
  %v6364 = vpop.f32.mrf.mxu0
  %6365 = vmatprep.mubr.bf16.mxu0 0
  %6366 = vmatmul.mubr.bf16.gmra.mxu0 %v6200
  %v6367 = vpop.f32.mrf.mxu0
  %v6368 = vadd.f32 0.0, %v6367
  %v6369 = vpop.f32.mrf.mxu0
  %v6370 = vpop.f32.mrf.mxu0
  %v6371 = vadd.f32 0.0, %v6370
  %v6372 = vpop.f32.mrf.mxu0
  %6373 = vmatprep.mubr.bf16.mxu0 0
  %6374 = vmatmul.mubr.bf16.gmra.mxu0 %v6203
  %v6375 = vpop.f32.mrf.mxu0
  %v6376 = vadd.f32 0.0, %v6375
  %v6377 = vpop.f32.mrf.mxu0
  %v6378 = vpop.f32.mrf.mxu0
  %v6379 = vadd.f32 0.0, %v6378
  %v6380 = vpop.f32.mrf.mxu0
  %6381 = vmatprep.mubr.bf16.mxu0 0
  %6382 = vmatmul.mubr.bf16.gmra.mxu0 %v6206
  %v6383 = vpop.f32.mrf.mxu0
  %v6384 = vadd.f32 0.0, %v6383
  %v6385 = vpop.f32.mrf.mxu0
  %v6386 = vpop.f32.mrf.mxu0
  %v6387 = vadd.f32 0.0, %v6386
  %v6388 = vpop.f32.mrf.mxu0
  %6389 = vmatprep.mubr.bf16.mxu0 0
  %6390 = vmatmul.mubr.bf16.gmra.mxu0 %v6209
  %v6391 = vpop.f32.mrf.mxu0
  %v6392 = vadd.f32 0.0, %v6391
  %v6393 = vpop.f32.mrf.mxu0
  %v6394 = vpop.f32.mrf.mxu0
  %v6395 = vadd.f32 0.0, %v6394
  %v6396 = vpop.f32.mrf.mxu0
  %6397 = vmatprep.mubr.bf16.mxu0 0
  %6398 = vmatmul.mubr.bf16.gmra.mxu0 %v6212
  %v6399 = vpop.f32.mrf.mxu0
  %v6400 = vadd.f32 0.0, %v6399
  %v6401 = vpop.f32.mrf.mxu0
  %v6402 = vpop.f32.mrf.mxu0
  %v6403 = vadd.f32 0.0, %v6402
  %v6404 = vpop.f32.mrf.mxu0
  %6405 = vmatprep.mubr.bf16.mxu0 0
  %6406 = vmatmul.mubr.bf16.gmra.mxu0 %v6215
  %v6407 = vpop.f32.mrf.mxu0
  %v6408 = vadd.f32 0.0, %v6407
  %v6409 = vpop.f32.mrf.mxu0
  %v6410 = vpop.f32.mrf.mxu0
  %v6411 = vadd.f32 0.0, %v6410
  %v6412 = vpop.f32.mrf.mxu0
  %6413 = vmatprep.mubr.bf16.mxu0 0
  %6414 = vmatmul.mubr.bf16.gmra.mxu0 %v6218
  %v6415 = vpop.f32.mrf.mxu0
  %v6416 = vadd.f32 0.0, %v6415
  %v6417 = vpop.f32.mrf.mxu0
  %v6418 = vpop.f32.mrf.mxu0
  %v6419 = vadd.f32 0.0, %v6418
  %v6420 = vpop.f32.mrf.mxu0
  %6421 = vmatprep.mubr.bf16.mxu0 0
  %6422 = vmatmul.mubr.bf16.gmra.mxu0 %v6221
  %v6423 = vpop.f32.mrf.mxu0
  %v6424 = vadd.f32 0.0, %v6423
  %v6425 = vpop.f32.mrf.mxu0
  %v6426 = vpop.f32.mrf.mxu0
  %v6427 = vadd.f32 0.0, %v6426
  %v6428 = vpop.f32.mrf.mxu0
  %6429 = vmatprep.mubr.bf16.mxu0 0
  %6430 = vmatmul.mubr.bf16.gmra.mxu0 %v6224
  %v6431 = vpop.f32.mrf.mxu0
  %v6432 = vadd.f32 0.0, %v6431
  %v6433 = vpop.f32.mrf.mxu0
  %v6434 = vpop.f32.mrf.mxu0
  %v6435 = vadd.f32 0.0, %v6434
  %v6436 = vpop.f32.mrf.mxu0
  %6437 = vmatprep.mubr.bf16.mxu0 0
  %6438 = vmatmul.mubr.bf16.gmra.mxu0 %v6227
  %v6439 = vpop.f32.mrf.mxu0
  %v6440 = vadd.f32 0.0, %v6439
  %v6441 = vpop.f32.mrf.mxu0
  %v6442 = vpop.f32.mrf.mxu0
  %v6443 = vadd.f32 0.0, %v6442
  %v6444 = vpop.f32.mrf.mxu0
  %6445 = vmatprep.mubr.bf16.mxu0 0
  %6446 = vmatmul.mubr.bf16.gmra.mxu0 %v6230
  %v6447 = vpop.f32.mrf.mxu0
  %v6448 = vadd.f32 0.0, %v6447
  %v6449 = vpop.f32.mrf.mxu0
  %v6450 = vpop.f32.mrf.mxu0
  %v6451 = vadd.f32 0.0, %v6450
  %v6452 = vpop.f32.mrf.mxu0
  %6453 = vmatprep.mubr.bf16.mxu0 0
  %6454 = vmatmul.mubr.bf16.gmra.mxu0 %v6233
  %v6455 = vpop.f32.mrf.mxu0
  %v6456 = vadd.f32 0.0, %v6455
  %v6457 = vpop.f32.mrf.mxu0
  %v6458 = vpop.f32.mrf.mxu0
  %v6459 = vadd.f32 0.0, %v6458
  %v6460 = vpop.f32.mrf.mxu0
  %6461 = vmatprep.mubr.bf16.mxu0 0
  %6462 = vmatmul.mubr.bf16.gmra.mxu0 %v6236
  %v6463 = vpop.f32.mrf.mxu0
  %v6464 = vadd.f32 0.0, %v6463
  %v6465 = vpop.f32.mrf.mxu0
  %v6466 = vpop.f32.mrf.mxu0
  %v6467 = vadd.f32 0.0, %v6466
  %v6468 = vpop.f32.mrf.mxu0
  %6469 = vmatprep.mubr.bf16.mxu0 0
  %6470 = vmatmul.mubr.bf16.gmra.mxu0 %v6239
  %v6471 = vpop.f32.mrf.mxu0
  %v6472 = vadd.f32 0.0, %v6471
  %v6473 = vpop.f32.mrf.mxu0
  %v6474 = vpop.f32.mrf.mxu0
  %v6475 = vadd.f32 0.0, %v6474
  %v6476 = vpop.f32.mrf.mxu0
  %6477 = vmatprep.mubr.bf16.mxu0 0
  %6478 = vmatmul.mubr.bf16.gmra.mxu0 %v6242
  %v6479 = vpop.f32.mrf.mxu0
  %v6480 = vadd.f32 0.0, %v6479
  %v6481 = vpop.f32.mrf.mxu0
  %v6482 = vpop.f32.mrf.mxu0
  %v6483 = vadd.f32 0.0, %v6482
  %v6484 = vpop.f32.mrf.mxu0
  %6485 = vmatprep.mubr.bf16.mxu0 0
  %6486 = vmatmul.mubr.bf16.gmra.mxu0 %v6245
  %v6487 = vpop.f32.mrf.mxu0
  %v6488 = vadd.f32 0.0, %v6487
  %v6489 = vpop.f32.mrf.mxu0
  %v6490 = vpop.f32.mrf.mxu0
  %v6491 = vadd.f32 0.0, %v6490
  %v6492 = vpop.f32.mrf.mxu0
  %6493 = vmatprep.mubr.bf16.mxu0 0
  %6494 = vmatmul.mubr.bf16.gmra.mxu0 %v6248
  %v6495 = vpop.f32.mrf.mxu0
  %v6496 = vadd.f32 0.0, %v6495
  %v6497 = vpop.f32.mrf.mxu0
  %v6498 = vpop.f32.mrf.mxu0
  %v6499 = vadd.f32 0.0, %v6498
  %v6500 = vpop.f32.mrf.mxu0
  %6501 = vmatprep.mubr.bf16.mxu0 0
  %6502 = vmatmul.mubr.bf16.gmra.mxu0 %v6251
  %v6503 = vpop.f32.mrf.mxu0
  %v6504 = vadd.f32 0.0, %v6503
  %v6505 = vpop.f32.mrf.mxu0
  %v6506 = vpop.f32.mrf.mxu0
  %v6507 = vadd.f32 0.0, %v6506
  %v6508 = vpop.f32.mrf.mxu0
  %6509 = vmatprep.mubr.bf16.mxu0 0
  %6510 = vmatmul.mubr.bf16.gmra.mxu0 %v6254
  %v6511 = vpop.f32.mrf.mxu0
  %v6512 = vadd.f32 0.0, %v6511
  %v6513 = vpop.f32.mrf.mxu0
  %v6514 = vpop.f32.mrf.mxu0
  %v6515 = vadd.f32 0.0, %v6514
  %v6516 = vpop.f32.mrf.mxu0
  %6517 = vmatprep.mubr.bf16.mxu0 0
  %6518 = vmatmul.mubr.bf16.gmra.mxu0 %v6257
  %v6519 = vpop.f32.mrf.mxu0
  %v6520 = vadd.f32 0.0, %v6519
  %v6521 = vpop.f32.mrf.mxu0
  %v6522 = vpop.f32.mrf.mxu0
  %v6523 = vadd.f32 0.0, %v6522
  %v6524 = vpop.f32.mrf.mxu0
  %6525 = vmatprep.mubr.bf16.mxu0 0
  %6526 = vmatmul.mubr.bf16.gmra.mxu0 %v6260
  %v6527 = vpop.f32.mrf.mxu0
  %v6528 = vadd.f32 0.0, %v6527
  %v6529 = vpop.f32.mrf.mxu0
  %v6530 = vpop.f32.mrf.mxu0
  %v6531 = vadd.f32 0.0, %v6530
  %v6532 = vpop.f32.mrf.mxu0
  %6533 = vmatprep.mubr.bf16.mxu0 0
  %6534 = vmatmul.mubr.bf16.gmra.mxu0 %v6263
  %v6535 = vpop.f32.mrf.mxu0
  %v6536 = vadd.f32 0.0, %v6535
  %v6537 = vpop.f32.mrf.mxu0
  %v6538 = vpop.f32.mrf.mxu0
  %v6539 = vadd.f32 0.0, %v6538
  %v6540 = vpop.f32.mrf.mxu0
  %6541 = vmatprep.mubr.bf16.mxu0 0
  %6542 = vmatmul.mubr.bf16.gmra.mxu0 %v6266
  %v6543 = vpop.f32.mrf.mxu0
  %v6544 = vadd.f32 0.0, %v6543
  %v6545 = vpop.f32.mrf.mxu0
  %v6546 = vpop.f32.mrf.mxu0
  %v6547 = vadd.f32 0.0, %v6546
  %v6548 = vpop.f32.mrf.mxu0
  %6549 = vmatprep.mubr.bf16.mxu0 0
  %6550 = vmatmul.mubr.bf16.gmra.mxu0 %v6269
  %v6551 = vpop.f32.mrf.mxu0
  %v6552 = vadd.f32 0.0, %v6551
  %v6553 = vpop.f32.mrf.mxu0
  %v6554 = vpop.f32.mrf.mxu0
  %v6555 = vadd.f32 0.0, %v6554
  %v6556 = vpop.f32.mrf.mxu0
  %6557 = vmatprep.mubr.bf16.mxu0 0
  %6558 = vmatmul.mubr.bf16.gmra.mxu0 %v6272
  %v6559 = vpop.f32.mrf.mxu0
  %v6560 = vadd.f32 0.0, %v6559
  %v6561 = vpop.f32.mrf.mxu0
  %v6562 = vpop.f32.mrf.mxu0
  %v6563 = vadd.f32 0.0, %v6562
  %v6564 = vpop.f32.mrf.mxu0
  %6565 = vdwg.mxu0
  %v6566 = vadd.f32 %v5504, %v6312
  %v6567 = vadd.f32 %v5505, %v6315
  %v6568 = vadd.f32 %v5506, %v6320
  %v6569 = vadd.f32 %v5507, %v6323
  %v6570 = vadd.f32 %v5508, %v6328
  %v6571 = vadd.f32 %v5509, %v6331
  %v6572 = vadd.f32 %v5510, %v6336
  %v6573 = vadd.f32 %v5511, %v6339
  %v6574 = vadd.f32 %v5512, %v6344
  %v6575 = vadd.f32 %v5513, %v6347
  %v6576 = vadd.f32 %v5514, %v6352
  %v6577 = vadd.f32 %v5515, %v6355
  %v6578 = vadd.f32 %v5516, %v6360
  %v6579 = vadd.f32 %v5517, %v6363
  %v6580 = vadd.f32 %v5518, %v6368
  %v6581 = vadd.f32 %v5519, %v6371
  %v6582 = vadd.f32 %v5520, %v6376
  %v6583 = vadd.f32 %v5521, %v6379
  %v6584 = vadd.f32 %v5522, %v6384
  %v6585 = vadd.f32 %v5523, %v6387
  %v6586 = vadd.f32 %v5524, %v6392
  %v6587 = vadd.f32 %v5525, %v6395
  %v6588 = vadd.f32 %v5526, %v6400
  %v6589 = vadd.f32 %v5527, %v6403
  %v6590 = vadd.f32 %v5528, %v6408
  %v6591 = vadd.f32 %v5529, %v6411
  %v6592 = vadd.f32 %v5530, %v6416
  %v6593 = vadd.f32 %v5531, %v6419
  %v6594 = vadd.f32 %v5532, %v6424
  %v6595 = vadd.f32 %v5533, %v6427
  %v6596 = vadd.f32 %v5534, %v6432
  %v6597 = vadd.f32 %v5535, %v6435
  %v6598 = vadd.f32 %v5536, %v6440
  %v6599 = vadd.f32 %v5537, %v6443
  %v6600 = vadd.f32 %v5538, %v6448
  %v6601 = vadd.f32 %v5539, %v6451
  %v6602 = vadd.f32 %v5540, %v6456
  %v6603 = vadd.f32 %v5541, %v6459
  %v6604 = vadd.f32 %v5542, %v6464
  %v6605 = vadd.f32 %v5543, %v6467
  %v6606 = vadd.f32 %v5544, %v6472
  %v6607 = vadd.f32 %v5545, %v6475
  %v6608 = vadd.f32 %v5546, %v6480
  %v6609 = vadd.f32 %v5547, %v6483
  %v6610 = vadd.f32 %v5548, %v6488
  %v6611 = vadd.f32 %v5549, %v6491
  %v6612 = vadd.f32 %v5550, %v6496
  %v6613 = vadd.f32 %v5551, %v6499
  %v6614 = vadd.f32 %v5552, %v6504
  %v6615 = vadd.f32 %v5553, %v6507
  %v6616 = vadd.f32 %v5554, %v6512
  %v6617 = vadd.f32 %v5555, %v6515
  %v6618 = vadd.f32 %v5556, %v6520
  %v6619 = vadd.f32 %v5557, %v6523
  %v6620 = vadd.f32 %v5558, %v6528
  %v6621 = vadd.f32 %v5559, %v6531
  %v6622 = vadd.f32 %v5560, %v6536
  %v6623 = vadd.f32 %v5561, %v6539
  %v6624 = vadd.f32 %v5562, %v6544
  %v6625 = vadd.f32 %v5563, %v6547
  %v6626 = vadd.f32 %v5564, %v6552
  %v6627 = vadd.f32 %v5565, %v6555
  %v6628 = vadd.f32 %v5566, %v6560
  %v6629 = vadd.f32 %v5567, %v6563
  %v6630 = vld [vmem:[%s0 + $0x21] sm:$0xff]
  %v6631 = vld [vmem:[%s0 + $0x29] sm:$0xff]
  %v6632 = vld [vmem:[%s0 + $0x31] sm:$0xff]
  %v6633 = vld [vmem:[%s0 + $0x39] sm:$0xff]
  %v6634 = vld [vmem:[%s0 + $0x41] sm:$0xff]
  %v6635 = vld [vmem:[%s0 + $0x49] sm:$0xff]
  %v6636 = vld [vmem:[%s0 + $0x51] sm:$0xff]
  %v6637 = vld [vmem:[%s0 + $0x59] sm:$0xff]
  %v6638 = vld [vmem:[%s0 + $0x61] sm:$0xff]
  %v6639 = vld [vmem:[%s0 + $0x69] sm:$0xff]
  %v6640 = vld [vmem:[%s0 + $0x71] sm:$0xff]
  %v6641 = vld [vmem:[%s0 + $0x79] sm:$0xff]
  %v6642 = vld [vmem:[%s0 + $0x81] sm:$0xff]
  %v6643 = vld [vmem:[%s0 + $0x89] sm:$0xff]
  %v6644 = vld [vmem:[%s0 + $0x91] sm:$0xff]
  %v6645 = vld [vmem:[%s0 + $0x99] sm:$0xff]
  %v6646 = vld [vmem:[%s0 + $0xa1] sm:$0xff]
  %v6647 = vld [vmem:[%s0 + $0xa9] sm:$0xff]
  %v6648 = vld [vmem:[%s0 + $0xb1] sm:$0xff]
  %v6649 = vld [vmem:[%s0 + $0xb9] sm:$0xff]
  %v6650 = vld [vmem:[%s0 + $0xc1] sm:$0xff]
  %v6651 = vld [vmem:[%s0 + $0xc9] sm:$0xff]
  %v6652 = vld [vmem:[%s0 + $0xd1] sm:$0xff]
  %v6653 = vld [vmem:[%s0 + $0xd9] sm:$0xff]
  %v6654 = vld [vmem:[%s0 + $0xe1] sm:$0xff]
  %v6655 = vld [vmem:[%s0 + $0xe9] sm:$0xff]
  %v6656 = vld [vmem:[%s0 + $0xf1] sm:$0xff]
  %v6657 = vld [vmem:[%s0 + $0xf9] sm:$0xff]
  %v6658 = vld [vmem:[%s0 + $0x101] sm:$0xff]
  %v6659 = vld [vmem:[%s0 + $0x109] sm:$0xff]
  %v6660 = vld [vmem:[%s0 + $0x111] sm:$0xff]
  %v6661 = vld [vmem:[%s0 + $0x119] sm:$0xff]
  %v6662 = vld [vmem:[%s0 + $0x121] sm:$0xff]
  %v6663 = vld [vmem:[%s0 + $0x129] sm:$0xff]
  %v6664 = vld [vmem:[%s0 + $0x131] sm:$0xff]
  %v6665 = vld [vmem:[%s0 + $0x139] sm:$0xff]
  %v6666 = vld [vmem:[%s0 + $0x141] sm:$0xff]
  %v6667 = vld [vmem:[%s0 + $0x149] sm:$0xff]
  %v6668 = vld [vmem:[%s0 + $0x151] sm:$0xff]
  %v6669 = vld [vmem:[%s0 + $0x159] sm:$0xff]
  %v6670 = vld [vmem:[%s0 + $0x161] sm:$0xff]
  %v6671 = vld [vmem:[%s0 + $0x169] sm:$0xff]
  %v6672 = vld [vmem:[%s0 + $0x171] sm:$0xff]
  %v6673 = vld [vmem:[%s0 + $0x179] sm:$0xff]
  %v6674 = vld [vmem:[%s0 + $0x181] sm:$0xff]
  %v6675 = vld [vmem:[%s0 + $0x189] sm:$0xff]
  %v6676 = vld [vmem:[%s0 + $0x191] sm:$0xff]
  %v6677 = vld [vmem:[%s0 + $0x199] sm:$0xff]
  %v6678 = vld [vmem:[%s0 + $0x1a1] sm:$0xff]
  %v6679 = vld [vmem:[%s0 + $0x1a9] sm:$0xff]
  %v6680 = vld [vmem:[%s0 + $0x1b1] sm:$0xff]
  %v6681 = vld [vmem:[%s0 + $0x1b9] sm:$0xff]
  %v6682 = vld [vmem:[%s0 + $0x1c1] sm:$0xff]
  %v6683 = vld [vmem:[%s0 + $0x1c9] sm:$0xff]
  %v6684 = vld [vmem:[%s0 + $0x1d1] sm:$0xff]
  %v6685 = vld [vmem:[%s0 + $0x1d9] sm:$0xff]
  %v6686 = vld [vmem:[%s0 + $0x1e1] sm:$0xff]
  %v6687 = vld [vmem:[%s0 + $0x1e9] sm:$0xff]
  %v6688 = vld [vmem:[%s0 + $0x1f1] sm:$0xff]
  %v6689 = vld [vmem:[%s0 + $0x1f9] sm:$0xff]
  %v6690 = vld [vmem:[%s0 + $0x201] sm:$0xff]
  %v6691 = vld [vmem:[%s0 + $0x209] sm:$0xff]
  %v6692 = vld [vmem:[%s0 + $0x211] sm:$0xff]
  %v6693 = vld [vmem:[%s0 + $0x219] sm:$0xff]
  %v6694 = vsel %vm5632, 1, 0
  %v6695 = vsel %vm5633, 1, 0
  %v6696 = vsel %vm5634, 1, 0
  %v6697 = vsel %vm5635, 1, 0
  %v6698 = vsel %vm5636, 1, 0
  %v6699 = vsel %vm5637, 1, 0
  %v6700 = vsel %vm5638, 1, 0
  %v6701 = vsel %vm5639, 1, 0
  %v6702 = vsel %vm5640, 1, 0
  %v6703 = vsel %vm5641, 1, 0
  %v6704 = vsel %vm5642, 1, 0
  %v6705 = vsel %vm5643, 1, 0
  %v6706 = vsel %vm5644, 1, 0
  %v6707 = vsel %vm5645, 1, 0
  %v6708 = vsel %vm5646, 1, 0
  %v6709 = vsel %vm5647, 1, 0
  %v6710 = vsel %vm5648, 1, 0
  %v6711 = vsel %vm5649, 1, 0
  %v6712 = vsel %vm5650, 1, 0
  %v6713 = vsel %vm5651, 1, 0
  %v6714 = vsel %vm5652, 1, 0
  %v6715 = vsel %vm5653, 1, 0
  %v6716 = vsel %vm5654, 1, 0
  %v6717 = vsel %vm5655, 1, 0
  %v6718 = vsel %vm5656, 1, 0
  %v6719 = vsel %vm5657, 1, 0
  %v6720 = vsel %vm5658, 1, 0
  %v6721 = vsel %vm5659, 1, 0
  %v6722 = vsel %vm5660, 1, 0
  %v6723 = vsel %vm5661, 1, 0
  %v6724 = vsel %vm5662, 1, 0
  %v6725 = vsel %vm5663, 1, 0
  %v6726 = vsel %vm5664, 1, 0
  %v6727 = vsel %vm5665, 1, 0
  %v6728 = vsel %vm5666, 1, 0
  %v6729 = vsel %vm5667, 1, 0
  %v6730 = vsel %vm5668, 1, 0
  %v6731 = vsel %vm5669, 1, 0
  %v6732 = vsel %vm5670, 1, 0
  %v6733 = vsel %vm5671, 1, 0
  %v6734 = vsel %vm5672, 1, 0
  %v6735 = vsel %vm5673, 1, 0
  %v6736 = vsel %vm5674, 1, 0
  %v6737 = vsel %vm5675, 1, 0
  %v6738 = vsel %vm5676, 1, 0
  %v6739 = vsel %vm5677, 1, 0
  %v6740 = vsel %vm5678, 1, 0
  %v6741 = vsel %vm5679, 1, 0
  %v6742 = vsel %vm5680, 1, 0
  %v6743 = vsel %vm5681, 1, 0
  %v6744 = vsel %vm5682, 1, 0
  %v6745 = vsel %vm5683, 1, 0
  %v6746 = vsel %vm5684, 1, 0
  %v6747 = vsel %vm5685, 1, 0
  %v6748 = vsel %vm5686, 1, 0
  %v6749 = vsel %vm5687, 1, 0
  %v6750 = vsel %vm5688, 1, 0
  %v6751 = vsel %vm5689, 1, 0
  %v6752 = vsel %vm5690, 1, 0
  %v6753 = vsel %vm5691, 1, 0
  %v6754 = vsel %vm5692, 1, 0
  %v6755 = vsel %vm5693, 1, 0
  %v6756 = vsel %vm5694, 1, 0
  %v6757 = vsel %vm5695, 1, 0
  %6758 = vset.pattern.permute.xlu0 0
  %6759 = vperm.xlu0 %6758, %v6694
  %v6760 = vpop.permute.xlu0 %6759
  %6761 = vset.pattern.permute.xlu0 0
  %6762 = vperm.xlu0 %6761, %v6695
  %v6763 = vpop.permute.xlu0 %6762
  %6764 = vset.pattern.permute.xlu0 0
  %6765 = vperm.xlu0 %6764, %v6696
  %v6766 = vpop.permute.xlu0 %6765
  %6767 = vset.pattern.permute.xlu0 0
  %6768 = vperm.xlu0 %6767, %v6697
  %v6769 = vpop.permute.xlu0 %6768
  %6770 = vset.pattern.permute.xlu0 0
  %6771 = vperm.xlu0 %6770, %v6698
  %v6772 = vpop.permute.xlu0 %6771
  %6773 = vset.pattern.permute.xlu0 0
  %6774 = vperm.xlu0 %6773, %v6699
  %v6775 = vpop.permute.xlu0 %6774
  %6776 = vset.pattern.permute.xlu0 0
  %6777 = vperm.xlu0 %6776, %v6700
  %v6778 = vpop.permute.xlu0 %6777
  %6779 = vset.pattern.permute.xlu0 0
  %6780 = vperm.xlu0 %6779, %v6701
  %v6781 = vpop.permute.xlu0 %6780
  %6782 = vset.pattern.permute.xlu0 0
  %6783 = vperm.xlu0 %6782, %v6702
  %v6784 = vpop.permute.xlu0 %6783
  %6785 = vset.pattern.permute.xlu0 0
  %6786 = vperm.xlu0 %6785, %v6703
  %v6787 = vpop.permute.xlu0 %6786
  %6788 = vset.pattern.permute.xlu0 0
  %6789 = vperm.xlu0 %6788, %v6704
  %v6790 = vpop.permute.xlu0 %6789
  %6791 = vset.pattern.permute.xlu0 0
  %6792 = vperm.xlu0 %6791, %v6705
  %v6793 = vpop.permute.xlu0 %6792
  %6794 = vset.pattern.permute.xlu0 0
  %6795 = vperm.xlu0 %6794, %v6706
  %v6796 = vpop.permute.xlu0 %6795
  %6797 = vset.pattern.permute.xlu0 0
  %6798 = vperm.xlu0 %6797, %v6707
  %v6799 = vpop.permute.xlu0 %6798
  %6800 = vset.pattern.permute.xlu0 0
  %6801 = vperm.xlu0 %6800, %v6708
  %v6802 = vpop.permute.xlu0 %6801
  %6803 = vset.pattern.permute.xlu0 0
  %6804 = vperm.xlu0 %6803, %v6709
  %v6805 = vpop.permute.xlu0 %6804
  %6806 = vset.pattern.permute.xlu0 0
  %6807 = vperm.xlu0 %6806, %v6710
  %v6808 = vpop.permute.xlu0 %6807
  %6809 = vset.pattern.permute.xlu0 0
  %6810 = vperm.xlu0 %6809, %v6711
  %v6811 = vpop.permute.xlu0 %6810
  %6812 = vset.pattern.permute.xlu0 0
  %6813 = vperm.xlu0 %6812, %v6712
  %v6814 = vpop.permute.xlu0 %6813
  %6815 = vset.pattern.permute.xlu0 0
  %6816 = vperm.xlu0 %6815, %v6713
  %v6817 = vpop.permute.xlu0 %6816
  %6818 = vset.pattern.permute.xlu0 0
  %6819 = vperm.xlu0 %6818, %v6714
  %v6820 = vpop.permute.xlu0 %6819
  %6821 = vset.pattern.permute.xlu0 0
  %6822 = vperm.xlu0 %6821, %v6715
  %v6823 = vpop.permute.xlu0 %6822
  %6824 = vset.pattern.permute.xlu0 0
  %6825 = vperm.xlu0 %6824, %v6716
  %v6826 = vpop.permute.xlu0 %6825
  %6827 = vset.pattern.permute.xlu0 0
  %6828 = vperm.xlu0 %6827, %v6717
  %v6829 = vpop.permute.xlu0 %6828
  %6830 = vset.pattern.permute.xlu0 0
  %6831 = vperm.xlu0 %6830, %v6718
  %v6832 = vpop.permute.xlu0 %6831
  %6833 = vset.pattern.permute.xlu0 0
  %6834 = vperm.xlu0 %6833, %v6719
  %v6835 = vpop.permute.xlu0 %6834
  %6836 = vset.pattern.permute.xlu0 0
  %6837 = vperm.xlu0 %6836, %v6720
  %v6838 = vpop.permute.xlu0 %6837
  %6839 = vset.pattern.permute.xlu0 0
  %6840 = vperm.xlu0 %6839, %v6721
  %v6841 = vpop.permute.xlu0 %6840
  %6842 = vset.pattern.permute.xlu0 0
  %6843 = vperm.xlu0 %6842, %v6722
  %v6844 = vpop.permute.xlu0 %6843
  %6845 = vset.pattern.permute.xlu0 0
  %6846 = vperm.xlu0 %6845, %v6723
  %v6847 = vpop.permute.xlu0 %6846
  %6848 = vset.pattern.permute.xlu0 0
  %6849 = vperm.xlu0 %6848, %v6724
  %v6850 = vpop.permute.xlu0 %6849
  %6851 = vset.pattern.permute.xlu0 0
  %6852 = vperm.xlu0 %6851, %v6725
  %v6853 = vpop.permute.xlu0 %6852
  %6854 = vset.pattern.permute.xlu0 0
  %6855 = vperm.xlu0 %6854, %v6726
  %v6856 = vpop.permute.xlu0 %6855
  %6857 = vset.pattern.permute.xlu0 0
  %6858 = vperm.xlu0 %6857, %v6727
  %v6859 = vpop.permute.xlu0 %6858
  %6860 = vset.pattern.permute.xlu0 0
  %6861 = vperm.xlu0 %6860, %v6728
  %v6862 = vpop.permute.xlu0 %6861
  %6863 = vset.pattern.permute.xlu0 0
  %6864 = vperm.xlu0 %6863, %v6729
  %v6865 = vpop.permute.xlu0 %6864
  %6866 = vset.pattern.permute.xlu0 0
  %6867 = vperm.xlu0 %6866, %v6730
  %v6868 = vpop.permute.xlu0 %6867
  %6869 = vset.pattern.permute.xlu0 0
  %6870 = vperm.xlu0 %6869, %v6731
  %v6871 = vpop.permute.xlu0 %6870
  %6872 = vset.pattern.permute.xlu0 0
  %6873 = vperm.xlu0 %6872, %v6732
  %v6874 = vpop.permute.xlu0 %6873
  %6875 = vset.pattern.permute.xlu0 0
  %6876 = vperm.xlu0 %6875, %v6733
  %v6877 = vpop.permute.xlu0 %6876
  %6878 = vset.pattern.permute.xlu0 0
  %6879 = vperm.xlu0 %6878, %v6734
  %v6880 = vpop.permute.xlu0 %6879
  %6881 = vset.pattern.permute.xlu0 0
  %6882 = vperm.xlu0 %6881, %v6735
  %v6883 = vpop.permute.xlu0 %6882
  %6884 = vset.pattern.permute.xlu0 0
  %6885 = vperm.xlu0 %6884, %v6736
  %v6886 = vpop.permute.xlu0 %6885
  %6887 = vset.pattern.permute.xlu0 0
  %6888 = vperm.xlu0 %6887, %v6737
  %v6889 = vpop.permute.xlu0 %6888
  %6890 = vset.pattern.permute.xlu0 0
  %6891 = vperm.xlu0 %6890, %v6738
  %v6892 = vpop.permute.xlu0 %6891
  %6893 = vset.pattern.permute.xlu0 0
  %6894 = vperm.xlu0 %6893, %v6739
  %v6895 = vpop.permute.xlu0 %6894
  %6896 = vset.pattern.permute.xlu0 0
  %6897 = vperm.xlu0 %6896, %v6740
  %v6898 = vpop.permute.xlu0 %6897
  %6899 = vset.pattern.permute.xlu0 0
  %6900 = vperm.xlu0 %6899, %v6741
  %v6901 = vpop.permute.xlu0 %6900
  %6902 = vset.pattern.permute.xlu0 0
  %6903 = vperm.xlu0 %6902, %v6742
  %v6904 = vpop.permute.xlu0 %6903
  %6905 = vset.pattern.permute.xlu0 0
  %6906 = vperm.xlu0 %6905, %v6743
  %v6907 = vpop.permute.xlu0 %6906
  %6908 = vset.pattern.permute.xlu0 0
  %6909 = vperm.xlu0 %6908, %v6744
  %v6910 = vpop.permute.xlu0 %6909
  %6911 = vset.pattern.permute.xlu0 0
  %6912 = vperm.xlu0 %6911, %v6745
  %v6913 = vpop.permute.xlu0 %6912
  %6914 = vset.pattern.permute.xlu0 0
  %6915 = vperm.xlu0 %6914, %v6746
  %v6916 = vpop.permute.xlu0 %6915
  %6917 = vset.pattern.permute.xlu0 0
  %6918 = vperm.xlu0 %6917, %v6747
  %v6919 = vpop.permute.xlu0 %6918
  %6920 = vset.pattern.permute.xlu0 0
  %6921 = vperm.xlu0 %6920, %v6748
  %v6922 = vpop.permute.xlu0 %6921
  %6923 = vset.pattern.permute.xlu0 0
  %6924 = vperm.xlu0 %6923, %v6749
  %v6925 = vpop.permute.xlu0 %6924
  %6926 = vset.pattern.permute.xlu0 0
  %6927 = vperm.xlu0 %6926, %v6750
  %v6928 = vpop.permute.xlu0 %6927
  %6929 = vset.pattern.permute.xlu0 0
  %6930 = vperm.xlu0 %6929, %v6751
  %v6931 = vpop.permute.xlu0 %6930
  %6932 = vset.pattern.permute.xlu0 0
  %6933 = vperm.xlu0 %6932, %v6752
  %v6934 = vpop.permute.xlu0 %6933
  %6935 = vset.pattern.permute.xlu0 0
  %6936 = vperm.xlu0 %6935, %v6753
  %v6937 = vpop.permute.xlu0 %6936
  %6938 = vset.pattern.permute.xlu0 0
  %6939 = vperm.xlu0 %6938, %v6754
  %v6940 = vpop.permute.xlu0 %6939
  %6941 = vset.pattern.permute.xlu0 0
  %6942 = vperm.xlu0 %6941, %v6755
  %v6943 = vpop.permute.xlu0 %6942
  %6944 = vset.pattern.permute.xlu0 0
  %6945 = vperm.xlu0 %6944, %v6756
  %v6946 = vpop.permute.xlu0 %6945
  %6947 = vset.pattern.permute.xlu0 0
  %6948 = vperm.xlu0 %6947, %v6757
  %v6949 = vpop.permute.xlu0 %6948
  %vm6950 = vcmp.eq.s32.totalorder %v6760, 1
  %vm6951 = vcmp.eq.s32.totalorder %v6763, 1
  %vm6952 = vcmp.eq.s32.totalorder %v6766, 1
  %vm6953 = vcmp.eq.s32.totalorder %v6769, 1
  %vm6954 = vcmp.eq.s32.totalorder %v6772, 1
  %vm6955 = vcmp.eq.s32.totalorder %v6775, 1
  %vm6956 = vcmp.eq.s32.totalorder %v6778, 1
  %vm6957 = vcmp.eq.s32.totalorder %v6781, 1
  %vm6958 = vcmp.eq.s32.totalorder %v6784, 1
  %vm6959 = vcmp.eq.s32.totalorder %v6787, 1
  %vm6960 = vcmp.eq.s32.totalorder %v6790, 1
  %vm6961 = vcmp.eq.s32.totalorder %v6793, 1
  %vm6962 = vcmp.eq.s32.totalorder %v6796, 1
  %vm6963 = vcmp.eq.s32.totalorder %v6799, 1
  %vm6964 = vcmp.eq.s32.totalorder %v6802, 1
  %vm6965 = vcmp.eq.s32.totalorder %v6805, 1
  %vm6966 = vcmp.eq.s32.totalorder %v6808, 1
  %vm6967 = vcmp.eq.s32.totalorder %v6811, 1
  %vm6968 = vcmp.eq.s32.totalorder %v6814, 1
  %vm6969 = vcmp.eq.s32.totalorder %v6817, 1
  %vm6970 = vcmp.eq.s32.totalorder %v6820, 1
  %vm6971 = vcmp.eq.s32.totalorder %v6823, 1
  %vm6972 = vcmp.eq.s32.totalorder %v6826, 1
  %vm6973 = vcmp.eq.s32.totalorder %v6829, 1
  %vm6974 = vcmp.eq.s32.totalorder %v6832, 1
  %vm6975 = vcmp.eq.s32.totalorder %v6835, 1
  %vm6976 = vcmp.eq.s32.totalorder %v6838, 1
  %vm6977 = vcmp.eq.s32.totalorder %v6841, 1
  %vm6978 = vcmp.eq.s32.totalorder %v6844, 1
  %vm6979 = vcmp.eq.s32.totalorder %v6847, 1
  %vm6980 = vcmp.eq.s32.totalorder %v6850, 1
  %vm6981 = vcmp.eq.s32.totalorder %v6853, 1
  %vm6982 = vcmp.eq.s32.totalorder %v6856, 1
  %vm6983 = vcmp.eq.s32.totalorder %v6859, 1
  %vm6984 = vcmp.eq.s32.totalorder %v6862, 1
  %vm6985 = vcmp.eq.s32.totalorder %v6865, 1
  %vm6986 = vcmp.eq.s32.totalorder %v6868, 1
  %vm6987 = vcmp.eq.s32.totalorder %v6871, 1
  %vm6988 = vcmp.eq.s32.totalorder %v6874, 1
  %vm6989 = vcmp.eq.s32.totalorder %v6877, 1
  %vm6990 = vcmp.eq.s32.totalorder %v6880, 1
  %vm6991 = vcmp.eq.s32.totalorder %v6883, 1
  %vm6992 = vcmp.eq.s32.totalorder %v6886, 1
  %vm6993 = vcmp.eq.s32.totalorder %v6889, 1
  %vm6994 = vcmp.eq.s32.totalorder %v6892, 1
  %vm6995 = vcmp.eq.s32.totalorder %v6895, 1
  %vm6996 = vcmp.eq.s32.totalorder %v6898, 1
  %vm6997 = vcmp.eq.s32.totalorder %v6901, 1
  %vm6998 = vcmp.eq.s32.totalorder %v6904, 1
  %vm6999 = vcmp.eq.s32.totalorder %v6907, 1
  %vm7000 = vcmp.eq.s32.totalorder %v6910, 1
  %vm7001 = vcmp.eq.s32.totalorder %v6913, 1
  %vm7002 = vcmp.eq.s32.totalorder %v6916, 1
  %vm7003 = vcmp.eq.s32.totalorder %v6919, 1
  %vm7004 = vcmp.eq.s32.totalorder %v6922, 1
  %vm7005 = vcmp.eq.s32.totalorder %v6925, 1
  %vm7006 = vcmp.eq.s32.totalorder %v6928, 1
  %vm7007 = vcmp.eq.s32.totalorder %v6931, 1
  %vm7008 = vcmp.eq.s32.totalorder %v6934, 1
  %vm7009 = vcmp.eq.s32.totalorder %v6937, 1
  %vm7010 = vcmp.eq.s32.totalorder %v6940, 1
  %vm7011 = vcmp.eq.s32.totalorder %v6943, 1
  %vm7012 = vcmp.eq.s32.totalorder %v6946, 1
  %vm7013 = vcmp.eq.s32.totalorder %v6949, 1
  %v7014 = vsel %vm6950, %v6630, 0.0
  %v7015 = vsel %vm6951, %v6631, 0.0
  %v7016 = vsel %vm6952, %v6632, 0.0
  %v7017 = vsel %vm6953, %v6633, 0.0
  %v7018 = vsel %vm6954, %v6634, 0.0
  %v7019 = vsel %vm6955, %v6635, 0.0
  %v7020 = vsel %vm6956, %v6636, 0.0
  %v7021 = vsel %vm6957, %v6637, 0.0
  %v7022 = vsel %vm6958, %v6638, 0.0
  %v7023 = vsel %vm6959, %v6639, 0.0
  %v7024 = vsel %vm6960, %v6640, 0.0
  %v7025 = vsel %vm6961, %v6641, 0.0
  %v7026 = vsel %vm6962, %v6642, 0.0
  %v7027 = vsel %vm6963, %v6643, 0.0
  %v7028 = vsel %vm6964, %v6644, 0.0
  %v7029 = vsel %vm6965, %v6645, 0.0
  %v7030 = vsel %vm6966, %v6646, 0.0
  %v7031 = vsel %vm6967, %v6647, 0.0
  %v7032 = vsel %vm6968, %v6648, 0.0
  %v7033 = vsel %vm6969, %v6649, 0.0
  %v7034 = vsel %vm6970, %v6650, 0.0
  %v7035 = vsel %vm6971, %v6651, 0.0
  %v7036 = vsel %vm6972, %v6652, 0.0
  %v7037 = vsel %vm6973, %v6653, 0.0
  %v7038 = vsel %vm6974, %v6654, 0.0
  %v7039 = vsel %vm6975, %v6655, 0.0
  %v7040 = vsel %vm6976, %v6656, 0.0
  %v7041 = vsel %vm6977, %v6657, 0.0
  %v7042 = vsel %vm6978, %v6658, 0.0
  %v7043 = vsel %vm6979, %v6659, 0.0
  %v7044 = vsel %vm6980, %v6660, 0.0
  %v7045 = vsel %vm6981, %v6661, 0.0
  %v7046 = vsel %vm6982, %v6662, 0.0
  %v7047 = vsel %vm6983, %v6663, 0.0
  %v7048 = vsel %vm6984, %v6664, 0.0
  %v7049 = vsel %vm6985, %v6665, 0.0
  %v7050 = vsel %vm6986, %v6666, 0.0
  %v7051 = vsel %vm6987, %v6667, 0.0
  %v7052 = vsel %vm6988, %v6668, 0.0
  %v7053 = vsel %vm6989, %v6669, 0.0
  %v7054 = vsel %vm6990, %v6670, 0.0
  %v7055 = vsel %vm6991, %v6671, 0.0
  %v7056 = vsel %vm6992, %v6672, 0.0
  %v7057 = vsel %vm6993, %v6673, 0.0
  %v7058 = vsel %vm6994, %v6674, 0.0
  %v7059 = vsel %vm6995, %v6675, 0.0
  %v7060 = vsel %vm6996, %v6676, 0.0
  %v7061 = vsel %vm6997, %v6677, 0.0
  %v7062 = vsel %vm6998, %v6678, 0.0
  %v7063 = vsel %vm6999, %v6679, 0.0
  %v7064 = vsel %vm7000, %v6680, 0.0
  %v7065 = vsel %vm7001, %v6681, 0.0
  %v7066 = vsel %vm7002, %v6682, 0.0
  %v7067 = vsel %vm7003, %v6683, 0.0
  %v7068 = vsel %vm7004, %v6684, 0.0
  %v7069 = vsel %vm7005, %v6685, 0.0
  %v7070 = vsel %vm7006, %v6686, 0.0
  %v7071 = vsel %vm7007, %v6687, 0.0
  %v7072 = vsel %vm7008, %v6688, 0.0
  %v7073 = vsel %vm7009, %v6689, 0.0
  %v7074 = vsel %vm7010, %v6690, 0.0
  %v7075 = vsel %vm7011, %v6691, 0.0
  %v7076 = vsel %vm7012, %v6692, 0.0
  %v7077 = vsel %vm7013, %v6693, 0.0
  %v7078 = vpack.c.bf16 %v7015, %v7014
  %v7079 = vpack.c.bf16 %v7017, %v7016
  %v7080 = vpack.c.bf16 %v7019, %v7018
  %v7081 = vpack.c.bf16 %v7021, %v7020
  %v7082 = vpack.c.bf16 %v7023, %v7022
  %v7083 = vpack.c.bf16 %v7025, %v7024
  %v7084 = vpack.c.bf16 %v7027, %v7026
  %v7085 = vpack.c.bf16 %v7029, %v7028
  %v7086 = vpack.c.bf16 %v7031, %v7030
  %v7087 = vpack.c.bf16 %v7033, %v7032
  %v7088 = vpack.c.bf16 %v7035, %v7034
  %v7089 = vpack.c.bf16 %v7037, %v7036
  %v7090 = vpack.c.bf16 %v7039, %v7038
  %v7091 = vpack.c.bf16 %v7041, %v7040
  %v7092 = vpack.c.bf16 %v7043, %v7042
  %v7093 = vpack.c.bf16 %v7045, %v7044
  %v7094 = vpack.c.bf16 %v7047, %v7046
  %v7095 = vpack.c.bf16 %v7049, %v7048
  %v7096 = vpack.c.bf16 %v7051, %v7050
  %v7097 = vpack.c.bf16 %v7053, %v7052
  %v7098 = vpack.c.bf16 %v7055, %v7054
  %v7099 = vpack.c.bf16 %v7057, %v7056
  %v7100 = vpack.c.bf16 %v7059, %v7058
  %v7101 = vpack.c.bf16 %v7061, %v7060
  %v7102 = vpack.c.bf16 %v7063, %v7062
  %v7103 = vpack.c.bf16 %v7065, %v7064
  %v7104 = vpack.c.bf16 %v7067, %v7066
  %v7105 = vpack.c.bf16 %v7069, %v7068
  %v7106 = vpack.c.bf16 %v7071, %v7070
  %v7107 = vpack.c.bf16 %v7073, %v7072
  %v7108 = vpack.c.bf16 %v7075, %v7074
  %v7109 = vpack.c.bf16 %v7077, %v7076
  %s7110 = scalar_lea.vmem %s3, 14
  %v7111 = vld [vmem:[%s7110] sm:$0x3]
  %v7113 = vsel %vm1307, %v7078, 0
  %v7116 = vsel %vm1307, %v7079, 0
  %v7119 = vsel %vm1307, %v7080, 0
  %v7122 = vsel %vm1307, %v7081, 0
  %v7125 = vsel %vm1307, %v7082, 0
  %v7128 = vsel %vm1307, %v7083, 0
  %v7131 = vsel %vm1307, %v7084, 0
  %v7134 = vsel %vm1307, %v7085, 0
  %v7137 = vsel %vm1307, %v7086, 0
  %v7140 = vsel %vm1307, %v7087, 0
  %v7143 = vsel %vm1307, %v7088, 0
  %v7146 = vsel %vm1307, %v7089, 0
  %v7149 = vsel %vm1307, %v7090, 0
  %v7152 = vsel %vm1307, %v7091, 0
  %v7155 = vsel %vm1307, %v7092, 0
  %v7158 = vsel %vm1307, %v7093, 0
  %v7161 = vsel %vm1307, %v7094, 0
  %v7164 = vsel %vm1307, %v7095, 0
  %v7167 = vsel %vm1307, %v7096, 0
  %v7170 = vsel %vm1307, %v7097, 0
  %v7173 = vsel %vm1307, %v7098, 0
  %v7176 = vsel %vm1307, %v7099, 0
  %v7179 = vsel %vm1307, %v7100, 0
  %v7182 = vsel %vm1307, %v7101, 0
  %v7185 = vsel %vm1307, %v7102, 0
  %v7188 = vsel %vm1307, %v7103, 0
  %v7191 = vsel %vm1307, %v7104, 0
  %v7194 = vsel %vm1307, %v7105, 0
  %v7197 = vsel %vm1307, %v7106, 0
  %v7200 = vsel %vm1307, %v7107, 0
  %v7203 = vsel %vm1307, %v7108, 0
  %v7206 = vsel %vm1307, %v7109, 0
  %v7209 = vand.u32 %v7111, %v1407
  %7211 = vmatprep.subr.bf16.mxu0 0
  %7212 = vmatpush1.bf16.msra.mxu0 0
  %7213 = vmatprep.subr.bf16.mxu0 0
  %7214 = vmatpush1.bf16.msra.mxu0 0
  %7215 = vmatprep.subr.bf16.mxu0 0
  %7216 = vmatpush1.bf16.msra.mxu0 0
  %7217 = vmatprep.subr.bf16.mxu0 0
  %7218 = vmatpush1.bf16.msra.mxu0 0
  %7219 = vmatprep.subr.bf16.mxu0 0
  %7220 = vmatpush1.bf16.msra.mxu0 0
  %7221 = vmatprep.subr.bf16.mxu0 0
  %7222 = vmatpush1.bf16.msra.mxu0 0
  %7223 = vmatprep.subr.bf16.mxu0 0
  %7224 = vmatpush1.bf16.msra.mxu0 0
  %7225 = vmatprep.subr.bf16.mxu0 0
  %7226 = vmatpush1.bf16.msra.mxu0 %v7209
  %7227 = vmatprep.subr.bf16.mxu0 0
  %7228 = vmatpush2.bf16.msra.mxu0 0
  %7229 = vmatprep.subr.bf16.mxu0 0
  %7230 = vmatpush2.bf16.msra.mxu0 0
  %7231 = vmatprep.subr.bf16.mxu0 0
  %7232 = vmatpush2.bf16.msra.mxu0 0
  %7233 = vmatprep.subr.bf16.mxu0 0
  %7234 = vmatpush2.bf16.msra.mxu0 0
  %7235 = vmatprep.subr.bf16.mxu0 0
  %7236 = vmatpush2.bf16.msra.mxu0 0
  %7237 = vmatprep.subr.bf16.mxu0 0
  %7238 = vmatpush2.bf16.msra.mxu0 0
  %7239 = vmatprep.subr.bf16.mxu0 0
  %7240 = vmatpush2.bf16.msra.mxu0 0
  %7241 = vmatprep.subr.bf16.mxu0 0
  %7242 = vmatpush2.bf16.msra.mxu0 0
  %7243 = vmatprep.mubr.bf16.mxu0 0
  %7244 = vmatmul.mubr.bf16.gmra.mxu0 %v7113
  %v7245 = vpop.f32.mrf.mxu0
  %v7246 = vadd.f32 0.0, %v7245
  %v7247 = vpop.f32.mrf.mxu0
  %v7248 = vpop.f32.mrf.mxu0
  %v7249 = vadd.f32 0.0, %v7248
  %v7250 = vpop.f32.mrf.mxu0
  %7251 = vmatprep.mubr.bf16.mxu0 0
  %7252 = vmatmul.mubr.bf16.gmra.mxu0 %v7116
  %v7253 = vpop.f32.mrf.mxu0
  %v7254 = vadd.f32 0.0, %v7253
  %v7255 = vpop.f32.mrf.mxu0
  %v7256 = vpop.f32.mrf.mxu0
  %v7257 = vadd.f32 0.0, %v7256
  %v7258 = vpop.f32.mrf.mxu0
  %7259 = vmatprep.mubr.bf16.mxu0 0
  %7260 = vmatmul.mubr.bf16.gmra.mxu0 %v7119
  %v7261 = vpop.f32.mrf.mxu0
  %v7262 = vadd.f32 0.0, %v7261
  %v7263 = vpop.f32.mrf.mxu0
  %v7264 = vpop.f32.mrf.mxu0
  %v7265 = vadd.f32 0.0, %v7264
  %v7266 = vpop.f32.mrf.mxu0
  %7267 = vmatprep.mubr.bf16.mxu0 0
  %7268 = vmatmul.mubr.bf16.gmra.mxu0 %v7122
  %v7269 = vpop.f32.mrf.mxu0
  %v7270 = vadd.f32 0.0, %v7269
  %v7271 = vpop.f32.mrf.mxu0
  %v7272 = vpop.f32.mrf.mxu0
  %v7273 = vadd.f32 0.0, %v7272
  %v7274 = vpop.f32.mrf.mxu0
  %7275 = vmatprep.mubr.bf16.mxu0 0
  %7276 = vmatmul.mubr.bf16.gmra.mxu0 %v7125
  %v7277 = vpop.f32.mrf.mxu0
  %v7278 = vadd.f32 0.0, %v7277
  %v7279 = vpop.f32.mrf.mxu0
  %v7280 = vpop.f32.mrf.mxu0
  %v7281 = vadd.f32 0.0, %v7280
  %v7282 = vpop.f32.mrf.mxu0
  %7283 = vmatprep.mubr.bf16.mxu0 0
  %7284 = vmatmul.mubr.bf16.gmra.mxu0 %v7128
  %v7285 = vpop.f32.mrf.mxu0
  %v7286 = vadd.f32 0.0, %v7285
  %v7287 = vpop.f32.mrf.mxu0
  %v7288 = vpop.f32.mrf.mxu0
  %v7289 = vadd.f32 0.0, %v7288
  %v7290 = vpop.f32.mrf.mxu0
  %7291 = vmatprep.mubr.bf16.mxu0 0
  %7292 = vmatmul.mubr.bf16.gmra.mxu0 %v7131
  %v7293 = vpop.f32.mrf.mxu0
  %v7294 = vadd.f32 0.0, %v7293
  %v7295 = vpop.f32.mrf.mxu0
  %v7296 = vpop.f32.mrf.mxu0
  %v7297 = vadd.f32 0.0, %v7296
  %v7298 = vpop.f32.mrf.mxu0
  %7299 = vmatprep.mubr.bf16.mxu0 0
  %7300 = vmatmul.mubr.bf16.gmra.mxu0 %v7134
  %v7301 = vpop.f32.mrf.mxu0
  %v7302 = vadd.f32 0.0, %v7301
  %v7303 = vpop.f32.mrf.mxu0
  %v7304 = vpop.f32.mrf.mxu0
  %v7305 = vadd.f32 0.0, %v7304
  %v7306 = vpop.f32.mrf.mxu0
  %7307 = vmatprep.mubr.bf16.mxu0 0
  %7308 = vmatmul.mubr.bf16.gmra.mxu0 %v7137
  %v7309 = vpop.f32.mrf.mxu0
  %v7310 = vadd.f32 0.0, %v7309
  %v7311 = vpop.f32.mrf.mxu0
  %v7312 = vpop.f32.mrf.mxu0
  %v7313 = vadd.f32 0.0, %v7312
  %v7314 = vpop.f32.mrf.mxu0
  %7315 = vmatprep.mubr.bf16.mxu0 0
  %7316 = vmatmul.mubr.bf16.gmra.mxu0 %v7140
  %v7317 = vpop.f32.mrf.mxu0
  %v7318 = vadd.f32 0.0, %v7317
  %v7319 = vpop.f32.mrf.mxu0
  %v7320 = vpop.f32.mrf.mxu0
  %v7321 = vadd.f32 0.0, %v7320
  %v7322 = vpop.f32.mrf.mxu0
  %7323 = vmatprep.mubr.bf16.mxu0 0
  %7324 = vmatmul.mubr.bf16.gmra.mxu0 %v7143
  %v7325 = vpop.f32.mrf.mxu0
  %v7326 = vadd.f32 0.0, %v7325
  %v7327 = vpop.f32.mrf.mxu0
  %v7328 = vpop.f32.mrf.mxu0
  %v7329 = vadd.f32 0.0, %v7328
  %v7330 = vpop.f32.mrf.mxu0
  %7331 = vmatprep.mubr.bf16.mxu0 0
  %7332 = vmatmul.mubr.bf16.gmra.mxu0 %v7146
  %v7333 = vpop.f32.mrf.mxu0
  %v7334 = vadd.f32 0.0, %v7333
  %v7335 = vpop.f32.mrf.mxu0
  %v7336 = vpop.f32.mrf.mxu0
  %v7337 = vadd.f32 0.0, %v7336
  %v7338 = vpop.f32.mrf.mxu0
  %7339 = vmatprep.mubr.bf16.mxu0 0
  %7340 = vmatmul.mubr.bf16.gmra.mxu0 %v7149
  %v7341 = vpop.f32.mrf.mxu0
  %v7342 = vadd.f32 0.0, %v7341
  %v7343 = vpop.f32.mrf.mxu0
  %v7344 = vpop.f32.mrf.mxu0
  %v7345 = vadd.f32 0.0, %v7344
  %v7346 = vpop.f32.mrf.mxu0
  %7347 = vmatprep.mubr.bf16.mxu0 0
  %7348 = vmatmul.mubr.bf16.gmra.mxu0 %v7152
  %v7349 = vpop.f32.mrf.mxu0
  %v7350 = vadd.f32 0.0, %v7349
  %v7351 = vpop.f32.mrf.mxu0
  %v7352 = vpop.f32.mrf.mxu0
  %v7353 = vadd.f32 0.0, %v7352
  %v7354 = vpop.f32.mrf.mxu0
  %7355 = vmatprep.mubr.bf16.mxu0 0
  %7356 = vmatmul.mubr.bf16.gmra.mxu0 %v7155
  %v7357 = vpop.f32.mrf.mxu0
  %v7358 = vadd.f32 0.0, %v7357
  %v7359 = vpop.f32.mrf.mxu0
  %v7360 = vpop.f32.mrf.mxu0
  %v7361 = vadd.f32 0.0, %v7360
  %v7362 = vpop.f32.mrf.mxu0
  %7363 = vmatprep.mubr.bf16.mxu0 0
  %7364 = vmatmul.mubr.bf16.gmra.mxu0 %v7158
  %v7365 = vpop.f32.mrf.mxu0
  %v7366 = vadd.f32 0.0, %v7365
  %v7367 = vpop.f32.mrf.mxu0
  %v7368 = vpop.f32.mrf.mxu0
  %v7369 = vadd.f32 0.0, %v7368
  %v7370 = vpop.f32.mrf.mxu0
  %7371 = vmatprep.mubr.bf16.mxu0 0
  %7372 = vmatmul.mubr.bf16.gmra.mxu0 %v7161
  %v7373 = vpop.f32.mrf.mxu0
  %v7374 = vadd.f32 0.0, %v7373
  %v7375 = vpop.f32.mrf.mxu0
  %v7376 = vpop.f32.mrf.mxu0
  %v7377 = vadd.f32 0.0, %v7376
  %v7378 = vpop.f32.mrf.mxu0
  %7379 = vmatprep.mubr.bf16.mxu0 0
  %7380 = vmatmul.mubr.bf16.gmra.mxu0 %v7164
  %v7381 = vpop.f32.mrf.mxu0
  %v7382 = vadd.f32 0.0, %v7381
  %v7383 = vpop.f32.mrf.mxu0
  %v7384 = vpop.f32.mrf.mxu0
  %v7385 = vadd.f32 0.0, %v7384
  %v7386 = vpop.f32.mrf.mxu0
  %7387 = vmatprep.mubr.bf16.mxu0 0
  %7388 = vmatmul.mubr.bf16.gmra.mxu0 %v7167
  %v7389 = vpop.f32.mrf.mxu0
  %v7390 = vadd.f32 0.0, %v7389
  %v7391 = vpop.f32.mrf.mxu0
  %v7392 = vpop.f32.mrf.mxu0
  %v7393 = vadd.f32 0.0, %v7392
  %v7394 = vpop.f32.mrf.mxu0
  %7395 = vmatprep.mubr.bf16.mxu0 0
  %7396 = vmatmul.mubr.bf16.gmra.mxu0 %v7170
  %v7397 = vpop.f32.mrf.mxu0
  %v7398 = vadd.f32 0.0, %v7397
  %v7399 = vpop.f32.mrf.mxu0
  %v7400 = vpop.f32.mrf.mxu0
  %v7401 = vadd.f32 0.0, %v7400
  %v7402 = vpop.f32.mrf.mxu0
  %7403 = vmatprep.mubr.bf16.mxu0 0
  %7404 = vmatmul.mubr.bf16.gmra.mxu0 %v7173
  %v7405 = vpop.f32.mrf.mxu0
  %v7406 = vadd.f32 0.0, %v7405
  %v7407 = vpop.f32.mrf.mxu0
  %v7408 = vpop.f32.mrf.mxu0
  %v7409 = vadd.f32 0.0, %v7408
  %v7410 = vpop.f32.mrf.mxu0
  %7411 = vmatprep.mubr.bf16.mxu0 0
  %7412 = vmatmul.mubr.bf16.gmra.mxu0 %v7176
  %v7413 = vpop.f32.mrf.mxu0
  %v7414 = vadd.f32 0.0, %v7413
  %v7415 = vpop.f32.mrf.mxu0
  %v7416 = vpop.f32.mrf.mxu0
  %v7417 = vadd.f32 0.0, %v7416
  %v7418 = vpop.f32.mrf.mxu0
  %7419 = vmatprep.mubr.bf16.mxu0 0
  %7420 = vmatmul.mubr.bf16.gmra.mxu0 %v7179
  %v7421 = vpop.f32.mrf.mxu0
  %v7422 = vadd.f32 0.0, %v7421
  %v7423 = vpop.f32.mrf.mxu0
  %v7424 = vpop.f32.mrf.mxu0
  %v7425 = vadd.f32 0.0, %v7424
  %v7426 = vpop.f32.mrf.mxu0
  %7427 = vmatprep.mubr.bf16.mxu0 0
  %7428 = vmatmul.mubr.bf16.gmra.mxu0 %v7182
  %v7429 = vpop.f32.mrf.mxu0
  %v7430 = vadd.f32 0.0, %v7429
  %v7431 = vpop.f32.mrf.mxu0
  %v7432 = vpop.f32.mrf.mxu0
  %v7433 = vadd.f32 0.0, %v7432
  %v7434 = vpop.f32.mrf.mxu0
  %7435 = vmatprep.mubr.bf16.mxu0 0
  %7436 = vmatmul.mubr.bf16.gmra.mxu0 %v7185
  %v7437 = vpop.f32.mrf.mxu0
  %v7438 = vadd.f32 0.0, %v7437
  %v7439 = vpop.f32.mrf.mxu0
  %v7440 = vpop.f32.mrf.mxu0
  %v7441 = vadd.f32 0.0, %v7440
  %v7442 = vpop.f32.mrf.mxu0
  %7443 = vmatprep.mubr.bf16.mxu0 0
  %7444 = vmatmul.mubr.bf16.gmra.mxu0 %v7188
  %v7445 = vpop.f32.mrf.mxu0
  %v7446 = vadd.f32 0.0, %v7445
  %v7447 = vpop.f32.mrf.mxu0
  %v7448 = vpop.f32.mrf.mxu0
  %v7449 = vadd.f32 0.0, %v7448
  %v7450 = vpop.f32.mrf.mxu0
  %7451 = vmatprep.mubr.bf16.mxu0 0
  %7452 = vmatmul.mubr.bf16.gmra.mxu0 %v7191
  %v7453 = vpop.f32.mrf.mxu0
  %v7454 = vadd.f32 0.0, %v7453
  %v7455 = vpop.f32.mrf.mxu0
  %v7456 = vpop.f32.mrf.mxu0
  %v7457 = vadd.f32 0.0, %v7456
  %v7458 = vpop.f32.mrf.mxu0
  %7459 = vmatprep.mubr.bf16.mxu0 0
  %7460 = vmatmul.mubr.bf16.gmra.mxu0 %v7194
  %v7461 = vpop.f32.mrf.mxu0
  %v7462 = vadd.f32 0.0, %v7461
  %v7463 = vpop.f32.mrf.mxu0
  %v7464 = vpop.f32.mrf.mxu0
  %v7465 = vadd.f32 0.0, %v7464
  %v7466 = vpop.f32.mrf.mxu0
  %7467 = vmatprep.mubr.bf16.mxu0 0
  %7468 = vmatmul.mubr.bf16.gmra.mxu0 %v7197
  %v7469 = vpop.f32.mrf.mxu0
  %v7470 = vadd.f32 0.0, %v7469
  %v7471 = vpop.f32.mrf.mxu0
  %v7472 = vpop.f32.mrf.mxu0
  %v7473 = vadd.f32 0.0, %v7472
  %v7474 = vpop.f32.mrf.mxu0
  %7475 = vmatprep.mubr.bf16.mxu0 0
  %7476 = vmatmul.mubr.bf16.gmra.mxu0 %v7200
  %v7477 = vpop.f32.mrf.mxu0
  %v7478 = vadd.f32 0.0, %v7477
  %v7479 = vpop.f32.mrf.mxu0
  %v7480 = vpop.f32.mrf.mxu0
  %v7481 = vadd.f32 0.0, %v7480
  %v7482 = vpop.f32.mrf.mxu0
  %7483 = vmatprep.mubr.bf16.mxu0 0
  %7484 = vmatmul.mubr.bf16.gmra.mxu0 %v7203
  %v7485 = vpop.f32.mrf.mxu0
  %v7486 = vadd.f32 0.0, %v7485
  %v7487 = vpop.f32.mrf.mxu0
  %v7488 = vpop.f32.mrf.mxu0
  %v7489 = vadd.f32 0.0, %v7488
  %v7490 = vpop.f32.mrf.mxu0
  %7491 = vmatprep.mubr.bf16.mxu0 0
  %7492 = vmatmul.mubr.bf16.gmra.mxu0 %v7206
  %v7493 = vpop.f32.mrf.mxu0
  %v7494 = vadd.f32 0.0, %v7493
  %v7495 = vpop.f32.mrf.mxu0
  %v7496 = vpop.f32.mrf.mxu0
  %v7497 = vadd.f32 0.0, %v7496
  %v7498 = vpop.f32.mrf.mxu0
  %7499 = vdwg.mxu0
  %v7500 = vadd.f32 %v6566, %v7246
  %v7501 = vadd.f32 %v6567, %v7249
  %v7502 = vadd.f32 %v6568, %v7254
  %v7503 = vadd.f32 %v6569, %v7257
  %v7504 = vadd.f32 %v6570, %v7262
  %v7505 = vadd.f32 %v6571, %v7265
  %v7506 = vadd.f32 %v6572, %v7270
  %v7507 = vadd.f32 %v6573, %v7273
  %v7508 = vadd.f32 %v6574, %v7278
  %v7509 = vadd.f32 %v6575, %v7281
  %v7510 = vadd.f32 %v6576, %v7286
  %v7511 = vadd.f32 %v6577, %v7289
  %v7512 = vadd.f32 %v6578, %v7294
  %v7513 = vadd.f32 %v6579, %v7297
  %v7514 = vadd.f32 %v6580, %v7302
  %v7515 = vadd.f32 %v6581, %v7305
  %v7516 = vadd.f32 %v6582, %v7310
  %v7517 = vadd.f32 %v6583, %v7313
  %v7518 = vadd.f32 %v6584, %v7318
  %v7519 = vadd.f32 %v6585, %v7321
  %v7520 = vadd.f32 %v6586, %v7326
  %v7521 = vadd.f32 %v6587, %v7329
  %v7522 = vadd.f32 %v6588, %v7334
  %v7523 = vadd.f32 %v6589, %v7337
  %v7524 = vadd.f32 %v6590, %v7342
  %v7525 = vadd.f32 %v6591, %v7345
  %v7526 = vadd.f32 %v6592, %v7350
  %v7527 = vadd.f32 %v6593, %v7353
  %v7528 = vadd.f32 %v6594, %v7358
  %v7529 = vadd.f32 %v6595, %v7361
  %v7530 = vadd.f32 %v6596, %v7366
  %v7531 = vadd.f32 %v6597, %v7369
  %v7532 = vadd.f32 %v6598, %v7374
  %v7533 = vadd.f32 %v6599, %v7377
  %v7534 = vadd.f32 %v6600, %v7382
  %v7535 = vadd.f32 %v6601, %v7385
  %v7536 = vadd.f32 %v6602, %v7390
  %v7537 = vadd.f32 %v6603, %v7393
  %v7538 = vadd.f32 %v6604, %v7398
  %v7539 = vadd.f32 %v6605, %v7401
  %v7540 = vadd.f32 %v6606, %v7406
  %v7541 = vadd.f32 %v6607, %v7409
  %v7542 = vadd.f32 %v6608, %v7414
  %v7543 = vadd.f32 %v6609, %v7417
  %v7544 = vadd.f32 %v6610, %v7422
  %v7545 = vadd.f32 %v6611, %v7425
  %v7546 = vadd.f32 %v6612, %v7430
  %v7547 = vadd.f32 %v6613, %v7433
  %v7548 = vadd.f32 %v6614, %v7438
  %v7549 = vadd.f32 %v6615, %v7441
  %v7550 = vadd.f32 %v6616, %v7446
  %v7551 = vadd.f32 %v6617, %v7449
  %v7552 = vadd.f32 %v6618, %v7454
  %v7553 = vadd.f32 %v6619, %v7457
  %v7554 = vadd.f32 %v6620, %v7462
  %v7555 = vadd.f32 %v6621, %v7465
  %v7556 = vadd.f32 %v6622, %v7470
  %v7557 = vadd.f32 %v6623, %v7473
  %v7558 = vadd.f32 %v6624, %v7478
  %v7559 = vadd.f32 %v6625, %v7481
  %v7560 = vadd.f32 %v6626, %v7486
  %v7561 = vadd.f32 %v6627, %v7489
  %v7562 = vadd.f32 %v6628, %v7494
  %v7563 = vadd.f32 %v6629, %v7497
  %v7564 = vld [vmem:[%s0 + $0x22] sm:$0xff]
  %v7565 = vld [vmem:[%s0 + $0x2a] sm:$0xff]
  %v7566 = vld [vmem:[%s0 + $0x32] sm:$0xff]
  %v7567 = vld [vmem:[%s0 + $0x3a] sm:$0xff]
  %v7568 = vld [vmem:[%s0 + $0x42] sm:$0xff]
  %v7569 = vld [vmem:[%s0 + $0x4a] sm:$0xff]
  %v7570 = vld [vmem:[%s0 + $0x52] sm:$0xff]
  %v7571 = vld [vmem:[%s0 + $0x5a] sm:$0xff]
  %v7572 = vld [vmem:[%s0 + $0x62] sm:$0xff]
  %v7573 = vld [vmem:[%s0 + $0x6a] sm:$0xff]
  %v7574 = vld [vmem:[%s0 + $0x72] sm:$0xff]
  %v7575 = vld [vmem:[%s0 + $0x7a] sm:$0xff]
  %v7576 = vld [vmem:[%s0 + $0x82] sm:$0xff]
  %v7577 = vld [vmem:[%s0 + $0x8a] sm:$0xff]
  %v7578 = vld [vmem:[%s0 + $0x92] sm:$0xff]
  %v7579 = vld [vmem:[%s0 + $0x9a] sm:$0xff]
  %v7580 = vld [vmem:[%s0 + $0xa2] sm:$0xff]
  %v7581 = vld [vmem:[%s0 + $0xaa] sm:$0xff]
  %v7582 = vld [vmem:[%s0 + $0xb2] sm:$0xff]
  %v7583 = vld [vmem:[%s0 + $0xba] sm:$0xff]
  %v7584 = vld [vmem:[%s0 + $0xc2] sm:$0xff]
  %v7585 = vld [vmem:[%s0 + $0xca] sm:$0xff]
  %v7586 = vld [vmem:[%s0 + $0xd2] sm:$0xff]
  %v7587 = vld [vmem:[%s0 + $0xda] sm:$0xff]
  %v7588 = vld [vmem:[%s0 + $0xe2] sm:$0xff]
  %v7589 = vld [vmem:[%s0 + $0xea] sm:$0xff]
  %v7590 = vld [vmem:[%s0 + $0xf2] sm:$0xff]
  %v7591 = vld [vmem:[%s0 + $0xfa] sm:$0xff]
  %v7592 = vld [vmem:[%s0 + $0x102] sm:$0xff]
  %v7593 = vld [vmem:[%s0 + $0x10a] sm:$0xff]
  %v7594 = vld [vmem:[%s0 + $0x112] sm:$0xff]
  %v7595 = vld [vmem:[%s0 + $0x11a] sm:$0xff]
  %v7596 = vld [vmem:[%s0 + $0x122] sm:$0xff]
  %v7597 = vld [vmem:[%s0 + $0x12a] sm:$0xff]
  %v7598 = vld [vmem:[%s0 + $0x132] sm:$0xff]
  %v7599 = vld [vmem:[%s0 + $0x13a] sm:$0xff]
  %v7600 = vld [vmem:[%s0 + $0x142] sm:$0xff]
  %v7601 = vld [vmem:[%s0 + $0x14a] sm:$0xff]
  %v7602 = vld [vmem:[%s0 + $0x152] sm:$0xff]
  %v7603 = vld [vmem:[%s0 + $0x15a] sm:$0xff]
  %v7604 = vld [vmem:[%s0 + $0x162] sm:$0xff]
  %v7605 = vld [vmem:[%s0 + $0x16a] sm:$0xff]
  %v7606 = vld [vmem:[%s0 + $0x172] sm:$0xff]
  %v7607 = vld [vmem:[%s0 + $0x17a] sm:$0xff]
  %v7608 = vld [vmem:[%s0 + $0x182] sm:$0xff]
  %v7609 = vld [vmem:[%s0 + $0x18a] sm:$0xff]
  %v7610 = vld [vmem:[%s0 + $0x192] sm:$0xff]
  %v7611 = vld [vmem:[%s0 + $0x19a] sm:$0xff]
  %v7612 = vld [vmem:[%s0 + $0x1a2] sm:$0xff]
  %v7613 = vld [vmem:[%s0 + $0x1aa] sm:$0xff]
  %v7614 = vld [vmem:[%s0 + $0x1b2] sm:$0xff]
  %v7615 = vld [vmem:[%s0 + $0x1ba] sm:$0xff]
  %v7616 = vld [vmem:[%s0 + $0x1c2] sm:$0xff]
  %v7617 = vld [vmem:[%s0 + $0x1ca] sm:$0xff]
  %v7618 = vld [vmem:[%s0 + $0x1d2] sm:$0xff]
  %v7619 = vld [vmem:[%s0 + $0x1da] sm:$0xff]
  %v7620 = vld [vmem:[%s0 + $0x1e2] sm:$0xff]
  %v7621 = vld [vmem:[%s0 + $0x1ea] sm:$0xff]
  %v7622 = vld [vmem:[%s0 + $0x1f2] sm:$0xff]
  %v7623 = vld [vmem:[%s0 + $0x1fa] sm:$0xff]
  %v7624 = vld [vmem:[%s0 + $0x202] sm:$0xff]
  %v7625 = vld [vmem:[%s0 + $0x20a] sm:$0xff]
  %v7626 = vld [vmem:[%s0 + $0x212] sm:$0xff]
  %v7627 = vld [vmem:[%s0 + $0x21a] sm:$0xff]
  %vm7628 = vmand %vm5632, %vm2152
  %vm7629 = vmand %vm5633, %vm2153
  %vm7630 = vmand %vm5634, %vm2154
  %vm7631 = vmand %vm5635, %vm2155
  %vm7632 = vmand %vm5636, %vm2156
  %vm7633 = vmand %vm5637, %vm2157
  %vm7634 = vmand %vm5638, %vm2158
  %vm7635 = vmand %vm5639, %vm2159
  %vm7636 = vmand %vm5640, %vm2160
  %vm7637 = vmand %vm5641, %vm2161
  %vm7638 = vmand %vm5642, %vm2162
  %vm7639 = vmand %vm5643, %vm2163
  %vm7640 = vmand %vm5644, %vm2164
  %vm7641 = vmand %vm5645, %vm2165
  %vm7642 = vmand %vm5646, %vm2166
  %vm7643 = vmand %vm5647, %vm2167
  %vm7644 = vmand %vm5648, %vm2168
  %vm7645 = vmand %vm5649, %vm2169
  %vm7646 = vmand %vm5650, %vm2170
  %vm7647 = vmand %vm5651, %vm2171
  %vm7648 = vmand %vm5652, %vm2172
  %vm7649 = vmand %vm5653, %vm2173
  %vm7650 = vmand %vm5654, %vm2174
  %vm7651 = vmand %vm5655, %vm2175
  %vm7652 = vmand %vm5656, %vm2176
  %vm7653 = vmand %vm5657, %vm2177
  %vm7654 = vmand %vm5658, %vm2178
  %vm7655 = vmand %vm5659, %vm2179
  %vm7656 = vmand %vm5660, %vm2180
  %vm7657 = vmand %vm5661, %vm2181
  %vm7658 = vmand %vm5662, %vm2182
  %vm7659 = vmand %vm5663, %vm2183
  %vm7660 = vmand %vm5664, %vm2184
  %vm7661 = vmand %vm5665, %vm2185
  %vm7662 = vmand %vm5666, %vm2186
  %vm7663 = vmand %vm5667, %vm2187
  %vm7664 = vmand %vm5668, %vm2188
  %vm7665 = vmand %vm5669, %vm2189
  %vm7666 = vmand %vm5670, %vm2190
  %vm7667 = vmand %vm5671, %vm2191
  %vm7668 = vmand %vm5672, %vm2192
  %vm7669 = vmand %vm5673, %vm2193
  %vm7670 = vmand %vm5674, %vm2194
  %vm7671 = vmand %vm5675, %vm2195
  %vm7672 = vmand %vm5676, %vm2196
  %vm7673 = vmand %vm5677, %vm2197
  %vm7674 = vmand %vm5678, %vm2198
  %vm7675 = vmand %vm5679, %vm2199
  %vm7676 = vmand %vm5680, %vm2200
  %vm7677 = vmand %vm5681, %vm2201
  %vm7678 = vmand %vm5682, %vm2202
  %vm7679 = vmand %vm5683, %vm2203
  %vm7680 = vmand %vm5684, %vm2204
  %vm7681 = vmand %vm5685, %vm2205
  %vm7682 = vmand %vm5686, %vm2206
  %vm7683 = vmand %vm5687, %vm2207
  %vm7684 = vmand %vm5688, %vm2208
  %vm7685 = vmand %vm5689, %vm2209
  %vm7686 = vmand %vm5690, %vm2210
  %vm7687 = vmand %vm5691, %vm2211
  %vm7688 = vmand %vm5692, %vm2212
  %vm7689 = vmand %vm5693, %vm2213
  %vm7690 = vmand %vm5694, %vm2214
  %vm7691 = vmand %vm5695, %vm2215
  %v7692 = vsel %vm7628, 1, 0
  %v7693 = vsel %vm7629, 1, 0
  %v7694 = vsel %vm7630, 1, 0
  %v7695 = vsel %vm7631, 1, 0
  %v7696 = vsel %vm7632, 1, 0
  %v7697 = vsel %vm7633, 1, 0
  %v7698 = vsel %vm7634, 1, 0
  %v7699 = vsel %vm7635, 1, 0
  %v7700 = vsel %vm7636, 1, 0
  %v7701 = vsel %vm7637, 1, 0
  %v7702 = vsel %vm7638, 1, 0
  %v7703 = vsel %vm7639, 1, 0
  %v7704 = vsel %vm7640, 1, 0
  %v7705 = vsel %vm7641, 1, 0
  %v7706 = vsel %vm7642, 1, 0
  %v7707 = vsel %vm7643, 1, 0
  %v7708 = vsel %vm7644, 1, 0
  %v7709 = vsel %vm7645, 1, 0
  %v7710 = vsel %vm7646, 1, 0
  %v7711 = vsel %vm7647, 1, 0
  %v7712 = vsel %vm7648, 1, 0
  %v7713 = vsel %vm7649, 1, 0
  %v7714 = vsel %vm7650, 1, 0
  %v7715 = vsel %vm7651, 1, 0
  %v7716 = vsel %vm7652, 1, 0
  %v7717 = vsel %vm7653, 1, 0
  %v7718 = vsel %vm7654, 1, 0
  %v7719 = vsel %vm7655, 1, 0
  %v7720 = vsel %vm7656, 1, 0
  %v7721 = vsel %vm7657, 1, 0
  %v7722 = vsel %vm7658, 1, 0
  %v7723 = vsel %vm7659, 1, 0
  %v7724 = vsel %vm7660, 1, 0
  %v7725 = vsel %vm7661, 1, 0
  %v7726 = vsel %vm7662, 1, 0
  %v7727 = vsel %vm7663, 1, 0
  %v7728 = vsel %vm7664, 1, 0
  %v7729 = vsel %vm7665, 1, 0
  %v7730 = vsel %vm7666, 1, 0
  %v7731 = vsel %vm7667, 1, 0
  %v7732 = vsel %vm7668, 1, 0
  %v7733 = vsel %vm7669, 1, 0
  %v7734 = vsel %vm7670, 1, 0
  %v7735 = vsel %vm7671, 1, 0
  %v7736 = vsel %vm7672, 1, 0
  %v7737 = vsel %vm7673, 1, 0
  %v7738 = vsel %vm7674, 1, 0
  %v7739 = vsel %vm7675, 1, 0
  %v7740 = vsel %vm7676, 1, 0
  %v7741 = vsel %vm7677, 1, 0
  %v7742 = vsel %vm7678, 1, 0
  %v7743 = vsel %vm7679, 1, 0
  %v7744 = vsel %vm7680, 1, 0
  %v7745 = vsel %vm7681, 1, 0
  %v7746 = vsel %vm7682, 1, 0
  %v7747 = vsel %vm7683, 1, 0
  %v7748 = vsel %vm7684, 1, 0
  %v7749 = vsel %vm7685, 1, 0
  %v7750 = vsel %vm7686, 1, 0
  %v7751 = vsel %vm7687, 1, 0
  %v7752 = vsel %vm7688, 1, 0
  %v7753 = vsel %vm7689, 1, 0
  %v7754 = vsel %vm7690, 1, 0
  %v7755 = vsel %vm7691, 1, 0
  %7756 = vset.pattern.permute.xlu0 0
  %7757 = vperm.xlu0 %7756, %v7692
  %v7758 = vpop.permute.xlu0 %7757
  %7759 = vset.pattern.permute.xlu0 0
  %7760 = vperm.xlu0 %7759, %v7693
  %v7761 = vpop.permute.xlu0 %7760
  %7762 = vset.pattern.permute.xlu0 0
  %7763 = vperm.xlu0 %7762, %v7694
  %v7764 = vpop.permute.xlu0 %7763
  %7765 = vset.pattern.permute.xlu0 0
  %7766 = vperm.xlu0 %7765, %v7695
  %v7767 = vpop.permute.xlu0 %7766
  %7768 = vset.pattern.permute.xlu0 0
  %7769 = vperm.xlu0 %7768, %v7696
  %v7770 = vpop.permute.xlu0 %7769
  %7771 = vset.pattern.permute.xlu0 0
  %7772 = vperm.xlu0 %7771, %v7697
  %v7773 = vpop.permute.xlu0 %7772
  %7774 = vset.pattern.permute.xlu0 0
  %7775 = vperm.xlu0 %7774, %v7698
  %v7776 = vpop.permute.xlu0 %7775
  %7777 = vset.pattern.permute.xlu0 0
  %7778 = vperm.xlu0 %7777, %v7699
  %v7779 = vpop.permute.xlu0 %7778
  %7780 = vset.pattern.permute.xlu0 0
  %7781 = vperm.xlu0 %7780, %v7700
  %v7782 = vpop.permute.xlu0 %7781
  %7783 = vset.pattern.permute.xlu0 0
  %7784 = vperm.xlu0 %7783, %v7701
  %v7785 = vpop.permute.xlu0 %7784
  %7786 = vset.pattern.permute.xlu0 0
  %7787 = vperm.xlu0 %7786, %v7702
  %v7788 = vpop.permute.xlu0 %7787
  %7789 = vset.pattern.permute.xlu0 0
  %7790 = vperm.xlu0 %7789, %v7703
  %v7791 = vpop.permute.xlu0 %7790
  %7792 = vset.pattern.permute.xlu0 0
  %7793 = vperm.xlu0 %7792, %v7704
  %v7794 = vpop.permute.xlu0 %7793
  %7795 = vset.pattern.permute.xlu0 0
  %7796 = vperm.xlu0 %7795, %v7705
  %v7797 = vpop.permute.xlu0 %7796
  %7798 = vset.pattern.permute.xlu0 0
  %7799 = vperm.xlu0 %7798, %v7706
  %v7800 = vpop.permute.xlu0 %7799
  %7801 = vset.pattern.permute.xlu0 0
  %7802 = vperm.xlu0 %7801, %v7707
  %v7803 = vpop.permute.xlu0 %7802
  %7804 = vset.pattern.permute.xlu0 0
  %7805 = vperm.xlu0 %7804, %v7708
  %v7806 = vpop.permute.xlu0 %7805
  %7807 = vset.pattern.permute.xlu0 0
  %7808 = vperm.xlu0 %7807, %v7709
  %v7809 = vpop.permute.xlu0 %7808
  %7810 = vset.pattern.permute.xlu0 0
  %7811 = vperm.xlu0 %7810, %v7710
  %v7812 = vpop.permute.xlu0 %7811
  %7813 = vset.pattern.permute.xlu0 0
  %7814 = vperm.xlu0 %7813, %v7711
  %v7815 = vpop.permute.xlu0 %7814
  %7816 = vset.pattern.permute.xlu0 0
  %7817 = vperm.xlu0 %7816, %v7712
  %v7818 = vpop.permute.xlu0 %7817
  %7819 = vset.pattern.permute.xlu0 0
  %7820 = vperm.xlu0 %7819, %v7713
  %v7821 = vpop.permute.xlu0 %7820
  %7822 = vset.pattern.permute.xlu0 0
  %7823 = vperm.xlu0 %7822, %v7714
  %v7824 = vpop.permute.xlu0 %7823
  %7825 = vset.pattern.permute.xlu0 0
  %7826 = vperm.xlu0 %7825, %v7715
  %v7827 = vpop.permute.xlu0 %7826
  %7828 = vset.pattern.permute.xlu0 0
  %7829 = vperm.xlu0 %7828, %v7716
  %v7830 = vpop.permute.xlu0 %7829
  %7831 = vset.pattern.permute.xlu0 0
  %7832 = vperm.xlu0 %7831, %v7717
  %v7833 = vpop.permute.xlu0 %7832
  %7834 = vset.pattern.permute.xlu0 0
  %7835 = vperm.xlu0 %7834, %v7718
  %v7836 = vpop.permute.xlu0 %7835
  %7837 = vset.pattern.permute.xlu0 0
  %7838 = vperm.xlu0 %7837, %v7719
  %v7839 = vpop.permute.xlu0 %7838
  %7840 = vset.pattern.permute.xlu0 0
  %7841 = vperm.xlu0 %7840, %v7720
  %v7842 = vpop.permute.xlu0 %7841
  %7843 = vset.pattern.permute.xlu0 0
  %7844 = vperm.xlu0 %7843, %v7721
  %v7845 = vpop.permute.xlu0 %7844
  %7846 = vset.pattern.permute.xlu0 0
  %7847 = vperm.xlu0 %7846, %v7722
  %v7848 = vpop.permute.xlu0 %7847
  %7849 = vset.pattern.permute.xlu0 0
  %7850 = vperm.xlu0 %7849, %v7723
  %v7851 = vpop.permute.xlu0 %7850
  %7852 = vset.pattern.permute.xlu0 0
  %7853 = vperm.xlu0 %7852, %v7724
  %v7854 = vpop.permute.xlu0 %7853
  %7855 = vset.pattern.permute.xlu0 0
  %7856 = vperm.xlu0 %7855, %v7725
  %v7857 = vpop.permute.xlu0 %7856
  %7858 = vset.pattern.permute.xlu0 0
  %7859 = vperm.xlu0 %7858, %v7726
  %v7860 = vpop.permute.xlu0 %7859
  %7861 = vset.pattern.permute.xlu0 0
  %7862 = vperm.xlu0 %7861, %v7727
  %v7863 = vpop.permute.xlu0 %7862
  %7864 = vset.pattern.permute.xlu0 0
  %7865 = vperm.xlu0 %7864, %v7728
  %v7866 = vpop.permute.xlu0 %7865
  %7867 = vset.pattern.permute.xlu0 0
  %7868 = vperm.xlu0 %7867, %v7729
  %v7869 = vpop.permute.xlu0 %7868
  %7870 = vset.pattern.permute.xlu0 0
  %7871 = vperm.xlu0 %7870, %v7730
  %v7872 = vpop.permute.xlu0 %7871
  %7873 = vset.pattern.permute.xlu0 0
  %7874 = vperm.xlu0 %7873, %v7731
  %v7875 = vpop.permute.xlu0 %7874
  %7876 = vset.pattern.permute.xlu0 0
  %7877 = vperm.xlu0 %7876, %v7732
  %v7878 = vpop.permute.xlu0 %7877
  %7879 = vset.pattern.permute.xlu0 0
  %7880 = vperm.xlu0 %7879, %v7733
  %v7881 = vpop.permute.xlu0 %7880
  %7882 = vset.pattern.permute.xlu0 0
  %7883 = vperm.xlu0 %7882, %v7734
  %v7884 = vpop.permute.xlu0 %7883
  %7885 = vset.pattern.permute.xlu0 0
  %7886 = vperm.xlu0 %7885, %v7735
  %v7887 = vpop.permute.xlu0 %7886
  %7888 = vset.pattern.permute.xlu0 0
  %7889 = vperm.xlu0 %7888, %v7736
  %v7890 = vpop.permute.xlu0 %7889
  %7891 = vset.pattern.permute.xlu0 0
  %7892 = vperm.xlu0 %7891, %v7737
  %v7893 = vpop.permute.xlu0 %7892
  %7894 = vset.pattern.permute.xlu0 0
  %7895 = vperm.xlu0 %7894, %v7738
  %v7896 = vpop.permute.xlu0 %7895
  %7897 = vset.pattern.permute.xlu0 0
  %7898 = vperm.xlu0 %7897, %v7739
  %v7899 = vpop.permute.xlu0 %7898
  %7900 = vset.pattern.permute.xlu0 0
  %7901 = vperm.xlu0 %7900, %v7740
  %v7902 = vpop.permute.xlu0 %7901
  %7903 = vset.pattern.permute.xlu0 0
  %7904 = vperm.xlu0 %7903, %v7741
  %v7905 = vpop.permute.xlu0 %7904
  %7906 = vset.pattern.permute.xlu0 0
  %7907 = vperm.xlu0 %7906, %v7742
  %v7908 = vpop.permute.xlu0 %7907
  %7909 = vset.pattern.permute.xlu0 0
  %7910 = vperm.xlu0 %7909, %v7743
  %v7911 = vpop.permute.xlu0 %7910
  %7912 = vset.pattern.permute.xlu0 0
  %7913 = vperm.xlu0 %7912, %v7744
  %v7914 = vpop.permute.xlu0 %7913
  %7915 = vset.pattern.permute.xlu0 0
  %7916 = vperm.xlu0 %7915, %v7745
  %v7917 = vpop.permute.xlu0 %7916
  %7918 = vset.pattern.permute.xlu0 0
  %7919 = vperm.xlu0 %7918, %v7746
  %v7920 = vpop.permute.xlu0 %7919
  %7921 = vset.pattern.permute.xlu0 0
  %7922 = vperm.xlu0 %7921, %v7747
  %v7923 = vpop.permute.xlu0 %7922
  %7924 = vset.pattern.permute.xlu0 0
  %7925 = vperm.xlu0 %7924, %v7748
  %v7926 = vpop.permute.xlu0 %7925
  %7927 = vset.pattern.permute.xlu0 0
  %7928 = vperm.xlu0 %7927, %v7749
  %v7929 = vpop.permute.xlu0 %7928
  %7930 = vset.pattern.permute.xlu0 0
  %7931 = vperm.xlu0 %7930, %v7750
  %v7932 = vpop.permute.xlu0 %7931
  %7933 = vset.pattern.permute.xlu0 0
  %7934 = vperm.xlu0 %7933, %v7751
  %v7935 = vpop.permute.xlu0 %7934
  %7936 = vset.pattern.permute.xlu0 0
  %7937 = vperm.xlu0 %7936, %v7752
  %v7938 = vpop.permute.xlu0 %7937
  %7939 = vset.pattern.permute.xlu0 0
  %7940 = vperm.xlu0 %7939, %v7753
  %v7941 = vpop.permute.xlu0 %7940
  %7942 = vset.pattern.permute.xlu0 0
  %7943 = vperm.xlu0 %7942, %v7754
  %v7944 = vpop.permute.xlu0 %7943
  %7945 = vset.pattern.permute.xlu0 0
  %7946 = vperm.xlu0 %7945, %v7755
  %v7947 = vpop.permute.xlu0 %7946
  %vm7948 = vcmp.eq.s32.totalorder %v7758, 1
  %vm7949 = vcmp.eq.s32.totalorder %v7761, 1
  %vm7950 = vcmp.eq.s32.totalorder %v7764, 1
  %vm7951 = vcmp.eq.s32.totalorder %v7767, 1
  %vm7952 = vcmp.eq.s32.totalorder %v7770, 1
  %vm7953 = vcmp.eq.s32.totalorder %v7773, 1
  %vm7954 = vcmp.eq.s32.totalorder %v7776, 1
  %vm7955 = vcmp.eq.s32.totalorder %v7779, 1
  %vm7956 = vcmp.eq.s32.totalorder %v7782, 1
  %vm7957 = vcmp.eq.s32.totalorder %v7785, 1
  %vm7958 = vcmp.eq.s32.totalorder %v7788, 1
  %vm7959 = vcmp.eq.s32.totalorder %v7791, 1
  %vm7960 = vcmp.eq.s32.totalorder %v7794, 1
  %vm7961 = vcmp.eq.s32.totalorder %v7797, 1
  %vm7962 = vcmp.eq.s32.totalorder %v7800, 1
  %vm7963 = vcmp.eq.s32.totalorder %v7803, 1
  %vm7964 = vcmp.eq.s32.totalorder %v7806, 1
  %vm7965 = vcmp.eq.s32.totalorder %v7809, 1
  %vm7966 = vcmp.eq.s32.totalorder %v7812, 1
  %vm7967 = vcmp.eq.s32.totalorder %v7815, 1
  %vm7968 = vcmp.eq.s32.totalorder %v7818, 1
  %vm7969 = vcmp.eq.s32.totalorder %v7821, 1
  %vm7970 = vcmp.eq.s32.totalorder %v7824, 1
  %vm7971 = vcmp.eq.s32.totalorder %v7827, 1
  %vm7972 = vcmp.eq.s32.totalorder %v7830, 1
  %vm7973 = vcmp.eq.s32.totalorder %v7833, 1
  %vm7974 = vcmp.eq.s32.totalorder %v7836, 1
  %vm7975 = vcmp.eq.s32.totalorder %v7839, 1
  %vm7976 = vcmp.eq.s32.totalorder %v7842, 1
  %vm7977 = vcmp.eq.s32.totalorder %v7845, 1
  %vm7978 = vcmp.eq.s32.totalorder %v7848, 1
  %vm7979 = vcmp.eq.s32.totalorder %v7851, 1
  %vm7980 = vcmp.eq.s32.totalorder %v7854, 1
  %vm7981 = vcmp.eq.s32.totalorder %v7857, 1
  %vm7982 = vcmp.eq.s32.totalorder %v7860, 1
  %vm7983 = vcmp.eq.s32.totalorder %v7863, 1
  %vm7984 = vcmp.eq.s32.totalorder %v7866, 1
  %vm7985 = vcmp.eq.s32.totalorder %v7869, 1
  %vm7986 = vcmp.eq.s32.totalorder %v7872, 1
  %vm7987 = vcmp.eq.s32.totalorder %v7875, 1
  %vm7988 = vcmp.eq.s32.totalorder %v7878, 1
  %vm7989 = vcmp.eq.s32.totalorder %v7881, 1
  %vm7990 = vcmp.eq.s32.totalorder %v7884, 1
  %vm7991 = vcmp.eq.s32.totalorder %v7887, 1
  %vm7992 = vcmp.eq.s32.totalorder %v7890, 1
  %vm7993 = vcmp.eq.s32.totalorder %v7893, 1
  %vm7994 = vcmp.eq.s32.totalorder %v7896, 1
  %vm7995 = vcmp.eq.s32.totalorder %v7899, 1
  %vm7996 = vcmp.eq.s32.totalorder %v7902, 1
  %vm7997 = vcmp.eq.s32.totalorder %v7905, 1
  %vm7998 = vcmp.eq.s32.totalorder %v7908, 1
  %vm7999 = vcmp.eq.s32.totalorder %v7911, 1
  %vm8000 = vcmp.eq.s32.totalorder %v7914, 1
  %vm8001 = vcmp.eq.s32.totalorder %v7917, 1
  %vm8002 = vcmp.eq.s32.totalorder %v7920, 1
  %vm8003 = vcmp.eq.s32.totalorder %v7923, 1
  %vm8004 = vcmp.eq.s32.totalorder %v7926, 1
  %vm8005 = vcmp.eq.s32.totalorder %v7929, 1
  %vm8006 = vcmp.eq.s32.totalorder %v7932, 1
  %vm8007 = vcmp.eq.s32.totalorder %v7935, 1
  %vm8008 = vcmp.eq.s32.totalorder %v7938, 1
  %vm8009 = vcmp.eq.s32.totalorder %v7941, 1
  %vm8010 = vcmp.eq.s32.totalorder %v7944, 1
  %vm8011 = vcmp.eq.s32.totalorder %v7947, 1
  %v8012 = vsel %vm7948, %v7564, 0.0
  %v8013 = vsel %vm7949, %v7565, 0.0
  %v8014 = vsel %vm7950, %v7566, 0.0
  %v8015 = vsel %vm7951, %v7567, 0.0
  %v8016 = vsel %vm7952, %v7568, 0.0
  %v8017 = vsel %vm7953, %v7569, 0.0
  %v8018 = vsel %vm7954, %v7570, 0.0
  %v8019 = vsel %vm7955, %v7571, 0.0
  %v8020 = vsel %vm7956, %v7572, 0.0
  %v8021 = vsel %vm7957, %v7573, 0.0
  %v8022 = vsel %vm7958, %v7574, 0.0
  %v8023 = vsel %vm7959, %v7575, 0.0
  %v8024 = vsel %vm7960, %v7576, 0.0
  %v8025 = vsel %vm7961, %v7577, 0.0
  %v8026 = vsel %vm7962, %v7578, 0.0
  %v8027 = vsel %vm7963, %v7579, 0.0
  %v8028 = vsel %vm7964, %v7580, 0.0
  %v8029 = vsel %vm7965, %v7581, 0.0
  %v8030 = vsel %vm7966, %v7582, 0.0
  %v8031 = vsel %vm7967, %v7583, 0.0
  %v8032 = vsel %vm7968, %v7584, 0.0
  %v8033 = vsel %vm7969, %v7585, 0.0
  %v8034 = vsel %vm7970, %v7586, 0.0
  %v8035 = vsel %vm7971, %v7587, 0.0
  %v8036 = vsel %vm7972, %v7588, 0.0
  %v8037 = vsel %vm7973, %v7589, 0.0
  %v8038 = vsel %vm7974, %v7590, 0.0
  %v8039 = vsel %vm7975, %v7591, 0.0
  %v8040 = vsel %vm7976, %v7592, 0.0
  %v8041 = vsel %vm7977, %v7593, 0.0
  %v8042 = vsel %vm7978, %v7594, 0.0
  %v8043 = vsel %vm7979, %v7595, 0.0
  %v8044 = vsel %vm7980, %v7596, 0.0
  %v8045 = vsel %vm7981, %v7597, 0.0
  %v8046 = vsel %vm7982, %v7598, 0.0
  %v8047 = vsel %vm7983, %v7599, 0.0
  %v8048 = vsel %vm7984, %v7600, 0.0
  %v8049 = vsel %vm7985, %v7601, 0.0
  %v8050 = vsel %vm7986, %v7602, 0.0
  %v8051 = vsel %vm7987, %v7603, 0.0
  %v8052 = vsel %vm7988, %v7604, 0.0
  %v8053 = vsel %vm7989, %v7605, 0.0
  %v8054 = vsel %vm7990, %v7606, 0.0
  %v8055 = vsel %vm7991, %v7607, 0.0
  %v8056 = vsel %vm7992, %v7608, 0.0
  %v8057 = vsel %vm7993, %v7609, 0.0
  %v8058 = vsel %vm7994, %v7610, 0.0
  %v8059 = vsel %vm7995, %v7611, 0.0
  %v8060 = vsel %vm7996, %v7612, 0.0
  %v8061 = vsel %vm7997, %v7613, 0.0
  %v8062 = vsel %vm7998, %v7614, 0.0
  %v8063 = vsel %vm7999, %v7615, 0.0
  %v8064 = vsel %vm8000, %v7616, 0.0
  %v8065 = vsel %vm8001, %v7617, 0.0
  %v8066 = vsel %vm8002, %v7618, 0.0
  %v8067 = vsel %vm8003, %v7619, 0.0
  %v8068 = vsel %vm8004, %v7620, 0.0
  %v8069 = vsel %vm8005, %v7621, 0.0
  %v8070 = vsel %vm8006, %v7622, 0.0
  %v8071 = vsel %vm8007, %v7623, 0.0
  %v8072 = vsel %vm8008, %v7624, 0.0
  %v8073 = vsel %vm8009, %v7625, 0.0
  %v8074 = vsel %vm8010, %v7626, 0.0
  %v8075 = vsel %vm8011, %v7627, 0.0
  %v8076 = vpack.c.bf16 %v8013, %v8012
  %v8077 = vpack.c.bf16 %v8015, %v8014
  %v8078 = vpack.c.bf16 %v8017, %v8016
  %v8079 = vpack.c.bf16 %v8019, %v8018
  %v8080 = vpack.c.bf16 %v8021, %v8020
  %v8081 = vpack.c.bf16 %v8023, %v8022
  %v8082 = vpack.c.bf16 %v8025, %v8024
  %v8083 = vpack.c.bf16 %v8027, %v8026
  %v8084 = vpack.c.bf16 %v8029, %v8028
  %v8085 = vpack.c.bf16 %v8031, %v8030
  %v8086 = vpack.c.bf16 %v8033, %v8032
  %v8087 = vpack.c.bf16 %v8035, %v8034
  %v8088 = vpack.c.bf16 %v8037, %v8036
  %v8089 = vpack.c.bf16 %v8039, %v8038
  %v8090 = vpack.c.bf16 %v8041, %v8040
  %v8091 = vpack.c.bf16 %v8043, %v8042
  %v8092 = vpack.c.bf16 %v8045, %v8044
  %v8093 = vpack.c.bf16 %v8047, %v8046
  %v8094 = vpack.c.bf16 %v8049, %v8048
  %v8095 = vpack.c.bf16 %v8051, %v8050
  %v8096 = vpack.c.bf16 %v8053, %v8052
  %v8097 = vpack.c.bf16 %v8055, %v8054
  %v8098 = vpack.c.bf16 %v8057, %v8056
  %v8099 = vpack.c.bf16 %v8059, %v8058
  %v8100 = vpack.c.bf16 %v8061, %v8060
  %v8101 = vpack.c.bf16 %v8063, %v8062
  %v8102 = vpack.c.bf16 %v8065, %v8064
  %v8103 = vpack.c.bf16 %v8067, %v8066
  %v8104 = vpack.c.bf16 %v8069, %v8068
  %v8105 = vpack.c.bf16 %v8071, %v8070
  %v8106 = vpack.c.bf16 %v8073, %v8072
  %v8107 = vpack.c.bf16 %v8075, %v8074
  %s8108 = scalar_lea.vmem %s3, 16
  %v8109 = vld [vmem:[%s8108] sm:$0x3]
  %v8111 = vsel %vm1307, %v8076, 0
  %v8114 = vsel %vm1307, %v8077, 0
  %v8117 = vsel %vm1307, %v8078, 0
  %v8120 = vsel %vm1307, %v8079, 0
  %v8123 = vsel %vm1307, %v8080, 0
  %v8126 = vsel %vm1307, %v8081, 0
  %v8129 = vsel %vm1307, %v8082, 0
  %v8132 = vsel %vm1307, %v8083, 0
  %v8135 = vsel %vm1307, %v8084, 0
  %v8138 = vsel %vm1307, %v8085, 0
  %v8141 = vsel %vm1307, %v8086, 0
  %v8144 = vsel %vm1307, %v8087, 0
  %v8147 = vsel %vm1307, %v8088, 0
  %v8150 = vsel %vm1307, %v8089, 0
  %v8153 = vsel %vm1307, %v8090, 0
  %v8156 = vsel %vm1307, %v8091, 0
  %v8159 = vsel %vm1307, %v8092, 0
  %v8162 = vsel %vm1307, %v8093, 0
  %v8165 = vsel %vm1307, %v8094, 0
  %v8168 = vsel %vm1307, %v8095, 0
  %v8171 = vsel %vm1307, %v8096, 0
  %v8174 = vsel %vm1307, %v8097, 0
  %v8177 = vsel %vm1307, %v8098, 0
  %v8180 = vsel %vm1307, %v8099, 0
  %v8183 = vsel %vm1307, %v8100, 0
  %v8186 = vsel %vm1307, %v8101, 0
  %v8189 = vsel %vm1307, %v8102, 0
  %v8192 = vsel %vm1307, %v8103, 0
  %v8195 = vsel %vm1307, %v8104, 0
  %v8198 = vsel %vm1307, %v8105, 0
  %v8201 = vsel %vm1307, %v8106, 0
  %v8204 = vsel %vm1307, %v8107, 0
  %v8207 = vand.u32 %v8109, %v1407
  %8209 = vmatprep.subr.bf16.mxu0 0
  %8210 = vmatpush1.bf16.msra.mxu0 0
  %8211 = vmatprep.subr.bf16.mxu0 0
  %8212 = vmatpush1.bf16.msra.mxu0 0
  %8213 = vmatprep.subr.bf16.mxu0 0
  %8214 = vmatpush1.bf16.msra.mxu0 0
  %8215 = vmatprep.subr.bf16.mxu0 0
  %8216 = vmatpush1.bf16.msra.mxu0 0
  %8217 = vmatprep.subr.bf16.mxu0 0
  %8218 = vmatpush1.bf16.msra.mxu0 0
  %8219 = vmatprep.subr.bf16.mxu0 0
  %8220 = vmatpush1.bf16.msra.mxu0 0
  %8221 = vmatprep.subr.bf16.mxu0 0
  %8222 = vmatpush1.bf16.msra.mxu0 0
  %8223 = vmatprep.subr.bf16.mxu0 0
  %8224 = vmatpush1.bf16.msra.mxu0 %v8207
  %8225 = vmatprep.subr.bf16.mxu0 0
  %8226 = vmatpush2.bf16.msra.mxu0 0
  %8227 = vmatprep.subr.bf16.mxu0 0
  %8228 = vmatpush2.bf16.msra.mxu0 0
  %8229 = vmatprep.subr.bf16.mxu0 0
  %8230 = vmatpush2.bf16.msra.mxu0 0
  %8231 = vmatprep.subr.bf16.mxu0 0
  %8232 = vmatpush2.bf16.msra.mxu0 0
  %8233 = vmatprep.subr.bf16.mxu0 0
  %8234 = vmatpush2.bf16.msra.mxu0 0
  %8235 = vmatprep.subr.bf16.mxu0 0
  %8236 = vmatpush2.bf16.msra.mxu0 0
  %8237 = vmatprep.subr.bf16.mxu0 0
  %8238 = vmatpush2.bf16.msra.mxu0 0
  %8239 = vmatprep.subr.bf16.mxu0 0
  %8240 = vmatpush2.bf16.msra.mxu0 0
  %8241 = vmatprep.mubr.bf16.mxu0 0
  %8242 = vmatmul.mubr.bf16.gmra.mxu0 %v8111
  %v8243 = vpop.f32.mrf.mxu0
  %v8244 = vadd.f32 0.0, %v8243
  %v8245 = vpop.f32.mrf.mxu0
  %v8246 = vpop.f32.mrf.mxu0
  %v8247 = vadd.f32 0.0, %v8246
  %v8248 = vpop.f32.mrf.mxu0
  %8249 = vmatprep.mubr.bf16.mxu0 0
  %8250 = vmatmul.mubr.bf16.gmra.mxu0 %v8114
  %v8251 = vpop.f32.mrf.mxu0
  %v8252 = vadd.f32 0.0, %v8251
  %v8253 = vpop.f32.mrf.mxu0
  %v8254 = vpop.f32.mrf.mxu0
  %v8255 = vadd.f32 0.0, %v8254
  %v8256 = vpop.f32.mrf.mxu0
  %8257 = vmatprep.mubr.bf16.mxu0 0
  %8258 = vmatmul.mubr.bf16.gmra.mxu0 %v8117
  %v8259 = vpop.f32.mrf.mxu0
  %v8260 = vadd.f32 0.0, %v8259
  %v8261 = vpop.f32.mrf.mxu0
  %v8262 = vpop.f32.mrf.mxu0
  %v8263 = vadd.f32 0.0, %v8262
  %v8264 = vpop.f32.mrf.mxu0
  %8265 = vmatprep.mubr.bf16.mxu0 0
  %8266 = vmatmul.mubr.bf16.gmra.mxu0 %v8120
  %v8267 = vpop.f32.mrf.mxu0
  %v8268 = vadd.f32 0.0, %v8267
  %v8269 = vpop.f32.mrf.mxu0
  %v8270 = vpop.f32.mrf.mxu0
  %v8271 = vadd.f32 0.0, %v8270
  %v8272 = vpop.f32.mrf.mxu0
  %8273 = vmatprep.mubr.bf16.mxu0 0
  %8274 = vmatmul.mubr.bf16.gmra.mxu0 %v8123
  %v8275 = vpop.f32.mrf.mxu0
  %v8276 = vadd.f32 0.0, %v8275
  %v8277 = vpop.f32.mrf.mxu0
  %v8278 = vpop.f32.mrf.mxu0
  %v8279 = vadd.f32 0.0, %v8278
  %v8280 = vpop.f32.mrf.mxu0
  %8281 = vmatprep.mubr.bf16.mxu0 0
  %8282 = vmatmul.mubr.bf16.gmra.mxu0 %v8126
  %v8283 = vpop.f32.mrf.mxu0
  %v8284 = vadd.f32 0.0, %v8283
  %v8285 = vpop.f32.mrf.mxu0
  %v8286 = vpop.f32.mrf.mxu0
  %v8287 = vadd.f32 0.0, %v8286
  %v8288 = vpop.f32.mrf.mxu0
  %8289 = vmatprep.mubr.bf16.mxu0 0
  %8290 = vmatmul.mubr.bf16.gmra.mxu0 %v8129
  %v8291 = vpop.f32.mrf.mxu0
  %v8292 = vadd.f32 0.0, %v8291
  %v8293 = vpop.f32.mrf.mxu0
  %v8294 = vpop.f32.mrf.mxu0
  %v8295 = vadd.f32 0.0, %v8294
  %v8296 = vpop.f32.mrf.mxu0
  %8297 = vmatprep.mubr.bf16.mxu0 0
  %8298 = vmatmul.mubr.bf16.gmra.mxu0 %v8132
  %v8299 = vpop.f32.mrf.mxu0
  %v8300 = vadd.f32 0.0, %v8299
  %v8301 = vpop.f32.mrf.mxu0
  %v8302 = vpop.f32.mrf.mxu0
  %v8303 = vadd.f32 0.0, %v8302
  %v8304 = vpop.f32.mrf.mxu0
  %8305 = vmatprep.mubr.bf16.mxu0 0
  %8306 = vmatmul.mubr.bf16.gmra.mxu0 %v8135
  %v8307 = vpop.f32.mrf.mxu0
  %v8308 = vadd.f32 0.0, %v8307
  %v8309 = vpop.f32.mrf.mxu0
  %v8310 = vpop.f32.mrf.mxu0
  %v8311 = vadd.f32 0.0, %v8310
  %v8312 = vpop.f32.mrf.mxu0
  %8313 = vmatprep.mubr.bf16.mxu0 0
  %8314 = vmatmul.mubr.bf16.gmra.mxu0 %v8138
  %v8315 = vpop.f32.mrf.mxu0
  %v8316 = vadd.f32 0.0, %v8315
  %v8317 = vpop.f32.mrf.mxu0
  %v8318 = vpop.f32.mrf.mxu0
  %v8319 = vadd.f32 0.0, %v8318
  %v8320 = vpop.f32.mrf.mxu0
  %8321 = vmatprep.mubr.bf16.mxu0 0
  %8322 = vmatmul.mubr.bf16.gmra.mxu0 %v8141
  %v8323 = vpop.f32.mrf.mxu0
  %v8324 = vadd.f32 0.0, %v8323
  %v8325 = vpop.f32.mrf.mxu0
  %v8326 = vpop.f32.mrf.mxu0
  %v8327 = vadd.f32 0.0, %v8326
  %v8328 = vpop.f32.mrf.mxu0
  %8329 = vmatprep.mubr.bf16.mxu0 0
  %8330 = vmatmul.mubr.bf16.gmra.mxu0 %v8144
  %v8331 = vpop.f32.mrf.mxu0
  %v8332 = vadd.f32 0.0, %v8331
  %v8333 = vpop.f32.mrf.mxu0
  %v8334 = vpop.f32.mrf.mxu0
  %v8335 = vadd.f32 0.0, %v8334
  %v8336 = vpop.f32.mrf.mxu0
  %8337 = vmatprep.mubr.bf16.mxu0 0
  %8338 = vmatmul.mubr.bf16.gmra.mxu0 %v8147
  %v8339 = vpop.f32.mrf.mxu0
  %v8340 = vadd.f32 0.0, %v8339
  %v8341 = vpop.f32.mrf.mxu0
  %v8342 = vpop.f32.mrf.mxu0
  %v8343 = vadd.f32 0.0, %v8342
  %v8344 = vpop.f32.mrf.mxu0
  %8345 = vmatprep.mubr.bf16.mxu0 0
  %8346 = vmatmul.mubr.bf16.gmra.mxu0 %v8150
  %v8347 = vpop.f32.mrf.mxu0
  %v8348 = vadd.f32 0.0, %v8347
  %v8349 = vpop.f32.mrf.mxu0
  %v8350 = vpop.f32.mrf.mxu0
  %v8351 = vadd.f32 0.0, %v8350
  %v8352 = vpop.f32.mrf.mxu0
  %8353 = vmatprep.mubr.bf16.mxu0 0
  %8354 = vmatmul.mubr.bf16.gmra.mxu0 %v8153
  %v8355 = vpop.f32.mrf.mxu0
  %v8356 = vadd.f32 0.0, %v8355
  %v8357 = vpop.f32.mrf.mxu0
  %v8358 = vpop.f32.mrf.mxu0
  %v8359 = vadd.f32 0.0, %v8358
  %v8360 = vpop.f32.mrf.mxu0
  %8361 = vmatprep.mubr.bf16.mxu0 0
  %8362 = vmatmul.mubr.bf16.gmra.mxu0 %v8156
  %v8363 = vpop.f32.mrf.mxu0
  %v8364 = vadd.f32 0.0, %v8363
  %v8365 = vpop.f32.mrf.mxu0
  %v8366 = vpop.f32.mrf.mxu0
  %v8367 = vadd.f32 0.0, %v8366
  %v8368 = vpop.f32.mrf.mxu0
  %8369 = vmatprep.mubr.bf16.mxu0 0
  %8370 = vmatmul.mubr.bf16.gmra.mxu0 %v8159
  %v8371 = vpop.f32.mrf.mxu0
  %v8372 = vadd.f32 0.0, %v8371
  %v8373 = vpop.f32.mrf.mxu0
  %v8374 = vpop.f32.mrf.mxu0
  %v8375 = vadd.f32 0.0, %v8374
  %v8376 = vpop.f32.mrf.mxu0
  %8377 = vmatprep.mubr.bf16.mxu0 0
  %8378 = vmatmul.mubr.bf16.gmra.mxu0 %v8162
  %v8379 = vpop.f32.mrf.mxu0
  %v8380 = vadd.f32 0.0, %v8379
  %v8381 = vpop.f32.mrf.mxu0
  %v8382 = vpop.f32.mrf.mxu0
  %v8383 = vadd.f32 0.0, %v8382
  %v8384 = vpop.f32.mrf.mxu0
  %8385 = vmatprep.mubr.bf16.mxu0 0
  %8386 = vmatmul.mubr.bf16.gmra.mxu0 %v8165
  %v8387 = vpop.f32.mrf.mxu0
  %v8388 = vadd.f32 0.0, %v8387
  %v8389 = vpop.f32.mrf.mxu0
  %v8390 = vpop.f32.mrf.mxu0
  %v8391 = vadd.f32 0.0, %v8390
  %v8392 = vpop.f32.mrf.mxu0
  %8393 = vmatprep.mubr.bf16.mxu0 0
  %8394 = vmatmul.mubr.bf16.gmra.mxu0 %v8168
  %v8395 = vpop.f32.mrf.mxu0
  %v8396 = vadd.f32 0.0, %v8395
  %v8397 = vpop.f32.mrf.mxu0
  %v8398 = vpop.f32.mrf.mxu0
  %v8399 = vadd.f32 0.0, %v8398
  %v8400 = vpop.f32.mrf.mxu0
  %8401 = vmatprep.mubr.bf16.mxu0 0
  %8402 = vmatmul.mubr.bf16.gmra.mxu0 %v8171
  %v8403 = vpop.f32.mrf.mxu0
  %v8404 = vadd.f32 0.0, %v8403
  %v8405 = vpop.f32.mrf.mxu0
  %v8406 = vpop.f32.mrf.mxu0
  %v8407 = vadd.f32 0.0, %v8406
  %v8408 = vpop.f32.mrf.mxu0
  %8409 = vmatprep.mubr.bf16.mxu0 0
  %8410 = vmatmul.mubr.bf16.gmra.mxu0 %v8174
  %v8411 = vpop.f32.mrf.mxu0
  %v8412 = vadd.f32 0.0, %v8411
  %v8413 = vpop.f32.mrf.mxu0
  %v8414 = vpop.f32.mrf.mxu0
  %v8415 = vadd.f32 0.0, %v8414
  %v8416 = vpop.f32.mrf.mxu0
  %8417 = vmatprep.mubr.bf16.mxu0 0
  %8418 = vmatmul.mubr.bf16.gmra.mxu0 %v8177
  %v8419 = vpop.f32.mrf.mxu0
  %v8420 = vadd.f32 0.0, %v8419
  %v8421 = vpop.f32.mrf.mxu0
  %v8422 = vpop.f32.mrf.mxu0
  %v8423 = vadd.f32 0.0, %v8422
  %v8424 = vpop.f32.mrf.mxu0
  %8425 = vmatprep.mubr.bf16.mxu0 0
  %8426 = vmatmul.mubr.bf16.gmra.mxu0 %v8180
  %v8427 = vpop.f32.mrf.mxu0
  %v8428 = vadd.f32 0.0, %v8427
  %v8429 = vpop.f32.mrf.mxu0
  %v8430 = vpop.f32.mrf.mxu0
  %v8431 = vadd.f32 0.0, %v8430
  %v8432 = vpop.f32.mrf.mxu0
  %8433 = vmatprep.mubr.bf16.mxu0 0
  %8434 = vmatmul.mubr.bf16.gmra.mxu0 %v8183
  %v8435 = vpop.f32.mrf.mxu0
  %v8436 = vadd.f32 0.0, %v8435
  %v8437 = vpop.f32.mrf.mxu0
  %v8438 = vpop.f32.mrf.mxu0
  %v8439 = vadd.f32 0.0, %v8438
  %v8440 = vpop.f32.mrf.mxu0
  %8441 = vmatprep.mubr.bf16.mxu0 0
  %8442 = vmatmul.mubr.bf16.gmra.mxu0 %v8186
  %v8443 = vpop.f32.mrf.mxu0
  %v8444 = vadd.f32 0.0, %v8443
  %v8445 = vpop.f32.mrf.mxu0
  %v8446 = vpop.f32.mrf.mxu0
  %v8447 = vadd.f32 0.0, %v8446
  %v8448 = vpop.f32.mrf.mxu0
  %8449 = vmatprep.mubr.bf16.mxu0 0
  %8450 = vmatmul.mubr.bf16.gmra.mxu0 %v8189
  %v8451 = vpop.f32.mrf.mxu0
  %v8452 = vadd.f32 0.0, %v8451
  %v8453 = vpop.f32.mrf.mxu0
  %v8454 = vpop.f32.mrf.mxu0
  %v8455 = vadd.f32 0.0, %v8454
  %v8456 = vpop.f32.mrf.mxu0
  %8457 = vmatprep.mubr.bf16.mxu0 0
  %8458 = vmatmul.mubr.bf16.gmra.mxu0 %v8192
  %v8459 = vpop.f32.mrf.mxu0
  %v8460 = vadd.f32 0.0, %v8459
  %v8461 = vpop.f32.mrf.mxu0
  %v8462 = vpop.f32.mrf.mxu0
  %v8463 = vadd.f32 0.0, %v8462
  %v8464 = vpop.f32.mrf.mxu0
  %8465 = vmatprep.mubr.bf16.mxu0 0
  %8466 = vmatmul.mubr.bf16.gmra.mxu0 %v8195
  %v8467 = vpop.f32.mrf.mxu0
  %v8468 = vadd.f32 0.0, %v8467
  %v8469 = vpop.f32.mrf.mxu0
  %v8470 = vpop.f32.mrf.mxu0
  %v8471 = vadd.f32 0.0, %v8470
  %v8472 = vpop.f32.mrf.mxu0
  %8473 = vmatprep.mubr.bf16.mxu0 0
  %8474 = vmatmul.mubr.bf16.gmra.mxu0 %v8198
  %v8475 = vpop.f32.mrf.mxu0
  %v8476 = vadd.f32 0.0, %v8475
  %v8477 = vpop.f32.mrf.mxu0
  %v8478 = vpop.f32.mrf.mxu0
  %v8479 = vadd.f32 0.0, %v8478
  %v8480 = vpop.f32.mrf.mxu0
  %8481 = vmatprep.mubr.bf16.mxu0 0
  %8482 = vmatmul.mubr.bf16.gmra.mxu0 %v8201
  %v8483 = vpop.f32.mrf.mxu0
  %v8484 = vadd.f32 0.0, %v8483
  %v8485 = vpop.f32.mrf.mxu0
  %v8486 = vpop.f32.mrf.mxu0
  %v8487 = vadd.f32 0.0, %v8486
  %v8488 = vpop.f32.mrf.mxu0
  %8489 = vmatprep.mubr.bf16.mxu0 0
  %8490 = vmatmul.mubr.bf16.gmra.mxu0 %v8204
  %v8491 = vpop.f32.mrf.mxu0
  %v8492 = vadd.f32 0.0, %v8491
  %v8493 = vpop.f32.mrf.mxu0
  %v8494 = vpop.f32.mrf.mxu0
  %v8495 = vadd.f32 0.0, %v8494
  %v8496 = vpop.f32.mrf.mxu0
  %8497 = vdwg.mxu0
  %v8498 = vadd.f32 %v7500, %v8244
  %v8499 = vadd.f32 %v7501, %v8247
  %v8500 = vadd.f32 %v7502, %v8252
  %v8501 = vadd.f32 %v7503, %v8255
  %v8502 = vadd.f32 %v7504, %v8260
  %v8503 = vadd.f32 %v7505, %v8263
  %v8504 = vadd.f32 %v7506, %v8268
  %v8505 = vadd.f32 %v7507, %v8271
  %v8506 = vadd.f32 %v7508, %v8276
  %v8507 = vadd.f32 %v7509, %v8279
  %v8508 = vadd.f32 %v7510, %v8284
  %v8509 = vadd.f32 %v7511, %v8287
  %v8510 = vadd.f32 %v7512, %v8292
  %v8511 = vadd.f32 %v7513, %v8295
  %v8512 = vadd.f32 %v7514, %v8300
  %v8513 = vadd.f32 %v7515, %v8303
  %v8514 = vadd.f32 %v7516, %v8308
  %v8515 = vadd.f32 %v7517, %v8311
  %v8516 = vadd.f32 %v7518, %v8316
  %v8517 = vadd.f32 %v7519, %v8319
  %v8518 = vadd.f32 %v7520, %v8324
  %v8519 = vadd.f32 %v7521, %v8327
  %v8520 = vadd.f32 %v7522, %v8332
  %v8521 = vadd.f32 %v7523, %v8335
  %v8522 = vadd.f32 %v7524, %v8340
  %v8523 = vadd.f32 %v7525, %v8343
  %v8524 = vadd.f32 %v7526, %v8348
  %v8525 = vadd.f32 %v7527, %v8351
  %v8526 = vadd.f32 %v7528, %v8356
  %v8527 = vadd.f32 %v7529, %v8359
  %v8528 = vadd.f32 %v7530, %v8364
  %v8529 = vadd.f32 %v7531, %v8367
  %v8530 = vadd.f32 %v7532, %v8372
  %v8531 = vadd.f32 %v7533, %v8375
  %v8532 = vadd.f32 %v7534, %v8380
  %v8533 = vadd.f32 %v7535, %v8383
  %v8534 = vadd.f32 %v7536, %v8388
  %v8535 = vadd.f32 %v7537, %v8391
  %v8536 = vadd.f32 %v7538, %v8396
  %v8537 = vadd.f32 %v7539, %v8399
  %v8538 = vadd.f32 %v7540, %v8404
  %v8539 = vadd.f32 %v7541, %v8407
  %v8540 = vadd.f32 %v7542, %v8412
  %v8541 = vadd.f32 %v7543, %v8415
  %v8542 = vadd.f32 %v7544, %v8420
  %v8543 = vadd.f32 %v7545, %v8423
  %v8544 = vadd.f32 %v7546, %v8428
  %v8545 = vadd.f32 %v7547, %v8431
  %v8546 = vadd.f32 %v7548, %v8436
  %v8547 = vadd.f32 %v7549, %v8439
  %v8548 = vadd.f32 %v7550, %v8444
  %v8549 = vadd.f32 %v7551, %v8447
  %v8550 = vadd.f32 %v7552, %v8452
  %v8551 = vadd.f32 %v7553, %v8455
  %v8552 = vadd.f32 %v7554, %v8460
  %v8553 = vadd.f32 %v7555, %v8463
  %v8554 = vadd.f32 %v7556, %v8468
  %v8555 = vadd.f32 %v7557, %v8471
  %v8556 = vadd.f32 %v7558, %v8476
  %v8557 = vadd.f32 %v7559, %v8479
  %v8558 = vadd.f32 %v7560, %v8484
  %v8559 = vadd.f32 %v7561, %v8487
  %v8560 = vadd.f32 %v7562, %v8492
  %v8561 = vadd.f32 %v7563, %v8495
  %v8562 = vld [vmem:[%s4] sm:$0x1]
  %v8563 = vld [vmem:[%s5] sm:$0x1]
  %vm8564 = vcmask 523264
  %v8565 = vsel %vm8564, %v8498, 0.0
  %v8566 = vsel %vm8564, %v8499, 0.0
  %v8567 = vadd.f32 %v8565, %v8566
  %v8568 = vsel %vm8564, %v8500, 0.0
  %v8569 = vadd.f32 %v8567, %v8568
  %v8570 = vsel %vm8564, %v8501, 0.0
  %v8571 = vadd.f32 %v8569, %v8570
  %v8572 = vsel %vm8564, %v8502, 0.0
  %v8573 = vadd.f32 %v8571, %v8572
  %v8574 = vsel %vm8564, %v8503, 0.0
  %v8575 = vadd.f32 %v8573, %v8574
  %v8576 = vsel %vm8564, %v8504, 0.0
  %v8577 = vadd.f32 %v8575, %v8576
  %v8578 = vsel %vm8564, %v8505, 0.0
  %v8579 = vadd.f32 %v8577, %v8578
  %v8580 = vsel %vm8564, %v8506, 0.0
  %v8581 = vadd.f32 %v8579, %v8580
  %v8582 = vsel %vm8564, %v8507, 0.0
  %v8583 = vadd.f32 %v8581, %v8582
  %v8584 = vsel %vm8564, %v8508, 0.0
  %v8585 = vadd.f32 %v8583, %v8584
  %v8586 = vsel %vm8564, %v8509, 0.0
  %v8587 = vadd.f32 %v8585, %v8586
  %v8588 = vsel %vm8564, %v8510, 0.0
  %v8589 = vadd.f32 %v8587, %v8588
  %v8590 = vsel %vm8564, %v8511, 0.0
  %v8591 = vadd.f32 %v8589, %v8590
  %v8592 = vsel %vm8564, %v8512, 0.0
  %v8593 = vadd.f32 %v8591, %v8592
  %v8594 = vsel %vm8564, %v8513, 0.0
  %v8595 = vadd.f32 %v8593, %v8594
  %v8596 = vsel %vm8564, %v8514, 0.0
  %v8597 = vadd.f32 %v8595, %v8596
  %v8598 = vsel %vm8564, %v8515, 0.0
  %v8599 = vadd.f32 %v8597, %v8598
  %v8600 = vsel %vm8564, %v8516, 0.0
  %v8601 = vadd.f32 %v8599, %v8600
  %v8602 = vsel %vm8564, %v8517, 0.0
  %v8603 = vadd.f32 %v8601, %v8602
  %v8604 = vsel %vm8564, %v8518, 0.0
  %v8605 = vadd.f32 %v8603, %v8604
  %v8606 = vsel %vm8564, %v8519, 0.0
  %v8607 = vadd.f32 %v8605, %v8606
  %v8608 = vsel %vm8564, %v8520, 0.0
  %v8609 = vadd.f32 %v8607, %v8608
  %v8610 = vsel %vm8564, %v8521, 0.0
  %v8611 = vadd.f32 %v8609, %v8610
  %v8612 = vsel %vm8564, %v8522, 0.0
  %v8613 = vadd.f32 %v8611, %v8612
  %v8614 = vsel %vm8564, %v8523, 0.0
  %v8615 = vadd.f32 %v8613, %v8614
  %v8616 = vsel %vm8564, %v8524, 0.0
  %v8617 = vadd.f32 %v8615, %v8616
  %v8618 = vsel %vm8564, %v8525, 0.0
  %v8619 = vadd.f32 %v8617, %v8618
  %v8620 = vsel %vm8564, %v8526, 0.0
  %v8621 = vadd.f32 %v8619, %v8620
  %v8622 = vsel %vm8564, %v8527, 0.0
  %v8623 = vadd.f32 %v8621, %v8622
  %v8624 = vsel %vm8564, %v8528, 0.0
  %v8625 = vadd.f32 %v8623, %v8624
  %v8626 = vsel %vm8564, %v8529, 0.0
  %v8627 = vadd.f32 %v8625, %v8626
  %v8628 = vsel %vm8564, %v8530, 0.0
  %v8629 = vadd.f32 %v8627, %v8628
  %v8630 = vsel %vm8564, %v8531, 0.0
  %v8631 = vadd.f32 %v8629, %v8630
  %v8632 = vsel %vm8564, %v8532, 0.0
  %v8633 = vadd.f32 %v8631, %v8632
  %v8634 = vsel %vm8564, %v8533, 0.0
  %v8635 = vadd.f32 %v8633, %v8634
  %v8636 = vsel %vm8564, %v8534, 0.0
  %v8637 = vadd.f32 %v8635, %v8636
  %v8638 = vsel %vm8564, %v8535, 0.0
  %v8639 = vadd.f32 %v8637, %v8638
  %v8640 = vsel %vm8564, %v8536, 0.0
  %v8641 = vadd.f32 %v8639, %v8640
  %v8642 = vsel %vm8564, %v8537, 0.0
  %v8643 = vadd.f32 %v8641, %v8642
  %v8644 = vsel %vm8564, %v8538, 0.0
  %v8645 = vadd.f32 %v8643, %v8644
  %v8646 = vsel %vm8564, %v8539, 0.0
  %v8647 = vadd.f32 %v8645, %v8646
  %v8648 = vsel %vm8564, %v8540, 0.0
  %v8649 = vadd.f32 %v8647, %v8648
  %v8650 = vsel %vm8564, %v8541, 0.0
  %v8651 = vadd.f32 %v8649, %v8650
  %v8652 = vsel %vm8564, %v8542, 0.0
  %v8653 = vadd.f32 %v8651, %v8652
  %v8654 = vsel %vm8564, %v8543, 0.0
  %v8655 = vadd.f32 %v8653, %v8654
  %v8656 = vsel %vm8564, %v8544, 0.0
  %v8657 = vadd.f32 %v8655, %v8656
  %v8658 = vsel %vm8564, %v8545, 0.0
  %v8659 = vadd.f32 %v8657, %v8658
  %v8660 = vsel %vm8564, %v8546, 0.0
  %v8661 = vadd.f32 %v8659, %v8660
  %v8662 = vsel %vm8564, %v8547, 0.0
  %v8663 = vadd.f32 %v8661, %v8662
  %v8664 = vsel %vm8564, %v8548, 0.0
  %v8665 = vadd.f32 %v8663, %v8664
  %v8666 = vsel %vm8564, %v8549, 0.0
  %v8667 = vadd.f32 %v8665, %v8666
  %v8668 = vsel %vm8564, %v8550, 0.0
  %v8669 = vadd.f32 %v8667, %v8668
  %v8670 = vsel %vm8564, %v8551, 0.0
  %v8671 = vadd.f32 %v8669, %v8670
  %v8672 = vsel %vm8564, %v8552, 0.0
  %v8673 = vadd.f32 %v8671, %v8672
  %v8674 = vsel %vm8564, %v8553, 0.0
  %v8675 = vadd.f32 %v8673, %v8674
  %v8676 = vsel %vm8564, %v8554, 0.0
  %v8677 = vadd.f32 %v8675, %v8676
  %v8678 = vsel %vm8564, %v8555, 0.0
  %v8679 = vadd.f32 %v8677, %v8678
  %v8680 = vsel %vm8564, %v8556, 0.0
  %v8681 = vadd.f32 %v8679, %v8680
  %v8682 = vsel %vm8564, %v8557, 0.0
  %v8683 = vadd.f32 %v8681, %v8682
  %v8684 = vsel %vm8564, %v8558, 0.0
  %v8685 = vadd.f32 %v8683, %v8684
  %v8686 = vsel %vm8564, %v8559, 0.0
  %v8687 = vadd.f32 %v8685, %v8686
  %v8688 = vsel %vm8564, %v8560, 0.0
  %v8689 = vadd.f32 %v8687, %v8688
  %v8690 = vsel %vm8564, %v8561, 0.0
  %v8691 = vadd.f32 %v8689, %v8690
  %v8692 = vrot.slane %v8691, 4
  %v8693 = vadd.f32 %v8691, %v8692
  %v8694 = vrot.slane %v8693, 2
  %v8695 = vadd.f32 %v8693, %v8694
  %v8696 = vrot.slane %v8695, 1
  %v8697 = vadd.f32 %v8695, %v8696
  %v8698 = vrcp.pop 512.0
  %v8699 = vmul.f32 %v8697, %v8698
  %v8700 = vsub.f32 %v8498, %v8699
  %v8701 = vsub.f32 %v8499, %v8699
  %v8702 = vsub.f32 %v8500, %v8699
  %v8703 = vsub.f32 %v8501, %v8699
  %v8704 = vsub.f32 %v8502, %v8699
  %v8705 = vsub.f32 %v8503, %v8699
  %v8706 = vsub.f32 %v8504, %v8699
  %v8707 = vsub.f32 %v8505, %v8699
  %v8708 = vsub.f32 %v8506, %v8699
  %v8709 = vsub.f32 %v8507, %v8699
  %v8710 = vsub.f32 %v8508, %v8699
  %v8711 = vsub.f32 %v8509, %v8699
  %v8712 = vsub.f32 %v8510, %v8699
  %v8713 = vsub.f32 %v8511, %v8699
  %v8714 = vsub.f32 %v8512, %v8699
  %v8715 = vsub.f32 %v8513, %v8699
  %v8716 = vsub.f32 %v8514, %v8699
  %v8717 = vsub.f32 %v8515, %v8699
  %v8718 = vsub.f32 %v8516, %v8699
  %v8719 = vsub.f32 %v8517, %v8699
  %v8720 = vsub.f32 %v8518, %v8699
  %v8721 = vsub.f32 %v8519, %v8699
  %v8722 = vsub.f32 %v8520, %v8699
  %v8723 = vsub.f32 %v8521, %v8699
  %v8724 = vsub.f32 %v8522, %v8699
  %v8725 = vsub.f32 %v8523, %v8699
  %v8726 = vsub.f32 %v8524, %v8699
  %v8727 = vsub.f32 %v8525, %v8699
  %v8728 = vsub.f32 %v8526, %v8699
  %v8729 = vsub.f32 %v8527, %v8699
  %v8730 = vsub.f32 %v8528, %v8699
  %v8731 = vsub.f32 %v8529, %v8699
  %v8732 = vsub.f32 %v8530, %v8699
  %v8733 = vsub.f32 %v8531, %v8699
  %v8734 = vsub.f32 %v8532, %v8699
  %v8735 = vsub.f32 %v8533, %v8699
  %v8736 = vsub.f32 %v8534, %v8699
  %v8737 = vsub.f32 %v8535, %v8699
  %v8738 = vsub.f32 %v8536, %v8699
  %v8739 = vsub.f32 %v8537, %v8699
  %v8740 = vsub.f32 %v8538, %v8699
  %v8741 = vsub.f32 %v8539, %v8699
  %v8742 = vsub.f32 %v8540, %v8699
  %v8743 = vsub.f32 %v8541, %v8699
  %v8744 = vsub.f32 %v8542, %v8699
  %v8745 = vsub.f32 %v8543, %v8699
  %v8746 = vsub.f32 %v8544, %v8699
  %v8747 = vsub.f32 %v8545, %v8699
  %v8748 = vsub.f32 %v8546, %v8699
  %v8749 = vsub.f32 %v8547, %v8699
  %v8750 = vsub.f32 %v8548, %v8699
  %v8751 = vsub.f32 %v8549, %v8699
  %v8752 = vsub.f32 %v8550, %v8699
  %v8753 = vsub.f32 %v8551, %v8699
  %v8754 = vsub.f32 %v8552, %v8699
  %v8755 = vsub.f32 %v8553, %v8699
  %v8756 = vsub.f32 %v8554, %v8699
  %v8757 = vsub.f32 %v8555, %v8699
  %v8758 = vsub.f32 %v8556, %v8699
  %v8759 = vsub.f32 %v8557, %v8699
  %v8760 = vsub.f32 %v8558, %v8699
  %v8761 = vsub.f32 %v8559, %v8699
  %v8762 = vsub.f32 %v8560, %v8699
  %v8763 = vsub.f32 %v8561, %v8699
  %v8764 = vmul.f32 %v8700, %v8700
  %v8765 = vmul.f32 %v8701, %v8701
  %v8766 = vmul.f32 %v8702, %v8702
  %v8767 = vmul.f32 %v8703, %v8703
  %v8768 = vmul.f32 %v8704, %v8704
  %v8769 = vmul.f32 %v8705, %v8705
  %v8770 = vmul.f32 %v8706, %v8706
  %v8771 = vmul.f32 %v8707, %v8707
  %v8772 = vmul.f32 %v8708, %v8708
  %v8773 = vmul.f32 %v8709, %v8709
  %v8774 = vmul.f32 %v8710, %v8710
  %v8775 = vmul.f32 %v8711, %v8711
  %v8776 = vmul.f32 %v8712, %v8712
  %v8777 = vmul.f32 %v8713, %v8713
  %v8778 = vmul.f32 %v8714, %v8714
  %v8779 = vmul.f32 %v8715, %v8715
  %v8780 = vmul.f32 %v8716, %v8716
  %v8781 = vmul.f32 %v8717, %v8717
  %v8782 = vmul.f32 %v8718, %v8718
  %v8783 = vmul.f32 %v8719, %v8719
  %v8784 = vmul.f32 %v8720, %v8720
  %v8785 = vmul.f32 %v8721, %v8721
  %v8786 = vmul.f32 %v8722, %v8722
  %v8787 = vmul.f32 %v8723, %v8723
  %v8788 = vmul.f32 %v8724, %v8724
  %v8789 = vmul.f32 %v8725, %v8725
  %v8790 = vmul.f32 %v8726, %v8726
  %v8791 = vmul.f32 %v8727, %v8727
  %v8792 = vmul.f32 %v8728, %v8728
  %v8793 = vmul.f32 %v8729, %v8729
  %v8794 = vmul.f32 %v8730, %v8730
  %v8795 = vmul.f32 %v8731, %v8731
  %v8796 = vmul.f32 %v8732, %v8732
  %v8797 = vmul.f32 %v8733, %v8733
  %v8798 = vmul.f32 %v8734, %v8734
  %v8799 = vmul.f32 %v8735, %v8735
  %v8800 = vmul.f32 %v8736, %v8736
  %v8801 = vmul.f32 %v8737, %v8737
  %v8802 = vmul.f32 %v8738, %v8738
  %v8803 = vmul.f32 %v8739, %v8739
  %v8804 = vmul.f32 %v8740, %v8740
  %v8805 = vmul.f32 %v8741, %v8741
  %v8806 = vmul.f32 %v8742, %v8742
  %v8807 = vmul.f32 %v8743, %v8743
  %v8808 = vmul.f32 %v8744, %v8744
  %v8809 = vmul.f32 %v8745, %v8745
  %v8810 = vmul.f32 %v8746, %v8746
  %v8811 = vmul.f32 %v8747, %v8747
  %v8812 = vmul.f32 %v8748, %v8748
  %v8813 = vmul.f32 %v8749, %v8749
  %v8814 = vmul.f32 %v8750, %v8750
  %v8815 = vmul.f32 %v8751, %v8751
  %v8816 = vmul.f32 %v8752, %v8752
  %v8817 = vmul.f32 %v8753, %v8753
  %v8818 = vmul.f32 %v8754, %v8754
  %v8819 = vmul.f32 %v8755, %v8755
  %v8820 = vmul.f32 %v8756, %v8756
  %v8821 = vmul.f32 %v8757, %v8757
  %v8822 = vmul.f32 %v8758, %v8758
  %v8823 = vmul.f32 %v8759, %v8759
  %v8824 = vmul.f32 %v8760, %v8760
  %v8825 = vmul.f32 %v8761, %v8761
  %v8826 = vmul.f32 %v8762, %v8762
  %v8827 = vmul.f32 %v8763, %v8763
  %v8828 = vsel %vm8564, %v8764, 0.0
  %v8829 = vsel %vm8564, %v8765, 0.0
  %v8830 = vadd.f32 %v8828, %v8829
  %v8831 = vsel %vm8564, %v8766, 0.0
  %v8832 = vadd.f32 %v8830, %v8831
  %v8833 = vsel %vm8564, %v8767, 0.0
  %v8834 = vadd.f32 %v8832, %v8833
  %v8835 = vsel %vm8564, %v8768, 0.0
  %v8836 = vadd.f32 %v8834, %v8835
  %v8837 = vsel %vm8564, %v8769, 0.0
  %v8838 = vadd.f32 %v8836, %v8837
  %v8839 = vsel %vm8564, %v8770, 0.0
  %v8840 = vadd.f32 %v8838, %v8839
  %v8841 = vsel %vm8564, %v8771, 0.0
  %v8842 = vadd.f32 %v8840, %v8841
  %v8843 = vsel %vm8564, %v8772, 0.0
  %v8844 = vadd.f32 %v8842, %v8843
  %v8845 = vsel %vm8564, %v8773, 0.0
  %v8846 = vadd.f32 %v8844, %v8845
  %v8847 = vsel %vm8564, %v8774, 0.0
  %v8848 = vadd.f32 %v8846, %v8847
  %v8849 = vsel %vm8564, %v8775, 0.0
  %v8850 = vadd.f32 %v8848, %v8849
  %v8851 = vsel %vm8564, %v8776, 0.0
  %v8852 = vadd.f32 %v8850, %v8851
  %v8853 = vsel %vm8564, %v8777, 0.0
  %v8854 = vadd.f32 %v8852, %v8853
  %v8855 = vsel %vm8564, %v8778, 0.0
  %v8856 = vadd.f32 %v8854, %v8855
  %v8857 = vsel %vm8564, %v8779, 0.0
  %v8858 = vadd.f32 %v8856, %v8857
  %v8859 = vsel %vm8564, %v8780, 0.0
  %v8860 = vadd.f32 %v8858, %v8859
  %v8861 = vsel %vm8564, %v8781, 0.0
  %v8862 = vadd.f32 %v8860, %v8861
  %v8863 = vsel %vm8564, %v8782, 0.0
  %v8864 = vadd.f32 %v8862, %v8863
  %v8865 = vsel %vm8564, %v8783, 0.0
  %v8866 = vadd.f32 %v8864, %v8865
  %v8867 = vsel %vm8564, %v8784, 0.0
  %v8868 = vadd.f32 %v8866, %v8867
  %v8869 = vsel %vm8564, %v8785, 0.0
  %v8870 = vadd.f32 %v8868, %v8869
  %v8871 = vsel %vm8564, %v8786, 0.0
  %v8872 = vadd.f32 %v8870, %v8871
  %v8873 = vsel %vm8564, %v8787, 0.0
  %v8874 = vadd.f32 %v8872, %v8873
  %v8875 = vsel %vm8564, %v8788, 0.0
  %v8876 = vadd.f32 %v8874, %v8875
  %v8877 = vsel %vm8564, %v8789, 0.0
  %v8878 = vadd.f32 %v8876, %v8877
  %v8879 = vsel %vm8564, %v8790, 0.0
  %v8880 = vadd.f32 %v8878, %v8879
  %v8881 = vsel %vm8564, %v8791, 0.0
  %v8882 = vadd.f32 %v8880, %v8881
  %v8883 = vsel %vm8564, %v8792, 0.0
  %v8884 = vadd.f32 %v8882, %v8883
  %v8885 = vsel %vm8564, %v8793, 0.0
  %v8886 = vadd.f32 %v8884, %v8885
  %v8887 = vsel %vm8564, %v8794, 0.0
  %v8888 = vadd.f32 %v8886, %v8887
  %v8889 = vsel %vm8564, %v8795, 0.0
  %v8890 = vadd.f32 %v8888, %v8889
  %v8891 = vsel %vm8564, %v8796, 0.0
  %v8892 = vadd.f32 %v8890, %v8891
  %v8893 = vsel %vm8564, %v8797, 0.0
  %v8894 = vadd.f32 %v8892, %v8893
  %v8895 = vsel %vm8564, %v8798, 0.0
  %v8896 = vadd.f32 %v8894, %v8895
  %v8897 = vsel %vm8564, %v8799, 0.0
  %v8898 = vadd.f32 %v8896, %v8897
  %v8899 = vsel %vm8564, %v8800, 0.0
  %v8900 = vadd.f32 %v8898, %v8899
  %v8901 = vsel %vm8564, %v8801, 0.0
  %v8902 = vadd.f32 %v8900, %v8901
  %v8903 = vsel %vm8564, %v8802, 0.0
  %v8904 = vadd.f32 %v8902, %v8903
  %v8905 = vsel %vm8564, %v8803, 0.0
  %v8906 = vadd.f32 %v8904, %v8905
  %v8907 = vsel %vm8564, %v8804, 0.0
  %v8908 = vadd.f32 %v8906, %v8907
  %v8909 = vsel %vm8564, %v8805, 0.0
  %v8910 = vadd.f32 %v8908, %v8909
  %v8911 = vsel %vm8564, %v8806, 0.0
  %v8912 = vadd.f32 %v8910, %v8911
  %v8913 = vsel %vm8564, %v8807, 0.0
  %v8914 = vadd.f32 %v8912, %v8913
  %v8915 = vsel %vm8564, %v8808, 0.0
  %v8916 = vadd.f32 %v8914, %v8915
  %v8917 = vsel %vm8564, %v8809, 0.0
  %v8918 = vadd.f32 %v8916, %v8917
  %v8919 = vsel %vm8564, %v8810, 0.0
  %v8920 = vadd.f32 %v8918, %v8919
  %v8921 = vsel %vm8564, %v8811, 0.0
  %v8922 = vadd.f32 %v8920, %v8921
  %v8923 = vsel %vm8564, %v8812, 0.0
  %v8924 = vadd.f32 %v8922, %v8923
  %v8925 = vsel %vm8564, %v8813, 0.0
  %v8926 = vadd.f32 %v8924, %v8925
  %v8927 = vsel %vm8564, %v8814, 0.0
  %v8928 = vadd.f32 %v8926, %v8927
  %v8929 = vsel %vm8564, %v8815, 0.0
  %v8930 = vadd.f32 %v8928, %v8929
  %v8931 = vsel %vm8564, %v8816, 0.0
  %v8932 = vadd.f32 %v8930, %v8931
  %v8933 = vsel %vm8564, %v8817, 0.0
  %v8934 = vadd.f32 %v8932, %v8933
  %v8935 = vsel %vm8564, %v8818, 0.0
  %v8936 = vadd.f32 %v8934, %v8935
  %v8937 = vsel %vm8564, %v8819, 0.0
  %v8938 = vadd.f32 %v8936, %v8937
  %v8939 = vsel %vm8564, %v8820, 0.0
  %v8940 = vadd.f32 %v8938, %v8939
  %v8941 = vsel %vm8564, %v8821, 0.0
  %v8942 = vadd.f32 %v8940, %v8941
  %v8943 = vsel %vm8564, %v8822, 0.0
  %v8944 = vadd.f32 %v8942, %v8943
  %v8945 = vsel %vm8564, %v8823, 0.0
  %v8946 = vadd.f32 %v8944, %v8945
  %v8947 = vsel %vm8564, %v8824, 0.0
  %v8948 = vadd.f32 %v8946, %v8947
  %v8949 = vsel %vm8564, %v8825, 0.0
  %v8950 = vadd.f32 %v8948, %v8949
  %v8951 = vsel %vm8564, %v8826, 0.0
  %v8952 = vadd.f32 %v8950, %v8951
  %v8953 = vsel %vm8564, %v8827, 0.0
  %v8954 = vadd.f32 %v8952, %v8953
  %v8955 = vrot.slane %v8954, 4
  %v8956 = vadd.f32 %v8954, %v8955
  %v8957 = vrot.slane %v8956, 2
  %v8958 = vadd.f32 %v8956, %v8957
  %v8959 = vrot.slane %v8958, 1
  %v8960 = vadd.f32 %v8958, %v8959
  %v8961 = vmul.f32 %v8960, %v8698
  %v8962 = vadd.f32 %v8961, 1e-05
  %v8963 = vrsqrt.pop %v8962
  %v8964 = vmul.f32 %v8700, %v8963
  %v8965 = vmul.f32 %v8701, %v8963
  %v8966 = vmul.f32 %v8702, %v8963
  %v8967 = vmul.f32 %v8703, %v8963
  %v8968 = vmul.f32 %v8704, %v8963
  %v8969 = vmul.f32 %v8705, %v8963
  %v8970 = vmul.f32 %v8706, %v8963
  %v8971 = vmul.f32 %v8707, %v8963
  %v8972 = vmul.f32 %v8708, %v8963
  %v8973 = vmul.f32 %v8709, %v8963
  %v8974 = vmul.f32 %v8710, %v8963
  %v8975 = vmul.f32 %v8711, %v8963
  %v8976 = vmul.f32 %v8712, %v8963
  %v8977 = vmul.f32 %v8713, %v8963
  %v8978 = vmul.f32 %v8714, %v8963
  %v8979 = vmul.f32 %v8715, %v8963
  %v8980 = vmul.f32 %v8716, %v8963
  %v8981 = vmul.f32 %v8717, %v8963
  %v8982 = vmul.f32 %v8718, %v8963
  %v8983 = vmul.f32 %v8719, %v8963
  %v8984 = vmul.f32 %v8720, %v8963
  %v8985 = vmul.f32 %v8721, %v8963
  %v8986 = vmul.f32 %v8722, %v8963
  %v8987 = vmul.f32 %v8723, %v8963
  %v8988 = vmul.f32 %v8724, %v8963
  %v8989 = vmul.f32 %v8725, %v8963
  %v8990 = vmul.f32 %v8726, %v8963
  %v8991 = vmul.f32 %v8727, %v8963
  %v8992 = vmul.f32 %v8728, %v8963
  %v8993 = vmul.f32 %v8729, %v8963
  %v8994 = vmul.f32 %v8730, %v8963
  %v8995 = vmul.f32 %v8731, %v8963
  %v8996 = vmul.f32 %v8732, %v8963
  %v8997 = vmul.f32 %v8733, %v8963
  %v8998 = vmul.f32 %v8734, %v8963
  %v8999 = vmul.f32 %v8735, %v8963
  %v9000 = vmul.f32 %v8736, %v8963
  %v9001 = vmul.f32 %v8737, %v8963
  %v9002 = vmul.f32 %v8738, %v8963
  %v9003 = vmul.f32 %v8739, %v8963
  %v9004 = vmul.f32 %v8740, %v8963
  %v9005 = vmul.f32 %v8741, %v8963
  %v9006 = vmul.f32 %v8742, %v8963
  %v9007 = vmul.f32 %v8743, %v8963
  %v9008 = vmul.f32 %v8744, %v8963
  %v9009 = vmul.f32 %v8745, %v8963
  %v9010 = vmul.f32 %v8746, %v8963
  %v9011 = vmul.f32 %v8747, %v8963
  %v9012 = vmul.f32 %v8748, %v8963
  %v9013 = vmul.f32 %v8749, %v8963
  %v9014 = vmul.f32 %v8750, %v8963
  %v9015 = vmul.f32 %v8751, %v8963
  %v9016 = vmul.f32 %v8752, %v8963
  %v9017 = vmul.f32 %v8753, %v8963
  %v9018 = vmul.f32 %v8754, %v8963
  %v9019 = vmul.f32 %v8755, %v8963
  %v9020 = vmul.f32 %v8756, %v8963
  %v9021 = vmul.f32 %v8757, %v8963
  %v9022 = vmul.f32 %v8758, %v8963
  %v9023 = vmul.f32 %v8759, %v8963
  %v9024 = vmul.f32 %v8760, %v8963
  %v9025 = vmul.f32 %v8761, %v8963
  %v9026 = vmul.f32 %v8762, %v8963
  %v9027 = vmul.f32 %v8763, %v8963
  %v9029 = vlaneseq
  %v9030 = vshrl.u32 %v9029, 7
  %v9031 = vsub.s32 0, %v9030
  %v9032 = vrot.slane %v8562, %v9031
  %v9034 = vmul.f32 %v8964, %v9032
  %v9035 = vmul.f32 %v8965, %v9032
  %v9036 = vmul.f32 %v8966, %v9032
  %v9037 = vmul.f32 %v8967, %v9032
  %v9038 = vmul.f32 %v8968, %v9032
  %v9039 = vmul.f32 %v8969, %v9032
  %v9040 = vmul.f32 %v8970, %v9032
  %v9041 = vmul.f32 %v8971, %v9032
  %v9042 = vmul.f32 %v8972, %v9032
  %v9043 = vmul.f32 %v8973, %v9032
  %v9044 = vmul.f32 %v8974, %v9032
  %v9045 = vmul.f32 %v8975, %v9032
  %v9046 = vmul.f32 %v8976, %v9032
  %v9047 = vmul.f32 %v8977, %v9032
  %v9048 = vmul.f32 %v8978, %v9032
  %v9049 = vmul.f32 %v8979, %v9032
  %v9050 = vmul.f32 %v8980, %v9032
  %v9051 = vmul.f32 %v8981, %v9032
  %v9052 = vmul.f32 %v8982, %v9032
  %v9053 = vmul.f32 %v8983, %v9032
  %v9054 = vmul.f32 %v8984, %v9032
  %v9055 = vmul.f32 %v8985, %v9032
  %v9056 = vmul.f32 %v8986, %v9032
  %v9057 = vmul.f32 %v8987, %v9032
  %v9058 = vmul.f32 %v8988, %v9032
  %v9059 = vmul.f32 %v8989, %v9032
  %v9060 = vmul.f32 %v8990, %v9032
  %v9061 = vmul.f32 %v8991, %v9032
  %v9062 = vmul.f32 %v8992, %v9032
  %v9063 = vmul.f32 %v8993, %v9032
  %v9064 = vmul.f32 %v8994, %v9032
  %v9065 = vmul.f32 %v8995, %v9032
  %v9066 = vmul.f32 %v8996, %v9032
  %v9067 = vmul.f32 %v8997, %v9032
  %v9068 = vmul.f32 %v8998, %v9032
  %v9069 = vmul.f32 %v8999, %v9032
  %v9070 = vmul.f32 %v9000, %v9032
  %v9071 = vmul.f32 %v9001, %v9032
  %v9072 = vmul.f32 %v9002, %v9032
  %v9073 = vmul.f32 %v9003, %v9032
  %v9074 = vmul.f32 %v9004, %v9032
  %v9075 = vmul.f32 %v9005, %v9032
  %v9076 = vmul.f32 %v9006, %v9032
  %v9077 = vmul.f32 %v9007, %v9032
  %v9078 = vmul.f32 %v9008, %v9032
  %v9079 = vmul.f32 %v9009, %v9032
  %v9080 = vmul.f32 %v9010, %v9032
  %v9081 = vmul.f32 %v9011, %v9032
  %v9082 = vmul.f32 %v9012, %v9032
  %v9083 = vmul.f32 %v9013, %v9032
  %v9084 = vmul.f32 %v9014, %v9032
  %v9085 = vmul.f32 %v9015, %v9032
  %v9086 = vmul.f32 %v9016, %v9032
  %v9087 = vmul.f32 %v9017, %v9032
  %v9088 = vmul.f32 %v9018, %v9032
  %v9089 = vmul.f32 %v9019, %v9032
  %v9090 = vmul.f32 %v9020, %v9032
  %v9091 = vmul.f32 %v9021, %v9032
  %v9092 = vmul.f32 %v9022, %v9032
  %v9093 = vmul.f32 %v9023, %v9032
  %v9094 = vmul.f32 %v9024, %v9032
  %v9095 = vmul.f32 %v9025, %v9032
  %v9096 = vmul.f32 %v9026, %v9032
  %v9097 = vmul.f32 %v9027, %v9032
  %v9099 = vlaneseq
  %v9100 = vshrl.u32 %v9099, 7
  %v9101 = vsub.s32 0, %v9100
  %v9102 = vrot.slane %v8563, %v9101
  %v9104 = vadd.f32 %v9034, %v9102
  %v9105 = vadd.f32 %v9035, %v9102
  %v9106 = vadd.f32 %v9036, %v9102
  %v9107 = vadd.f32 %v9037, %v9102
  %v9108 = vadd.f32 %v9038, %v9102
  %v9109 = vadd.f32 %v9039, %v9102
  %v9110 = vadd.f32 %v9040, %v9102
  %v9111 = vadd.f32 %v9041, %v9102
  %v9112 = vadd.f32 %v9042, %v9102
  %v9113 = vadd.f32 %v9043, %v9102
  %v9114 = vadd.f32 %v9044, %v9102
  %v9115 = vadd.f32 %v9045, %v9102
  %v9116 = vadd.f32 %v9046, %v9102
  %v9117 = vadd.f32 %v9047, %v9102
  %v9118 = vadd.f32 %v9048, %v9102
  %v9119 = vadd.f32 %v9049, %v9102
  %v9120 = vadd.f32 %v9050, %v9102
  %v9121 = vadd.f32 %v9051, %v9102
  %v9122 = vadd.f32 %v9052, %v9102
  %v9123 = vadd.f32 %v9053, %v9102
  %v9124 = vadd.f32 %v9054, %v9102
  %v9125 = vadd.f32 %v9055, %v9102
  %v9126 = vadd.f32 %v9056, %v9102
  %v9127 = vadd.f32 %v9057, %v9102
  %v9128 = vadd.f32 %v9058, %v9102
  %v9129 = vadd.f32 %v9059, %v9102
  %v9130 = vadd.f32 %v9060, %v9102
  %v9131 = vadd.f32 %v9061, %v9102
  %v9132 = vadd.f32 %v9062, %v9102
  %v9133 = vadd.f32 %v9063, %v9102
  %v9134 = vadd.f32 %v9064, %v9102
  %v9135 = vadd.f32 %v9065, %v9102
  %v9136 = vadd.f32 %v9066, %v9102
  %v9137 = vadd.f32 %v9067, %v9102
  %v9138 = vadd.f32 %v9068, %v9102
  %v9139 = vadd.f32 %v9069, %v9102
  %v9140 = vadd.f32 %v9070, %v9102
  %v9141 = vadd.f32 %v9071, %v9102
  %v9142 = vadd.f32 %v9072, %v9102
  %v9143 = vadd.f32 %v9073, %v9102
  %v9144 = vadd.f32 %v9074, %v9102
  %v9145 = vadd.f32 %v9075, %v9102
  %v9146 = vadd.f32 %v9076, %v9102
  %v9147 = vadd.f32 %v9077, %v9102
  %v9148 = vadd.f32 %v9078, %v9102
  %v9149 = vadd.f32 %v9079, %v9102
  %v9150 = vadd.f32 %v9080, %v9102
  %v9151 = vadd.f32 %v9081, %v9102
  %v9152 = vadd.f32 %v9082, %v9102
  %v9153 = vadd.f32 %v9083, %v9102
  %v9154 = vadd.f32 %v9084, %v9102
  %v9155 = vadd.f32 %v9085, %v9102
  %v9156 = vadd.f32 %v9086, %v9102
  %v9157 = vadd.f32 %v9087, %v9102
  %v9158 = vadd.f32 %v9088, %v9102
  %v9159 = vadd.f32 %v9089, %v9102
  %v9160 = vadd.f32 %v9090, %v9102
  %v9161 = vadd.f32 %v9091, %v9102
  %v9162 = vadd.f32 %v9092, %v9102
  %v9163 = vadd.f32 %v9093, %v9102
  %v9164 = vadd.f32 %v9094, %v9102
  %v9165 = vadd.f32 %v9095, %v9102
  %v9166 = vadd.f32 %v9096, %v9102
  %v9167 = vadd.f32 %v9097, %v9102
  %v9168 = vmax.f32 %v9104, 0.0
  %v9169 = vmax.f32 %v9105, 0.0
  %v9170 = vmax.f32 %v9106, 0.0
  %v9171 = vmax.f32 %v9107, 0.0
  %v9172 = vmax.f32 %v9108, 0.0
  %v9173 = vmax.f32 %v9109, 0.0
  %v9174 = vmax.f32 %v9110, 0.0
  %v9175 = vmax.f32 %v9111, 0.0
  %v9176 = vmax.f32 %v9112, 0.0
  %v9177 = vmax.f32 %v9113, 0.0
  %v9178 = vmax.f32 %v9114, 0.0
  %v9179 = vmax.f32 %v9115, 0.0
  %v9180 = vmax.f32 %v9116, 0.0
  %v9181 = vmax.f32 %v9117, 0.0
  %v9182 = vmax.f32 %v9118, 0.0
  %v9183 = vmax.f32 %v9119, 0.0
  %v9184 = vmax.f32 %v9120, 0.0
  %v9185 = vmax.f32 %v9121, 0.0
  %v9186 = vmax.f32 %v9122, 0.0
  %v9187 = vmax.f32 %v9123, 0.0
  %v9188 = vmax.f32 %v9124, 0.0
  %v9189 = vmax.f32 %v9125, 0.0
  %v9190 = vmax.f32 %v9126, 0.0
  %v9191 = vmax.f32 %v9127, 0.0
  %v9192 = vmax.f32 %v9128, 0.0
  %v9193 = vmax.f32 %v9129, 0.0
  %v9194 = vmax.f32 %v9130, 0.0
  %v9195 = vmax.f32 %v9131, 0.0
  %v9196 = vmax.f32 %v9132, 0.0
  %v9197 = vmax.f32 %v9133, 0.0
  %v9198 = vmax.f32 %v9134, 0.0
  %v9199 = vmax.f32 %v9135, 0.0
  %v9200 = vmax.f32 %v9136, 0.0
  %v9201 = vmax.f32 %v9137, 0.0
  %v9202 = vmax.f32 %v9138, 0.0
  %v9203 = vmax.f32 %v9139, 0.0
  %v9204 = vmax.f32 %v9140, 0.0
  %v9205 = vmax.f32 %v9141, 0.0
  %v9206 = vmax.f32 %v9142, 0.0
  %v9207 = vmax.f32 %v9143, 0.0
  %v9208 = vmax.f32 %v9144, 0.0
  %v9209 = vmax.f32 %v9145, 0.0
  %v9210 = vmax.f32 %v9146, 0.0
  %v9211 = vmax.f32 %v9147, 0.0
  %v9212 = vmax.f32 %v9148, 0.0
  %v9213 = vmax.f32 %v9149, 0.0
  %v9214 = vmax.f32 %v9150, 0.0
  %v9215 = vmax.f32 %v9151, 0.0
  %v9216 = vmax.f32 %v9152, 0.0
  %v9217 = vmax.f32 %v9153, 0.0
  %v9218 = vmax.f32 %v9154, 0.0
  %v9219 = vmax.f32 %v9155, 0.0
  %v9220 = vmax.f32 %v9156, 0.0
  %v9221 = vmax.f32 %v9157, 0.0
  %v9222 = vmax.f32 %v9158, 0.0
  %v9223 = vmax.f32 %v9159, 0.0
  %v9224 = vmax.f32 %v9160, 0.0
  %v9225 = vmax.f32 %v9161, 0.0
  %v9226 = vmax.f32 %v9162, 0.0
  %v9227 = vmax.f32 %v9163, 0.0
  %v9228 = vmax.f32 %v9164, 0.0
  %v9229 = vmax.f32 %v9165, 0.0
  %v9230 = vmax.f32 %v9166, 0.0
  %v9231 = vmax.f32 %v9167, 0.0
  %9232 = vst.msk [vmem:[%s6] sm:$0xff] %vm8564, %v9168
  %9233 = vst.msk [vmem:[%s6 + $0x8] sm:$0xff] %vm8564, %v9169
  %9234 = vst.msk [vmem:[%s6 + $0x10] sm:$0xff] %vm8564, %v9170
  %9235 = vst.msk [vmem:[%s6 + $0x18] sm:$0xff] %vm8564, %v9171
  %9236 = vst.msk [vmem:[%s6 + $0x20] sm:$0xff] %vm8564, %v9172
  %9237 = vst.msk [vmem:[%s6 + $0x28] sm:$0xff] %vm8564, %v9173
  %9238 = vst.msk [vmem:[%s6 + $0x30] sm:$0xff] %vm8564, %v9174
  %9239 = vst.msk [vmem:[%s6 + $0x38] sm:$0xff] %vm8564, %v9175
  %9240 = vst.msk [vmem:[%s6 + $0x40] sm:$0xff] %vm8564, %v9176
  %9241 = vst.msk [vmem:[%s6 + $0x48] sm:$0xff] %vm8564, %v9177
  %9242 = vst.msk [vmem:[%s6 + $0x50] sm:$0xff] %vm8564, %v9178
  %9243 = vst.msk [vmem:[%s6 + $0x58] sm:$0xff] %vm8564, %v9179
  %9244 = vst.msk [vmem:[%s6 + $0x60] sm:$0xff] %vm8564, %v9180
  %9245 = vst.msk [vmem:[%s6 + $0x68] sm:$0xff] %vm8564, %v9181
  %9246 = vst.msk [vmem:[%s6 + $0x70] sm:$0xff] %vm8564, %v9182
  %9247 = vst.msk [vmem:[%s6 + $0x78] sm:$0xff] %vm8564, %v9183
  %9248 = vst.msk [vmem:[%s6 + $0x80] sm:$0xff] %vm8564, %v9184
  %9249 = vst.msk [vmem:[%s6 + $0x88] sm:$0xff] %vm8564, %v9185
  %9250 = vst.msk [vmem:[%s6 + $0x90] sm:$0xff] %vm8564, %v9186
  %9251 = vst.msk [vmem:[%s6 + $0x98] sm:$0xff] %vm8564, %v9187
  %9252 = vst.msk [vmem:[%s6 + $0xa0] sm:$0xff] %vm8564, %v9188
  %9253 = vst.msk [vmem:[%s6 + $0xa8] sm:$0xff] %vm8564, %v9189
  %9254 = vst.msk [vmem:[%s6 + $0xb0] sm:$0xff] %vm8564, %v9190
  %9255 = vst.msk [vmem:[%s6 + $0xb8] sm:$0xff] %vm8564, %v9191
  %9256 = vst.msk [vmem:[%s6 + $0xc0] sm:$0xff] %vm8564, %v9192
  %9257 = vst.msk [vmem:[%s6 + $0xc8] sm:$0xff] %vm8564, %v9193
  %9258 = vst.msk [vmem:[%s6 + $0xd0] sm:$0xff] %vm8564, %v9194
  %9259 = vst.msk [vmem:[%s6 + $0xd8] sm:$0xff] %vm8564, %v9195
  %9260 = vst.msk [vmem:[%s6 + $0xe0] sm:$0xff] %vm8564, %v9196
  %9261 = vst.msk [vmem:[%s6 + $0xe8] sm:$0xff] %vm8564, %v9197
  %9262 = vst.msk [vmem:[%s6 + $0xf0] sm:$0xff] %vm8564, %v9198
  %9263 = vst.msk [vmem:[%s6 + $0xf8] sm:$0xff] %vm8564, %v9199
  %9264 = vst.msk [vmem:[%s6 + $0x100] sm:$0xff] %vm8564, %v9200
  %9265 = vst.msk [vmem:[%s6 + $0x108] sm:$0xff] %vm8564, %v9201
  %9266 = vst.msk [vmem:[%s6 + $0x110] sm:$0xff] %vm8564, %v9202
  %9267 = vst.msk [vmem:[%s6 + $0x118] sm:$0xff] %vm8564, %v9203
  %9268 = vst.msk [vmem:[%s6 + $0x120] sm:$0xff] %vm8564, %v9204
  %9269 = vst.msk [vmem:[%s6 + $0x128] sm:$0xff] %vm8564, %v9205
  %9270 = vst.msk [vmem:[%s6 + $0x130] sm:$0xff] %vm8564, %v9206
  %9271 = vst.msk [vmem:[%s6 + $0x138] sm:$0xff] %vm8564, %v9207
  %9272 = vst.msk [vmem:[%s6 + $0x140] sm:$0xff] %vm8564, %v9208
  %9273 = vst.msk [vmem:[%s6 + $0x148] sm:$0xff] %vm8564, %v9209
  %9274 = vst.msk [vmem:[%s6 + $0x150] sm:$0xff] %vm8564, %v9210
  %9275 = vst.msk [vmem:[%s6 + $0x158] sm:$0xff] %vm8564, %v9211
  %9276 = vst.msk [vmem:[%s6 + $0x160] sm:$0xff] %vm8564, %v9212
  %9277 = vst.msk [vmem:[%s6 + $0x168] sm:$0xff] %vm8564, %v9213
  %9278 = vst.msk [vmem:[%s6 + $0x170] sm:$0xff] %vm8564, %v9214
  %9279 = vst.msk [vmem:[%s6 + $0x178] sm:$0xff] %vm8564, %v9215
  %9280 = vst.msk [vmem:[%s6 + $0x180] sm:$0xff] %vm8564, %v9216
  %9281 = vst.msk [vmem:[%s6 + $0x188] sm:$0xff] %vm8564, %v9217
  %9282 = vst.msk [vmem:[%s6 + $0x190] sm:$0xff] %vm8564, %v9218
  %9283 = vst.msk [vmem:[%s6 + $0x198] sm:$0xff] %vm8564, %v9219
  %9284 = vst.msk [vmem:[%s6 + $0x1a0] sm:$0xff] %vm8564, %v9220
  %9285 = vst.msk [vmem:[%s6 + $0x1a8] sm:$0xff] %vm8564, %v9221
  %9286 = vst.msk [vmem:[%s6 + $0x1b0] sm:$0xff] %vm8564, %v9222
  %9287 = vst.msk [vmem:[%s6 + $0x1b8] sm:$0xff] %vm8564, %v9223
  %9288 = vst.msk [vmem:[%s6 + $0x1c0] sm:$0xff] %vm8564, %v9224
  %9289 = vst.msk [vmem:[%s6 + $0x1c8] sm:$0xff] %vm8564, %v9225
  %9290 = vst.msk [vmem:[%s6 + $0x1d0] sm:$0xff] %vm8564, %v9226
  %9291 = vst.msk [vmem:[%s6 + $0x1d8] sm:$0xff] %vm8564, %v9227
  %9292 = vst.msk [vmem:[%s6 + $0x1e0] sm:$0xff] %vm8564, %v9228
  %9293 = vst.msk [vmem:[%s6 + $0x1e8] sm:$0xff] %vm8564, %v9229
  %9294 = vst.msk [vmem:[%s6 + $0x1f0] sm:$0xff] %vm8564, %v9230
  %9295 = vst.msk [vmem:[%s6 + $0x1f8] sm:$0xff] %vm8564, %v9231
  // Predicated region
  $region26: #{tpu_custom_call.1} parent=0 // pred_check
    _
  $region27: #{tpu_custom_call.1} parent=0 // pred_check_branch
    %9297 = sbr.rel (0) target = $region29
  $region28: #{tpu_custom_call.1} parent=0 // pred_region
    _
  $region29: #{tpu_custom_call.1} parent=0 // pred_fallthru
    _
  // Predicated region
  $region30: #{tpu_custom_call.1} parent=0 // pred_check
    _
  $region31: #{tpu_custom_call.1} parent=0 // pred_check_branch
    %9299 = sbr.rel (0) target = $region33
  $region32: #{tpu_custom_call.1} parent=0 // pred_region
    _
  $region33: #{tpu_custom_call.1} parent=0 // pred_fallthru
    _

</llo_original>
